<compile_context>
chip_gen: v7x
topology: tpu7x:2x2x1
jax: 0.10.0
libtpu: 0.0.40
codegen_flags: <defaults>
</compile_context>

<pallas_src>
import functools

import jax
import jax.numpy as jnp
from jax import lax
from jax.experimental import pallas as pl
from jax.experimental.pallas import tpu as pltpu

R_NUM = 2                        # cfg.GAN.R_NUM
BN_EPS = 1e-5                    # nn.BatchNorm2d default eps
COMPUTE_DTYPE = jnp.bfloat16     # MXU operand dtype; accumulation stays f32


def _default_vmem_limit():
    # ~3/4 of physical VMEM: 96 MiB on v5e/v6e (128 MiB), 48 MiB on v7x (64 MiB).
    try:
        cap = int(pltpu.get_tpu_info().vmem_capacity_bytes)
        return max(32 * 1024 * 1024, (cap * 3) // 4)
    except Exception:
        return 64 * 1024 * 1024


_VMEM_LIMIT = _default_vmem_limit()
_CP = pltpu.CompilerParams(dimension_semantics=("parallel",),
                           vmem_limit_bytes=_VMEM_LIMIT)


# ----------------------------- in-kernel helpers (traced) -----------------------------

def _zero_pad_hw(x):
    # x: (H, W, C) VMEM value -> (H+2, W+2, C) with a zero halo, built in VMEM.
    H, W, C = x.shape
    zr = jnp.zeros((1, W, C), x.dtype)
    x = jnp.concatenate([zr, x, zr], axis=0)
    zc = jnp.zeros((H + 2, 1, C), x.dtype)
    return jnp.concatenate([zc, x, zc], axis=1)


def _conv3x3_rows(x, w_ref):
    # 3x3 conv, stride 1, pad 1, no bias, as THREE accumulating MXU matmuls grouped by
    # kernel row ky, each over (H*W, 3*Cin) patches (patch rows ordered (kx, ci)).
    # x: (H, W, Cin) value; w_ref: (3, 3*Cin, Cout) ref (rows grouped by ky).
    H, W, Cin = x.shape
    Cout = w_ref.shape[-1]
    xp = _zero_pad_hw(x.astype(COMPUTE_DTYPE))                       # (H+2, W+2, Cin)
    n = H * W
    acc = jnp.zeros((n, Cout), jnp.float32)
    for ky in range(3):
        rows = xp[ky:ky + H]                                         # (H, W+2, Cin)
        patch = jnp.concatenate(
            [rows[:, kx:kx + W, :] for kx in range(3)], axis=-1
        ).reshape(n, 3 * Cin)                                        # (H*W, 3*Cin) bf16
        acc = acc + jnp.dot(patch, w_ref[ky].astype(COMPUTE_DTYPE),
                            preferred_element_type=jnp.float32)
    return acc                                                        # (H*W, Cout) f32


# ----------------------------- Pallas kernels -----------------------------

def _attn_kernel(q_ref, ctx_ref, w_ref, mask_ref, c_ref):
    # One batch element per grid step.
    # q_ref: (1, QL, idf)  ctx_ref: (1, SL, cdf)  w_ref: (cdf, idf)  mask_ref: (1, 1, SL)
    src = jnp.dot(ctx_ref[0].astype(COMPUTE_DTYPE),
                  w_ref[...].astype(COMPUTE_DTYPE),
                  preferred_element_type=jnp.float32)                # (SL, idf)
    scores = lax.dot_general(q_ref[0].astype(COMPUTE_DTYPE),
                             src.astype(COMPUTE_DTYPE),
                             (((1,), (1,)), ((), ())),
                             preferred_element_type=jnp.float32)     # (QL, SL)
    scores = scores - mask_ref[0] * 1e30      # finite mask: no NaN on all-masked rows
    mx = jnp.max(scores, axis=-1, keepdims=True)
    e = jnp.exp(scores - mx)
    p = e * pl.reciprocal(jnp.sum(e, axis=-1, keepdims=True), approx=True)
    c = jnp.dot(p.astype(COMPUTE_DTYPE), src.astype(COMPUTE_DTYPE),
                preferred_element_type=jnp.float32)                  # (QL, idf)
    c_ref[0] = c.astype(c_ref.dtype)


def _resblock_kernel(*refs, n_inputs):
    # Fully fused ResBlock on one batch element:
    #   (optional channel concat) -> conv3x3 -> BN(scale/shift) -> ReLU
    #   -> conv3x3 -> BN -> +residual -> ReLU
    # refs = [x_0, ..., x_{n-1}, w1, s1, b1, w2, s2, b2, out]; w*: (3, 3*C, C); s/b: (1, C)
    x_refs = refs[:n_inputs]
    w1_ref, s1_ref, b1_ref, w2_ref, s2_ref, b2_ref, o_ref = refs[n_inputs:]
    _, H, W, C = o_ref.shape
    parts = [r[0].astype(jnp.float32) for r in x_refs]               # each (H, W, ci)
    x = parts[0] if n_inputs == 1 else jnp.concatenate(parts, axis=-1)   # (H, W, C)

    y = _conv3x3_rows(x, w1_ref)                                     # (H*W, C) f32
    y = jnp.maximum(y * s1_ref[...] + b1_ref[...], 0.0)
    y = _conv3x3_rows(y.reshape(H, W, C), w2_ref)
    y = y * s2_ref[...] + b2_ref[...]
    y = jnp.maximum(y + x.reshape(H * W, C), 0.0)
    o_ref[0] = y.reshape(H, W, C).astype(o_ref.dtype)


def _upblock_kernel(x_ref, w_ref, s_ref, b_ref, o_ref):
    # Fused upBlock on one batch element: nearest-2x upsample -> conv3x3 -> BN -> ReLU.
    # The four parity kernels are packed into one (3*Cin, 4*Cout) weight per ky group so
    # everything is ONE lane-dense matmul chain; the pixel interleave happens in VMEM.
    # x_ref: (1, H, W, Cin); w_ref: (3, 3*Cin, 4*Cout) (cols ordered p=2*dp+dq, then c)
    # o_ref: (1, 2H, 2W, Cout)
    _, H, W, Cin = x_ref.shape
    Cout = o_ref.shape[-1]
    x = x_ref[0].astype(jnp.float32)
    y = _conv3x3_rows(x, w_ref)                                      # (H*W, 4*Cout) f32
    y = jnp.maximum(y * s_ref[...] + b_ref[...], 0.0)                # BN + ReLU
    y = y.reshape(H, W, 4 * Cout)
    planes = [y[:, :, p * Cout:(p + 1) * Cout] for p in range(4)]    # p = 2*dp + dq
    # interleave dq along W (for each dp):  out[i, 2j+dq, c] = planes[2dp+dq][i, j, c]
    r0 = jnp.concatenate([planes[0][:, :, None, :], planes[1][:, :, None, :]],
                         axis=2).reshape(H, 2 * W, Cout)
    r1 = jnp.concatenate([planes[2][:, :, None, :], planes[3][:, :, None, :]],
                         axis=2).reshape(H, 2 * W, Cout)
    # interleave dp along H:  out[2i+dp, :, :] = r_dp[i, :, :]
    out = jnp.concatenate([r0[:, None, :, :], r1[:, None, :, :]],
                          axis=1).reshape(2 * H, 2 * W, Cout)
    o_ref[0] = out.astype(o_ref.dtype)


# ----------------------------- Pallas wrappers -----------------------------

def cross_attention(q, ctx, w_proj, mask):
    # q: (B, QL, idf)  ctx: (B, SL, cdf)  w_proj: (cdf, idf)  mask: (B, SL) float(0/1)
    B, QL, idf = q.shape
    SL, cdf = ctx.shape[1], ctx.shape[2]
    mask3 = mask.reshape(B, 1, SL).astype(jnp.float32)
    return pl.pallas_call(
        _attn_kernel,
        grid=(B,),
        in_specs=[pl.BlockSpec((1, QL, idf), lambda b: (b, 0, 0)),
                  pl.BlockSpec((1, SL, cdf), lambda b: (b, 0, 0)),
                  pl.BlockSpec((cdf, idf), lambda b: (0, 0)),      # resident weight
                  pl.BlockSpec((1, 1, SL), lambda b: (b, 0, 0))],
        out_specs=pl.BlockSpec((1, QL, idf), lambda b: (b, 0, 0)),
        out_shape=jax.ShapeDtypeStruct((B, QL, idf), jnp.float32),
        compiler_params=_CP,
    )(q, ctx, w_proj, mask3)


def fused_resblock(xs, w1, s1, b1, w2, s2, b2):
    # xs: list of NHWC tensors (B, H, W, ci); channels concat to C inside the kernel.
    B, H, W = xs[0].shape[:3]
    C = sum(x.shape[-1] for x in xs)
    in_specs = [pl.BlockSpec((1, H, W, x.shape[-1]), lambda b: (b, 0, 0, 0)) for x in xs]
    w_spec = pl.BlockSpec((3, 3 * C, C), lambda b: (0, 0, 0))        # resident weights
    v_spec = pl.BlockSpec((1, C), lambda b: (0, 0))
    in_specs += [w_spec, v_spec, v_spec, w_spec, v_spec, v_spec]
    kern = functools.partial(_resblock_kernel, n_inputs=len(xs))
    return pl.pallas_call(
        kern,
        grid=(B,),
        in_specs=in_specs,
        out_specs=pl.BlockSpec((1, H, W, C), lambda b: (b, 0, 0, 0)),
        out_shape=jax.ShapeDtypeStruct((B, H, W, C), jnp.float32),
        compiler_params=_CP,
    )(*xs,
      w1.reshape(3, 3 * C, C), s1.reshape(1, C), b1.reshape(1, C),
      w2.reshape(3, 3 * C, C), s2.reshape(1, C), b2.reshape(1, C))


# Row/column parity maps of (nearest-2x upsample -> conv3x3 pad 1):
#   patch tap ky (= x[i-1+ky]) receives original 3x3 taps per M[parity][ky, a].
_M_UP = (jnp.array([[1., 0., 0.], [0., 1., 1.], [0., 0., 0.]], jnp.float32),   # dp/dq = 0
         jnp.array([[0., 0., 0.], [1., 1., 0.], [0., 0., 1.]], jnp.float32))   # dp/dq = 1


def _upsample_eff_weights(w):
    # w: (3, 3, Cin, Cout) HWIO -> (3, 3*Cin, 4*Cout): four parity kernels zero-embedded
    # into 3x3 taps, packed as output-column blocks p = 2*dp + dq (then c).
    Cin, Cout = w.shape[2], w.shape[3]
    pk = [jnp.einsum('ka,lb,abio->klio', _M_UP[dp], _M_UP[dq], w)
          for dp in range(2) for dq in range(2)]                     # 4 x (3,3,Cin,Cout)
    w4 = jnp.stack(pk, axis=3)                                       # (3,3,Cin,4,Cout)
    return w4.reshape(3, 3 * Cin, 4 * Cout)


def fused_upblock(x, w, scale, shift):
    # x: (B, H, W, Cin) NHWC -> (B, 2H, 2W, Cout) NHWC (pixel interleave done in-kernel)
    B, H, W, Cin = x.shape
    Cout = w.shape[-1]
    w_eff = _upsample_eff_weights(w)
    s4 = jnp.tile(scale, 4).reshape(1, 4 * Cout)
    b4 = jnp.tile(shift, 4).reshape(1, 4 * Cout)
    return pl.pallas_call(
        _upblock_kernel,
        grid=(B,),
        in_specs=[pl.BlockSpec((1, H, W, Cin), lambda b: (b, 0, 0, 0)),
                  pl.BlockSpec((3, 3 * Cin, 4 * Cout), lambda b: (0, 0, 0)),  # resident
                  pl.BlockSpec((1, 4 * Cout), lambda b: (0, 0)),
                  pl.BlockSpec((1, 4 * Cout), lambda b: (0, 0))],
        out_specs=pl.BlockSpec((1, 2 * H, 2 * W, Cout), lambda b: (b, 0, 0, 0)),
        out_shape=jax.ShapeDtypeStruct((B, 2 * H, 2 * W, Cout), jnp.float32),
        compiler_params=_CP,
    )(x, w_eff, s4, b4)


# ----------------------------- Model glue -----------------------------

def _bn_fold(gamma, beta, running_mean, running_var, eps=BN_EPS):
    # Eval-mode BatchNorm folded to a per-channel scale/shift.
    scale = gamma * lax.rsqrt(running_var + eps)
    return scale, beta - running_mean * scale


def init_params(key, ngf, nef):
    ch = 2 * ngf
    ks = jax.random.split(key, 2 * R_NUM + 2)

    def convw(k, cin, cout, scale=0.05):
        return scale * jax.random.normal(k, (3, 3, cin, cout), jnp.float32)

    p = {"w_attn": 0.05 * jax.random.normal(ks[0], (nef, ngf), jnp.float32)}
    idx = 1
    for i in range(R_NUM):
        p[f"res{i}_w1"] = convw(ks[idx], ch, ch); idx += 1
        p[f"res{i}_w2"] = convw(ks[idx], ch, ch); idx += 1
        for j in (1, 2):
            p[f"res{i}_g{j}"] = jnp.ones((ch,), jnp.float32)
            p[f"res{i}_b{j}"] = jnp.zeros((ch,), jnp.float32)
            p[f"res{i}_m{j}"] = jnp.zeros((ch,), jnp.float32)   # BN running_mean
            p[f"res{i}_v{j}"] = jnp.ones((ch,), jnp.float32)    # BN running_var
    p["up_w"] = convw(ks[idx], ch, ngf)
    p["up_g"] = jnp.ones((ngf,), jnp.float32)
    p["up_b"] = jnp.zeros((ngf,), jnp.float32)
    p["up_m"] = jnp.zeros((ngf,), jnp.float32)
    p["up_v"] = jnp.ones((ngf,), jnp.float32)
    return p


@jax.jit
def next_stage_g_forward(params, h_code, c_code_in, word_embs, mask):
    """
    h_code:    (B, ngf, ih, iw)   NCHW  (query)
    c_code_in: unused on the 'cross' path (kept for signature parity)
    word_embs: (B, nef, sourceL)
    mask:      (B, sourceL)  1.0 where word is padded / masked
    returns (out_code: (B, ngf, 2*ih, 2*iw) NCHW, c_code: (B, ngf, ih, iw) NCHW)
    """
    del c_code_in  # 'cross' branch overwrites c_code with the attention output
    B, ngf, H, W = h_code.shape

    # ---- CrossAttn (one batch element per grid step) ----
    h_nhwc = jnp.transpose(h_code, (0, 2, 3, 1))                    # (B, H, W, ngf)
    q = h_nhwc.reshape(B, H * W, ngf)
    ctx = jnp.transpose(word_embs, (0, 2, 1))                       # (B, SL, nef)
    c_flat = cross_attention(q, ctx, params["w_attn"], mask)        # (B, H*W, ngf)
    c_nhwc = c_flat.reshape(B, H, W, ngf)
    c_code = jnp.transpose(c_nhwc, (0, 3, 1, 2))                    # NCHW return value

    # ---- ResBlocks (cat(h, c) fused into the first kernel, never hits HBM) ----
    x = None
    for i in range(R_NUM):
        s1, b1 = _bn_fold(params[f"res{i}_g1"], params[f"res{i}_b1"],
                          params[f"res{i}_m1"], params[f"res{i}_v1"])
        s2, b2 = _bn_fold(params[f"res{i}_g2"], params[f"res{i}_b2"],
                          params[f"res{i}_m2"], params[f"res{i}_v2"])
        x = fused_resblock([h_nhwc, c_nhwc] if i == 0 else [x],
                           params[f"res{i}_w1"], s1, b1,
                           params[f"res{i}_w2"], s2, b2)

    # ---- upBlock: fused upsample + conv3x3 + BN + ReLU, interleaved NHWC output ----
    su, bu = _bn_fold(params["up_g"], params["up_b"], params["up_m"], params["up_v"])
    out_nhwc = fused_upblock(x, params["up_w"], su, bu)             # (B, 2H, 2W, ngf)
    out_code = jnp.transpose(out_nhwc, (0, 3, 1, 2))                # single NCHW transpose
    return out_code, c_code


# ----------------------------- Main -----------------------------

if __name__ == "__main__":
    key = jax.random.PRNGKey(0)
    B, ngf, nef, ncf = 2, 8, 16, 4
    H = W = 8
    SL = 6

    k0, k1, k2, k3 = jax.random.split(key, 4)
    h_code = jax.random.normal(k0, (B, ngf, H, W), jnp.float32)
    c_code_in = jax.random.normal(k1, (B, ncf), jnp.float32)        # unused ('cross')
    word_embs = jax.random.normal(k2, (B, nef, SL), jnp.float32)
    # mask: last two words of the second sentence are padding
    mask = jnp.array([[0, 0, 0, 0, 0, 0],
                      [0, 0, 0, 0, 1, 1]], dtype=jnp.float32)

    params = init_params(k3, ngf, nef)

    out_code, c_code = next_stage_g_forward(params, h_code, c_code_in, word_embs, mask)
    jax.block_until_ready((out_code, c_code))

    assert out_code.shape == (B, ngf, 2 * H, 2 * W), out_code.shape
    assert c_code.shape == (B, ngf, H, W), c_code.shape
    assert bool(jnp.all(jnp.isfinite(out_code))) and bool(jnp.all(jnp.isfinite(c_code)))
    print("KERNEL_OK")
</pallas_src>

<mosaic_0001>
module attributes {stable_mosaic.version = 11 : i64} {
  func.func @_attn_kernel(%arg0: i32, %arg1: memref<1x64x8xf32, #tpu.memory_space<vmem>>, %arg2: memref<1x6x16xf32, #tpu.memory_space<vmem>>, %arg3: memref<16x8xf32, #tpu.memory_space<vmem>>, %arg4: memref<1x1x6xf32, #tpu.memory_space<vmem>>, %arg5: memref<1x64x8xf32, #tpu.memory_space<vmem>>) attributes {dimension_semantics = [#tpu.dimension_semantics<parallel>], iteration_bounds = array<i64: 2>, scalar_prefetch = 0 : i64, scratch_operands = 0 : i64, tpu.core_type = #tpu.core_type<tc>, window_params = [{transform_indices = @transform_0, window_bounds = array<i64: 1, 64, 8>}, {transform_indices = @transform_1, window_bounds = array<i64: 1, 6, 16>}, {pipeline_mode = #tpu.pipeline_mode<synchronous>, transform_indices = @transform_2, window_bounds = array<i64: 16, 8>}, {transform_indices = @transform_3, window_bounds = array<i64: 1, 1, 6>}, {transform_indices = @transform_4, window_bounds = array<i64: 1, 64, 8>}]} {
    %c0 = arith.constant 0 : index
    %c0_0 = arith.constant 0 : index
    %c0_1 = arith.constant 0 : index
    %0 = vector.load %arg2[%c0, %c0_0, %c0_1] : memref<1x6x16xf32, #tpu.memory_space<vmem>>, vector<1x6x16xf32>
    %1 = vector.shape_cast %0 : vector<1x6x16xf32> to vector<6x16xf32>
    %2 = arith.truncf %1 : vector<6x16xf32> to vector<6x16xbf16>
    %c0_2 = arith.constant 0 : index
    %c0_3 = arith.constant 0 : index
    %3 = vector.load %arg3[%c0_2, %c0_3] : memref<16x8xf32, #tpu.memory_space<vmem>>, vector<16x8xf32>
    %4 = arith.truncf %3 : vector<16x8xf32> to vector<16x8xbf16>
    %cst = arith.constant dense<0.000000e+00> : vector<6x8xf32>
    %5 = tpu.matmul %2, %4, %cst {dimension_numbers = #tpu.dot_dimension_numbers<[1], [0], [0], [1], [0, 0, 1, 1], [], []>} : vector<6x16xbf16>, vector<16x8xbf16>, vector<6x8xf32> -> vector<6x8xf32>
    %c0_4 = arith.constant 0 : index
    %c0_5 = arith.constant 0 : index
    %c0_6 = arith.constant 0 : index
    %6 = vector.load %arg1[%c0_4, %c0_5, %c0_6] : memref<1x64x8xf32, #tpu.memory_space<vmem>>, vector<1x64x8xf32>
    %7 = vector.shape_cast %6 : vector<1x64x8xf32> to vector<64x8xf32>
    %8 = arith.truncf %7 : vector<64x8xf32> to vector<64x8xbf16>
    %9 = arith.truncf %5 : vector<6x8xf32> to vector<6x8xbf16>
    %cst_7 = arith.constant dense<0.000000e+00> : vector<64x6xf32>
    %10 = tpu.matmul %8, %9, %cst_7 {dimension_numbers = #tpu.dot_dimension_numbers<[1], [1], [0], [0], [0, 0, 1, 0], [], []>} : vector<64x8xbf16>, vector<6x8xbf16>, vector<64x6xf32> -> vector<64x6xf32>
    %c0_8 = arith.constant 0 : index
    %c0_9 = arith.constant 0 : index
    %c0_10 = arith.constant 0 : index
    %11 = vector.load %arg4[%c0_8, %c0_9, %c0_10] : memref<1x1x6xf32, #tpu.memory_space<vmem>>, vector<1x1x6xf32>
    %12 = vector.shape_cast %11 : vector<1x1x6xf32> to vector<1x6xf32>
    %cst_11 = arith.constant 1.000000e+30 : f32
    %13 = vector.broadcast %cst_11 : f32 to vector<1x6xf32>
    %14 = arith.mulf %12, %13 : vector<1x6xf32>
    %15 = vector.broadcast %14 : vector<1x6xf32> to vector<64x6xf32>
    %16 = arith.subf %10, %15 : vector<64x6xf32>
    %cst_12 = arith.constant dense<0xFF800000> : vector<64xf32>
    %17 = vector.multi_reduction <maximumf>, %16, %cst_12 [1] : vector<64x6xf32> to vector<64xf32>
    %18 = vector.shape_cast %17 : vector<64xf32> to vector<64x1xf32>
    %19 = vector.broadcast %18 : vector<64x1xf32> to vector<64x6xf32>
    %20 = arith.subf %16, %19 : vector<64x6xf32>
    %21 = math.exp %20 : vector<64x6xf32>
    %cst_13 = arith.constant dense<0.000000e+00> : vector<64xf32>
    %22 = vector.multi_reduction <add>, %21, %cst_13 [1] : vector<64x6xf32> to vector<64xf32>
    %23 = vector.shape_cast %22 : vector<64xf32> to vector<64x1xf32>
    %24 = tpu.reciprocal %23 {approx = true} : vector<64x1xf32> -> vector<64x1xf32>
    %25 = vector.broadcast %24 : vector<64x1xf32> to vector<64x6xf32>
    %26 = arith.mulf %21, %25 : vector<64x6xf32>
    %27 = arith.truncf %26 : vector<64x6xf32> to vector<64x6xbf16>
    %28 = arith.truncf %5 : vector<6x8xf32> to vector<6x8xbf16>
    %cst_14 = arith.constant dense<0.000000e+00> : vector<64x8xf32>
    %29 = tpu.matmul %27, %28, %cst_14 {dimension_numbers = #tpu.dot_dimension_numbers<[1], [0], [0], [1], [0, 0, 1, 1], [], []>} : vector<64x6xbf16>, vector<6x8xbf16>, vector<64x8xf32> -> vector<64x8xf32>
    %c0_15 = arith.constant 0 : index
    %c0_16 = arith.constant 0 : index
    %c0_17 = arith.constant 0 : index
    %30 = vector.load %arg5[%c0_15, %c0_16, %c0_17] : memref<1x64x8xf32, #tpu.memory_space<vmem>>, vector<1x64x8xf32>
    %31 = vector.shape_cast %30 : vector<1x64x8xf32> to vector<64x8xf32>
    %32 = vector.shape_cast %29 : vector<64x8xf32> to vector<1x64x8xf32>
    tpu.vector_store %arg5[%c0_15, %c0_16, %c0_17], %32 {strides = array<i32>} : memref<1x64x8xf32, #tpu.memory_space<vmem>>, vector<1x64x8xf32>,
    return
  }
  func.func @transform_0(%arg0: i32) -> (i32, i32, i32) {
    %c0_i32 = arith.constant 0 : i32
    %c0_i32_0 = arith.constant 0 : i32
    %c0_i32_1 = arith.constant 0 : i32
    return %arg0, %c0_i32, %c0_i32_0 : i32, i32, i32
  }
  func.func @transform_1(%arg0: i32) -> (i32, i32, i32) {
    %c0_i32 = arith.constant 0 : i32
    %c0_i32_0 = arith.constant 0 : i32
    %c0_i32_1 = arith.constant 0 : i32
    return %arg0, %c0_i32, %c0_i32_0 : i32, i32, i32
  }
  func.func @transform_2(%arg0: i32) -> (i32, i32) {
    %c0_i32 = arith.constant 0 : i32
    %c0_i32_0 = arith.constant 0 : i32
    %c0_i32_1 = arith.constant 0 : i32
    return %c0_i32, %c0_i32_0 : i32, i32
  }
  func.func @transform_3(%arg0: i32) -> (i32, i32, i32) {
    %c0_i32 = arith.constant 0 : i32
    %c0_i32_0 = arith.constant 0 : i32
    %c0_i32_1 = arith.constant 0 : i32
    return %arg0, %c0_i32, %c0_i32_0 : i32, i32, i32
  }
  func.func @transform_4(%arg0: i32) -> (i32, i32, i32) {
    %c0_i32 = arith.constant 0 : i32
    %c0_i32_0 = arith.constant 0 : i32
    %c0_i32_1 = arith.constant 0 : i32
    return %arg0, %c0_i32, %c0_i32_0 : i32, i32, i32
  }
}

module attributes {stable_mosaic.version = 11 : i64} {
  func.func @_resblock_kernel(%arg0: i32, %arg1: memref<1x8x8x8xf32, #tpu.memory_space<vmem>>, %arg2: memref<1x8x8x8xf32, #tpu.memory_space<vmem>>, %arg3: memref<3x48x16xf32, #tpu.memory_space<vmem>>, %arg4: memref<1x16xf32, #tpu.memory_space<vmem>>, %arg5: memref<1x16xf32, #tpu.memory_space<vmem>>, %arg6: memref<3x48x16xf32, #tpu.memory_space<vmem>>, %arg7: memref<1x16xf32, #tpu.memory_space<vmem>>, %arg8: memref<1x16xf32, #tpu.memory_space<vmem>>, %arg9: memref<1x8x8x16xf32, #tpu.memory_space<vmem>>) attributes {dimension_semantics = [#tpu.dimension_semantics<parallel>], iteration_bounds = array<i64: 2>, scalar_prefetch = 0 : i64, scratch_operands = 0 : i64, tpu.core_type = #tpu.core_type<tc>, window_params = [{transform_indices = @transform_0, window_bounds = array<i64: 1, 8, 8, 8>}, {transform_indices = @transform_1, window_bounds = array<i64: 1, 8, 8, 8>}, {pipeline_mode = #tpu.pipeline_mode<synchronous>, transform_indices = @transform_2, window_bounds = array<i64: 3, 48, 16>}, {pipeline_mode = #tpu.pipeline_mode<synchronous>, transform_indices = @transform_3, window_bounds = array<i64: 1, 16>}, {pipeline_mode = #tpu.pipeline_mode<synchronous>, transform_indices = @transform_4, window_bounds = array<i64: 1, 16>}, {pipeline_mode = #tpu.pipeline_mode<synchronous>, transform_indices = @transform_5, window_bounds = array<i64: 3, 48, 16>}, {pipeline_mode = #tpu.pipeline_mode<synchronous>, transform_indices = @transform_6, window_bounds = array<i64: 1, 16>}, {pipeline_mode = #tpu.pipeline_mode<synchronous>, transform_indices = @transform_7, window_bounds = array<i64: 1, 16>}, {transform_indices = @transform_8, window_bounds = array<i64: 1, 8, 8, 16>}]} {
    %c0 = arith.constant 0 : index
    %c0_0 = arith.constant 0 : index
    %c0_1 = arith.constant 0 : index
    %c0_2 = arith.constant 0 : index
    %0 = vector.load %arg1[%c0, %c0_0, %c0_1, %c0_2] : memref<1x8x8x8xf32, #tpu.memory_space<vmem>>, vector<1x8x8x8xf32>
    %1 = vector.shape_cast %0 : vector<1x8x8x8xf32> to vector<8x8x8xf32>
    %c0_3 = arith.constant 0 : index
    %c0_4 = arith.constant 0 : index
    %c0_5 = arith.constant 0 : index
    %c0_6 = arith.constant 0 : index
    %2 = vector.load %arg2[%c0_3, %c0_4, %c0_5, %c0_6] : memref<1x8x8x8xf32, #tpu.memory_space<vmem>>, vector<1x8x8x8xf32>
    %3 = vector.shape_cast %2 : vector<1x8x8x8xf32> to vector<8x8x8xf32>
    %4 = tpu.concatenate %1, %3 in 2 : vector<8x8x8xf32>, vector<8x8x8xf32> -> vector<8x8x16xf32>
    %5 = arith.truncf %4 : vector<8x8x16xf32> to vector<8x8x16xbf16>
    %cst = arith.constant 0.000000e+00 : bf16
    %6 = vector.broadcast %cst : bf16 to vector<1x8x16xbf16>
    %7 = tpu.concatenate %6, %5, %6 in 0 : vector<1x8x16xbf16>, vector<8x8x16xbf16>, vector<1x8x16xbf16> -> vector<10x8x16xbf16>
    %cst_7 = arith.constant 0.000000e+00 : bf16
    %8 = vector.broadcast %cst_7 : bf16 to vector<10x1x16xbf16>
    %9 = tpu.concatenate %8, %7, %8 in 1 : vector<10x1x16xbf16>, vector<10x8x16xbf16>, vector<10x1x16xbf16> -> vector<10x10x16xbf16>
    %cst_8 = arith.constant 0.000000e+00 : f32
    %10 = vector.broadcast %cst_8 : f32 to vector<64x16xf32>
    %11 = vector.extract_strided_slice %9 {offsets = [0, 0, 0], sizes = [8, 10, 16], strides = [1, 1, 1]} : vector<10x10x16xbf16> to vector<8x10x16xbf16>
    %12 = vector.extract_strided_slice %11 {offsets = [0, 0, 0], sizes = [8, 8, 16], strides = [1, 1, 1]} : vector<8x10x16xbf16> to vector<8x8x16xbf16>
    %13 = vector.extract_strided_slice %11 {offsets = [0, 1, 0], sizes = [8, 8, 16], strides = [1, 1, 1]} : vector<8x10x16xbf16> to vector<8x8x16xbf16>
    %14 = vector.extract_strided_slice %11 {offsets = [0, 2, 0], sizes = [8, 8, 16], strides = [1, 1, 1]} : vector<8x10x16xbf16> to vector<8x8x16xbf16>
    %15 = tpu.concatenate %12, %13, %14 in 2 : vector<8x8x16xbf16>, vector<8x8x16xbf16>, vector<8x8x16xbf16> -> vector<8x8x48xbf16>
    %16 = vector.shape_cast %15 : vector<8x8x48xbf16> to vector<64x48xbf16>
    %c0_9 = arith.constant 0 : index
    %c0_10 = arith.constant 0 : index
    %c0_11 = arith.constant 0 : index
    %17 = vector.load %arg3[%c0_9, %c0_10, %c0_11] : memref<3x48x16xf32, #tpu.memory_space<vmem>>, vector<1x48x16xf32>
    %18 = vector.shape_cast %17 : vector<1x48x16xf32> to vector<48x16xf32>
    %19 = arith.truncf %18 : vector<48x16xf32> to vector<48x16xbf16>
    %cst_12 = arith.constant dense<0.000000e+00> : vector<64x16xf32>
    %20 = tpu.matmul %16, %19, %cst_12 {dimension_numbers = #tpu.dot_dimension_numbers<[1], [0], [0], [1], [0, 0, 1, 1], [], []>} : vector<64x48xbf16>, vector<48x16xbf16>, vector<64x16xf32> -> vector<64x16xf32>
    %21 = arith.addf %10, %20 : vector<64x16xf32>
    %22 = vector.extract_strided_slice %9 {offsets = [1, 0, 0], sizes = [8, 10, 16], strides = [1, 1, 1]} : vector<10x10x16xbf16> to vector<8x10x16xbf16>
    %23 = vector.extract_strided_slice %22 {offsets = [0, 0, 0], sizes = [8, 8, 16], strides = [1, 1, 1]} : vector<8x10x16xbf16> to vector<8x8x16xbf16>
    %24 = vector.extract_strided_slice %22 {offsets = [0, 1, 0], sizes = [8, 8, 16], strides = [1, 1, 1]} : vector<8x10x16xbf16> to vector<8x8x16xbf16>
    %25 = vector.extract_strided_slice %22 {offsets = [0, 2, 0], sizes = [8, 8, 16], strides = [1, 1, 1]} : vector<8x10x16xbf16> to vector<8x8x16xbf16>
    %26 = tpu.concatenate %23, %24, %25 in 2 : vector<8x8x16xbf16>, vector<8x8x16xbf16>, vector<8x8x16xbf16> -> vector<8x8x48xbf16>
    %27 = vector.shape_cast %26 : vector<8x8x48xbf16> to vector<64x48xbf16>
    %c1 = arith.constant 1 : index
    %c0_13 = arith.constant 0 : index
    %c0_14 = arith.constant 0 : index
    %28 = vector.load %arg3[%c1, %c0_13, %c0_14] : memref<3x48x16xf32, #tpu.memory_space<vmem>>, vector<1x48x16xf32>
    %29 = vector.shape_cast %28 : vector<1x48x16xf32> to vector<48x16xf32>
    %30 = arith.truncf %29 : vector<48x16xf32> to vector<48x16xbf16>
    %cst_15 = arith.constant dense<0.000000e+00> : vector<64x16xf32>
    %31 = tpu.matmul %27, %30, %cst_15 {dimension_numbers = #tpu.dot_dimension_numbers<[1], [0], [0], [1], [0, 0, 1, 1], [], []>} : vector<64x48xbf16>, vector<48x16xbf16>, vector<64x16xf32> -> vector<64x16xf32>
    %32 = arith.addf %21, %31 : vector<64x16xf32>
    %33 = vector.extract_strided_slice %9 {offsets = [2, 0, 0], sizes = [8, 10, 16], strides = [1, 1, 1]} : vector<10x10x16xbf16> to vector<8x10x16xbf16>
    %34 = vector.extract_strided_slice %33 {offsets = [0, 0, 0], sizes = [8, 8, 16], strides = [1, 1, 1]} : vector<8x10x16xbf16> to vector<8x8x16xbf16>
    %35 = vector.extract_strided_slice %33 {offsets = [0, 1, 0], sizes = [8, 8, 16], strides = [1, 1, 1]} : vector<8x10x16xbf16> to vector<8x8x16xbf16>
    %36 = vector.extract_strided_slice %33 {offsets = [0, 2, 0], sizes = [8, 8, 16], strides = [1, 1, 1]} : vector<8x10x16xbf16> to vector<8x8x16xbf16>
    %37 = tpu.concatenate %34, %35, %36 in 2 : vector<8x8x16xbf16>, vector<8x8x16xbf16>, vector<8x8x16xbf16> -> vector<8x8x48xbf16>
    %38 = vector.shape_cast %37 : vector<8x8x48xbf16> to vector<64x48xbf16>
    %c2 = arith.constant 2 : index
    %c0_16 = arith.constant 0 : index
    %c0_17 = arith.constant 0 : index
    %39 = vector.load %arg3[%c2, %c0_16, %c0_17] : memref<3x48x16xf32, #tpu.memory_space<vmem>>, vector<1x48x16xf32>
    %40 = vector.shape_cast %39 : vector<1x48x16xf32> to vector<48x16xf32>
    %41 = arith.truncf %40 : vector<48x16xf32> to vector<48x16xbf16>
    %cst_18 = arith.constant dense<0.000000e+00> : vector<64x16xf32>
    %42 = tpu.matmul %38, %41, %cst_18 {dimension_numbers = #tpu.dot_dimension_numbers<[1], [0], [0], [1], [0, 0, 1, 1], [], []>} : vector<64x48xbf16>, vector<48x16xbf16>, vector<64x16xf32> -> vector<64x16xf32>
    %43 = arith.addf %32, %42 : vector<64x16xf32>
    %c0_19 = arith.constant 0 : index
    %c0_20 = arith.constant 0 : index
    %44 = vector.load %arg4[%c0_19, %c0_20] : memref<1x16xf32, #tpu.memory_space<vmem>>, vector<1x16xf32>
    %45 = vector.broadcast %44 : vector<1x16xf32> to vector<64x16xf32>
    %46 = arith.mulf %43, %45 : vector<64x16xf32>
    %c0_21 = arith.constant 0 : index
    %c0_22 = arith.constant 0 : index
    %47 = vector.load %arg5[%c0_21, %c0_22] : memref<1x16xf32, #tpu.memory_space<vmem>>, vector<1x16xf32>
    %48 = vector.broadcast %47 : vector<1x16xf32> to vector<64x16xf32>
    %49 = arith.addf %46, %48 : vector<64x16xf32>
    %cst_23 = arith.constant 0.000000e+00 : f32
    %50 = vector.broadcast %cst_23 : f32 to vector<64x16xf32>
    %51 = arith.maximumf %49, %50 : vector<64x16xf32>
    %52 = vector.shape_cast %51 : vector<64x16xf32> to vector<8x8x16xf32>
    %53 = arith.truncf %52 : vector<8x8x16xf32> to vector<8x8x16xbf16>
    %cst_24 = arith.constant 0.000000e+00 : bf16
    %54 = vector.broadcast %cst_24 : bf16 to vector<1x8x16xbf16>
    %55 = tpu.concatenate %54, %53, %54 in 0 : vector<1x8x16xbf16>, vector<8x8x16xbf16>, vector<1x8x16xbf16> -> vector<10x8x16xbf16>
    %cst_25 = arith.constant 0.000000e+00 : bf16
    %56 = vector.broadcast %cst_25 : bf16 to vector<10x1x16xbf16>
    %57 = tpu.concatenate %56, %55, %56 in 1 : vector<10x1x16xbf16>, vector<10x8x16xbf16>, vector<10x1x16xbf16> -> vector<10x10x16xbf16>
    %cst_26 = arith.constant 0.000000e+00 : f32
    %58 = vector.broadcast %cst_26 : f32 to vector<64x16xf32>
    %59 = vector.extract_strided_slice %57 {offsets = [0, 0, 0], sizes = [8, 10, 16], strides = [1, 1, 1]} : vector<10x10x16xbf16> to vector<8x10x16xbf16>
    %60 = vector.extract_strided_slice %59 {offsets = [0, 0, 0], sizes = [8, 8, 16], strides = [1, 1, 1]} : vector<8x10x16xbf16> to vector<8x8x16xbf16>
    %61 = vector.extract_strided_slice %59 {offsets = [0, 1, 0], sizes = [8, 8, 16], strides = [1, 1, 1]} : vector<8x10x16xbf16> to vector<8x8x16xbf16>
    %62 = vector.extract_strided_slice %59 {offsets = [0, 2, 0], sizes = [8, 8, 16], strides = [1, 1, 1]} : vector<8x10x16xbf16> to vector<8x8x16xbf16>
    %63 = tpu.concatenate %60, %61, %62 in 2 : vector<8x8x16xbf16>, vector<8x8x16xbf16>, vector<8x8x16xbf16> -> vector<8x8x48xbf16>
    %64 = vector.shape_cast %63 : vector<8x8x48xbf16> to vector<64x48xbf16>
    %c0_27 = arith.constant 0 : index
    %c0_28 = arith.constant 0 : index
    %c0_29 = arith.constant 0 : index
    %65 = vector.load %arg6[%c0_27, %c0_28, %c0_29] : memref<3x48x16xf32, #tpu.memory_space<vmem>>, vector<1x48x16xf32>
    %66 = vector.shape_cast %65 : vector<1x48x16xf32> to vector<48x16xf32>
    %67 = arith.truncf %66 : vector<48x16xf32> to vector<48x16xbf16>
    %cst_30 = arith.constant dense<0.000000e+00> : vector<64x16xf32>
    %68 = tpu.matmul %64, %67, %cst_30 {dimension_numbers = #tpu.dot_dimension_numbers<[1], [0], [0], [1], [0, 0, 1, 1], [], []>} : vector<64x48xbf16>, vector<48x16xbf16>, vector<64x16xf32> -> vector<64x16xf32>
    %69 = arith.addf %58, %68 : vector<64x16xf32>
    %70 = vector.extract_strided_slice %57 {offsets = [1, 0, 0], sizes = [8, 10, 16], strides = [1, 1, 1]} : vector<10x10x16xbf16> to vector<8x10x16xbf16>
    %71 = vector.extract_strided_slice %70 {offsets = [0, 0, 0], sizes = [8, 8, 16], strides = [1, 1, 1]} : vector<8x10x16xbf16> to vector<8x8x16xbf16>
    %72 = vector.extract_strided_slice %70 {offsets = [0, 1, 0], sizes = [8, 8, 16], strides = [1, 1, 1]} : vector<8x10x16xbf16> to vector<8x8x16xbf16>
    %73 = vector.extract_strided_slice %70 {offsets = [0, 2, 0], sizes = [8, 8, 16], strides = [1, 1, 1]} : vector<8x10x16xbf16> to vector<8x8x16xbf16>
    %74 = tpu.concatenate %71, %72, %73 in 2 : vector<8x8x16xbf16>, vector<8x8x16xbf16>, vector<8x8x16xbf16> -> vector<8x8x48xbf16>
    %75 = vector.shape_cast %74 : vector<8x8x48xbf16> to vector<64x48xbf16>
    %c1_31 = arith.constant 1 : index
    %c0_32 = arith.constant 0 : index
    %c0_33 = arith.constant 0 : index
    %76 = vector.load %arg6[%c1_31, %c0_32, %c0_33] : memref<3x48x16xf32, #tpu.memory_space<vmem>>, vector<1x48x16xf32>
    %77 = vector.shape_cast %76 : vector<1x48x16xf32> to vector<48x16xf32>
    %78 = arith.truncf %77 : vector<48x16xf32> to vector<48x16xbf16>
    %cst_34 = arith.constant dense<0.000000e+00> : vector<64x16xf32>
    %79 = tpu.matmul %75, %78, %cst_34 {dimension_numbers = #tpu.dot_dimension_numbers<[1], [0], [0], [1], [0, 0, 1, 1], [], []>} : vector<64x48xbf16>, vector<48x16xbf16>, vector<64x16xf32> -> vector<64x16xf32>
    %80 = arith.addf %69, %79 : vector<64x16xf32>
    %81 = vector.extract_strided_slice %57 {offsets = [2, 0, 0], sizes = [8, 10, 16], strides = [1, 1, 1]} : vector<10x10x16xbf16> to vector<8x10x16xbf16>
    %82 = vector.extract_strided_slice %81 {offsets = [0, 0, 0], sizes = [8, 8, 16], strides = [1, 1, 1]} : vector<8x10x16xbf16> to vector<8x8x16xbf16>
    %83 = vector.extract_strided_slice %81 {offsets = [0, 1, 0], sizes = [8, 8, 16], strides = [1, 1, 1]} : vector<8x10x16xbf16> to vector<8x8x16xbf16>
    %84 = vector.extract_strided_slice %81 {offsets = [0, 2, 0], sizes = [8, 8, 16], strides = [1, 1, 1]} : vector<8x10x16xbf16> to vector<8x8x16xbf16>
    %85 = tpu.concatenate %82, %83, %84 in 2 : vector<8x8x16xbf16>, vector<8x8x16xbf16>, vector<8x8x16xbf16> -> vector<8x8x48xbf16>
    %86 = vector.shape_cast %85 : vector<8x8x48xbf16> to vector<64x48xbf16>
    %c2_35 = arith.constant 2 : index
    %c0_36 = arith.constant 0 : index
    %c0_37 = arith.constant 0 : index
    %87 = vector.load %arg6[%c2_35, %c0_36, %c0_37] : memref<3x48x16xf32, #tpu.memory_space<vmem>>, vector<1x48x16xf32>
    %88 = vector.shape_cast %87 : vector<1x48x16xf32> to vector<48x16xf32>
    %89 = arith.truncf %88 : vector<48x16xf32> to vector<48x16xbf16>
    %cst_38 = arith.constant dense<0.000000e+00> : vector<64x16xf32>
    %90 = tpu.matmul %86, %89, %cst_38 {dimension_numbers = #tpu.dot_dimension_numbers<[1], [0], [0], [1], [0, 0, 1, 1], [], []>} : vector<64x48xbf16>, vector<48x16xbf16>, vector<64x16xf32> -> vector<64x16xf32>
    %91 = arith.addf %80, %90 : vector<64x16xf32>
    %c0_39 = arith.constant 0 : index
    %c0_40 = arith.constant 0 : index
    %92 = vector.load %arg7[%c0_39, %c0_40] : memref<1x16xf32, #tpu.memory_space<vmem>>, vector<1x16xf32>
    %93 = vector.broadcast %92 : vector<1x16xf32> to vector<64x16xf32>
    %94 = arith.mulf %91, %93 : vector<64x16xf32>
    %c0_41 = arith.constant 0 : index
    %c0_42 = arith.constant 0 : index
    %95 = vector.load %arg8[%c0_41, %c0_42] : memref<1x16xf32, #tpu.memory_space<vmem>>, vector<1x16xf32>
    %96 = vector.broadcast %95 : vector<1x16xf32> to vector<64x16xf32>
    %97 = arith.addf %94, %96 : vector<64x16xf32>
    %98 = vector.shape_cast %4 : vector<8x8x16xf32> to vector<64x16xf32>
    %99 = arith.addf %97, %98 : vector<64x16xf32>
    %cst_43 = arith.constant 0.000000e+00 : f32
    %100 = vector.broadcast %cst_43 : f32 to vector<64x16xf32>
    %101 = arith.maximumf %99, %100 : vector<64x16xf32>
    %102 = vector.shape_cast %101 : vector<64x16xf32> to vector<8x8x16xf32>
    %c0_44 = arith.constant 0 : index
    %c0_45 = arith.constant 0 : index
    %c0_46 = arith.constant 0 : index
    %c0_47 = arith.constant 0 : index
    %103 = vector.load %arg9[%c0_44, %c0_45, %c0_46, %c0_47] : memref<1x8x8x16xf32, #tpu.memory_space<vmem>>, vector<1x8x8x16xf32>
    %104 = vector.shape_cast %103 : vector<1x8x8x16xf32> to vector<8x8x16xf32>
    %105 = vector.shape_cast %102 : vector<8x8x16xf32> to vector<1x8x8x16xf32>
    tpu.vector_store %arg9[%c0_44, %c0_45, %c0_46, %c0_47], %105 {strides = array<i32>} : memref<1x8x8x16xf32, #tpu.memory_space<vmem>>, vector<1x8x8x16xf32>,
    return
  }
  func.func @transform_0(%arg0: i32) -> (i32, i32, i32, i32) {
    %c0_i32 = arith.constant 0 : i32
    %c0_i32_0 = arith.constant 0 : i32
    %c0_i32_1 = arith.constant 0 : i32
    %c0_i32_2 = arith.constant 0 : i32
    return %arg0, %c0_i32, %c0_i32_0, %c0_i32_1 : i32, i32, i32, i32
  }
  func.func @transform_1(%arg0: i32) -> (i32, i32, i32, i32) {
    %c0_i32 = arith.constant 0 : i32
    %c0_i32_0 = arith.constant 0 : i32
    %c0_i32_1 = arith.constant 0 : i32
    %c0_i32_2 = arith.constant 0 : i32
    return %arg0, %c0_i32, %c0_i32_0, %c0_i32_1 : i32, i32, i32, i32
  }
  func.func @transform_2(%arg0: i32) -> (i32, i32, i32) {
    %c0_i32 = arith.constant 0 : i32
    %c0_i32_0 = arith.constant 0 : i32
    %c0_i32_1 = arith.constant 0 : i32
    %c0_i32_2 = arith.constant 0 : i32
    return %c0_i32, %c0_i32_0, %c0_i32_1 : i32, i32, i32
  }
  func.func @transform_3(%arg0: i32) -> (i32, i32) {
    %c0_i32 = arith.constant 0 : i32
    %c0_i32_0 = arith.constant 0 : i32
    %c0_i32_1 = arith.constant 0 : i32
    return %c0_i32, %c0_i32_0 : i32, i32
  }
  func.func @transform_4(%arg0: i32) -> (i32, i32) {
    %c0_i32 = arith.constant 0 : i32
    %c0_i32_0 = arith.constant 0 : i32
    %c0_i32_1 = arith.constant 0 : i32
    return %c0_i32, %c0_i32_0 : i32, i32
  }
  func.func @transform_5(%arg0: i32) -> (i32, i32, i32) {
    %c0_i32 = arith.constant 0 : i32
    %c0_i32_0 = arith.constant 0 : i32
    %c0_i32_1 = arith.constant 0 : i32
    %c0_i32_2 = arith.constant 0 : i32
    return %c0_i32, %c0_i32_0, %c0_i32_1 : i32, i32, i32
  }
  func.func @transform_6(%arg0: i32) -> (i32, i32) {
    %c0_i32 = arith.constant 0 : i32
    %c0_i32_0 = arith.constant 0 : i32
    %c0_i32_1 = arith.constant 0 : i32
    return %c0_i32, %c0_i32_0 : i32, i32
  }
  func.func @transform_7(%arg0: i32) -> (i32, i32) {
    %c0_i32 = arith.constant 0 : i32
    %c0_i32_0 = arith.constant 0 : i32
    %c0_i32_1 = arith.constant 0 : i32
    return %c0_i32, %c0_i32_0 : i32, i32
  }
  func.func @transform_8(%arg0: i32) -> (i32, i32, i32, i32) {
    %c0_i32 = arith.constant 0 : i32
    %c0_i32_0 = arith.constant 0 : i32
    %c0_i32_1 = arith.constant 0 : i32
    %c0_i32_2 = arith.constant 0 : i32
    return %arg0, %c0_i32, %c0_i32_0, %c0_i32_1 : i32, i32, i32, i32
  }
}

module attributes {stable_mosaic.version = 11 : i64} {
  func.func @_resblock_kernel(%arg0: i32, %arg1: memref<1x8x8x16xf32, #tpu.memory_space<vmem>>, %arg2: memref<3x48x16xf32, #tpu.memory_space<vmem>>, %arg3: memref<1x16xf32, #tpu.memory_space<vmem>>, %arg4: memref<1x16xf32, #tpu.memory_space<vmem>>, %arg5: memref<3x48x16xf32, #tpu.memory_space<vmem>>, %arg6: memref<1x16xf32, #tpu.memory_space<vmem>>, %arg7: memref<1x16xf32, #tpu.memory_space<vmem>>, %arg8: memref<1x8x8x16xf32, #tpu.memory_space<vmem>>) attributes {dimension_semantics = [#tpu.dimension_semantics<parallel>], iteration_bounds = array<i64: 2>, scalar_prefetch = 0 : i64, scratch_operands = 0 : i64, tpu.core_type = #tpu.core_type<tc>, window_params = [{transform_indices = @transform_0, window_bounds = array<i64: 1, 8, 8, 16>}, {pipeline_mode = #tpu.pipeline_mode<synchronous>, transform_indices = @transform_1, window_bounds = array<i64: 3, 48, 16>}, {pipeline_mode = #tpu.pipeline_mode<synchronous>, transform_indices = @transform_2, window_bounds = array<i64: 1, 16>}, {pipeline_mode = #tpu.pipeline_mode<synchronous>, transform_indices = @transform_3, window_bounds = array<i64: 1, 16>}, {pipeline_mode = #tpu.pipeline_mode<synchronous>, transform_indices = @transform_4, window_bounds = array<i64: 3, 48, 16>}, {pipeline_mode = #tpu.pipeline_mode<synchronous>, transform_indices = @transform_5, window_bounds = array<i64: 1, 16>}, {pipeline_mode = #tpu.pipeline_mode<synchronous>, transform_indices = @transform_6, window_bounds = array<i64: 1, 16>}, {transform_indices = @transform_7, window_bounds = array<i64: 1, 8, 8, 16>}]} {
    %c0 = arith.constant 0 : index
    %c0_0 = arith.constant 0 : index
    %c0_1 = arith.constant 0 : index
    %c0_2 = arith.constant 0 : index
    %0 = vector.load %arg1[%c0, %c0_0, %c0_1, %c0_2] : memref<1x8x8x16xf32, #tpu.memory_space<vmem>>, vector<1x8x8x16xf32>
    %1 = vector.shape_cast %0 : vector<1x8x8x16xf32> to vector<8x8x16xf32>
    %2 = arith.truncf %1 : vector<8x8x16xf32> to vector<8x8x16xbf16>
    %cst = arith.constant 0.000000e+00 : bf16
    %3 = vector.broadcast %cst : bf16 to vector<1x8x16xbf16>
    %4 = tpu.concatenate %3, %2, %3 in 0 : vector<1x8x16xbf16>, vector<8x8x16xbf16>, vector<1x8x16xbf16> -> vector<10x8x16xbf16>
    %cst_3 = arith.constant 0.000000e+00 : bf16
    %5 = vector.broadcast %cst_3 : bf16 to vector<10x1x16xbf16>
    %6 = tpu.concatenate %5, %4, %5 in 1 : vector<10x1x16xbf16>, vector<10x8x16xbf16>, vector<10x1x16xbf16> -> vector<10x10x16xbf16>
    %cst_4 = arith.constant 0.000000e+00 : f32
    %7 = vector.broadcast %cst_4 : f32 to vector<64x16xf32>
    %8 = vector.extract_strided_slice %6 {offsets = [0, 0, 0], sizes = [8, 10, 16], strides = [1, 1, 1]} : vector<10x10x16xbf16> to vector<8x10x16xbf16>
    %9 = vector.extract_strided_slice %8 {offsets = [0, 0, 0], sizes = [8, 8, 16], strides = [1, 1, 1]} : vector<8x10x16xbf16> to vector<8x8x16xbf16>
    %10 = vector.extract_strided_slice %8 {offsets = [0, 1, 0], sizes = [8, 8, 16], strides = [1, 1, 1]} : vector<8x10x16xbf16> to vector<8x8x16xbf16>
    %11 = vector.extract_strided_slice %8 {offsets = [0, 2, 0], sizes = [8, 8, 16], strides = [1, 1, 1]} : vector<8x10x16xbf16> to vector<8x8x16xbf16>
    %12 = tpu.concatenate %9, %10, %11 in 2 : vector<8x8x16xbf16>, vector<8x8x16xbf16>, vector<8x8x16xbf16> -> vector<8x8x48xbf16>
    %13 = vector.shape_cast %12 : vector<8x8x48xbf16> to vector<64x48xbf16>
    %c0_5 = arith.constant 0 : index
    %c0_6 = arith.constant 0 : index
    %c0_7 = arith.constant 0 : index
    %14 = vector.load %arg2[%c0_5, %c0_6, %c0_7] : memref<3x48x16xf32, #tpu.memory_space<vmem>>, vector<1x48x16xf32>
    %15 = vector.shape_cast %14 : vector<1x48x16xf32> to vector<48x16xf32>
    %16 = arith.truncf %15 : vector<48x16xf32> to vector<48x16xbf16>
    %cst_8 = arith.constant dense<0.000000e+00> : vector<64x16xf32>
    %17 = tpu.matmul %13, %16, %cst_8 {dimension_numbers = #tpu.dot_dimension_numbers<[1], [0], [0], [1], [0, 0, 1, 1], [], []>} : vector<64x48xbf16>, vector<48x16xbf16>, vector<64x16xf32> -> vector<64x16xf32>
    %18 = arith.addf %7, %17 : vector<64x16xf32>
    %19 = vector.extract_strided_slice %6 {offsets = [1, 0, 0], sizes = [8, 10, 16], strides = [1, 1, 1]} : vector<10x10x16xbf16> to vector<8x10x16xbf16>
    %20 = vector.extract_strided_slice %19 {offsets = [0, 0, 0], sizes = [8, 8, 16], strides = [1, 1, 1]} : vector<8x10x16xbf16> to vector<8x8x16xbf16>
    %21 = vector.extract_strided_slice %19 {offsets = [0, 1, 0], sizes = [8, 8, 16], strides = [1, 1, 1]} : vector<8x10x16xbf16> to vector<8x8x16xbf16>
    %22 = vector.extract_strided_slice %19 {offsets = [0, 2, 0], sizes = [8, 8, 16], strides = [1, 1, 1]} : vector<8x10x16xbf16> to vector<8x8x16xbf16>
    %23 = tpu.concatenate %20, %21, %22 in 2 : vector<8x8x16xbf16>, vector<8x8x16xbf16>, vector<8x8x16xbf16> -> vector<8x8x48xbf16>
    %24 = vector.shape_cast %23 : vector<8x8x48xbf16> to vector<64x48xbf16>
    %c1 = arith.constant 1 : index
    %c0_9 = arith.constant 0 : index
    %c0_10 = arith.constant 0 : index
    %25 = vector.load %arg2[%c1, %c0_9, %c0_10] : memref<3x48x16xf32, #tpu.memory_space<vmem>>, vector<1x48x16xf32>
    %26 = vector.shape_cast %25 : vector<1x48x16xf32> to vector<48x16xf32>
    %27 = arith.truncf %26 : vector<48x16xf32> to vector<48x16xbf16>
    %cst_11 = arith.constant dense<0.000000e+00> : vector<64x16xf32>
    %28 = tpu.matmul %24, %27, %cst_11 {dimension_numbers = #tpu.dot_dimension_numbers<[1], [0], [0], [1], [0, 0, 1, 1], [], []>} : vector<64x48xbf16>, vector<48x16xbf16>, vector<64x16xf32> -> vector<64x16xf32>
    %29 = arith.addf %18, %28 : vector<64x16xf32>
    %30 = vector.extract_strided_slice %6 {offsets = [2, 0, 0], sizes = [8, 10, 16], strides = [1, 1, 1]} : vector<10x10x16xbf16> to vector<8x10x16xbf16>
    %31 = vector.extract_strided_slice %30 {offsets = [0, 0, 0], sizes = [8, 8, 16], strides = [1, 1, 1]} : vector<8x10x16xbf16> to vector<8x8x16xbf16>
    %32 = vector.extract_strided_slice %30 {offsets = [0, 1, 0], sizes = [8, 8, 16], strides = [1, 1, 1]} : vector<8x10x16xbf16> to vector<8x8x16xbf16>
    %33 = vector.extract_strided_slice %30 {offsets = [0, 2, 0], sizes = [8, 8, 16], strides = [1, 1, 1]} : vector<8x10x16xbf16> to vector<8x8x16xbf16>
    %34 = tpu.concatenate %31, %32, %33 in 2 : vector<8x8x16xbf16>, vector<8x8x16xbf16>, vector<8x8x16xbf16> -> vector<8x8x48xbf16>
    %35 = vector.shape_cast %34 : vector<8x8x48xbf16> to vector<64x48xbf16>
    %c2 = arith.constant 2 : index
    %c0_12 = arith.constant 0 : index
    %c0_13 = arith.constant 0 : index
    %36 = vector.load %arg2[%c2, %c0_12, %c0_13] : memref<3x48x16xf32, #tpu.memory_space<vmem>>, vector<1x48x16xf32>
    %37 = vector.shape_cast %36 : vector<1x48x16xf32> to vector<48x16xf32>
    %38 = arith.truncf %37 : vector<48x16xf32> to vector<48x16xbf16>
    %cst_14 = arith.constant dense<0.000000e+00> : vector<64x16xf32>
    %39 = tpu.matmul %35, %38, %cst_14 {dimension_numbers = #tpu.dot_dimension_numbers<[1], [0], [0], [1], [0, 0, 1, 1], [], []>} : vector<64x48xbf16>, vector<48x16xbf16>, vector<64x16xf32> -> vector<64x16xf32>
    %40 = arith.addf %29, %39 : vector<64x16xf32>
    %c0_15 = arith.constant 0 : index
    %c0_16 = arith.constant 0 : index
    %41 = vector.load %arg3[%c0_15, %c0_16] : memref<1x16xf32, #tpu.memory_space<vmem>>, vector<1x16xf32>
    %42 = vector.broadcast %41 : vector<1x16xf32> to vector<64x16xf32>
    %43 = arith.mulf %40, %42 : vector<64x16xf32>
    %c0_17 = arith.constant 0 : index
    %c0_18 = arith.constant 0 : index
    %44 = vector.load %arg4[%c0_17, %c0_18] : memref<1x16xf32, #tpu.memory_space<vmem>>, vector<1x16xf32>
    %45 = vector.broadcast %44 : vector<1x16xf32> to vector<64x16xf32>
    %46 = arith.addf %43, %45 : vector<64x16xf32>
    %cst_19 = arith.constant 0.000000e+00 : f32
    %47 = vector.broadcast %cst_19 : f32 to vector<64x16xf32>
    %48 = arith.maximumf %46, %47 : vector<64x16xf32>
    %49 = vector.shape_cast %48 : vector<64x16xf32> to vector<8x8x16xf32>
    %50 = arith.truncf %49 : vector<8x8x16xf32> to vector<8x8x16xbf16>
    %cst_20 = arith.constant 0.000000e+00 : bf16
    %51 = vector.broadcast %cst_20 : bf16 to vector<1x8x16xbf16>
    %52 = tpu.concatenate %51, %50, %51 in 0 : vector<1x8x16xbf16>, vector<8x8x16xbf16>, vector<1x8x16xbf16> -> vector<10x8x16xbf16>
    %cst_21 = arith.constant 0.000000e+00 : bf16
    %53 = vector.broadcast %cst_21 : bf16 to vector<10x1x16xbf16>
    %54 = tpu.concatenate %53, %52, %53 in 1 : vector<10x1x16xbf16>, vector<10x8x16xbf16>, vector<10x1x16xbf16> -> vector<10x10x16xbf16>
    %cst_22 = arith.constant 0.000000e+00 : f32
    %55 = vector.broadcast %cst_22 : f32 to vector<64x16xf32>
    %56 = vector.extract_strided_slice %54 {offsets = [0, 0, 0], sizes = [8, 10, 16], strides = [1, 1, 1]} : vector<10x10x16xbf16> to vector<8x10x16xbf16>
    %57 = vector.extract_strided_slice %56 {offsets = [0, 0, 0], sizes = [8, 8, 16], strides = [1, 1, 1]} : vector<8x10x16xbf16> to vector<8x8x16xbf16>
    %58 = vector.extract_strided_slice %56 {offsets = [0, 1, 0], sizes = [8, 8, 16], strides = [1, 1, 1]} : vector<8x10x16xbf16> to vector<8x8x16xbf16>
    %59 = vector.extract_strided_slice %56 {offsets = [0, 2, 0], sizes = [8, 8, 16], strides = [1, 1, 1]} : vector<8x10x16xbf16> to vector<8x8x16xbf16>
    %60 = tpu.concatenate %57, %58, %59 in 2 : vector<8x8x16xbf16>, vector<8x8x16xbf16>, vector<8x8x16xbf16> -> vector<8x8x48xbf16>
    %61 = vector.shape_cast %60 : vector<8x8x48xbf16> to vector<64x48xbf16>
    %c0_23 = arith.constant 0 : index
    %c0_24 = arith.constant 0 : index
    %c0_25 = arith.constant 0 : index
    %62 = vector.load %arg5[%c0_23, %c0_24, %c0_25] : memref<3x48x16xf32, #tpu.memory_space<vmem>>, vector<1x48x16xf32>
    %63 = vector.shape_cast %62 : vector<1x48x16xf32> to vector<48x16xf32>
    %64 = arith.truncf %63 : vector<48x16xf32> to vector<48x16xbf16>
    %cst_26 = arith.constant dense<0.000000e+00> : vector<64x16xf32>
    %65 = tpu.matmul %61, %64, %cst_26 {dimension_numbers = #tpu.dot_dimension_numbers<[1], [0], [0], [1], [0, 0, 1, 1], [], []>} : vector<64x48xbf16>, vector<48x16xbf16>, vector<64x16xf32> -> vector<64x16xf32>
    %66 = arith.addf %55, %65 : vector<64x16xf32>
    %67 = vector.extract_strided_slice %54 {offsets = [1, 0, 0], sizes = [8, 10, 16], strides = [1, 1, 1]} : vector<10x10x16xbf16> to vector<8x10x16xbf16>
    %68 = vector.extract_strided_slice %67 {offsets = [0, 0, 0], sizes = [8, 8, 16], strides = [1, 1, 1]} : vector<8x10x16xbf16> to vector<8x8x16xbf16>
    %69 = vector.extract_strided_slice %67 {offsets = [0, 1, 0], sizes = [8, 8, 16], strides = [1, 1, 1]} : vector<8x10x16xbf16> to vector<8x8x16xbf16>
    %70 = vector.extract_strided_slice %67 {offsets = [0, 2, 0], sizes = [8, 8, 16], strides = [1, 1, 1]} : vector<8x10x16xbf16> to vector<8x8x16xbf16>
    %71 = tpu.concatenate %68, %69, %70 in 2 : vector<8x8x16xbf16>, vector<8x8x16xbf16>, vector<8x8x16xbf16> -> vector<8x8x48xbf16>
    %72 = vector.shape_cast %71 : vector<8x8x48xbf16> to vector<64x48xbf16>
    %c1_27 = arith.constant 1 : index
    %c0_28 = arith.constant 0 : index
    %c0_29 = arith.constant 0 : index
    %73 = vector.load %arg5[%c1_27, %c0_28, %c0_29] : memref<3x48x16xf32, #tpu.memory_space<vmem>>, vector<1x48x16xf32>
    %74 = vector.shape_cast %73 : vector<1x48x16xf32> to vector<48x16xf32>
    %75 = arith.truncf %74 : vector<48x16xf32> to vector<48x16xbf16>
    %cst_30 = arith.constant dense<0.000000e+00> : vector<64x16xf32>
    %76 = tpu.matmul %72, %75, %cst_30 {dimension_numbers = #tpu.dot_dimension_numbers<[1], [0], [0], [1], [0, 0, 1, 1], [], []>} : vector<64x48xbf16>, vector<48x16xbf16>, vector<64x16xf32> -> vector<64x16xf32>
    %77 = arith.addf %66, %76 : vector<64x16xf32>
    %78 = vector.extract_strided_slice %54 {offsets = [2, 0, 0], sizes = [8, 10, 16], strides = [1, 1, 1]} : vector<10x10x16xbf16> to vector<8x10x16xbf16>
    %79 = vector.extract_strided_slice %78 {offsets = [0, 0, 0], sizes = [8, 8, 16], strides = [1, 1, 1]} : vector<8x10x16xbf16> to vector<8x8x16xbf16>
    %80 = vector.extract_strided_slice %78 {offsets = [0, 1, 0], sizes = [8, 8, 16], strides = [1, 1, 1]} : vector<8x10x16xbf16> to vector<8x8x16xbf16>
    %81 = vector.extract_strided_slice %78 {offsets = [0, 2, 0], sizes = [8, 8, 16], strides = [1, 1, 1]} : vector<8x10x16xbf16> to vector<8x8x16xbf16>
    %82 = tpu.concatenate %79, %80, %81 in 2 : vector<8x8x16xbf16>, vector<8x8x16xbf16>, vector<8x8x16xbf16> -> vector<8x8x48xbf16>
    %83 = vector.shape_cast %82 : vector<8x8x48xbf16> to vector<64x48xbf16>
    %c2_31 = arith.constant 2 : index
    %c0_32 = arith.constant 0 : index
    %c0_33 = arith.constant 0 : index
    %84 = vector.load %arg5[%c2_31, %c0_32, %c0_33] : memref<3x48x16xf32, #tpu.memory_space<vmem>>, vector<1x48x16xf32>
    %85 = vector.shape_cast %84 : vector<1x48x16xf32> to vector<48x16xf32>
    %86 = arith.truncf %85 : vector<48x16xf32> to vector<48x16xbf16>
    %cst_34 = arith.constant dense<0.000000e+00> : vector<64x16xf32>
    %87 = tpu.matmul %83, %86, %cst_34 {dimension_numbers = #tpu.dot_dimension_numbers<[1], [0], [0], [1], [0, 0, 1, 1], [], []>} : vector<64x48xbf16>, vector<48x16xbf16>, vector<64x16xf32> -> vector<64x16xf32>
    %88 = arith.addf %77, %87 : vector<64x16xf32>
    %c0_35 = arith.constant 0 : index
    %c0_36 = arith.constant 0 : index
    %89 = vector.load %arg6[%c0_35, %c0_36] : memref<1x16xf32, #tpu.memory_space<vmem>>, vector<1x16xf32>
    %90 = vector.broadcast %89 : vector<1x16xf32> to vector<64x16xf32>
    %91 = arith.mulf %88, %90 : vector<64x16xf32>
    %c0_37 = arith.constant 0 : index
    %c0_38 = arith.constant 0 : index
    %92 = vector.load %arg7[%c0_37, %c0_38] : memref<1x16xf32, #tpu.memory_space<vmem>>, vector<1x16xf32>
    %93 = vector.broadcast %92 : vector<1x16xf32> to vector<64x16xf32>
    %94 = arith.addf %91, %93 : vector<64x16xf32>
    %95 = vector.shape_cast %1 : vector<8x8x16xf32> to vector<64x16xf32>
    %96 = arith.addf %94, %95 : vector<64x16xf32>
    %cst_39 = arith.constant 0.000000e+00 : f32
    %97 = vector.broadcast %cst_39 : f32 to vector<64x16xf32>
    %98 = arith.maximumf %96, %97 : vector<64x16xf32>
    %99 = vector.shape_cast %98 : vector<64x16xf32> to vector<8x8x16xf32>
    %c0_40 = arith.constant 0 : index
    %c0_41 = arith.constant 0 : index
    %c0_42 = arith.constant 0 : index
    %c0_43 = arith.constant 0 : index
    %100 = vector.load %arg8[%c0_40, %c0_41, %c0_42, %c0_43] : memref<1x8x8x16xf32, #tpu.memory_space<vmem>>, vector<1x8x8x16xf32>
    %101 = vector.shape_cast %100 : vector<1x8x8x16xf32> to vector<8x8x16xf32>
    %102 = vector.shape_cast %99 : vector<8x8x16xf32> to vector<1x8x8x16xf32>
    tpu.vector_store %arg8[%c0_40, %c0_41, %c0_42, %c0_43], %102 {strides = array<i32>} : memref<1x8x8x16xf32, #tpu.memory_space<vmem>>, vector<1x8x8x16xf32>,
    return
  }
  func.func @transform_0(%arg0: i32) -> (i32, i32, i32, i32) {
    %c0_i32 = arith.constant 0 : i32
    %c0_i32_0 = arith.constant 0 : i32
    %c0_i32_1 = arith.constant 0 : i32
    %c0_i32_2 = arith.constant 0 : i32
    return %arg0, %c0_i32, %c0_i32_0, %c0_i32_1 : i32, i32, i32, i32
  }
  func.func @transform_1(%arg0: i32) -> (i32, i32, i32) {
    %c0_i32 = arith.constant 0 : i32
    %c0_i32_0 = arith.constant 0 : i32
    %c0_i32_1 = arith.constant 0 : i32
    %c0_i32_2 = arith.constant 0 : i32
    return %c0_i32, %c0_i32_0, %c0_i32_1 : i32, i32, i32
  }
  func.func @transform_2(%arg0: i32) -> (i32, i32) {
    %c0_i32 = arith.constant 0 : i32
    %c0_i32_0 = arith.constant 0 : i32
    %c0_i32_1 = arith.constant 0 : i32
    return %c0_i32, %c0_i32_0 : i32, i32
  }
  func.func @transform_3(%arg0: i32) -> (i32, i32) {
    %c0_i32 = arith.constant 0 : i32
    %c0_i32_0 = arith.constant 0 : i32
    %c0_i32_1 = arith.constant 0 : i32
    return %c0_i32, %c0_i32_0 : i32, i32
  }
  func.func @transform_4(%arg0: i32) -> (i32, i32, i32) {
    %c0_i32 = arith.constant 0 : i32
    %c0_i32_0 = arith.constant 0 : i32
    %c0_i32_1 = arith.constant 0 : i32
    %c0_i32_2 = arith.constant 0 : i32
    return %c0_i32, %c0_i32_0, %c0_i32_1 : i32, i32, i32
  }
  func.func @transform_5(%arg0: i32) -> (i32, i32) {
    %c0_i32 = arith.constant 0 : i32
    %c0_i32_0 = arith.constant 0 : i32
    %c0_i32_1 = arith.constant 0 : i32
    return %c0_i32, %c0_i32_0 : i32, i32
  }
  func.func @transform_6(%arg0: i32) -> (i32, i32) {
    %c0_i32 = arith.constant 0 : i32
    %c0_i32_0 = arith.constant 0 : i32
    %c0_i32_1 = arith.constant 0 : i32
    return %c0_i32, %c0_i32_0 : i32, i32
  }
  func.func @transform_7(%arg0: i32) -> (i32, i32, i32, i32) {
    %c0_i32 = arith.constant 0 : i32
    %c0_i32_0 = arith.constant 0 : i32
    %c0_i32_1 = arith.constant 0 : i32
    %c0_i32_2 = arith.constant 0 : i32
    return %arg0, %c0_i32, %c0_i32_0, %c0_i32_1 : i32, i32, i32, i32
  }
}

module attributes {stable_mosaic.version = 11 : i64} {
  func.func @_upblock_kernel(%arg0: i32, %arg1: memref<1x8x8x16xf32, #tpu.memory_space<vmem>>, %arg2: memref<3x48x32xf32, #tpu.memory_space<vmem>>, %arg3: memref<1x32xf32, #tpu.memory_space<vmem>>, %arg4: memref<1x32xf32, #tpu.memory_space<vmem>>, %arg5: memref<1x16x16x8xf32, #tpu.memory_space<vmem>>) attributes {dimension_semantics = [#tpu.dimension_semantics<parallel>], iteration_bounds = array<i64: 2>, scalar_prefetch = 0 : i64, scratch_operands = 0 : i64, tpu.core_type = #tpu.core_type<tc>, window_params = [{transform_indices = @transform_0, window_bounds = array<i64: 1, 8, 8, 16>}, {pipeline_mode = #tpu.pipeline_mode<synchronous>, transform_indices = @transform_1, window_bounds = array<i64: 3, 48, 32>}, {pipeline_mode = #tpu.pipeline_mode<synchronous>, transform_indices = @transform_2, window_bounds = array<i64: 1, 32>}, {pipeline_mode = #tpu.pipeline_mode<synchronous>, transform_indices = @transform_3, window_bounds = array<i64: 1, 32>}, {transform_indices = @transform_4, window_bounds = array<i64: 1, 16, 16, 8>}]} {
    %c0 = arith.constant 0 : index
    %c0_0 = arith.constant 0 : index
    %c0_1 = arith.constant 0 : index
    %c0_2 = arith.constant 0 : index
    %0 = vector.load %arg1[%c0, %c0_0, %c0_1, %c0_2] : memref<1x8x8x16xf32, #tpu.memory_space<vmem>>, vector<1x8x8x16xf32>
    %1 = vector.shape_cast %0 : vector<1x8x8x16xf32> to vector<8x8x16xf32>
    %2 = arith.truncf %1 : vector<8x8x16xf32> to vector<8x8x16xbf16>
    %cst = arith.constant 0.000000e+00 : bf16
    %3 = vector.broadcast %cst : bf16 to vector<1x8x16xbf16>
    %4 = tpu.concatenate %3, %2, %3 in 0 : vector<1x8x16xbf16>, vector<8x8x16xbf16>, vector<1x8x16xbf16> -> vector<10x8x16xbf16>
    %cst_3 = arith.constant 0.000000e+00 : bf16
    %5 = vector.broadcast %cst_3 : bf16 to vector<10x1x16xbf16>
    %6 = tpu.concatenate %5, %4, %5 in 1 : vector<10x1x16xbf16>, vector<10x8x16xbf16>, vector<10x1x16xbf16> -> vector<10x10x16xbf16>
    %cst_4 = arith.constant 0.000000e+00 : f32
    %7 = vector.broadcast %cst_4 : f32 to vector<64x32xf32>
    %8 = vector.extract_strided_slice %6 {offsets = [0, 0, 0], sizes = [8, 10, 16], strides = [1, 1, 1]} : vector<10x10x16xbf16> to vector<8x10x16xbf16>
    %9 = vector.extract_strided_slice %8 {offsets = [0, 0, 0], sizes = [8, 8, 16], strides = [1, 1, 1]} : vector<8x10x16xbf16> to vector<8x8x16xbf16>
    %10 = vector.extract_strided_slice %8 {offsets = [0, 1, 0], sizes = [8, 8, 16], strides = [1, 1, 1]} : vector<8x10x16xbf16> to vector<8x8x16xbf16>
    %11 = vector.extract_strided_slice %8 {offsets = [0, 2, 0], sizes = [8, 8, 16], strides = [1, 1, 1]} : vector<8x10x16xbf16> to vector<8x8x16xbf16>
    %12 = tpu.concatenate %9, %10, %11 in 2 : vector<8x8x16xbf16>, vector<8x8x16xbf16>, vector<8x8x16xbf16> -> vector<8x8x48xbf16>
    %13 = vector.shape_cast %12 : vector<8x8x48xbf16> to vector<64x48xbf16>
    %c0_5 = arith.constant 0 : index
    %c0_6 = arith.constant 0 : index
    %c0_7 = arith.constant 0 : index
    %14 = vector.load %arg2[%c0_5, %c0_6, %c0_7] : memref<3x48x32xf32, #tpu.memory_space<vmem>>, vector<1x48x32xf32>
    %15 = vector.shape_cast %14 : vector<1x48x32xf32> to vector<48x32xf32>
    %16 = arith.truncf %15 : vector<48x32xf32> to vector<48x32xbf16>
    %cst_8 = arith.constant dense<0.000000e+00> : vector<64x32xf32>
    %17 = tpu.matmul %13, %16, %cst_8 {dimension_numbers = #tpu.dot_dimension_numbers<[1], [0], [0], [1], [0, 0, 1, 1], [], []>} : vector<64x48xbf16>, vector<48x32xbf16>, vector<64x32xf32> -> vector<64x32xf32>
    %18 = arith.addf %7, %17 : vector<64x32xf32>
    %19 = vector.extract_strided_slice %6 {offsets = [1, 0, 0], sizes = [8, 10, 16], strides = [1, 1, 1]} : vector<10x10x16xbf16> to vector<8x10x16xbf16>
    %20 = vector.extract_strided_slice %19 {offsets = [0, 0, 0], sizes = [8, 8, 16], strides = [1, 1, 1]} : vector<8x10x16xbf16> to vector<8x8x16xbf16>
    %21 = vector.extract_strided_slice %19 {offsets = [0, 1, 0], sizes = [8, 8, 16], strides = [1, 1, 1]} : vector<8x10x16xbf16> to vector<8x8x16xbf16>
    %22 = vector.extract_strided_slice %19 {offsets = [0, 2, 0], sizes = [8, 8, 16], strides = [1, 1, 1]} : vector<8x10x16xbf16> to vector<8x8x16xbf16>
    %23 = tpu.concatenate %20, %21, %22 in 2 : vector<8x8x16xbf16>, vector<8x8x16xbf16>, vector<8x8x16xbf16> -> vector<8x8x48xbf16>
    %24 = vector.shape_cast %23 : vector<8x8x48xbf16> to vector<64x48xbf16>
    %c1 = arith.constant 1 : index
    %c0_9 = arith.constant 0 : index
    %c0_10 = arith.constant 0 : index
    %25 = vector.load %arg2[%c1, %c0_9, %c0_10] : memref<3x48x32xf32, #tpu.memory_space<vmem>>, vector<1x48x32xf32>
    %26 = vector.shape_cast %25 : vector<1x48x32xf32> to vector<48x32xf32>
    %27 = arith.truncf %26 : vector<48x32xf32> to vector<48x32xbf16>
    %cst_11 = arith.constant dense<0.000000e+00> : vector<64x32xf32>
    %28 = tpu.matmul %24, %27, %cst_11 {dimension_numbers = #tpu.dot_dimension_numbers<[1], [0], [0], [1], [0, 0, 1, 1], [], []>} : vector<64x48xbf16>, vector<48x32xbf16>, vector<64x32xf32> -> vector<64x32xf32>
    %29 = arith.addf %18, %28 : vector<64x32xf32>
    %30 = vector.extract_strided_slice %6 {offsets = [2, 0, 0], sizes = [8, 10, 16], strides = [1, 1, 1]} : vector<10x10x16xbf16> to vector<8x10x16xbf16>
    %31 = vector.extract_strided_slice %30 {offsets = [0, 0, 0], sizes = [8, 8, 16], strides = [1, 1, 1]} : vector<8x10x16xbf16> to vector<8x8x16xbf16>
    %32 = vector.extract_strided_slice %30 {offsets = [0, 1, 0], sizes = [8, 8, 16], strides = [1, 1, 1]} : vector<8x10x16xbf16> to vector<8x8x16xbf16>
    %33 = vector.extract_strided_slice %30 {offsets = [0, 2, 0], sizes = [8, 8, 16], strides = [1, 1, 1]} : vector<8x10x16xbf16> to vector<8x8x16xbf16>
    %34 = tpu.concatenate %31, %32, %33 in 2 : vector<8x8x16xbf16>, vector<8x8x16xbf16>, vector<8x8x16xbf16> -> vector<8x8x48xbf16>
    %35 = vector.shape_cast %34 : vector<8x8x48xbf16> to vector<64x48xbf16>
    %c2 = arith.constant 2 : index
    %c0_12 = arith.constant 0 : index
    %c0_13 = arith.constant 0 : index
    %36 = vector.load %arg2[%c2, %c0_12, %c0_13] : memref<3x48x32xf32, #tpu.memory_space<vmem>>, vector<1x48x32xf32>
    %37 = vector.shape_cast %36 : vector<1x48x32xf32> to vector<48x32xf32>
    %38 = arith.truncf %37 : vector<48x32xf32> to vector<48x32xbf16>
    %cst_14 = arith.constant dense<0.000000e+00> : vector<64x32xf32>
    %39 = tpu.matmul %35, %38, %cst_14 {dimension_numbers = #tpu.dot_dimension_numbers<[1], [0], [0], [1], [0, 0, 1, 1], [], []>} : vector<64x48xbf16>, vector<48x32xbf16>, vector<64x32xf32> -> vector<64x32xf32>
    %40 = arith.addf %29, %39 : vector<64x32xf32>
    %c0_15 = arith.constant 0 : index
    %c0_16 = arith.constant 0 : index
    %41 = vector.load %arg3[%c0_15, %c0_16] : memref<1x32xf32, #tpu.memory_space<vmem>>, vector<1x32xf32>
    %42 = vector.broadcast %41 : vector<1x32xf32> to vector<64x32xf32>
    %43 = arith.mulf %40, %42 : vector<64x32xf32>
    %c0_17 = arith.constant 0 : index
    %c0_18 = arith.constant 0 : index
    %44 = vector.load %arg4[%c0_17, %c0_18] : memref<1x32xf32, #tpu.memory_space<vmem>>, vector<1x32xf32>
    %45 = vector.broadcast %44 : vector<1x32xf32> to vector<64x32xf32>
    %46 = arith.addf %43, %45 : vector<64x32xf32>
    %cst_19 = arith.constant 0.000000e+00 : f32
    %47 = vector.broadcast %cst_19 : f32 to vector<64x32xf32>
    %48 = arith.maximumf %46, %47 : vector<64x32xf32>
    %49 = vector.shape_cast %48 : vector<64x32xf32> to vector<8x8x32xf32>
    %50 = vector.extract_strided_slice %49 {offsets = [0, 0, 0], sizes = [8, 8, 8], strides = [1, 1, 1]} : vector<8x8x32xf32> to vector<8x8x8xf32>
    %51 = vector.extract_strided_slice %49 {offsets = [0, 0, 8], sizes = [8, 8, 8], strides = [1, 1, 1]} : vector<8x8x32xf32> to vector<8x8x8xf32>
    %52 = vector.extract_strided_slice %49 {offsets = [0, 0, 16], sizes = [8, 8, 8], strides = [1, 1, 1]} : vector<8x8x32xf32> to vector<8x8x8xf32>
    %53 = vector.extract_strided_slice %49 {offsets = [0, 0, 24], sizes = [8, 8, 8], strides = [1, 1, 1]} : vector<8x8x32xf32> to vector<8x8x8xf32>
    %54 = vector.shape_cast %50 : vector<8x8x8xf32> to vector<8x8x1x8xf32>
    %55 = vector.shape_cast %51 : vector<8x8x8xf32> to vector<8x8x1x8xf32>
    %56 = tpu.concatenate %54, %55 in 2 : vector<8x8x1x8xf32>, vector<8x8x1x8xf32> -> vector<8x8x2x8xf32>
    %57 = vector.shape_cast %56 : vector<8x8x2x8xf32> to vector<8x16x8xf32>
    %58 = vector.shape_cast %52 : vector<8x8x8xf32> to vector<8x8x1x8xf32>
    %59 = vector.shape_cast %53 : vector<8x8x8xf32> to vector<8x8x1x8xf32>
    %60 = tpu.concatenate %58, %59 in 2 : vector<8x8x1x8xf32>, vector<8x8x1x8xf32> -> vector<8x8x2x8xf32>
    %61 = vector.shape_cast %60 : vector<8x8x2x8xf32> to vector<8x16x8xf32>
    %62 = vector.shape_cast %57 : vector<8x16x8xf32> to vector<8x1x16x8xf32>
    %63 = vector.shape_cast %61 : vector<8x16x8xf32> to vector<8x1x16x8xf32>
    %64 = tpu.concatenate %62, %63 in 1 : vector<8x1x16x8xf32>, vector<8x1x16x8xf32> -> vector<8x2x16x8xf32>
    %65 = vector.shape_cast %64 : vector<8x2x16x8xf32> to vector<16x16x8xf32>
    %c0_20 = arith.constant 0 : index
    %c0_21 = arith.constant 0 : index
    %c0_22 = arith.constant 0 : index
    %c0_23 = arith.constant 0 : index
    %66 = vector.load %arg5[%c0_20, %c0_21, %c0_22, %c0_23] : memref<1x16x16x8xf32, #tpu.memory_space<vmem>>, vector<1x16x16x8xf32>
    %67 = vector.shape_cast %66 : vector<1x16x16x8xf32> to vector<16x16x8xf32>
    %68 = vector.shape_cast %65 : vector<16x16x8xf32> to vector<1x16x16x8xf32>
    tpu.vector_store %arg5[%c0_20, %c0_21, %c0_22, %c0_23], %68 {strides = array<i32>} : memref<1x16x16x8xf32, #tpu.memory_space<vmem>>, vector<1x16x16x8xf32>,
    return
  }
  func.func @transform_0(%arg0: i32) -> (i32, i32, i32, i32) {
    %c0_i32 = arith.constant 0 : i32
    %c0_i32_0 = arith.constant 0 : i32
    %c0_i32_1 = arith.constant 0 : i32
    %c0_i32_2 = arith.constant 0 : i32
    return %arg0, %c0_i32, %c0_i32_0, %c0_i32_1 : i32, i32, i32, i32
  }
  func.func @transform_1(%arg0: i32) -> (i32, i32, i32) {
    %c0_i32 = arith.constant 0 : i32
    %c0_i32_0 = arith.constant 0 : i32
    %c0_i32_1 = arith.constant 0 : i32
    %c0_i32_2 = arith.constant 0 : i32
    return %c0_i32, %c0_i32_0, %c0_i32_1 : i32, i32, i32
  }
  func.func @transform_2(%arg0: i32) -> (i32, i32) {
    %c0_i32 = arith.constant 0 : i32
    %c0_i32_0 = arith.constant 0 : i32
    %c0_i32_1 = arith.constant 0 : i32
    return %c0_i32, %c0_i32_0 : i32, i32
  }
  func.func @transform_3(%arg0: i32) -> (i32, i32) {
    %c0_i32 = arith.constant 0 : i32
    %c0_i32_0 = arith.constant 0 : i32
    %c0_i32_1 = arith.constant 0 : i32
    return %c0_i32, %c0_i32_0 : i32, i32
  }
  func.func @transform_4(%arg0: i32) -> (i32, i32, i32, i32) {
    %c0_i32 = arith.constant 0 : i32
    %c0_i32_0 = arith.constant 0 : i32
    %c0_i32_1 = arith.constant 0 : i32
    %c0_i32_2 = arith.constant 0 : i32
    return %arg0, %c0_i32, %c0_i32_0, %c0_i32_1 : i32, i32, i32, i32
  }
}

</mosaic_0001>

<llo_original>
// kernel: tile.18
$region0: #{tile.18}
  #allocation0 [shape = 's32[1]{0}', space=sflag, size = 0x4, scoped, tag = 'scoped memory for tile.18']
  %s0 = inlined_call_operand.vmem [shape: f32[8], index: 0, kind: input, shape index: {}]
  %s1 = inlined_call_operand.vmem [shape: f32[4,8], index: 1, kind: output, shape index: {}]
  // Predicated region
  $region2: #{tile.18} parent=0 // pred_check
    _
  $region3: #{tile.18} parent=0 // pred_check_branch
    %3 = sbr.rel (0) target = $region5
  $region4: #{tile.18} parent=0 // pred_region
    _
  $region5: #{tile.18} parent=0 // pred_fallthru
    _
  %v4 = vld [vmem:[%s0] ss:$0 sm:$0xff]
  %5 = vst [vmem:[%s1] sm:$0xf] %v4

// kernel: tile.19
$region0: #{tile.19}
  %s0 = inlined_call_operand.vmem [shape: f32[4,8], index: 0, kind: input, shape index: {}]
  %s1 = inlined_call_operand.hbm [shape: f32[1,32], index: 1, kind: output, shape index: {}]
  $region1: #{tile.19} parent=0
    #allocation0 [shape = 'u8[512]{0}', space=vmem, size = 0x400, scoped, tag = 'operand span for operand 1']
    #allocation1 [shape = 's32[1]{0}', space=sflag, size = 0x4, scoped, tag = 'scoped memory for tile.19']
    #allocation2 [shape = 'u8[4096]{0}', space=vmem, size = 0x1000, scoped, tag = 'scoped mem for output reshape']
    #allocation3 [shape = 'u8[4096]{0}', space=vmem, size = 0x1000, scoped, tag = 'scoped mem for input reshape']
    %2 = vsyncpa [#allocation1], 0
    %s4 = sshllo.u32 0, 4
    %v5 = vld [vmem:[%s0] sm:%s4]
    %6 = vst [vmem:[#allocation3] sm:%s4] %v5
    %v7 = vld [vmem:[#allocation3] sm:$0x1]
    %vm8 = vcmask 64512
    %9 = vst.msk [vmem:[#allocation2] sm:$0x1] %vm8, %v7
    %s10 = scalar_lea.vmem [#allocation3], 3
    %v11 = vld [vmem:[%s10] sm:$0x1]
    %12 = vrot.lane.b32.xlu0 %v11, 24
    %v13 = vpop.permute.xlu0 %12
    %vm14 = vcmask 261312
    %15 = vst.msk [vmem:[#allocation2] sm:$0x1] %vm14, %v13
    %s16 = scalar_lea.vmem [#allocation3], 2
    %v17 = vld [vmem:[%s16] sm:$0x1]
    %18 = vrot.lane.b32.xlu0 %v17, 16
    %v19 = vpop.permute.xlu0 %18
    %vm20 = vcmask 195712
    %21 = vst.msk [vmem:[#allocation2] sm:$0x1] %vm20, %v19
    %s22 = scalar_lea.vmem [#allocation3], 1
    %v23 = vld [vmem:[%s22] sm:$0x1]
    %24 = vrot.lane.b32.xlu0 %v23, 8
    %v25 = vpop.permute.xlu0 %24
    %vm26 = vcmask 130112
    %27 = vst.msk [vmem:[#allocation2] sm:$0x1] %vm26, %v25
    %s29 = sshllo.u32 0, 1
    %v31 = vld [vmem:[#allocation2] sm:%s29]
    %s32 = sshllo.u32 0, 1
    %33 = vst [vmem:[#allocation0] sm:%s32] %v31
    %s35 = ssub.s32 16, 16
    %36 = vsyncadd [#allocation1], %s35
    %s38 = sshll.u32 [#allocation0], 4
    %s39 = int_to_ptr.vmem [resolvable:$true] %s38
    %41 = dma.vmem_to_hbm [thread:$0]  %s39, 16, %s1, [#allocation1]
    %42 = dma.done [#allocation1], 16
    %43 = vsyncpa [#allocation1], 1

// kernel: next_stage_g_forward.4
$region0: #{next_stage_g_forward.4}
  #allocation0 [shape = 'u32[]', space=smem, size = 0x4, offset = 0x4, fixed_abs, tag = 'smem constant byte address 0x4 - core index']
  #allocation1 [shape = 'u32[144,128]{1,0:T(1,128)}', space=vmem, size = 0x12000, scoped, tag = 'internal scratch']
  %s0 = inlined_call_operand.hbm [shape: f32[2,64,8], index: 0, kind: input, shape index: {}]
  %s1 = inlined_call_operand.hbm [shape: f32[2,6,16], index: 1, kind: input, shape index: {}]
  %s2 = inlined_call_operand.hbm [shape: f32[16,8], index: 2, kind: input, shape index: {}]
  %s3 = inlined_call_operand.hbm [shape: f32[2,1,6], index: 3, kind: input, shape index: {}]
  %s4 = inlined_call_operand.hbm [shape: f32[2,64,8], index: 4, kind: output, shape index: {}]
  %s5 = sld [smem:[#allocation0]]
  $region65: #{next_stage_g_forward.4} parent=0
    _
  %s7 = ssub.s32 1, %s5
  %s8 = scalar_select 0, %s7, %s5
  $region1: #{next_stage_g_forward.4} parent=0
    #allocation2 [shape = 'u8[65536]{0}', space=vmem, size = 0x10000, scoped, tag = 'input window, operand 0']
    #allocation3 [shape = 's32[2]{0}', space=sflag, size = 0x8, scoped, tag = 'scoped memory for next_stage_g_forward.4']
    #allocation4 [shape = 's32[2]{0}', space=sflag, size = 0x8, scoped, tag = 'scoped memory for next_stage_g_forward.4']
    #allocation5 [shape = 'u8[8192]{0}', space=vmem, size = 0x2000, scoped, tag = 'input window, operand 1']
    #allocation6 [shape = 's32[2]{0}', space=sflag, size = 0x8, scoped, tag = 'scoped memory for next_stage_g_forward.4']
    #allocation7 [shape = 'u8[8192]{0}', space=vmem, size = 0x2000, scoped, tag = 'input window, operand 2, single buffered']
    #allocation8 [shape = 'u8[1024]{0}', space=vmem, size = 0x400, scoped, tag = 'input window, operand 3']
    #allocation9 [shape = 's32[2]{0}', space=sflag, size = 0x8, scoped, tag = 'scoped memory for next_stage_g_forward.4']
    #allocation10 [shape = 'u8[65536]{0}', space=vmem, size = 0x10000, scoped, tag = 'output window, operand 0']
    %9 = vsyncpa [#allocation3], 0
    %s10 = scalar_lea.sflag [#allocation3], 1
    %11 = vsyncpa %s10, 0
    %12 = vsyncpa [#allocation6], 0
    %s13 = scalar_lea.sflag [#allocation6], 1
    %14 = vsyncpa %s13, 0
    %15 = vsyncpa [#allocation9], 0
    %s16 = scalar_lea.sflag [#allocation9], 1
    %17 = vsyncpa %s16, 0
    %18 = vsyncpa [#allocation4], 0
    %s19 = scalar_lea.sflag [#allocation4], 1
    %20 = vsyncpa %s19, 0
    loop: start=0, step=1, limit=4
    $region2: #{next_stage_g_forward.4} parent=1 // loop_pre_header
      _
    $region3: #{next_stage_g_forward.4} parent=1 // loop_header
      %s22 = sphi 0, %s26
      %p23 = scmp.ge.s32.totalorder %s22, 4
      %s32 = sphi 0, %s34
      %s35 = sphi 0, %s32
      %s36 = sphi 0, %s35
      %s52 = sphi 0, %s36
      %s58 = sphi 0, %s60
      %s61 = sphi 0, %s58
      %s62 = sphi 0, %s61
      %s78 = sphi 0, %s62
      %s82 = sphi 0, %s82
      %s84 = sphi 0, %s82
      %s85 = sphi 0, %s84
      %s99 = sphi 0, %s85
      %s105 = sphi 0, %s107
      %s108 = sphi 0, %s105
      %s109 = sphi 0, %s108
      %s125 = sphi 0, %s109
      %s131 = sphi 0, %s133
      %s134 = sphi 0, %s131
      %s135 = sphi 0, %s134
      %s151 = sphi 0, %s135
    $region4: #{next_stage_g_forward.4} parent=1 // loop_header_branch
      %25 = sbr.rel (%p23) target = $region8
    $region5: #{next_stage_g_forward.4} parent=1 // loop_body
      %s27 = ssub.s32 %s22, 1
      %s28 = ssub.s32 %s22, 2
      %s29 = sadd.s32 %s22, 1
      %s30 = ssub.s32 %s22, %s29
      %p31 = scmp.eq.s32.totalorder %s30, 0
      %s33 = sadd.s32 %s32, 1
      %s34 = scalar_select %p31, %s32, %s33
      %p37 = pneg %p31
      %p38 = scmp.eq.s32.totalorder %s22, 1
      %p39 = por %p37, %p38
      %p40 = scmp.ne.s32.totalorder %s32, %s35
      %p41 = scmp.eq.s32.totalorder %s22, 0
      %p42 = por %p40, %p41
      %p43 = scmp.ne.s32.totalorder %s32, %s35
      %p44 = scmp.eq.s32.totalorder %s27, 1
      %p45 = por %p43, %p44
      %p46 = scmp.ne.s32.totalorder %s35, %s36
      %p47 = scmp.eq.s32.totalorder %s27, 0
      %p48 = por %p46, %p47
      %p49 = scmp.ne.s32.totalorder %s35, %s36
      %p50 = scmp.eq.s32.totalorder %s28, 1
      %p51 = por %p49, %p50
      %p53 = scmp.ne.s32.totalorder %s36, %s52
      %p54 = scmp.eq.s32.totalorder %s28, 0
      %p55 = por %p53, %p54
      %s56 = ssub.s32 %s22, %s29
      %p57 = scmp.eq.s32.totalorder %s56, 0
      %s59 = sadd.s32 %s58, 1
      %s60 = scalar_select %p57, %s58, %s59
      %p63 = pneg %p57
      %p64 = scmp.eq.s32.totalorder %s22, 1
      %p65 = por %p63, %p64
      %p66 = scmp.ne.s32.totalorder %s58, %s61
      %p67 = scmp.eq.s32.totalorder %s22, 0
      %p68 = por %p66, %p67
      %p69 = scmp.ne.s32.totalorder %s58, %s61
      %p70 = scmp.eq.s32.totalorder %s27, 1
      %p71 = por %p69, %p70
      %p72 = scmp.ne.s32.totalorder %s61, %s62
      %p73 = scmp.eq.s32.totalorder %s27, 0
      %p74 = por %p72, %p73
      %p75 = scmp.ne.s32.totalorder %s61, %s62
      %p76 = scmp.eq.s32.totalorder %s28, 1
      %p77 = por %p75, %p76
      %p79 = scmp.ne.s32.totalorder %s62, %s78
      %p80 = scmp.eq.s32.totalorder %s28, 0
      %p81 = por %p79, %p80
      %s83 = sadd.s32 %s82, 1
      %p86 = scmp.eq.s32.totalorder %s22, 1
      %p87 = scmp.ne.s32.totalorder %s82, %s84
      %p88 = scmp.eq.s32.totalorder %s22, 0
      %p89 = por %p87, %p88
      %p90 = scmp.ne.s32.totalorder %s82, %s84
      %p91 = scmp.eq.s32.totalorder %s27, 1
      %p92 = por %p90, %p91
      %p93 = scmp.ne.s32.totalorder %s84, %s85
      %p94 = scmp.eq.s32.totalorder %s27, 0
      %p95 = por %p93, %p94
      %p96 = scmp.ne.s32.totalorder %s84, %s85
      %p97 = scmp.eq.s32.totalorder %s28, 1
      %p98 = por %p96, %p97
      %p100 = scmp.ne.s32.totalorder %s85, %s99
      %p101 = scmp.eq.s32.totalorder %s28, 0
      %p102 = por %p100, %p101
      %s103 = ssub.s32 %s22, %s29
      %p104 = scmp.eq.s32.totalorder %s103, 0
      %s106 = sadd.s32 %s105, 1
      %s107 = scalar_select %p104, %s105, %s106
      %p110 = pneg %p104
      %p111 = scmp.eq.s32.totalorder %s22, 1
      %p112 = por %p110, %p111
      %p113 = scmp.ne.s32.totalorder %s105, %s108
      %p114 = scmp.eq.s32.totalorder %s22, 0
      %p115 = por %p113, %p114
      %p116 = scmp.ne.s32.totalorder %s105, %s108
      %p117 = scmp.eq.s32.totalorder %s27, 1
      %p118 = por %p116, %p117
      %p119 = scmp.ne.s32.totalorder %s108, %s109
      %p120 = scmp.eq.s32.totalorder %s27, 0
      %p121 = por %p119, %p120
      %p122 = scmp.ne.s32.totalorder %s108, %s109
      %p123 = scmp.eq.s32.totalorder %s28, 1
      %p124 = por %p122, %p123
      %p126 = scmp.ne.s32.totalorder %s109, %s125
      %p127 = scmp.eq.s32.totalorder %s28, 0
      %p128 = por %p126, %p127
      %s129 = ssub.s32 %s22, %s29
      %p130 = scmp.eq.s32.totalorder %s129, 0
      %s132 = sadd.s32 %s131, 1
      %s133 = scalar_select %p130, %s131, %s132
      %p136 = pneg %p130
      %p137 = scmp.eq.s32.totalorder %s22, 1
      %p138 = por %p136, %p137
      %p139 = scmp.ne.s32.totalorder %s131, %s134
      %p140 = scmp.eq.s32.totalorder %s22, 0
      %p141 = por %p139, %p140
      %p142 = scmp.ne.s32.totalorder %s131, %s134
      %p143 = scmp.eq.s32.totalorder %s27, 1
      %p144 = por %p142, %p143
      %p145 = scmp.ne.s32.totalorder %s134, %s135
      %p146 = scmp.eq.s32.totalorder %s27, 0
      %p147 = por %p145, %p146
      %p148 = scmp.ne.s32.totalorder %s134, %s135
      %p149 = scmp.eq.s32.totalorder %s28, 1
      %p150 = por %p148, %p149
      %p152 = scmp.ne.s32.totalorder %s135, %s151
      %p153 = scmp.eq.s32.totalorder %s28, 0
      %p154 = por %p152, %p153
      %p155 = scmp.le.s32.totalorder 1, %s22
      %p156 = scmp.lt.s32.totalorder %s22, 3
      %p157 = pnand %p155, %p156
      %p158 = pneg %p157
      // Predicated region
      $region9: #{next_stage_g_forward.4} parent=5 // pred_check
        _
      $region10: #{next_stage_g_forward.4} parent=5 // pred_check_branch
        %160 = sbr.rel (%p157) target = $region12
      $region11: #{next_stage_g_forward.4} parent=5 // pred_region
        %s161 = ssub.s32 %s22, 1
        // Predicated region
        $region13: #{next_stage_g_forward.4} parent=11 // pred_check
          %p162 = pneg %p95
        $region14: #{next_stage_g_forward.4} parent=11 // pred_check_branch
          %164 = sbr.rel (%p162) target = $region16
        $region15: #{next_stage_g_forward.4} parent=11 // pred_region
          %s166 = ssub.s32 256, 256
          %167 = vsyncadd [#allocation6], %s166
          %s168 = sshll.u32 [#allocation7], 4
          %s169 = int_to_ptr.vmem [resolvable:$true] %s168
          %174 = dma.hbm_to_vmem [thread:$0]  %s2, 256, %s169, [#allocation6], 128, 128, 8
        $region16: #{next_stage_g_forward.4} parent=11 // pred_fallthru
          _
      $region12: #{next_stage_g_forward.4} parent=5 // pred_fallthru
        _
      %p175 = scmp.lt.s32.totalorder %s22, 2
      // Predicated region
      $region17: #{next_stage_g_forward.4} parent=5 // pred_check
        %p176 = pneg %p175
      $region18: #{next_stage_g_forward.4} parent=5 // pred_check_branch
        %178 = sbr.rel (%p176) target = $region20
      $region19: #{next_stage_g_forward.4} parent=5 // pred_region
        // Predicated region
        $region21: #{next_stage_g_forward.4} parent=19 // pred_check
          %p179 = pneg %p42
        $region22: #{next_stage_g_forward.4} parent=19 // pred_check_branch
          %181 = sbr.rel (%p179) target = $region24
        $region23: #{next_stage_g_forward.4} parent=19 // pred_region
          %s182 = sand.u32 %s32, 1
          %s183 = scalar_lea.sflag [#allocation3], %s182
          %s184 = sand.u32 %s32, 1
          %s185 = smul.addr %s184, 64
          %s186 = scalar_lea.vmem [#allocation2], %s185
          %s188 = ssub.s32 1024, 1024
          %189 = vsyncadd %s183, %s188
          %s190 = smul.addr %s22, 8
          %s191 = smul.addr %s190, 128
          %s192 = scalar_lea.hbm %s0, %s191
          %s193 = sshll.u32 %s186, 4
          %s194 = int_to_ptr.vmem [resolvable:$true] %s193
          %199 = dma.hbm_to_vmem [thread:$0]  %s192, 1024, %s194, %s183, 128, 128, 8
        $region24: #{next_stage_g_forward.4} parent=19 // pred_fallthru
          _
        // Predicated region
        $region25: #{next_stage_g_forward.4} parent=19 // pred_check
          %p200 = pneg %p68
        $region26: #{next_stage_g_forward.4} parent=19 // pred_check_branch
          %202 = sbr.rel (%p200) target = $region28
        $region27: #{next_stage_g_forward.4} parent=19 // pred_region
          %s203 = sand.u32 %s22, 1
          %s204 = scalar_lea.sflag [#allocation6], %s203
          %s205 = sand.u32 %s58, 1
          %s206 = smul.addr %s205, 8
          %s207 = scalar_lea.vmem [#allocation5], %s206
          %s209 = ssub.s32 128, 128
          %210 = vsyncadd %s204, %s209
          %s211 = smul.addr %s22, 128
          %s212 = scalar_lea.hbm %s1, %s211
          %s214 = sshll.u32 %s207, 4
          %s215 = int_to_ptr.vmem [resolvable:$true] %s214
          %217 = dma.hbm_to_vmem [thread:$0]  %s212, 128, %s215, %s204
        $region28: #{next_stage_g_forward.4} parent=19 // pred_fallthru
          _
        // Predicated region
        $region29: #{next_stage_g_forward.4} parent=19 // pred_check
          %p218 = pneg %p115
        $region30: #{next_stage_g_forward.4} parent=19 // pred_check_branch
          %220 = sbr.rel (%p218) target = $region32
        $region31: #{next_stage_g_forward.4} parent=19 // pred_region
          %s221 = sand.u32 %s105, 1
          %s222 = scalar_lea.sflag [#allocation9], %s221
          %s223 = sand.u32 %s105, 1
          %s224 = scalar_lea.vmem [#allocation8], %s223
          %s226 = ssub.s32 16, 16
          %227 = vsyncadd %s222, %s226
          %s228 = smul.addr %s22, 16
          %s229 = scalar_lea.hbm %s3, %s228
          %s231 = sshll.u32 %s224, 4
          %s232 = int_to_ptr.vmem [resolvable:$true] %s231
          %234 = dma.hbm_to_vmem [thread:$0]  %s229, 16, %s232, %s222
        $region32: #{next_stage_g_forward.4} parent=19 // pred_fallthru
          _
      $region20: #{next_stage_g_forward.4} parent=5 // pred_fallthru
        _
      %p235 = scmp.le.s32.totalorder 1, %s22
      %p236 = scmp.lt.s32.totalorder %s22, 3
      %p237 = pnand %p235, %p236
      %p238 = pneg %p237
      // Predicated region
      $region33: #{next_stage_g_forward.4} parent=5 // pred_check
        _
      $region34: #{next_stage_g_forward.4} parent=5 // pred_check_branch
        %240 = sbr.rel (%p237) target = $region36
      $region35: #{next_stage_g_forward.4} parent=5 // pred_region
        %s241 = ssub.s32 %s22, 1
        %s242 = sand.u32 %s35, 1
        %s243 = scalar_lea.sflag [#allocation3], %s242
        %s244 = sand.u32 %s35, 1
        %s245 = smul.addr %s244, 64
        %s246 = scalar_lea.vmem [#allocation2], %s245
        // Predicated region
        $region37: #{next_stage_g_forward.4} parent=35 // pred_check
          %p247 = pneg %p48
        $region38: #{next_stage_g_forward.4} parent=35 // pred_check_branch
          %249 = sbr.rel (%p247) target = $region40
        $region39: #{next_stage_g_forward.4} parent=35 // pred_region
          %250 = dma.done %s243, 1024
        $region40: #{next_stage_g_forward.4} parent=35 // pred_fallthru
          _
        %s251 = sand.u32 %s27, 1
        %s252 = scalar_lea.sflag [#allocation6], %s251
        %s253 = sand.u32 %s61, 1
        %s254 = smul.addr %s253, 8
        %s255 = scalar_lea.vmem [#allocation5], %s254
        // Predicated region
        $region41: #{next_stage_g_forward.4} parent=35 // pred_check
          %p256 = pneg %p74
        $region42: #{next_stage_g_forward.4} parent=35 // pred_check_branch
          %258 = sbr.rel (%p256) target = $region44
        $region43: #{next_stage_g_forward.4} parent=35 // pred_region
          %259 = dma.done %s252, 128
        $region44: #{next_stage_g_forward.4} parent=35 // pred_fallthru
          _
        // Predicated region
        $region45: #{next_stage_g_forward.4} parent=35 // pred_check
          %p260 = pneg %p95
        $region46: #{next_stage_g_forward.4} parent=35 // pred_check_branch
          %262 = sbr.rel (%p260) target = $region48
        $region47: #{next_stage_g_forward.4} parent=35 // pred_region
          %263 = dma.done [#allocation6], 256
        $region48: #{next_stage_g_forward.4} parent=35 // pred_fallthru
          _
        %s264 = sand.u32 %s108, 1
        %s265 = scalar_lea.sflag [#allocation9], %s264
        %s266 = sand.u32 %s108, 1
        %s267 = scalar_lea.vmem [#allocation8], %s266
        // Predicated region
        $region49: #{next_stage_g_forward.4} parent=35 // pred_check
          %p268 = pneg %p121
        $region50: #{next_stage_g_forward.4} parent=35 // pred_check_branch
          %270 = sbr.rel (%p268) target = $region52
        $region51: #{next_stage_g_forward.4} parent=35 // pred_region
          %271 = dma.done %s265, 16
        $region52: #{next_stage_g_forward.4} parent=35 // pred_fallthru
          _
        %s272 = sand.u32 %s35, 1
        %s273 = scalar_lea.sflag [#allocation3], %s272
        %s274 = sand.u32 %s35, 1
        %s275 = smul.addr %s274, 64
        %s276 = scalar_lea.vmem [#allocation2], %s275
        %p277 = pneg %p48
        %p278 = pneg %p45
        %s279 = sand.u32 %s27, 1
        %s280 = scalar_lea.sflag [#allocation6], %s279
        %s281 = sand.u32 %s61, 1
        %s282 = smul.addr %s281, 8
        %s283 = scalar_lea.vmem [#allocation5], %s282
        %p284 = pneg %p74
        %p285 = pneg %p71
        %p286 = pneg %p95
        %p287 = pneg %p92
        %s288 = sand.u32 %s108, 1
        %s289 = scalar_lea.sflag [#allocation9], %s288
        %s290 = sand.u32 %s108, 1
        %s291 = scalar_lea.vmem [#allocation8], %s290
        %p292 = pneg %p121
        %p293 = pneg %p118
        %p294 = pneg %p147
        %p295 = pneg %p144
        %s296 = sand.u32 %s134, 1
        %s297 = scalar_lea.sflag [#allocation4], %s296
        %s298 = sand.u32 %s134, 1
        %s299 = smul.addr %s298, 64
        %s300 = scalar_lea.vmem [#allocation10], %s299
        %v302 = vld [vmem:[%s255] sm:$0x3f]
        %v303 = vpack.c.bf16 %v302, %v302
        %v304 = vld [vmem:[#allocation7] sm:$0xff]
        %v305 = vld [vmem:[#allocation7 + $0x8] sm:$0xff]
        %v306 = vpack.c.bf16 %v305, %v304
        %vm307 = vcmask 130048
        %v309 = vsel %vm307, %v303, 0
        %311 = vmatprep.subr.bf16.mxu0 0
        %312 = vmatpush1.bf16.msra.mxu0 %v306
        %313 = vmatprep.subr.bf16.mxu0 0
        %314 = vmatpush1.bf16.msra.mxu0 0
        %315 = vmatprep.subr.bf16.mxu0 0
        %316 = vmatpush1.bf16.msra.mxu0 0
        %317 = vmatprep.subr.bf16.mxu0 0
        %318 = vmatpush1.bf16.msra.mxu0 0
        %319 = vmatprep.subr.bf16.mxu0 0
        %320 = vmatpush1.bf16.msra.mxu0 0
        %321 = vmatprep.subr.bf16.mxu0 0
        %322 = vmatpush1.bf16.msra.mxu0 0
        %323 = vmatprep.subr.bf16.mxu0 0
        %324 = vmatpush1.bf16.msra.mxu0 0
        %325 = vmatprep.subr.bf16.mxu0 0
        %326 = vmatpush1.bf16.msra.mxu0 0
        %327 = vmatprep.subr.bf16.mxu0 0
        %328 = vmatpush1.bf16.msra.mxu0 0
        %329 = vmatprep.subr.bf16.mxu0 0
        %330 = vmatpush1.bf16.msra.mxu0 0
        %331 = vmatprep.subr.bf16.mxu0 0
        %332 = vmatpush1.bf16.msra.mxu0 0
        %333 = vmatprep.subr.bf16.mxu0 0
        %334 = vmatpush1.bf16.msra.mxu0 0
        %335 = vmatprep.subr.bf16.mxu0 0
        %336 = vmatpush1.bf16.msra.mxu0 0
        %337 = vmatprep.subr.bf16.mxu0 0
        %338 = vmatpush1.bf16.msra.mxu0 0
        %339 = vmatprep.subr.bf16.mxu0 0
        %340 = vmatpush1.bf16.msra.mxu0 0
        %341 = vmatprep.subr.bf16.mxu0 0
        %342 = vmatpush1.bf16.msra.mxu0 0
        %343 = vmatprep.mubr.bf16.mxu0 0
        %344 = vmatmul.mubr.bf16.gmra.mrb[0].mxu0 %v309
        %v345 = vpop.f32.mrb[0].mxu0
        %v346 = vadd.f32 0.0, %v345
        %v347 = vpop.f32.mrb[0].mxu0
        %v348 = vpop.f32.mrb[0].mxu0
        %v349 = vpop.f32.mrb[0].mxu0
        %350 = vdwg.mxu0
        %v351 = vld [vmem:[%s246] sm:$0xff]
        %v352 = vld [vmem:[%s246 + $0x8] sm:$0xff]
        %v353 = vld [vmem:[%s246 + $0x10] sm:$0xff]
        %v354 = vld [vmem:[%s246 + $0x18] sm:$0xff]
        %v355 = vld [vmem:[%s246 + $0x20] sm:$0xff]
        %v356 = vld [vmem:[%s246 + $0x28] sm:$0xff]
        %v357 = vld [vmem:[%s246 + $0x30] sm:$0xff]
        %v358 = vld [vmem:[%s246 + $0x38] sm:$0xff]
        %v359 = vpack.c.bf16 %v352, %v351
        %v360 = vpack.c.bf16 %v354, %v353
        %v361 = vpack.c.bf16 %v356, %v355
        %v362 = vpack.c.bf16 %v358, %v357
        %v363 = vpack.c.bf16 %v346, %v346
        %vm364 = vcmask 64512
        %v366 = vsel %vm364, %v359, 0
        %v369 = vsel %vm364, %v360, 0
        %v372 = vsel %vm364, %v361, 0
        %v375 = vsel %vm364, %v362, 0
        %v378 = vsel %vm364, %v363, 0
        %380 = vmatprep.subr.bf16.mxu0 0
        %381 = vmatpush1.bf16.xpose.msra.mxu0 %v378
        %382 = vmatprep.subr.bf16.mxu0 0
        %383 = vmatpush1.bf16.xpose.msra.mxu0 0
        %384 = vmatprep.subr.bf16.mxu0 0
        %385 = vmatpush1.bf16.xpose.msra.mxu0 0
        %386 = vmatprep.subr.bf16.mxu0 0
        %387 = vmatpush1.bf16.xpose.msra.mxu0 0
        %388 = vmatprep.subr.bf16.mxu0 0
        %389 = vmatpush1.bf16.xpose.msra.mxu0 0
        %390 = vmatprep.subr.bf16.mxu0 0
        %391 = vmatpush1.bf16.xpose.msra.mxu0 0
        %392 = vmatprep.subr.bf16.mxu0 0
        %393 = vmatpush1.bf16.xpose.msra.mxu0 0
        %394 = vmatprep.subr.bf16.mxu0 0
        %395 = vmatpush1.bf16.xpose.msra.mxu0 0
        %396 = vmatprep.subr.bf16.mxu0 0
        %397 = vmatpush1.bf16.xpose.msra.mxu0 0
        %398 = vmatprep.subr.bf16.mxu0 0
        %399 = vmatpush1.bf16.xpose.msra.mxu0 0
        %400 = vmatprep.subr.bf16.mxu0 0
        %401 = vmatpush1.bf16.xpose.msra.mxu0 0
        %402 = vmatprep.subr.bf16.mxu0 0
        %403 = vmatpush1.bf16.xpose.msra.mxu0 0
        %404 = vmatprep.subr.bf16.mxu0 0
        %405 = vmatpush1.bf16.xpose.msra.mxu0 0
        %406 = vmatprep.subr.bf16.mxu0 0
        %407 = vmatpush1.bf16.xpose.msra.mxu0 0
        %408 = vmatprep.subr.bf16.mxu0 0
        %409 = vmatpush1.bf16.xpose.msra.mxu0 0
        %410 = vmatprep.subr.bf16.mxu0 0
        %411 = vmatpush1.bf16.xpose.msra.mxu0 0
        %412 = vmatprep.mubr.bf16.mxu0 0
        %413 = vmatmul.mubr.bf16.gmra.mrb[0].mxu0 %v366
        %v414 = vpop.f32.mrb[0].mxu0
        %v415 = vadd.f32 0.0, %v414
        %v416 = vpop.f32.mrb[0].mxu0
        %v417 = vpop.f32.mrb[0].mxu0
        %v418 = vadd.f32 0.0, %v417
        %v419 = vpop.f32.mrb[0].mxu0
        %420 = vmatprep.mubr.bf16.mxu0 0
        %421 = vmatmul.mubr.bf16.gmra.mrb[0].mxu0 %v369
        %v422 = vpop.f32.mrb[0].mxu0
        %v423 = vadd.f32 0.0, %v422
        %v424 = vpop.f32.mrb[0].mxu0
        %v425 = vpop.f32.mrb[0].mxu0
        %v426 = vadd.f32 0.0, %v425
        %v427 = vpop.f32.mrb[0].mxu0
        %428 = vmatprep.mubr.bf16.mxu0 0
        %429 = vmatmul.mubr.bf16.gmra.mrb[0].mxu0 %v372
        %v430 = vpop.f32.mrb[0].mxu0
        %v431 = vadd.f32 0.0, %v430
        %v432 = vpop.f32.mrb[0].mxu0
        %v433 = vpop.f32.mrb[0].mxu0
        %v434 = vadd.f32 0.0, %v433
        %v435 = vpop.f32.mrb[0].mxu0
        %436 = vmatprep.mubr.bf16.mxu0 0
        %437 = vmatmul.mubr.bf16.gmra.mrb[0].mxu0 %v375
        %v438 = vpop.f32.mrb[0].mxu0
        %v439 = vadd.f32 0.0, %v438
        %v440 = vpop.f32.mrb[0].mxu0
        %v441 = vpop.f32.mrb[0].mxu0
        %v442 = vadd.f32 0.0, %v441
        %v443 = vpop.f32.mrb[0].mxu0
        %444 = vdwg.mxu0
        %v445 = vld [vmem:[%s267] sm:$0x1]
        %v446 = vmul.f32 %v445, 1e+30
        %v448 = vlaneseq
        %v449 = vshrl.u32 %v448, 7
        %v450 = vsub.s32 0, %v449
        %v451 = vrot.slane %v446, %v450
        %v453 = vsub.f32 %v415, %v451
        %v454 = vsub.f32 %v418, %v451
        %v455 = vsub.f32 %v423, %v451
        %v456 = vsub.f32 %v426, %v451
        %v457 = vsub.f32 %v431, %v451
        %v458 = vsub.f32 %v434, %v451
        %v459 = vsub.f32 %v439, %v451
        %v460 = vsub.f32 %v442, %v451
        %vm461 = vcmask 48128
        %v462 = vsel %vm461, %v453, -inf
        %463 = vmax.xlane.f32.xlu0 %v462
        %v464 = vpop.xlane.xlu0 %463
        %v465 = vsel %vm461, %v454, -inf
        %466 = vmax.xlane.f32.xlu0 %v465
        %v467 = vpop.xlane.xlu0 %466
        %v468 = vsel %vm461, %v455, -inf
        %469 = vmax.xlane.f32.xlu0 %v468
        %v470 = vpop.xlane.xlu0 %469
        %v471 = vsel %vm461, %v456, -inf
        %472 = vmax.xlane.f32.xlu0 %v471
        %v473 = vpop.xlane.xlu0 %472
        %v474 = vsel %vm461, %v457, -inf
        %475 = vmax.xlane.f32.xlu0 %v474
        %v476 = vpop.xlane.xlu0 %475
        %v477 = vsel %vm461, %v458, -inf
        %478 = vmax.xlane.f32.xlu0 %v477
        %v479 = vpop.xlane.xlu0 %478
        %v480 = vsel %vm461, %v459, -inf
        %481 = vmax.xlane.f32.xlu0 %v480
        %v482 = vpop.xlane.xlu0 %481
        %v483 = vsel %vm461, %v460, -inf
        %484 = vmax.xlane.f32.xlu0 %v483
        %v485 = vpop.xlane.xlu0 %484
        %v486 = vsub.f32 %v453, %v464
        %v487 = vsub.f32 %v454, %v467
        %v488 = vsub.f32 %v455, %v470
        %v489 = vsub.f32 %v456, %v473
        %v490 = vsub.f32 %v457, %v476
        %v491 = vsub.f32 %v458, %v479
        %v492 = vsub.f32 %v459, %v482
        %v493 = vsub.f32 %v460, %v485
        %v494 = vmul.f32 %v486, 1.442695
        %v495 = vpow.pop %v494
        %v496 = vmul.f32 %v487, 1.442695
        %v497 = vpow.pop %v496
        %v498 = vmul.f32 %v488, 1.442695
        %v499 = vpow.pop %v498
        %v500 = vmul.f32 %v489, 1.442695
        %v501 = vpow.pop %v500
        %v502 = vmul.f32 %v490, 1.442695
        %v503 = vpow.pop %v502
        %v504 = vmul.f32 %v491, 1.442695
        %v505 = vpow.pop %v504
        %v506 = vmul.f32 %v492, 1.442695
        %v507 = vpow.pop %v506
        %v508 = vmul.f32 %v493, 1.442695
        %v509 = vpow.pop %v508
        %v510 = vsel %vm461, %v495, 0.0
        %511 = vadd.xlane.f32.xlu0 %v510
        %v512 = vpop.xlane.xlu0 %511
        %v513 = vsel %vm461, %v497, 0.0
        %514 = vadd.xlane.f32.xlu0 %v513
        %v515 = vpop.xlane.xlu0 %514
        %v516 = vsel %vm461, %v499, 0.0
        %517 = vadd.xlane.f32.xlu0 %v516
        %v518 = vpop.xlane.xlu0 %517
        %v519 = vsel %vm461, %v501, 0.0
        %520 = vadd.xlane.f32.xlu0 %v519
        %v521 = vpop.xlane.xlu0 %520
        %v522 = vsel %vm461, %v503, 0.0
        %523 = vadd.xlane.f32.xlu0 %v522
        %v524 = vpop.xlane.xlu0 %523
        %v525 = vsel %vm461, %v505, 0.0
        %526 = vadd.xlane.f32.xlu0 %v525
        %v527 = vpop.xlane.xlu0 %526
        %v528 = vsel %vm461, %v507, 0.0
        %529 = vadd.xlane.f32.xlu0 %v528
        %v530 = vpop.xlane.xlu0 %529
        %v531 = vsel %vm461, %v509, 0.0
        %532 = vadd.xlane.f32.xlu0 %v531
        %v533 = vpop.xlane.xlu0 %532
        %v534 = vrcp.pop %v512
        %v535 = vrcp.pop %v515
        %v536 = vrcp.pop %v518
        %v537 = vrcp.pop %v521
        %v538 = vrcp.pop %v524
        %v539 = vrcp.pop %v527
        %v540 = vrcp.pop %v530
        %v541 = vrcp.pop %v533
        %v542 = vmul.f32 %v495, %v534
        %v543 = vmul.f32 %v497, %v535
        %v544 = vmul.f32 %v499, %v536
        %v545 = vmul.f32 %v501, %v537
        %v546 = vmul.f32 %v503, %v538
        %v547 = vmul.f32 %v505, %v539
        %v548 = vmul.f32 %v507, %v540
        %v549 = vmul.f32 %v509, %v541
        %v550 = vpack.c.bf16 %v543, %v542
        %v551 = vpack.c.bf16 %v545, %v544
        %v552 = vpack.c.bf16 %v547, %v546
        %v553 = vpack.c.bf16 %v549, %v548
        %v555 = vsel %vm461, %v550, 0
        %v558 = vsel %vm461, %v551, 0
        %v561 = vsel %vm461, %v552, 0
        %v564 = vsel %vm461, %v553, 0
        %vm566 = vcmask 1042432
        %v567 = vsel %vm566, %v363, 0
        %569 = vmatprep.subr.bf16.mxu0 0
        %570 = vmatpush1.bf16.msra.mxu0 %v567
        %571 = vmatprep.subr.bf16.mxu0 0
        %572 = vmatpush1.bf16.msra.mxu0 0
        %573 = vmatprep.subr.bf16.mxu0 0
        %574 = vmatpush1.bf16.msra.mxu0 0
        %575 = vmatprep.subr.bf16.mxu0 0
        %576 = vmatpush1.bf16.msra.mxu0 0
        %577 = vmatprep.subr.bf16.mxu0 0
        %578 = vmatpush1.bf16.msra.mxu0 0
        %579 = vmatprep.subr.bf16.mxu0 0
        %580 = vmatpush1.bf16.msra.mxu0 0
        %581 = vmatprep.subr.bf16.mxu0 0
        %582 = vmatpush1.bf16.msra.mxu0 0
        %583 = vmatprep.subr.bf16.mxu0 0
        %584 = vmatpush1.bf16.msra.mxu0 0
        %585 = vmatprep.subr.bf16.mxu0 0
        %586 = vmatpush1.bf16.msra.mxu0 0
        %587 = vmatprep.subr.bf16.mxu0 0
        %588 = vmatpush1.bf16.msra.mxu0 0
        %589 = vmatprep.subr.bf16.mxu0 0
        %590 = vmatpush1.bf16.msra.mxu0 0
        %591 = vmatprep.subr.bf16.mxu0 0
        %592 = vmatpush1.bf16.msra.mxu0 0
        %593 = vmatprep.subr.bf16.mxu0 0
        %594 = vmatpush1.bf16.msra.mxu0 0
        %595 = vmatprep.subr.bf16.mxu0 0
        %596 = vmatpush1.bf16.msra.mxu0 0
        %597 = vmatprep.subr.bf16.mxu0 0
        %598 = vmatpush1.bf16.msra.mxu0 0
        %599 = vmatprep.subr.bf16.mxu0 0
        %600 = vmatpush1.bf16.msra.mxu0 0
        %601 = vmatprep.mubr.bf16.mxu0 0
        %602 = vmatmul.mubr.bf16.gmra.mrb[0].mxu0 %v555
        %v603 = vpop.f32.mrb[0].mxu0
        %v604 = vadd.f32 0.0, %v603
        %v605 = vpop.f32.mrb[0].mxu0
        %v606 = vpop.f32.mrb[0].mxu0
        %v607 = vadd.f32 0.0, %v606
        %v608 = vpop.f32.mrb[0].mxu0
        %609 = vmatprep.mubr.bf16.mxu0 0
        %610 = vmatmul.mubr.bf16.gmra.mrb[0].mxu0 %v558
        %v611 = vpop.f32.mrb[0].mxu0
        %v612 = vadd.f32 0.0, %v611
        %v613 = vpop.f32.mrb[0].mxu0
        %v614 = vpop.f32.mrb[0].mxu0
        %v615 = vadd.f32 0.0, %v614
        %v616 = vpop.f32.mrb[0].mxu0
        %617 = vmatprep.mubr.bf16.mxu0 0
        %618 = vmatmul.mubr.bf16.gmra.mrb[0].mxu0 %v561
        %v619 = vpop.f32.mrb[0].mxu0
        %v620 = vadd.f32 0.0, %v619
        %v621 = vpop.f32.mrb[0].mxu0
        %v622 = vpop.f32.mrb[0].mxu0
        %v623 = vadd.f32 0.0, %v622
        %v624 = vpop.f32.mrb[0].mxu0
        %625 = vmatprep.mubr.bf16.mxu0 0
        %626 = vmatmul.mubr.bf16.gmra.mrb[0].mxu0 %v564
        %v627 = vpop.f32.mrb[0].mxu0
        %v628 = vadd.f32 0.0, %v627
        %v629 = vpop.f32.mrb[0].mxu0
        %v630 = vpop.f32.mrb[0].mxu0
        %v631 = vadd.f32 0.0, %v630
        %v632 = vpop.f32.mrb[0].mxu0
        %633 = vdwg.mxu0
        %634 = vst.msk [vmem:[%s300] sm:$0xff] %vm364, %v604
        %635 = vst.msk [vmem:[%s300 + $0x8] sm:$0xff] %vm364, %v607
        %636 = vst.msk [vmem:[%s300 + $0x10] sm:$0xff] %vm364, %v612
        %637 = vst.msk [vmem:[%s300 + $0x18] sm:$0xff] %vm364, %v615
        %638 = vst.msk [vmem:[%s300 + $0x20] sm:$0xff] %vm364, %v620
        %639 = vst.msk [vmem:[%s300 + $0x28] sm:$0xff] %vm364, %v623
        %640 = vst.msk [vmem:[%s300 + $0x30] sm:$0xff] %vm364, %v628
        %641 = vst.msk [vmem:[%s300 + $0x38] sm:$0xff] %vm364, %v631
        %s642 = sand.u32 %s134, 1
        %s643 = scalar_lea.sflag [#allocation4], %s642
        %s644 = sand.u32 %s134, 1
        %s645 = smul.addr %s644, 64
        %s646 = scalar_lea.vmem [#allocation10], %s645
        // Predicated region
        $region53: #{next_stage_g_forward.4} parent=35 // pred_check
          %p647 = pneg %p144
        $region54: #{next_stage_g_forward.4} parent=35 // pred_check_branch
          %649 = sbr.rel (%p647) target = $region56
        $region55: #{next_stage_g_forward.4} parent=35 // pred_region
          %s651 = ssub.s32 1024, 1024
          %652 = vsyncadd %s643, %s651
          %s653 = smul.addr %s27, 8
          %s654 = smul.addr %s653, 128
          %s655 = scalar_lea.hbm %s4, %s654
          %s656 = sshll.u32 %s646, 4
          %s657 = int_to_ptr.vmem [resolvable:$true] %s656
          %662 = dma.vmem_to_hbm [thread:$0]  %s657, 1024, %s655, %s643, 128, 128, 8
        $region56: #{next_stage_g_forward.4} parent=35 // pred_fallthru
          _
      $region36: #{next_stage_g_forward.4} parent=5 // pred_fallthru
        _
      %p663 = scmp.le.s32.totalorder 2, %s22
      // Predicated region
      $region57: #{next_stage_g_forward.4} parent=5 // pred_check
        %p664 = pneg %p663
      $region58: #{next_stage_g_forward.4} parent=5 // pred_check_branch
        %666 = sbr.rel (%p664) target = $region60
      $region59: #{next_stage_g_forward.4} parent=5 // pred_region
        %s667 = ssub.s32 %s22, 2
        // Predicated region
        $region61: #{next_stage_g_forward.4} parent=59 // pred_check
          %p668 = pneg %p150
        $region62: #{next_stage_g_forward.4} parent=59 // pred_check_branch
          %670 = sbr.rel (%p668) target = $region64
        $region63: #{next_stage_g_forward.4} parent=59 // pred_region
          %s671 = sand.u32 %s135, 1
          %s672 = scalar_lea.sflag [#allocation4], %s671
          %s673 = sand.u32 %s135, 1
          %s674 = smul.addr %s673, 64
          %s675 = scalar_lea.vmem [#allocation10], %s674
          %676 = dma.done %s672, 1024
        $region64: #{next_stage_g_forward.4} parent=59 // pred_fallthru
          _
      $region60: #{next_stage_g_forward.4} parent=5 // pred_fallthru
        _
    $region6: #{next_stage_g_forward.4} parent=1 // loop_footer
      %s26 = sadd.s32 1, %s22
    $region7: #{next_stage_g_forward.4} parent=1 // loop_footer_branch
      %21 = sbr.rel target = $region3
    $region8: #{next_stage_g_forward.4} parent=1 // loop_exit
      _
    %677 = vsyncpa [#allocation3], 1
    %s678 = scalar_lea.sflag [#allocation3], 1
    %679 = vsyncpa %s678, 1
    %680 = vsyncpa [#allocation6], 1
    %s681 = scalar_lea.sflag [#allocation6], 1
    %682 = vsyncpa %s681, 1
    %683 = vsyncpa [#allocation9], 1
    %s684 = scalar_lea.sflag [#allocation9], 1
    %685 = vsyncpa %s684, 1
    %686 = vsyncpa [#allocation4], 1
    %s687 = scalar_lea.sflag [#allocation4], 1
    %688 = vsyncpa %s687, 1

// kernel: next_stage_g_forward.5
$region0: #{next_stage_g_forward.5}
  #allocation0 [shape = 'u32[]', space=smem, size = 0x4, offset = 0x4, fixed_abs, tag = 'smem constant byte address 0x4 - core index']
  #allocation1 [shape = 'u32[144,128]{1,0:T(1,128)}', space=vmem, size = 0x12000, scoped, tag = 'internal scratch']
  %s0 = inlined_call_operand.hbm [shape: f32[2,8,8,8], index: 0, kind: input, shape index: {}]
  %s1 = inlined_call_operand.hbm [shape: f32[2,8,8,8], index: 1, kind: input, shape index: {}]
  %s2 = inlined_call_operand.hbm [shape: f32[3,48,16], index: 2, kind: input, shape index: {}]
  %s3 = inlined_call_operand.hbm [shape: f32[1,16], index: 3, kind: input, shape index: {}]
  %s4 = inlined_call_operand.hbm [shape: f32[1,16], index: 4, kind: input, shape index: {}]
  %s5 = inlined_call_operand.hbm [shape: f32[3,48,16], index: 5, kind: input, shape index: {}]
  %s6 = inlined_call_operand.hbm [shape: f32[1,16], index: 6, kind: input, shape index: {}]
  %s7 = inlined_call_operand.hbm [shape: f32[1,16], index: 7, kind: input, shape index: {}]
  %s8 = inlined_call_operand.hbm [shape: f32[2,8,8,16], index: 8, kind: output, shape index: {}]
  %s9 = sld [smem:[#allocation0]]
  $region97: #{next_stage_g_forward.5} parent=0
    _
  %s11 = ssub.s32 1, %s9
  %s12 = scalar_select 0, %s11, %s9
  $region1: #{next_stage_g_forward.5} parent=0
    #allocation2 [shape = 'u8[65536]{0}', space=vmem, size = 0x10000, scoped, tag = 'input window, operand 0']
    #allocation3 [shape = 's32[2]{0}', space=sflag, size = 0x8, scoped, tag = 'scoped memory for next_stage_g_forward.5']
    #allocation4 [shape = 's32[2]{0}', space=sflag, size = 0x8, scoped, tag = 'scoped memory for next_stage_g_forward.5']
    #allocation5 [shape = 'u8[65536]{0}', space=vmem, size = 0x10000, scoped, tag = 'input window, operand 1']
    #allocation6 [shape = 's32[2]{0}', space=sflag, size = 0x8, scoped, tag = 'scoped memory for next_stage_g_forward.5']
    #allocation7 [shape = 'u8[73728]{0}', space=vmem, size = 0x12000, scoped, tag = 'input window, operand 2, single buffered']
    #allocation8 [shape = 'u8[512]{0}', space=vmem, size = 0x400, scoped, tag = 'input window, operand 3, single buffered']
    #allocation9 [shape = 's32[1]{0}', space=sflag, size = 0x4, scoped, tag = 'scoped memory for next_stage_g_forward.5']
    #allocation10 [shape = 'u8[512]{0}', space=vmem, size = 0x400, scoped, tag = 'input window, operand 4, single buffered']
    #allocation11 [shape = 'u8[73728]{0}', space=vmem, size = 0x12000, scoped, tag = 'input window, operand 5, single buffered']
    #allocation12 [shape = 's32[1]{0}', space=sflag, size = 0x4, scoped, tag = 'scoped memory for next_stage_g_forward.5']
    #allocation13 [shape = 'u8[512]{0}', space=vmem, size = 0x400, scoped, tag = 'input window, operand 6, single buffered']
    #allocation14 [shape = 'u8[512]{0}', space=vmem, size = 0x400, scoped, tag = 'input window, operand 7, single buffered']
    #allocation15 [shape = 's32[1]{0}', space=sflag, size = 0x4, scoped, tag = 'scoped memory for next_stage_g_forward.5']
    #allocation16 [shape = 'u8[65536]{0}', space=vmem, size = 0x10000, scoped, tag = 'output window, operand 0']
    %13 = vsyncpa [#allocation3], 0
    %s14 = scalar_lea.sflag [#allocation3], 1
    %15 = vsyncpa %s14, 0
    %16 = vsyncpa [#allocation6], 0
    %s17 = scalar_lea.sflag [#allocation6], 1
    %18 = vsyncpa %s17, 0
    %19 = vsyncpa [#allocation9], 0
    %20 = vsyncpa [#allocation12], 0
    %21 = vsyncpa [#allocation15], 0
    %22 = vsyncpa [#allocation4], 0
    %s23 = scalar_lea.sflag [#allocation4], 1
    %24 = vsyncpa %s23, 0
    loop: start=0, step=1, limit=4
    $region2: #{next_stage_g_forward.5} parent=1 // loop_pre_header
      _
    $region3: #{next_stage_g_forward.5} parent=1 // loop_header
      %s26 = sphi 0, %s30
      %p27 = scmp.ge.s32.totalorder %s26, 4
      %s36 = sphi 0, %s38
      %s39 = sphi 0, %s36
      %s40 = sphi 0, %s39
      %s56 = sphi 0, %s40
      %s62 = sphi 0, %s64
      %s65 = sphi 0, %s62
      %s66 = sphi 0, %s65
      %s82 = sphi 0, %s66
      %s86 = sphi 0, %s86
      %s88 = sphi 0, %s86
      %s89 = sphi 0, %s88
      %s103 = sphi 0, %s89
      %s107 = sphi 0, %s107
      %s109 = sphi 0, %s107
      %s110 = sphi 0, %s109
      %s124 = sphi 0, %s110
      %s128 = sphi 0, %s128
      %s130 = sphi 0, %s128
      %s131 = sphi 0, %s130
      %s145 = sphi 0, %s131
      %s149 = sphi 0, %s149
      %s151 = sphi 0, %s149
      %s152 = sphi 0, %s151
      %s166 = sphi 0, %s152
      %s170 = sphi 0, %s170
      %s172 = sphi 0, %s170
      %s173 = sphi 0, %s172
      %s187 = sphi 0, %s173
      %s191 = sphi 0, %s191
      %s193 = sphi 0, %s191
      %s194 = sphi 0, %s193
      %s208 = sphi 0, %s194
      %s214 = sphi 0, %s216
      %s217 = sphi 0, %s214
      %s218 = sphi 0, %s217
      %s234 = sphi 0, %s218
    $region4: #{next_stage_g_forward.5} parent=1 // loop_header_branch
      %29 = sbr.rel (%p27) target = $region8
    $region5: #{next_stage_g_forward.5} parent=1 // loop_body
      %s31 = ssub.s32 %s26, 1
      %s32 = ssub.s32 %s26, 2
      %s33 = sadd.s32 %s26, 1
      %s34 = ssub.s32 %s26, %s33
      %p35 = scmp.eq.s32.totalorder %s34, 0
      %s37 = sadd.s32 %s36, 1
      %s38 = scalar_select %p35, %s36, %s37
      %p41 = pneg %p35
      %p42 = scmp.eq.s32.totalorder %s26, 1
      %p43 = por %p41, %p42
      %p44 = scmp.ne.s32.totalorder %s36, %s39
      %p45 = scmp.eq.s32.totalorder %s26, 0
      %p46 = por %p44, %p45
      %p47 = scmp.ne.s32.totalorder %s36, %s39
      %p48 = scmp.eq.s32.totalorder %s31, 1
      %p49 = por %p47, %p48
      %p50 = scmp.ne.s32.totalorder %s39, %s40
      %p51 = scmp.eq.s32.totalorder %s31, 0
      %p52 = por %p50, %p51
      %p53 = scmp.ne.s32.totalorder %s39, %s40
      %p54 = scmp.eq.s32.totalorder %s32, 1
      %p55 = por %p53, %p54
      %p57 = scmp.ne.s32.totalorder %s40, %s56
      %p58 = scmp.eq.s32.totalorder %s32, 0
      %p59 = por %p57, %p58
      %s60 = ssub.s32 %s26, %s33
      %p61 = scmp.eq.s32.totalorder %s60, 0
      %s63 = sadd.s32 %s62, 1
      %s64 = scalar_select %p61, %s62, %s63
      %p67 = pneg %p61
      %p68 = scmp.eq.s32.totalorder %s26, 1
      %p69 = por %p67, %p68
      %p70 = scmp.ne.s32.totalorder %s62, %s65
      %p71 = scmp.eq.s32.totalorder %s26, 0
      %p72 = por %p70, %p71
      %p73 = scmp.ne.s32.totalorder %s62, %s65
      %p74 = scmp.eq.s32.totalorder %s31, 1
      %p75 = por %p73, %p74
      %p76 = scmp.ne.s32.totalorder %s65, %s66
      %p77 = scmp.eq.s32.totalorder %s31, 0
      %p78 = por %p76, %p77
      %p79 = scmp.ne.s32.totalorder %s65, %s66
      %p80 = scmp.eq.s32.totalorder %s32, 1
      %p81 = por %p79, %p80
      %p83 = scmp.ne.s32.totalorder %s66, %s82
      %p84 = scmp.eq.s32.totalorder %s32, 0
      %p85 = por %p83, %p84
      %s87 = sadd.s32 %s86, 1
      %p90 = scmp.eq.s32.totalorder %s26, 1
      %p91 = scmp.ne.s32.totalorder %s86, %s88
      %p92 = scmp.eq.s32.totalorder %s26, 0
      %p93 = por %p91, %p92
      %p94 = scmp.ne.s32.totalorder %s86, %s88
      %p95 = scmp.eq.s32.totalorder %s31, 1
      %p96 = por %p94, %p95
      %p97 = scmp.ne.s32.totalorder %s88, %s89
      %p98 = scmp.eq.s32.totalorder %s31, 0
      %p99 = por %p97, %p98
      %p100 = scmp.ne.s32.totalorder %s88, %s89
      %p101 = scmp.eq.s32.totalorder %s32, 1
      %p102 = por %p100, %p101
      %p104 = scmp.ne.s32.totalorder %s89, %s103
      %p105 = scmp.eq.s32.totalorder %s32, 0
      %p106 = por %p104, %p105
      %s108 = sadd.s32 %s107, 1
      %p111 = scmp.eq.s32.totalorder %s26, 1
      %p112 = scmp.ne.s32.totalorder %s107, %s109
      %p113 = scmp.eq.s32.totalorder %s26, 0
      %p114 = por %p112, %p113
      %p115 = scmp.ne.s32.totalorder %s107, %s109
      %p116 = scmp.eq.s32.totalorder %s31, 1
      %p117 = por %p115, %p116
      %p118 = scmp.ne.s32.totalorder %s109, %s110
      %p119 = scmp.eq.s32.totalorder %s31, 0
      %p120 = por %p118, %p119
      %p121 = scmp.ne.s32.totalorder %s109, %s110
      %p122 = scmp.eq.s32.totalorder %s32, 1
      %p123 = por %p121, %p122
      %p125 = scmp.ne.s32.totalorder %s110, %s124
      %p126 = scmp.eq.s32.totalorder %s32, 0
      %p127 = por %p125, %p126
      %s129 = sadd.s32 %s128, 1
      %p132 = scmp.eq.s32.totalorder %s26, 1
      %p133 = scmp.ne.s32.totalorder %s128, %s130
      %p134 = scmp.eq.s32.totalorder %s26, 0
      %p135 = por %p133, %p134
      %p136 = scmp.ne.s32.totalorder %s128, %s130
      %p137 = scmp.eq.s32.totalorder %s31, 1
      %p138 = por %p136, %p137
      %p139 = scmp.ne.s32.totalorder %s130, %s131
      %p140 = scmp.eq.s32.totalorder %s31, 0
      %p141 = por %p139, %p140
      %p142 = scmp.ne.s32.totalorder %s130, %s131
      %p143 = scmp.eq.s32.totalorder %s32, 1
      %p144 = por %p142, %p143
      %p146 = scmp.ne.s32.totalorder %s131, %s145
      %p147 = scmp.eq.s32.totalorder %s32, 0
      %p148 = por %p146, %p147
      %s150 = sadd.s32 %s149, 1
      %p153 = scmp.eq.s32.totalorder %s26, 1
      %p154 = scmp.ne.s32.totalorder %s149, %s151
      %p155 = scmp.eq.s32.totalorder %s26, 0
      %p156 = por %p154, %p155
      %p157 = scmp.ne.s32.totalorder %s149, %s151
      %p158 = scmp.eq.s32.totalorder %s31, 1
      %p159 = por %p157, %p158
      %p160 = scmp.ne.s32.totalorder %s151, %s152
      %p161 = scmp.eq.s32.totalorder %s31, 0
      %p162 = por %p160, %p161
      %p163 = scmp.ne.s32.totalorder %s151, %s152
      %p164 = scmp.eq.s32.totalorder %s32, 1
      %p165 = por %p163, %p164
      %p167 = scmp.ne.s32.totalorder %s152, %s166
      %p168 = scmp.eq.s32.totalorder %s32, 0
      %p169 = por %p167, %p168
      %s171 = sadd.s32 %s170, 1
      %p174 = scmp.eq.s32.totalorder %s26, 1
      %p175 = scmp.ne.s32.totalorder %s170, %s172
      %p176 = scmp.eq.s32.totalorder %s26, 0
      %p177 = por %p175, %p176
      %p178 = scmp.ne.s32.totalorder %s170, %s172
      %p179 = scmp.eq.s32.totalorder %s31, 1
      %p180 = por %p178, %p179
      %p181 = scmp.ne.s32.totalorder %s172, %s173
      %p182 = scmp.eq.s32.totalorder %s31, 0
      %p183 = por %p181, %p182
      %p184 = scmp.ne.s32.totalorder %s172, %s173
      %p185 = scmp.eq.s32.totalorder %s32, 1
      %p186 = por %p184, %p185
      %p188 = scmp.ne.s32.totalorder %s173, %s187
      %p189 = scmp.eq.s32.totalorder %s32, 0
      %p190 = por %p188, %p189
      %s192 = sadd.s32 %s191, 1
      %p195 = scmp.eq.s32.totalorder %s26, 1
      %p196 = scmp.ne.s32.totalorder %s191, %s193
      %p197 = scmp.eq.s32.totalorder %s26, 0
      %p198 = por %p196, %p197
      %p199 = scmp.ne.s32.totalorder %s191, %s193
      %p200 = scmp.eq.s32.totalorder %s31, 1
      %p201 = por %p199, %p200
      %p202 = scmp.ne.s32.totalorder %s193, %s194
      %p203 = scmp.eq.s32.totalorder %s31, 0
      %p204 = por %p202, %p203
      %p205 = scmp.ne.s32.totalorder %s193, %s194
      %p206 = scmp.eq.s32.totalorder %s32, 1
      %p207 = por %p205, %p206
      %p209 = scmp.ne.s32.totalorder %s194, %s208
      %p210 = scmp.eq.s32.totalorder %s32, 0
      %p211 = por %p209, %p210
      %s212 = ssub.s32 %s26, %s33
      %p213 = scmp.eq.s32.totalorder %s212, 0
      %s215 = sadd.s32 %s214, 1
      %s216 = scalar_select %p213, %s214, %s215
      %p219 = pneg %p213
      %p220 = scmp.eq.s32.totalorder %s26, 1
      %p221 = por %p219, %p220
      %p222 = scmp.ne.s32.totalorder %s214, %s217
      %p223 = scmp.eq.s32.totalorder %s26, 0
      %p224 = por %p222, %p223
      %p225 = scmp.ne.s32.totalorder %s214, %s217
      %p226 = scmp.eq.s32.totalorder %s31, 1
      %p227 = por %p225, %p226
      %p228 = scmp.ne.s32.totalorder %s217, %s218
      %p229 = scmp.eq.s32.totalorder %s31, 0
      %p230 = por %p228, %p229
      %p231 = scmp.ne.s32.totalorder %s217, %s218
      %p232 = scmp.eq.s32.totalorder %s32, 1
      %p233 = por %p231, %p232
      %p235 = scmp.ne.s32.totalorder %s218, %s234
      %p236 = scmp.eq.s32.totalorder %s32, 0
      %p237 = por %p235, %p236
      %p238 = scmp.le.s32.totalorder 1, %s26
      %p239 = scmp.lt.s32.totalorder %s26, 3
      %p240 = pnand %p238, %p239
      %p241 = pneg %p240
      // Predicated region
      $region9: #{next_stage_g_forward.5} parent=5 // pred_check
        _
      $region10: #{next_stage_g_forward.5} parent=5 // pred_check_branch
        %243 = sbr.rel (%p240) target = $region12
      $region11: #{next_stage_g_forward.5} parent=5 // pred_region
        %s244 = ssub.s32 %s26, 1
        // Predicated region
        $region13: #{next_stage_g_forward.5} parent=11 // pred_check
          %p245 = pneg %p99
        $region14: #{next_stage_g_forward.5} parent=11 // pred_check_branch
          %247 = sbr.rel (%p245) target = $region16
        $region15: #{next_stage_g_forward.5} parent=11 // pred_region
          %s249 = ssub.s32 2304, 2304
          %250 = vsyncadd [#allocation6], %s249
          %s251 = sshll.u32 [#allocation7], 4
          %s252 = int_to_ptr.vmem [resolvable:$true] %s251
          %257 = dma.hbm_to_vmem [thread:$0]  %s2, 2304, %s252, [#allocation6], 128, 128, 8
        $region16: #{next_stage_g_forward.5} parent=11 // pred_fallthru
          _
        // Predicated region
        $region17: #{next_stage_g_forward.5} parent=11 // pred_check
          %p258 = pneg %p120
        $region18: #{next_stage_g_forward.5} parent=11 // pred_check_branch
          %260 = sbr.rel (%p258) target = $region20
        $region19: #{next_stage_g_forward.5} parent=11 // pred_region
          %s262 = ssub.s32 16, 16
          %263 = vsyncadd [#allocation9], %s262
          %s265 = sshll.u32 [#allocation8], 4
          %s266 = int_to_ptr.vmem [resolvable:$true] %s265
          %268 = dma.hbm_to_vmem [thread:$0]  %s3, 16, %s266, [#allocation9]
        $region20: #{next_stage_g_forward.5} parent=11 // pred_fallthru
          _
        // Predicated region
        $region21: #{next_stage_g_forward.5} parent=11 // pred_check
          %p269 = pneg %p141
        $region22: #{next_stage_g_forward.5} parent=11 // pred_check_branch
          %271 = sbr.rel (%p269) target = $region24
        $region23: #{next_stage_g_forward.5} parent=11 // pred_region
          %s273 = ssub.s32 16, 16
          %274 = vsyncadd [#allocation9], %s273
          %s276 = sshll.u32 [#allocation10], 4
          %s277 = int_to_ptr.vmem [resolvable:$true] %s276
          %279 = dma.hbm_to_vmem [thread:$0]  %s4, 16, %s277, [#allocation9]
        $region24: #{next_stage_g_forward.5} parent=11 // pred_fallthru
          _
        // Predicated region
        $region25: #{next_stage_g_forward.5} parent=11 // pred_check
          %p280 = pneg %p162
        $region26: #{next_stage_g_forward.5} parent=11 // pred_check_branch
          %282 = sbr.rel (%p280) target = $region28
        $region27: #{next_stage_g_forward.5} parent=11 // pred_region
          %s284 = ssub.s32 2304, 2304
          %285 = vsyncadd [#allocation12], %s284
          %s286 = sshll.u32 [#allocation11], 4
          %s287 = int_to_ptr.vmem [resolvable:$true] %s286
          %292 = dma.hbm_to_vmem [thread:$0]  %s5, 2304, %s287, [#allocation12], 128, 128, 8
        $region28: #{next_stage_g_forward.5} parent=11 // pred_fallthru
          _
        // Predicated region
        $region29: #{next_stage_g_forward.5} parent=11 // pred_check
          %p293 = pneg %p183
        $region30: #{next_stage_g_forward.5} parent=11 // pred_check_branch
          %295 = sbr.rel (%p293) target = $region32
        $region31: #{next_stage_g_forward.5} parent=11 // pred_region
          %s297 = ssub.s32 16, 16
          %298 = vsyncadd [#allocation12], %s297
          %s300 = sshll.u32 [#allocation13], 4
          %s301 = int_to_ptr.vmem [resolvable:$true] %s300
          %303 = dma.hbm_to_vmem [thread:$0]  %s6, 16, %s301, [#allocation12]
        $region32: #{next_stage_g_forward.5} parent=11 // pred_fallthru
          _
        // Predicated region
        $region33: #{next_stage_g_forward.5} parent=11 // pred_check
          %p304 = pneg %p204
        $region34: #{next_stage_g_forward.5} parent=11 // pred_check_branch
          %306 = sbr.rel (%p304) target = $region36
        $region35: #{next_stage_g_forward.5} parent=11 // pred_region
          %s308 = ssub.s32 16, 16
          %309 = vsyncadd [#allocation15], %s308
          %s311 = sshll.u32 [#allocation14], 4
          %s312 = int_to_ptr.vmem [resolvable:$true] %s311
          %314 = dma.hbm_to_vmem [thread:$0]  %s7, 16, %s312, [#allocation15]
        $region36: #{next_stage_g_forward.5} parent=11 // pred_fallthru
          _
      $region12: #{next_stage_g_forward.5} parent=5 // pred_fallthru
        _
      %p315 = scmp.lt.s32.totalorder %s26, 2
      // Predicated region
      $region37: #{next_stage_g_forward.5} parent=5 // pred_check
        %p316 = pneg %p315
      $region38: #{next_stage_g_forward.5} parent=5 // pred_check_branch
        %318 = sbr.rel (%p316) target = $region40
      $region39: #{next_stage_g_forward.5} parent=5 // pred_region
        // Predicated region
        $region41: #{next_stage_g_forward.5} parent=39 // pred_check
          %p319 = pneg %p46
        $region42: #{next_stage_g_forward.5} parent=39 // pred_check_branch
          %321 = sbr.rel (%p319) target = $region44
        $region43: #{next_stage_g_forward.5} parent=39 // pred_region
          %s322 = sand.u32 %s36, 1
          %s323 = scalar_lea.sflag [#allocation3], %s322
          %s324 = sand.u32 %s36, 1
          %s325 = smul.addr %s324, 64
          %s326 = scalar_lea.vmem [#allocation2], %s325
          %s328 = ssub.s32 1024, 1024
          %329 = vsyncadd %s323, %s328
          %s330 = smul.addr %s26, 8
          %s331 = smul.addr %s330, 128
          %s332 = scalar_lea.hbm %s0, %s331
          %s333 = sshll.u32 %s326, 4
          %s334 = int_to_ptr.vmem [resolvable:$true] %s333
          %339 = dma.hbm_to_vmem [thread:$0]  %s332, 1024, %s334, %s323, 128, 128, 8
        $region44: #{next_stage_g_forward.5} parent=39 // pred_fallthru
          _
        // Predicated region
        $region45: #{next_stage_g_forward.5} parent=39 // pred_check
          %p340 = pneg %p72
        $region46: #{next_stage_g_forward.5} parent=39 // pred_check_branch
          %342 = sbr.rel (%p340) target = $region48
        $region47: #{next_stage_g_forward.5} parent=39 // pred_region
          %s343 = sand.u32 %s26, 1
          %s344 = scalar_lea.sflag [#allocation6], %s343
          %s345 = sand.u32 %s62, 1
          %s346 = smul.addr %s345, 64
          %s347 = scalar_lea.vmem [#allocation5], %s346
          %s349 = ssub.s32 1024, 1024
          %350 = vsyncadd %s344, %s349
          %s351 = smul.addr %s26, 8
          %s352 = smul.addr %s351, 128
          %s353 = scalar_lea.hbm %s1, %s352
          %s354 = sshll.u32 %s347, 4
          %s355 = int_to_ptr.vmem [resolvable:$true] %s354
          %360 = dma.hbm_to_vmem [thread:$0]  %s353, 1024, %s355, %s344, 128, 128, 8
        $region48: #{next_stage_g_forward.5} parent=39 // pred_fallthru
          _
      $region40: #{next_stage_g_forward.5} parent=5 // pred_fallthru
        _
      %p361 = scmp.le.s32.totalorder 1, %s26
      %p362 = scmp.lt.s32.totalorder %s26, 3
      %p363 = pnand %p361, %p362
      %p364 = pneg %p363
      // Predicated region
      $region49: #{next_stage_g_forward.5} parent=5 // pred_check
        _
      $region50: #{next_stage_g_forward.5} parent=5 // pred_check_branch
        %366 = sbr.rel (%p363) target = $region52
      $region51: #{next_stage_g_forward.5} parent=5 // pred_region
        %s367 = ssub.s32 %s26, 1
        %s368 = sand.u32 %s39, 1
        %s369 = scalar_lea.sflag [#allocation3], %s368
        %s370 = sand.u32 %s39, 1
        %s371 = smul.addr %s370, 64
        %s372 = scalar_lea.vmem [#allocation2], %s371
        // Predicated region
        $region53: #{next_stage_g_forward.5} parent=51 // pred_check
          %p373 = pneg %p52
        $region54: #{next_stage_g_forward.5} parent=51 // pred_check_branch
          %375 = sbr.rel (%p373) target = $region56
        $region55: #{next_stage_g_forward.5} parent=51 // pred_region
          %376 = dma.done %s369, 1024
        $region56: #{next_stage_g_forward.5} parent=51 // pred_fallthru
          _
        %s377 = sand.u32 %s31, 1
        %s378 = scalar_lea.sflag [#allocation6], %s377
        %s379 = sand.u32 %s65, 1
        %s380 = smul.addr %s379, 64
        %s381 = scalar_lea.vmem [#allocation5], %s380
        // Predicated region
        $region57: #{next_stage_g_forward.5} parent=51 // pred_check
          %p382 = pneg %p78
        $region58: #{next_stage_g_forward.5} parent=51 // pred_check_branch
          %384 = sbr.rel (%p382) target = $region60
        $region59: #{next_stage_g_forward.5} parent=51 // pred_region
          %385 = dma.done %s378, 1024
        $region60: #{next_stage_g_forward.5} parent=51 // pred_fallthru
          _
        // Predicated region
        $region61: #{next_stage_g_forward.5} parent=51 // pred_check
          %p386 = pneg %p99
        $region62: #{next_stage_g_forward.5} parent=51 // pred_check_branch
          %388 = sbr.rel (%p386) target = $region64
        $region63: #{next_stage_g_forward.5} parent=51 // pred_region
          %389 = dma.done [#allocation6], 2304
        $region64: #{next_stage_g_forward.5} parent=51 // pred_fallthru
          _
        // Predicated region
        $region65: #{next_stage_g_forward.5} parent=51 // pred_check
          %p390 = pneg %p120
        $region66: #{next_stage_g_forward.5} parent=51 // pred_check_branch
          %392 = sbr.rel (%p390) target = $region68
        $region67: #{next_stage_g_forward.5} parent=51 // pred_region
          %393 = dma.done [#allocation9], 16
        $region68: #{next_stage_g_forward.5} parent=51 // pred_fallthru
          _
        // Predicated region
        $region69: #{next_stage_g_forward.5} parent=51 // pred_check
          %p394 = pneg %p141
        $region70: #{next_stage_g_forward.5} parent=51 // pred_check_branch
          %396 = sbr.rel (%p394) target = $region72
        $region71: #{next_stage_g_forward.5} parent=51 // pred_region
          %397 = dma.done [#allocation9], 16
        $region72: #{next_stage_g_forward.5} parent=51 // pred_fallthru
          _
        // Predicated region
        $region73: #{next_stage_g_forward.5} parent=51 // pred_check
          %p398 = pneg %p162
        $region74: #{next_stage_g_forward.5} parent=51 // pred_check_branch
          %400 = sbr.rel (%p398) target = $region76
        $region75: #{next_stage_g_forward.5} parent=51 // pred_region
          %401 = dma.done [#allocation12], 2304
        $region76: #{next_stage_g_forward.5} parent=51 // pred_fallthru
          _
        // Predicated region
        $region77: #{next_stage_g_forward.5} parent=51 // pred_check
          %p402 = pneg %p183
        $region78: #{next_stage_g_forward.5} parent=51 // pred_check_branch
          %404 = sbr.rel (%p402) target = $region80
        $region79: #{next_stage_g_forward.5} parent=51 // pred_region
          %405 = dma.done [#allocation12], 16
        $region80: #{next_stage_g_forward.5} parent=51 // pred_fallthru
          _
        // Predicated region
        $region81: #{next_stage_g_forward.5} parent=51 // pred_check
          %p406 = pneg %p204
        $region82: #{next_stage_g_forward.5} parent=51 // pred_check_branch
          %408 = sbr.rel (%p406) target = $region84
        $region83: #{next_stage_g_forward.5} parent=51 // pred_region
          %409 = dma.done [#allocation15], 16
        $region84: #{next_stage_g_forward.5} parent=51 // pred_fallthru
          _
        %s410 = sand.u32 %s39, 1
        %s411 = scalar_lea.sflag [#allocation3], %s410
        %s412 = sand.u32 %s39, 1
        %s413 = smul.addr %s412, 64
        %s414 = scalar_lea.vmem [#allocation2], %s413
        %p415 = pneg %p52
        %p416 = pneg %p49
        %s417 = sand.u32 %s31, 1
        %s418 = scalar_lea.sflag [#allocation6], %s417
        %s419 = sand.u32 %s65, 1
        %s420 = smul.addr %s419, 64
        %s421 = scalar_lea.vmem [#allocation5], %s420
        %p422 = pneg %p78
        %p423 = pneg %p75
        %p424 = pneg %p99
        %p425 = pneg %p96
        %p426 = pneg %p120
        %p427 = pneg %p117
        %p428 = pneg %p141
        %p429 = pneg %p138
        %p430 = pneg %p162
        %p431 = pneg %p159
        %p432 = pneg %p183
        %p433 = pneg %p180
        %p434 = pneg %p204
        %p435 = pneg %p201
        %p436 = pneg %p230
        %p437 = pneg %p227
        %s438 = sand.u32 %s217, 1
        %s439 = scalar_lea.sflag [#allocation4], %s438
        %s440 = sand.u32 %s217, 1
        %s441 = smul.addr %s440, 64
        %s442 = scalar_lea.vmem [#allocation16], %s441
        %v444 = vld [vmem:[%s372] sm:$0xff]
        %v445 = vld [vmem:[%s372 + $0x8] sm:$0xff]
        %v446 = vld [vmem:[%s372 + $0x10] sm:$0xff]
        %v447 = vld [vmem:[%s372 + $0x18] sm:$0xff]
        %v448 = vld [vmem:[%s372 + $0x20] sm:$0xff]
        %v449 = vld [vmem:[%s372 + $0x28] sm:$0xff]
        %v450 = vld [vmem:[%s372 + $0x30] sm:$0xff]
        %v451 = vld [vmem:[%s372 + $0x38] sm:$0xff]
        %v452 = vld [vmem:[%s381] sm:$0xff]
        %v453 = vld [vmem:[%s381 + $0x8] sm:$0xff]
        %v454 = vld [vmem:[%s381 + $0x10] sm:$0xff]
        %v455 = vld [vmem:[%s381 + $0x18] sm:$0xff]
        %v456 = vld [vmem:[%s381 + $0x20] sm:$0xff]
        %v457 = vld [vmem:[%s381 + $0x28] sm:$0xff]
        %v458 = vld [vmem:[%s381 + $0x30] sm:$0xff]
        %v459 = vld [vmem:[%s381 + $0x38] sm:$0xff]
        %468 = vrot.lane.b32.xlu0 %v452, 8
        %v469 = vpop.permute.xlu0 %468
        %470 = vrot.lane.b32.xlu0 %v453, 8
        %v471 = vpop.permute.xlu0 %470
        %472 = vrot.lane.b32.xlu0 %v454, 8
        %v473 = vpop.permute.xlu0 %472
        %474 = vrot.lane.b32.xlu0 %v455, 8
        %v475 = vpop.permute.xlu0 %474
        %476 = vrot.lane.b32.xlu0 %v456, 8
        %v477 = vpop.permute.xlu0 %476
        %478 = vrot.lane.b32.xlu0 %v457, 8
        %v479 = vpop.permute.xlu0 %478
        %480 = vrot.lane.b32.xlu0 %v458, 8
        %v481 = vpop.permute.xlu0 %480
        %482 = vrot.lane.b32.xlu0 %v459, 8
        %v483 = vpop.permute.xlu0 %482
        %vm492 = vcmask 64512
        %v493 = vsel %vm492, %v444, %v469
        %v494 = vsel %vm492, %v445, %v471
        %v495 = vsel %vm492, %v446, %v473
        %v496 = vsel %vm492, %v447, %v475
        %v497 = vsel %vm492, %v448, %v477
        %v498 = vsel %vm492, %v449, %v479
        %v499 = vsel %vm492, %v450, %v481
        %v500 = vsel %vm492, %v451, %v483
        %v501 = vpack.c.bf16 %v493, %v493
        %v502 = vpack.c.bf16 %v494, %v494
        %v503 = vpack.c.bf16 %v495, %v495
        %v504 = vpack.c.bf16 %v496, %v496
        %v505 = vpack.c.bf16 %v497, %v497
        %v506 = vpack.c.bf16 %v498, %v498
        %v507 = vpack.c.bf16 %v499, %v499
        %v508 = vpack.c.bf16 %v500, %v500
        %v510 = vshrl.u32 0, 16
        %v512 = vrot.slane %v510, 7
        %v513 = vshll.u32 0, 16
        %v515 = vor.u32 %v512, %v513
        %v517 = vshrl.u32 %v501, 16
        %v519 = vrot.slane %v517, 7
        %v520 = vshll.u32 %v501, 16
        %v522 = vor.u32 %v519, %v520
        %v524 = vshrl.u32 %v502, 16
        %v526 = vrot.slane %v524, 7
        %v527 = vshll.u32 %v502, 16
        %v529 = vor.u32 %v526, %v527
        %v531 = vshrl.u32 %v503, 16
        %v533 = vrot.slane %v531, 7
        %v534 = vshll.u32 %v503, 16
        %v536 = vor.u32 %v533, %v534
        %v538 = vshrl.u32 %v504, 16
        %v540 = vrot.slane %v538, 7
        %v541 = vshll.u32 %v504, 16
        %v543 = vor.u32 %v540, %v541
        %v545 = vshrl.u32 %v505, 16
        %v547 = vrot.slane %v545, 7
        %v548 = vshll.u32 %v505, 16
        %v550 = vor.u32 %v547, %v548
        %v552 = vshrl.u32 %v506, 16
        %v554 = vrot.slane %v552, 7
        %v555 = vshll.u32 %v506, 16
        %v557 = vor.u32 %v554, %v555
        %v559 = vshrl.u32 %v507, 16
        %v561 = vrot.slane %v559, 7
        %v562 = vshll.u32 %v507, 16
        %v564 = vor.u32 %v561, %v562
        %v566 = vshrl.u32 %v508, 16
        %v568 = vrot.slane %v566, 7
        %v569 = vshll.u32 %v508, 16
        %v571 = vor.u32 %v568, %v569
        %vm581 = vcmask 1040384
        %vm582 = vsmask.f32 256
        %vm583 = vmand %vm581, %vm582
        %v584 = vsel %vm583, 0, %v515
        %v585 = vsel %vm583, 0, %v522
        %v586 = vsel %vm583, 0, %v529
        %v587 = vsel %vm583, 0, %v536
        %v588 = vsel %vm583, 0, %v543
        %v589 = vsel %vm583, 0, %v550
        %v590 = vsel %vm583, 0, %v557
        %v591 = vsel %vm583, 0, %v564
        %v592 = vsel %vm583, 0, %v571
        %vm593 = vcmask 1044480
        %vm594 = vsmask.f32 4352
        %vm595 = vmand %vm593, %vm594
        %v596 = vsel %vm595, %v584, 0
        %v597 = vsel %vm595, %v585, 0
        %v598 = vsel %vm595, %v586, 0
        %v599 = vsel %vm595, %v587, 0
        %v600 = vsel %vm595, %v588, 0
        %v601 = vsel %vm595, %v589, 0
        %v602 = vsel %vm595, %v590, 0
        %v603 = vsel %vm595, %v591, 0
        %v604 = vsel %vm595, %v592, 0
        %v606 = vshrl.u32 %v596, 16
        %v608 = vshll.u32 %v596, 16
        %v610 = vrot.slane %v608, 1
        %v611 = vor.u32 %v606, %v610
        %v613 = vshrl.u32 %v597, 16
        %v615 = vshll.u32 %v597, 16
        %v617 = vrot.slane %v615, 1
        %v618 = vor.u32 %v613, %v617
        %v620 = vshrl.u32 %v598, 16
        %v622 = vshll.u32 %v598, 16
        %v624 = vrot.slane %v622, 1
        %v625 = vor.u32 %v620, %v624
        %v627 = vshrl.u32 %v599, 16
        %v629 = vshll.u32 %v599, 16
        %v631 = vrot.slane %v629, 1
        %v632 = vor.u32 %v627, %v631
        %v634 = vshrl.u32 %v600, 16
        %v636 = vshll.u32 %v600, 16
        %v638 = vrot.slane %v636, 1
        %v639 = vor.u32 %v634, %v638
        %v641 = vshrl.u32 %v601, 16
        %v643 = vshll.u32 %v601, 16
        %v645 = vrot.slane %v643, 1
        %v646 = vor.u32 %v641, %v645
        %v648 = vshrl.u32 %v602, 16
        %v650 = vshll.u32 %v602, 16
        %v652 = vrot.slane %v650, 1
        %v653 = vor.u32 %v648, %v652
        %v655 = vshrl.u32 %v603, 16
        %v657 = vshll.u32 %v603, 16
        %v659 = vrot.slane %v657, 1
        %v660 = vor.u32 %v655, %v659
        %661 = vrot.lane.b32.xlu0 %v611, 16
        %v662 = vpop.permute.xlu0 %661
        %663 = vrot.lane.b32.xlu0 %v618, 16
        %v664 = vpop.permute.xlu0 %663
        %665 = vrot.lane.b32.xlu0 %v625, 16
        %v666 = vpop.permute.xlu0 %665
        %667 = vrot.lane.b32.xlu0 %v632, 16
        %v668 = vpop.permute.xlu0 %667
        %669 = vrot.lane.b32.xlu0 %v639, 16
        %v670 = vpop.permute.xlu0 %669
        %671 = vrot.lane.b32.xlu0 %v646, 16
        %v672 = vpop.permute.xlu0 %671
        %673 = vrot.lane.b32.xlu0 %v653, 16
        %v674 = vpop.permute.xlu0 %673
        %675 = vrot.lane.b32.xlu0 %v660, 16
        %v676 = vpop.permute.xlu0 %675
        %v685 = vrot.slane %v596, 1
        %v686 = vrot.slane %v597, 1
        %v687 = vrot.slane %v598, 1
        %v688 = vrot.slane %v599, 1
        %v689 = vrot.slane %v600, 1
        %v690 = vrot.slane %v601, 1
        %v691 = vrot.slane %v602, 1
        %v692 = vrot.slane %v603, 1
        %693 = vrot.lane.b32.xlu0 %v685, 32
        %v694 = vpop.permute.xlu0 %693
        %695 = vrot.lane.b32.xlu0 %v686, 32
        %v696 = vpop.permute.xlu0 %695
        %697 = vrot.lane.b32.xlu0 %v687, 32
        %v698 = vpop.permute.xlu0 %697
        %699 = vrot.lane.b32.xlu0 %v688, 32
        %v700 = vpop.permute.xlu0 %699
        %701 = vrot.lane.b32.xlu0 %v689, 32
        %v702 = vpop.permute.xlu0 %701
        %703 = vrot.lane.b32.xlu0 %v690, 32
        %v704 = vpop.permute.xlu0 %703
        %705 = vrot.lane.b32.xlu0 %v691, 32
        %v706 = vpop.permute.xlu0 %705
        %707 = vrot.lane.b32.xlu0 %v692, 32
        %v708 = vpop.permute.xlu0 %707
        %vm709 = vcmask 130048
        %v711 = vsel %vm709, %v596, %v662
        %v713 = vsel %vm709, %v597, %v664
        %v715 = vsel %vm709, %v598, %v666
        %v717 = vsel %vm709, %v599, %v668
        %v719 = vsel %vm709, %v600, %v670
        %v721 = vsel %vm709, %v601, %v672
        %v723 = vsel %vm709, %v602, %v674
        %v725 = vsel %vm709, %v603, %v676
        %vm726 = vcmask 261120
        %v728 = vsel %vm726, %v711, %v694
        %v730 = vsel %vm726, %v713, %v696
        %v732 = vsel %vm726, %v715, %v698
        %v734 = vsel %vm726, %v717, %v700
        %v736 = vsel %vm726, %v719, %v702
        %v738 = vsel %vm726, %v721, %v704
        %v740 = vsel %vm726, %v723, %v706
        %v742 = vsel %vm726, %v725, %v708
        %v743 = vld [vmem:[#allocation7] sm:$0xff]
        %v744 = vld [vmem:[#allocation7 + $0x8] sm:$0xff]
        %v745 = vld [vmem:[#allocation7 + $0x10] sm:$0xff]
        %v746 = vld [vmem:[#allocation7 + $0x18] sm:$0xff]
        %v747 = vld [vmem:[#allocation7 + $0x20] sm:$0xff]
        %v748 = vld [vmem:[#allocation7 + $0x28] sm:$0xff]
        %v749 = vpack.c.bf16 %v744, %v743
        %v750 = vpack.c.bf16 %v746, %v745
        %v751 = vpack.c.bf16 %v748, %v747
        %v753 = vshrl.u32 %v604, 16
        %v755 = vshll.u32 %v604, 16
        %v757 = vrot.slane %v755, 1
        %v758 = vor.u32 %v753, %v757
        %759 = vrot.lane.b32.xlu0 %v758, 16
        %v760 = vpop.permute.xlu0 %759
        %v762 = vrot.slane %v604, 1
        %763 = vrot.lane.b32.xlu0 %v762, 32
        %v764 = vpop.permute.xlu0 %763
        %v766 = vsel %vm709, %v604, %v760
        %v768 = vsel %vm726, %v766, %v764
        %s769 = scalar_lea.vmem [#allocation7], 48
        %v770 = vld [vmem:[%s769] sm:$0xff]
        %v771 = vld [vmem:[%s769 + $0x8] sm:$0xff]
        %v772 = vld [vmem:[%s769 + $0x10] sm:$0xff]
        %v773 = vld [vmem:[%s769 + $0x18] sm:$0xff]
        %v774 = vld [vmem:[%s769 + $0x20] sm:$0xff]
        %v775 = vld [vmem:[%s769 + $0x28] sm:$0xff]
        %v776 = vpack.c.bf16 %v771, %v770
        %v777 = vpack.c.bf16 %v773, %v772
        %v778 = vpack.c.bf16 %v775, %v774
        %v787 = vunpack.c.l.b16 %v730
        %v788 = vunpack.c.l.b16 %v732
        %v789 = vunpack.c.l.b16 %v734
        %v790 = vunpack.c.l.b16 %v736
        %v791 = vunpack.c.l.b16 %v738
        %v792 = vunpack.c.l.b16 %v740
        %v793 = vunpack.c.l.b16 %v742
        %v794 = vunpack.c.l.b16 %v768
        %v795 = vpack.c.b16 %v788, %v787
        %v796 = vpack.c.b16 %v790, %v789
        %v797 = vpack.c.b16 %v792, %v791
        %v798 = vpack.c.b16 %v794, %v793
        %vm799 = vcmask 392192
        %v801 = vsel %vm799, %v795, 0
        %v804 = vsel %vm799, %v796, 0
        %v807 = vsel %vm799, %v797, 0
        %v810 = vsel %vm799, %v798, 0
        %812 = vmatprep.subr.bf16.mxu0 0
        %813 = vmatpush1.bf16.msra.mxu0 %v776
        %814 = vmatprep.subr.bf16.mxu0 0
        %815 = vmatpush1.bf16.msra.mxu0 %v777
        %816 = vmatprep.subr.bf16.mxu0 0
        %817 = vmatpush1.bf16.msra.mxu0 %v778
        %818 = vmatprep.subr.bf16.mxu0 0
        %819 = vmatpush1.bf16.msra.mxu0 0
        %820 = vmatprep.subr.bf16.mxu0 0
        %821 = vmatpush1.bf16.msra.mxu0 0
        %822 = vmatprep.subr.bf16.mxu0 0
        %823 = vmatpush1.bf16.msra.mxu0 0
        %824 = vmatprep.subr.bf16.mxu0 0
        %825 = vmatpush1.bf16.msra.mxu0 0
        %826 = vmatprep.subr.bf16.mxu0 0
        %827 = vmatpush1.bf16.msra.mxu0 0
        %828 = vmatprep.subr.bf16.mxu0 0
        %829 = vmatpush1.bf16.msra.mxu0 0
        %830 = vmatprep.subr.bf16.mxu0 0
        %831 = vmatpush1.bf16.msra.mxu0 0
        %832 = vmatprep.subr.bf16.mxu0 0
        %833 = vmatpush1.bf16.msra.mxu0 0
        %834 = vmatprep.subr.bf16.mxu0 0
        %835 = vmatpush1.bf16.msra.mxu0 0
        %836 = vmatprep.subr.bf16.mxu0 0
        %837 = vmatpush1.bf16.msra.mxu0 0
        %838 = vmatprep.subr.bf16.mxu0 0
        %839 = vmatpush1.bf16.msra.mxu0 0
        %840 = vmatprep.subr.bf16.mxu0 0
        %841 = vmatpush1.bf16.msra.mxu0 0
        %842 = vmatprep.subr.bf16.mxu0 0
        %843 = vmatpush1.bf16.msra.mxu0 0
        %844 = vmatprep.mubr.bf16.mxu0 0
        %845 = vmatmul.mubr.bf16.gmra.mrb[0].mxu0 %v801
        %v846 = vpop.f32.mrb[0].mxu0
        %v847 = vadd.f32 0.0, %v846
        %v848 = vpop.f32.mrb[0].mxu0
        %v849 = vpop.f32.mrb[0].mxu0
        %v850 = vadd.f32 0.0, %v849
        %v851 = vpop.f32.mrb[0].mxu0
        %852 = vmatprep.mubr.bf16.mxu0 0
        %853 = vmatmul.mubr.bf16.gmra.mrb[0].mxu0 %v804
        %v854 = vpop.f32.mrb[0].mxu0
        %v855 = vadd.f32 0.0, %v854
        %v856 = vpop.f32.mrb[0].mxu0
        %v857 = vpop.f32.mrb[0].mxu0
        %v858 = vadd.f32 0.0, %v857
        %v859 = vpop.f32.mrb[0].mxu0
        %860 = vmatprep.mubr.bf16.mxu0 0
        %861 = vmatmul.mubr.bf16.gmra.mrb[0].mxu0 %v807
        %v862 = vpop.f32.mrb[0].mxu0
        %v863 = vadd.f32 0.0, %v862
        %v864 = vpop.f32.mrb[0].mxu0
        %v865 = vpop.f32.mrb[0].mxu0
        %v866 = vadd.f32 0.0, %v865
        %v867 = vpop.f32.mrb[0].mxu0
        %868 = vmatprep.mubr.bf16.mxu0 0
        %869 = vmatmul.mubr.bf16.gmra.mrb[0].mxu0 %v810
        %v870 = vpop.f32.mrb[0].mxu0
        %v871 = vadd.f32 0.0, %v870
        %v872 = vpop.f32.mrb[0].mxu0
        %v873 = vpop.f32.mrb[0].mxu0
        %v874 = vadd.f32 0.0, %v873
        %v875 = vpop.f32.mrb[0].mxu0
        %876 = vdwg.mxu0
        %v878 = vunpack.c.l.b16 %v728
        %v879 = vpack.c.b16 %v787, %v878
        %v880 = vpack.c.b16 %v789, %v788
        %v881 = vpack.c.b16 %v791, %v790
        %v882 = vpack.c.b16 %v793, %v792
        %v884 = vsel %vm799, %v879, 0
        %v887 = vsel %vm799, %v880, 0
        %v890 = vsel %vm799, %v881, 0
        %v893 = vsel %vm799, %v882, 0
        %895 = vmatprep.subr.bf16.mxu0 0
        %896 = vmatpush1.bf16.msra.mxu0 %v749
        %897 = vmatprep.subr.bf16.mxu0 0
        %898 = vmatpush1.bf16.msra.mxu0 %v750
        %899 = vmatprep.subr.bf16.mxu0 0
        %900 = vmatpush1.bf16.msra.mxu0 %v751
        %901 = vmatprep.subr.bf16.mxu0 0
        %902 = vmatpush1.bf16.msra.mxu0 0
        %903 = vmatprep.subr.bf16.mxu0 0
        %904 = vmatpush1.bf16.msra.mxu0 0
        %905 = vmatprep.subr.bf16.mxu0 0
        %906 = vmatpush1.bf16.msra.mxu0 0
        %907 = vmatprep.subr.bf16.mxu0 0
        %908 = vmatpush1.bf16.msra.mxu0 0
        %909 = vmatprep.subr.bf16.mxu0 0
        %910 = vmatpush1.bf16.msra.mxu0 0
        %911 = vmatprep.subr.bf16.mxu0 0
        %912 = vmatpush1.bf16.msra.mxu0 0
        %913 = vmatprep.subr.bf16.mxu0 0
        %914 = vmatpush1.bf16.msra.mxu0 0
        %915 = vmatprep.subr.bf16.mxu0 0
        %916 = vmatpush1.bf16.msra.mxu0 0
        %917 = vmatprep.subr.bf16.mxu0 0
        %918 = vmatpush1.bf16.msra.mxu0 0
        %919 = vmatprep.subr.bf16.mxu0 0
        %920 = vmatpush1.bf16.msra.mxu0 0
        %921 = vmatprep.subr.bf16.mxu0 0
        %922 = vmatpush1.bf16.msra.mxu0 0
        %923 = vmatprep.subr.bf16.mxu0 0
        %924 = vmatpush1.bf16.msra.mxu0 0
        %925 = vmatprep.subr.bf16.mxu0 0
        %926 = vmatpush1.bf16.msra.mxu0 0
        %927 = vmatprep.mubr.bf16.mxu0 0
        %928 = vmatmul.mubr.bf16.gmra.mrb[0].mxu0 %v884
        %v929 = vpop.f32.mrb[0].mxu0
        %v930 = vadd.f32 %v847, %v929
        %v931 = vpop.f32.mrb[0].mxu0
        %v932 = vpop.f32.mrb[0].mxu0
        %v933 = vadd.f32 %v850, %v932
        %v934 = vpop.f32.mrb[0].mxu0
        %935 = vmatprep.mubr.bf16.mxu0 0
        %936 = vmatmul.mubr.bf16.gmra.mrb[0].mxu0 %v887
        %v937 = vpop.f32.mrb[0].mxu0
        %v938 = vadd.f32 %v855, %v937
        %v939 = vpop.f32.mrb[0].mxu0
        %v940 = vpop.f32.mrb[0].mxu0
        %v941 = vadd.f32 %v858, %v940
        %v942 = vpop.f32.mrb[0].mxu0
        %943 = vmatprep.mubr.bf16.mxu0 0
        %944 = vmatmul.mubr.bf16.gmra.mrb[0].mxu0 %v890
        %v945 = vpop.f32.mrb[0].mxu0
        %v946 = vadd.f32 %v863, %v945
        %v947 = vpop.f32.mrb[0].mxu0
        %v948 = vpop.f32.mrb[0].mxu0
        %v949 = vadd.f32 %v866, %v948
        %v950 = vpop.f32.mrb[0].mxu0
        %951 = vmatprep.mubr.bf16.mxu0 0
        %952 = vmatmul.mubr.bf16.gmra.mrb[0].mxu0 %v893
        %v953 = vpop.f32.mrb[0].mxu0
        %v954 = vadd.f32 %v871, %v953
        %v955 = vpop.f32.mrb[0].mxu0
        %v956 = vpop.f32.mrb[0].mxu0
        %v957 = vadd.f32 %v874, %v956
        %v958 = vpop.f32.mrb[0].mxu0
        %959 = vdwg.mxu0
        %s960 = scalar_lea.vmem [#allocation7], 96
        %v961 = vld [vmem:[%s960] sm:$0xff]
        %v962 = vld [vmem:[%s960 + $0x8] sm:$0xff]
        %v963 = vld [vmem:[%s960 + $0x10] sm:$0xff]
        %v964 = vld [vmem:[%s960 + $0x18] sm:$0xff]
        %v965 = vld [vmem:[%s960 + $0x20] sm:$0xff]
        %v966 = vld [vmem:[%s960 + $0x28] sm:$0xff]
        %v967 = vpack.c.bf16 %v962, %v961
        %v968 = vpack.c.bf16 %v964, %v963
        %v969 = vpack.c.bf16 %v966, %v965
        %v970 = vpack.c.b16 %v878, %v794
        %v972 = vsel %vm799, %v970, 0
        %974 = vmatprep.subr.bf16.mxu0 0
        %975 = vmatpush1.bf16.msra.mxu0 %v967
        %976 = vmatprep.subr.bf16.mxu0 0
        %977 = vmatpush1.bf16.msra.mxu0 %v968
        %978 = vmatprep.subr.bf16.mxu0 0
        %979 = vmatpush1.bf16.msra.mxu0 %v969
        %980 = vmatprep.subr.bf16.mxu0 0
        %981 = vmatpush1.bf16.msra.mxu0 0
        %982 = vmatprep.subr.bf16.mxu0 0
        %983 = vmatpush1.bf16.msra.mxu0 0
        %984 = vmatprep.subr.bf16.mxu0 0
        %985 = vmatpush1.bf16.msra.mxu0 0
        %986 = vmatprep.subr.bf16.mxu0 0
        %987 = vmatpush1.bf16.msra.mxu0 0
        %988 = vmatprep.subr.bf16.mxu0 0
        %989 = vmatpush1.bf16.msra.mxu0 0
        %990 = vmatprep.subr.bf16.mxu0 0
        %991 = vmatpush1.bf16.msra.mxu0 0
        %992 = vmatprep.subr.bf16.mxu0 0
        %993 = vmatpush1.bf16.msra.mxu0 0
        %994 = vmatprep.subr.bf16.mxu0 0
        %995 = vmatpush1.bf16.msra.mxu0 0
        %996 = vmatprep.subr.bf16.mxu0 0
        %997 = vmatpush1.bf16.msra.mxu0 0
        %998 = vmatprep.subr.bf16.mxu0 0
        %999 = vmatpush1.bf16.msra.mxu0 0
        %1000 = vmatprep.subr.bf16.mxu0 0
        %1001 = vmatpush1.bf16.msra.mxu0 0
        %1002 = vmatprep.subr.bf16.mxu0 0
        %1003 = vmatpush1.bf16.msra.mxu0 0
        %1004 = vmatprep.subr.bf16.mxu0 0
        %1005 = vmatpush1.bf16.msra.mxu0 0
        %1006 = vmatprep.mubr.bf16.mxu0 0
        %1007 = vmatmul.mubr.bf16.gmra.mrb[0].mxu0 %v887
        %v1008 = vpop.f32.mrb[0].mxu0
        %v1009 = vadd.f32 0.0, %v1008
        %v1010 = vpop.f32.mrb[0].mxu0
        %v1011 = vpop.f32.mrb[0].mxu0
        %v1012 = vadd.f32 0.0, %v1011
        %v1013 = vpop.f32.mrb[0].mxu0
        %1014 = vmatprep.mubr.bf16.mxu0 0
        %1015 = vmatmul.mubr.bf16.gmra.mrb[0].mxu0 %v890
        %v1016 = vpop.f32.mrb[0].mxu0
        %v1017 = vadd.f32 0.0, %v1016
        %v1018 = vpop.f32.mrb[0].mxu0
        %v1019 = vpop.f32.mrb[0].mxu0
        %v1020 = vadd.f32 0.0, %v1019
        %v1021 = vpop.f32.mrb[0].mxu0
        %1022 = vmatprep.mubr.bf16.mxu0 0
        %1023 = vmatmul.mubr.bf16.gmra.mrb[0].mxu0 %v893
        %v1024 = vpop.f32.mrb[0].mxu0
        %v1025 = vadd.f32 0.0, %v1024
        %v1026 = vpop.f32.mrb[0].mxu0
        %v1027 = vpop.f32.mrb[0].mxu0
        %v1028 = vadd.f32 0.0, %v1027
        %v1029 = vpop.f32.mrb[0].mxu0
        %1030 = vmatprep.mubr.bf16.mxu0 0
        %1031 = vmatmul.mubr.bf16.gmra.mrb[0].mxu0 %v972
        %v1032 = vpop.f32.mrb[0].mxu0
        %v1033 = vadd.f32 0.0, %v1032
        %v1034 = vpop.f32.mrb[0].mxu0
        %v1035 = vpop.f32.mrb[0].mxu0
        %v1036 = vadd.f32 0.0, %v1035
        %v1037 = vpop.f32.mrb[0].mxu0
        %1038 = vdwg.mxu0
        %v1039 = vadd.f32 %v930, %v1009
        %v1040 = vadd.f32 %v933, %v1012
        %v1041 = vadd.f32 %v938, %v1017
        %v1042 = vadd.f32 %v941, %v1020
        %v1043 = vadd.f32 %v946, %v1025
        %v1044 = vadd.f32 %v949, %v1028
        %v1045 = vadd.f32 %v954, %v1033
        %v1046 = vadd.f32 %v957, %v1036
        %v1047 = vld [vmem:[#allocation8] sm:$0x1]
        %v1049 = vlaneseq
        %v1050 = vshrl.u32 %v1049, 7
        %v1051 = vsub.s32 0, %v1050
        %v1052 = vrot.slane %v1047, %v1051
        %v1054 = vmul.f32 %v1039, %v1052
        %v1055 = vmul.f32 %v1040, %v1052
        %v1056 = vmul.f32 %v1041, %v1052
        %v1057 = vmul.f32 %v1042, %v1052
        %v1058 = vmul.f32 %v1043, %v1052
        %v1059 = vmul.f32 %v1044, %v1052
        %v1060 = vmul.f32 %v1045, %v1052
        %v1061 = vmul.f32 %v1046, %v1052
        %v1062 = vld [vmem:[#allocation10] sm:$0x1]
        %v1064 = vlaneseq
        %v1065 = vshrl.u32 %v1064, 7
        %v1066 = vsub.s32 0, %v1065
        %v1067 = vrot.slane %v1062, %v1066
        %v1069 = vadd.f32 %v1054, %v1067
        %v1070 = vadd.f32 %v1055, %v1067
        %v1071 = vadd.f32 %v1056, %v1067
        %v1072 = vadd.f32 %v1057, %v1067
        %v1073 = vadd.f32 %v1058, %v1067
        %v1074 = vadd.f32 %v1059, %v1067
        %v1075 = vadd.f32 %v1060, %v1067
        %v1076 = vadd.f32 %v1061, %v1067
        %v1077 = vmax.f32 %v1069, 0.0
        %v1078 = vmax.f32 %v1070, 0.0
        %v1079 = vmax.f32 %v1071, 0.0
        %v1080 = vmax.f32 %v1072, 0.0
        %v1081 = vmax.f32 %v1073, 0.0
        %v1082 = vmax.f32 %v1074, 0.0
        %v1083 = vmax.f32 %v1075, 0.0
        %v1084 = vmax.f32 %v1076, 0.0
        %v1085 = vpack.c.bf16 %v1077, %v1077
        %v1086 = vpack.c.bf16 %v1078, %v1078
        %v1087 = vpack.c.bf16 %v1079, %v1079
        %v1088 = vpack.c.bf16 %v1080, %v1080
        %v1089 = vpack.c.bf16 %v1081, %v1081
        %v1090 = vpack.c.bf16 %v1082, %v1082
        %v1091 = vpack.c.bf16 %v1083, %v1083
        %v1092 = vpack.c.bf16 %v1084, %v1084
        %v1094 = vshrl.u32 %v1085, 16
        %v1096 = vrot.slane %v1094, 7
        %v1097 = vshll.u32 %v1085, 16
        %v1099 = vor.u32 %v1096, %v1097
        %v1101 = vshrl.u32 %v1086, 16
        %v1103 = vrot.slane %v1101, 7
        %v1104 = vshll.u32 %v1086, 16
        %v1106 = vor.u32 %v1103, %v1104
        %v1108 = vshrl.u32 %v1087, 16
        %v1110 = vrot.slane %v1108, 7
        %v1111 = vshll.u32 %v1087, 16
        %v1113 = vor.u32 %v1110, %v1111
        %v1115 = vshrl.u32 %v1088, 16
        %v1117 = vrot.slane %v1115, 7
        %v1118 = vshll.u32 %v1088, 16
        %v1120 = vor.u32 %v1117, %v1118
        %v1122 = vshrl.u32 %v1089, 16
        %v1124 = vrot.slane %v1122, 7
        %v1125 = vshll.u32 %v1089, 16
        %v1127 = vor.u32 %v1124, %v1125
        %v1129 = vshrl.u32 %v1090, 16
        %v1131 = vrot.slane %v1129, 7
        %v1132 = vshll.u32 %v1090, 16
        %v1134 = vor.u32 %v1131, %v1132
        %v1136 = vshrl.u32 %v1091, 16
        %v1138 = vrot.slane %v1136, 7
        %v1139 = vshll.u32 %v1091, 16
        %v1141 = vor.u32 %v1138, %v1139
        %v1143 = vshrl.u32 %v1092, 16
        %v1145 = vrot.slane %v1143, 7
        %v1146 = vshll.u32 %v1092, 16
        %v1148 = vor.u32 %v1145, %v1146
        %v1157 = vsel %vm583, 0, %v1099
        %v1158 = vsel %vm583, 0, %v1106
        %v1159 = vsel %vm583, 0, %v1113
        %v1160 = vsel %vm583, 0, %v1120
        %v1161 = vsel %vm583, 0, %v1127
        %v1162 = vsel %vm583, 0, %v1134
        %v1163 = vsel %vm583, 0, %v1141
        %v1164 = vsel %vm583, 0, %v1148
        %v1165 = vsel %vm595, %v1157, 0
        %v1166 = vsel %vm595, %v1158, 0
        %v1167 = vsel %vm595, %v1159, 0
        %v1168 = vsel %vm595, %v1160, 0
        %v1169 = vsel %vm595, %v1161, 0
        %v1170 = vsel %vm595, %v1162, 0
        %v1171 = vsel %vm595, %v1163, 0
        %v1172 = vsel %vm595, %v1164, 0
        %v1174 = vshrl.u32 %v1165, 16
        %v1176 = vshll.u32 %v1165, 16
        %v1178 = vrot.slane %v1176, 1
        %v1179 = vor.u32 %v1174, %v1178
        %v1181 = vshrl.u32 %v1166, 16
        %v1183 = vshll.u32 %v1166, 16
        %v1185 = vrot.slane %v1183, 1
        %v1186 = vor.u32 %v1181, %v1185
        %v1188 = vshrl.u32 %v1167, 16
        %v1190 = vshll.u32 %v1167, 16
        %v1192 = vrot.slane %v1190, 1
        %v1193 = vor.u32 %v1188, %v1192
        %v1195 = vshrl.u32 %v1168, 16
        %v1197 = vshll.u32 %v1168, 16
        %v1199 = vrot.slane %v1197, 1
        %v1200 = vor.u32 %v1195, %v1199
        %v1202 = vshrl.u32 %v1169, 16
        %v1204 = vshll.u32 %v1169, 16
        %v1206 = vrot.slane %v1204, 1
        %v1207 = vor.u32 %v1202, %v1206
        %v1209 = vshrl.u32 %v1170, 16
        %v1211 = vshll.u32 %v1170, 16
        %v1213 = vrot.slane %v1211, 1
        %v1214 = vor.u32 %v1209, %v1213
        %v1216 = vshrl.u32 %v1171, 16
        %v1218 = vshll.u32 %v1171, 16
        %v1220 = vrot.slane %v1218, 1
        %v1221 = vor.u32 %v1216, %v1220
        %1222 = vrot.lane.b32.xlu0 %v1179, 16
        %v1223 = vpop.permute.xlu0 %1222
        %1224 = vrot.lane.b32.xlu0 %v1186, 16
        %v1225 = vpop.permute.xlu0 %1224
        %1226 = vrot.lane.b32.xlu0 %v1193, 16
        %v1227 = vpop.permute.xlu0 %1226
        %1228 = vrot.lane.b32.xlu0 %v1200, 16
        %v1229 = vpop.permute.xlu0 %1228
        %1230 = vrot.lane.b32.xlu0 %v1207, 16
        %v1231 = vpop.permute.xlu0 %1230
        %1232 = vrot.lane.b32.xlu0 %v1214, 16
        %v1233 = vpop.permute.xlu0 %1232
        %1234 = vrot.lane.b32.xlu0 %v1221, 16
        %v1235 = vpop.permute.xlu0 %1234
        %v1243 = vrot.slane %v1165, 1
        %v1244 = vrot.slane %v1166, 1
        %v1245 = vrot.slane %v1167, 1
        %v1246 = vrot.slane %v1168, 1
        %v1247 = vrot.slane %v1169, 1
        %v1248 = vrot.slane %v1170, 1
        %v1249 = vrot.slane %v1171, 1
        %1250 = vrot.lane.b32.xlu0 %v1243, 32
        %v1251 = vpop.permute.xlu0 %1250
        %1252 = vrot.lane.b32.xlu0 %v1244, 32
        %v1253 = vpop.permute.xlu0 %1252
        %1254 = vrot.lane.b32.xlu0 %v1245, 32
        %v1255 = vpop.permute.xlu0 %1254
        %1256 = vrot.lane.b32.xlu0 %v1246, 32
        %v1257 = vpop.permute.xlu0 %1256
        %1258 = vrot.lane.b32.xlu0 %v1247, 32
        %v1259 = vpop.permute.xlu0 %1258
        %1260 = vrot.lane.b32.xlu0 %v1248, 32
        %v1261 = vpop.permute.xlu0 %1260
        %1262 = vrot.lane.b32.xlu0 %v1249, 32
        %v1263 = vpop.permute.xlu0 %1262
        %v1265 = vsel %vm709, %v1165, %v1223
        %v1267 = vsel %vm709, %v1166, %v1225
        %v1269 = vsel %vm709, %v1167, %v1227
        %v1271 = vsel %vm709, %v1168, %v1229
        %v1273 = vsel %vm709, %v1169, %v1231
        %v1275 = vsel %vm709, %v1170, %v1233
        %v1277 = vsel %vm709, %v1171, %v1235
        %v1279 = vsel %vm726, %v1265, %v1251
        %v1281 = vsel %vm726, %v1267, %v1253
        %v1283 = vsel %vm726, %v1269, %v1255
        %v1285 = vsel %vm726, %v1271, %v1257
        %v1287 = vsel %vm726, %v1273, %v1259
        %v1289 = vsel %vm726, %v1275, %v1261
        %v1291 = vsel %vm726, %v1277, %v1263
        %v1292 = vld [vmem:[#allocation11] sm:$0xff]
        %v1293 = vld [vmem:[#allocation11 + $0x8] sm:$0xff]
        %v1294 = vld [vmem:[#allocation11 + $0x10] sm:$0xff]
        %v1295 = vld [vmem:[#allocation11 + $0x18] sm:$0xff]
        %v1296 = vld [vmem:[#allocation11 + $0x20] sm:$0xff]
        %v1297 = vld [vmem:[#allocation11 + $0x28] sm:$0xff]
        %v1298 = vpack.c.bf16 %v1293, %v1292
        %v1299 = vpack.c.bf16 %v1295, %v1294
        %v1300 = vpack.c.bf16 %v1297, %v1296
        %v1302 = vshrl.u32 %v1172, 16
        %v1304 = vshll.u32 %v1172, 16
        %v1306 = vrot.slane %v1304, 1
        %v1307 = vor.u32 %v1302, %v1306
        %1308 = vrot.lane.b32.xlu0 %v1307, 16
        %v1309 = vpop.permute.xlu0 %1308
        %v1311 = vrot.slane %v1172, 1
        %1312 = vrot.lane.b32.xlu0 %v1311, 32
        %v1313 = vpop.permute.xlu0 %1312
        %v1315 = vsel %vm709, %v1172, %v1309
        %v1317 = vsel %vm726, %v1315, %v1313
        %s1318 = scalar_lea.vmem [#allocation11], 48
        %v1319 = vld [vmem:[%s1318] sm:$0xff]
        %v1320 = vld [vmem:[%s1318 + $0x8] sm:$0xff]
        %v1321 = vld [vmem:[%s1318 + $0x10] sm:$0xff]
        %v1322 = vld [vmem:[%s1318 + $0x18] sm:$0xff]
        %v1323 = vld [vmem:[%s1318 + $0x20] sm:$0xff]
        %v1324 = vld [vmem:[%s1318 + $0x28] sm:$0xff]
        %v1325 = vpack.c.bf16 %v1320, %v1319
        %v1326 = vpack.c.bf16 %v1322, %v1321
        %v1327 = vpack.c.bf16 %v1324, %v1323
        %v1336 = vunpack.c.l.b16 %v1279
        %v1337 = vunpack.c.l.b16 %v1281
        %v1338 = vunpack.c.l.b16 %v1283
        %v1339 = vunpack.c.l.b16 %v1285
        %v1340 = vunpack.c.l.b16 %v1287
        %v1341 = vunpack.c.l.b16 %v1289
        %v1342 = vunpack.c.l.b16 %v1291
        %v1343 = vunpack.c.l.b16 %v1317
        %v1344 = vpack.c.b16 %v1337, %v1336
        %v1345 = vpack.c.b16 %v1339, %v1338
        %v1346 = vpack.c.b16 %v1341, %v1340
        %v1347 = vpack.c.b16 %v1343, %v1342
        %v1349 = vsel %vm799, %v1344, 0
        %v1352 = vsel %vm799, %v1345, 0
        %v1355 = vsel %vm799, %v1346, 0
        %v1358 = vsel %vm799, %v1347, 0
        %1360 = vmatprep.subr.bf16.mxu0 0
        %1361 = vmatpush1.bf16.msra.mxu0 %v1325
        %1362 = vmatprep.subr.bf16.mxu0 0
        %1363 = vmatpush1.bf16.msra.mxu0 %v1326
        %1364 = vmatprep.subr.bf16.mxu0 0
        %1365 = vmatpush1.bf16.msra.mxu0 %v1327
        %1366 = vmatprep.subr.bf16.mxu0 0
        %1367 = vmatpush1.bf16.msra.mxu0 0
        %1368 = vmatprep.subr.bf16.mxu0 0
        %1369 = vmatpush1.bf16.msra.mxu0 0
        %1370 = vmatprep.subr.bf16.mxu0 0
        %1371 = vmatpush1.bf16.msra.mxu0 0
        %1372 = vmatprep.subr.bf16.mxu0 0
        %1373 = vmatpush1.bf16.msra.mxu0 0
        %1374 = vmatprep.subr.bf16.mxu0 0
        %1375 = vmatpush1.bf16.msra.mxu0 0
        %1376 = vmatprep.subr.bf16.mxu0 0
        %1377 = vmatpush1.bf16.msra.mxu0 0
        %1378 = vmatprep.subr.bf16.mxu0 0
        %1379 = vmatpush1.bf16.msra.mxu0 0
        %1380 = vmatprep.subr.bf16.mxu0 0
        %1381 = vmatpush1.bf16.msra.mxu0 0
        %1382 = vmatprep.subr.bf16.mxu0 0
        %1383 = vmatpush1.bf16.msra.mxu0 0
        %1384 = vmatprep.subr.bf16.mxu0 0
        %1385 = vmatpush1.bf16.msra.mxu0 0
        %1386 = vmatprep.subr.bf16.mxu0 0
        %1387 = vmatpush1.bf16.msra.mxu0 0
        %1388 = vmatprep.subr.bf16.mxu0 0
        %1389 = vmatpush1.bf16.msra.mxu0 0
        %1390 = vmatprep.subr.bf16.mxu0 0
        %1391 = vmatpush1.bf16.msra.mxu0 0
        %1392 = vmatprep.mubr.bf16.mxu0 0
        %1393 = vmatmul.mubr.bf16.gmra.mrb[0].mxu0 %v1349
        %v1394 = vpop.f32.mrb[0].mxu0
        %v1395 = vadd.f32 0.0, %v1394
        %v1396 = vpop.f32.mrb[0].mxu0
        %v1397 = vpop.f32.mrb[0].mxu0
        %v1398 = vadd.f32 0.0, %v1397
        %v1399 = vpop.f32.mrb[0].mxu0
        %1400 = vmatprep.mubr.bf16.mxu0 0
        %1401 = vmatmul.mubr.bf16.gmra.mrb[0].mxu0 %v1352
        %v1402 = vpop.f32.mrb[0].mxu0
        %v1403 = vadd.f32 0.0, %v1402
        %v1404 = vpop.f32.mrb[0].mxu0
        %v1405 = vpop.f32.mrb[0].mxu0
        %v1406 = vadd.f32 0.0, %v1405
        %v1407 = vpop.f32.mrb[0].mxu0
        %1408 = vmatprep.mubr.bf16.mxu0 0
        %1409 = vmatmul.mubr.bf16.gmra.mrb[0].mxu0 %v1355
        %v1410 = vpop.f32.mrb[0].mxu0
        %v1411 = vadd.f32 0.0, %v1410
        %v1412 = vpop.f32.mrb[0].mxu0
        %v1413 = vpop.f32.mrb[0].mxu0
        %v1414 = vadd.f32 0.0, %v1413
        %v1415 = vpop.f32.mrb[0].mxu0
        %1416 = vmatprep.mubr.bf16.mxu0 0
        %1417 = vmatmul.mubr.bf16.gmra.mrb[0].mxu0 %v1358
        %v1418 = vpop.f32.mrb[0].mxu0
        %v1419 = vadd.f32 0.0, %v1418
        %v1420 = vpop.f32.mrb[0].mxu0
        %v1421 = vpop.f32.mrb[0].mxu0
        %v1422 = vadd.f32 0.0, %v1421
        %v1423 = vpop.f32.mrb[0].mxu0
        %1424 = vdwg.mxu0
        %v1425 = vpack.c.b16 %v1336, %v878
        %v1426 = vpack.c.b16 %v1338, %v1337
        %v1427 = vpack.c.b16 %v1340, %v1339
        %v1428 = vpack.c.b16 %v1342, %v1341
        %v1430 = vsel %vm799, %v1425, 0
        %v1433 = vsel %vm799, %v1426, 0
        %v1436 = vsel %vm799, %v1427, 0
        %v1439 = vsel %vm799, %v1428, 0
        %1441 = vmatprep.subr.bf16.mxu0 0
        %1442 = vmatpush1.bf16.msra.mxu0 %v1298
        %1443 = vmatprep.subr.bf16.mxu0 0
        %1444 = vmatpush1.bf16.msra.mxu0 %v1299
        %1445 = vmatprep.subr.bf16.mxu0 0
        %1446 = vmatpush1.bf16.msra.mxu0 %v1300
        %1447 = vmatprep.subr.bf16.mxu0 0
        %1448 = vmatpush1.bf16.msra.mxu0 0
        %1449 = vmatprep.subr.bf16.mxu0 0
        %1450 = vmatpush1.bf16.msra.mxu0 0
        %1451 = vmatprep.subr.bf16.mxu0 0
        %1452 = vmatpush1.bf16.msra.mxu0 0
        %1453 = vmatprep.subr.bf16.mxu0 0
        %1454 = vmatpush1.bf16.msra.mxu0 0
        %1455 = vmatprep.subr.bf16.mxu0 0
        %1456 = vmatpush1.bf16.msra.mxu0 0
        %1457 = vmatprep.subr.bf16.mxu0 0
        %1458 = vmatpush1.bf16.msra.mxu0 0
        %1459 = vmatprep.subr.bf16.mxu0 0
        %1460 = vmatpush1.bf16.msra.mxu0 0
        %1461 = vmatprep.subr.bf16.mxu0 0
        %1462 = vmatpush1.bf16.msra.mxu0 0
        %1463 = vmatprep.subr.bf16.mxu0 0
        %1464 = vmatpush1.bf16.msra.mxu0 0
        %1465 = vmatprep.subr.bf16.mxu0 0
        %1466 = vmatpush1.bf16.msra.mxu0 0
        %1467 = vmatprep.subr.bf16.mxu0 0
        %1468 = vmatpush1.bf16.msra.mxu0 0
        %1469 = vmatprep.subr.bf16.mxu0 0
        %1470 = vmatpush1.bf16.msra.mxu0 0
        %1471 = vmatprep.subr.bf16.mxu0 0
        %1472 = vmatpush1.bf16.msra.mxu0 0
        %1473 = vmatprep.mubr.bf16.mxu0 0
        %1474 = vmatmul.mubr.bf16.gmra.mrb[0].mxu0 %v1430
        %v1475 = vpop.f32.mrb[0].mxu0
        %v1476 = vadd.f32 %v1395, %v1475
        %v1477 = vpop.f32.mrb[0].mxu0
        %v1478 = vpop.f32.mrb[0].mxu0
        %v1479 = vadd.f32 %v1398, %v1478
        %v1480 = vpop.f32.mrb[0].mxu0
        %1481 = vmatprep.mubr.bf16.mxu0 0
        %1482 = vmatmul.mubr.bf16.gmra.mrb[0].mxu0 %v1433
        %v1483 = vpop.f32.mrb[0].mxu0
        %v1484 = vadd.f32 %v1403, %v1483
        %v1485 = vpop.f32.mrb[0].mxu0
        %v1486 = vpop.f32.mrb[0].mxu0
        %v1487 = vadd.f32 %v1406, %v1486
        %v1488 = vpop.f32.mrb[0].mxu0
        %1489 = vmatprep.mubr.bf16.mxu0 0
        %1490 = vmatmul.mubr.bf16.gmra.mrb[0].mxu0 %v1436
        %v1491 = vpop.f32.mrb[0].mxu0
        %v1492 = vadd.f32 %v1411, %v1491
        %v1493 = vpop.f32.mrb[0].mxu0
        %v1494 = vpop.f32.mrb[0].mxu0
        %v1495 = vadd.f32 %v1414, %v1494
        %v1496 = vpop.f32.mrb[0].mxu0
        %1497 = vmatprep.mubr.bf16.mxu0 0
        %1498 = vmatmul.mubr.bf16.gmra.mrb[0].mxu0 %v1439
        %v1499 = vpop.f32.mrb[0].mxu0
        %v1500 = vadd.f32 %v1419, %v1499
        %v1501 = vpop.f32.mrb[0].mxu0
        %v1502 = vpop.f32.mrb[0].mxu0
        %v1503 = vadd.f32 %v1422, %v1502
        %v1504 = vpop.f32.mrb[0].mxu0
        %1505 = vdwg.mxu0
        %s1506 = scalar_lea.vmem [#allocation11], 96
        %v1507 = vld [vmem:[%s1506] sm:$0xff]
        %v1508 = vld [vmem:[%s1506 + $0x8] sm:$0xff]
        %v1509 = vld [vmem:[%s1506 + $0x10] sm:$0xff]
        %v1510 = vld [vmem:[%s1506 + $0x18] sm:$0xff]
        %v1511 = vld [vmem:[%s1506 + $0x20] sm:$0xff]
        %v1512 = vld [vmem:[%s1506 + $0x28] sm:$0xff]
        %v1513 = vpack.c.bf16 %v1508, %v1507
        %v1514 = vpack.c.bf16 %v1510, %v1509
        %v1515 = vpack.c.bf16 %v1512, %v1511
        %v1516 = vpack.c.b16 %v878, %v1343
        %v1518 = vsel %vm799, %v1516, 0
        %1520 = vmatprep.subr.bf16.mxu0 0
        %1521 = vmatpush1.bf16.msra.mxu0 %v1513
        %1522 = vmatprep.subr.bf16.mxu0 0
        %1523 = vmatpush1.bf16.msra.mxu0 %v1514
        %1524 = vmatprep.subr.bf16.mxu0 0
        %1525 = vmatpush1.bf16.msra.mxu0 %v1515
        %1526 = vmatprep.subr.bf16.mxu0 0
        %1527 = vmatpush1.bf16.msra.mxu0 0
        %1528 = vmatprep.subr.bf16.mxu0 0
        %1529 = vmatpush1.bf16.msra.mxu0 0
        %1530 = vmatprep.subr.bf16.mxu0 0
        %1531 = vmatpush1.bf16.msra.mxu0 0
        %1532 = vmatprep.subr.bf16.mxu0 0
        %1533 = vmatpush1.bf16.msra.mxu0 0
        %1534 = vmatprep.subr.bf16.mxu0 0
        %1535 = vmatpush1.bf16.msra.mxu0 0
        %1536 = vmatprep.subr.bf16.mxu0 0
        %1537 = vmatpush1.bf16.msra.mxu0 0
        %1538 = vmatprep.subr.bf16.mxu0 0
        %1539 = vmatpush1.bf16.msra.mxu0 0
        %1540 = vmatprep.subr.bf16.mxu0 0
        %1541 = vmatpush1.bf16.msra.mxu0 0
        %1542 = vmatprep.subr.bf16.mxu0 0
        %1543 = vmatpush1.bf16.msra.mxu0 0
        %1544 = vmatprep.subr.bf16.mxu0 0
        %1545 = vmatpush1.bf16.msra.mxu0 0
        %1546 = vmatprep.subr.bf16.mxu0 0
        %1547 = vmatpush1.bf16.msra.mxu0 0
        %1548 = vmatprep.subr.bf16.mxu0 0
        %1549 = vmatpush1.bf16.msra.mxu0 0
        %1550 = vmatprep.subr.bf16.mxu0 0
        %1551 = vmatpush1.bf16.msra.mxu0 0
        %1552 = vmatprep.mubr.bf16.mxu0 0
        %1553 = vmatmul.mubr.bf16.gmra.mrb[0].mxu0 %v1433
        %v1554 = vpop.f32.mrb[0].mxu0
        %v1555 = vadd.f32 0.0, %v1554
        %v1556 = vpop.f32.mrb[0].mxu0
        %v1557 = vpop.f32.mrb[0].mxu0
        %v1558 = vadd.f32 0.0, %v1557
        %v1559 = vpop.f32.mrb[0].mxu0
        %1560 = vmatprep.mubr.bf16.mxu0 0
        %1561 = vmatmul.mubr.bf16.gmra.mrb[0].mxu0 %v1436
        %v1562 = vpop.f32.mrb[0].mxu0
        %v1563 = vadd.f32 0.0, %v1562
        %v1564 = vpop.f32.mrb[0].mxu0
        %v1565 = vpop.f32.mrb[0].mxu0
        %v1566 = vadd.f32 0.0, %v1565
        %v1567 = vpop.f32.mrb[0].mxu0
        %1568 = vmatprep.mubr.bf16.mxu0 0
        %1569 = vmatmul.mubr.bf16.gmra.mrb[0].mxu0 %v1439
        %v1570 = vpop.f32.mrb[0].mxu0
        %v1571 = vadd.f32 0.0, %v1570
        %v1572 = vpop.f32.mrb[0].mxu0
        %v1573 = vpop.f32.mrb[0].mxu0
        %v1574 = vadd.f32 0.0, %v1573
        %v1575 = vpop.f32.mrb[0].mxu0
        %1576 = vmatprep.mubr.bf16.mxu0 0
        %1577 = vmatmul.mubr.bf16.gmra.mrb[0].mxu0 %v1518
        %v1578 = vpop.f32.mrb[0].mxu0
        %v1579 = vadd.f32 0.0, %v1578
        %v1580 = vpop.f32.mrb[0].mxu0
        %v1581 = vpop.f32.mrb[0].mxu0
        %v1582 = vadd.f32 0.0, %v1581
        %v1583 = vpop.f32.mrb[0].mxu0
        %1584 = vdwg.mxu0
        %v1585 = vadd.f32 %v1476, %v1555
        %v1586 = vadd.f32 %v1479, %v1558
        %v1587 = vadd.f32 %v1484, %v1563
        %v1588 = vadd.f32 %v1487, %v1566
        %v1589 = vadd.f32 %v1492, %v1571
        %v1590 = vadd.f32 %v1495, %v1574
        %v1591 = vadd.f32 %v1500, %v1579
        %v1592 = vadd.f32 %v1503, %v1582
        %v1593 = vld [vmem:[#allocation13] sm:$0x1]
        %v1595 = vlaneseq
        %v1596 = vshrl.u32 %v1595, 7
        %v1597 = vsub.s32 0, %v1596
        %v1598 = vrot.slane %v1593, %v1597
        %v1600 = vmul.f32 %v1585, %v1598
        %v1601 = vmul.f32 %v1586, %v1598
        %v1602 = vmul.f32 %v1587, %v1598
        %v1603 = vmul.f32 %v1588, %v1598
        %v1604 = vmul.f32 %v1589, %v1598
        %v1605 = vmul.f32 %v1590, %v1598
        %v1606 = vmul.f32 %v1591, %v1598
        %v1607 = vmul.f32 %v1592, %v1598
        %v1608 = vld [vmem:[#allocation14] sm:$0x1]
        %v1610 = vlaneseq
        %v1611 = vshrl.u32 %v1610, 7
        %v1612 = vsub.s32 0, %v1611
        %v1613 = vrot.slane %v1608, %v1612
        %v1615 = vadd.f32 %v1600, %v1613
        %v1616 = vadd.f32 %v1601, %v1613
        %v1617 = vadd.f32 %v1602, %v1613
        %v1618 = vadd.f32 %v1603, %v1613
        %v1619 = vadd.f32 %v1604, %v1613
        %v1620 = vadd.f32 %v1605, %v1613
        %v1621 = vadd.f32 %v1606, %v1613
        %v1622 = vadd.f32 %v1607, %v1613
        %v1623 = vadd.f32 %v1615, %v493
        %v1624 = vadd.f32 %v1616, %v494
        %v1625 = vadd.f32 %v1617, %v495
        %v1626 = vadd.f32 %v1618, %v496
        %v1627 = vadd.f32 %v1619, %v497
        %v1628 = vadd.f32 %v1620, %v498
        %v1629 = vadd.f32 %v1621, %v499
        %v1630 = vadd.f32 %v1622, %v500
        %v1631 = vmax.f32 %v1623, 0.0
        %v1632 = vmax.f32 %v1624, 0.0
        %v1633 = vmax.f32 %v1625, 0.0
        %v1634 = vmax.f32 %v1626, 0.0
        %v1635 = vmax.f32 %v1627, 0.0
        %v1636 = vmax.f32 %v1628, 0.0
        %v1637 = vmax.f32 %v1629, 0.0
        %v1638 = vmax.f32 %v1630, 0.0
        %1639 = vst.msk [vmem:[%s442] sm:$0xff] %vm709, %v1631
        %1640 = vst.msk [vmem:[%s442 + $0x8] sm:$0xff] %vm709, %v1632
        %1641 = vst.msk [vmem:[%s442 + $0x10] sm:$0xff] %vm709, %v1633
        %1642 = vst.msk [vmem:[%s442 + $0x18] sm:$0xff] %vm709, %v1634
        %1643 = vst.msk [vmem:[%s442 + $0x20] sm:$0xff] %vm709, %v1635
        %1644 = vst.msk [vmem:[%s442 + $0x28] sm:$0xff] %vm709, %v1636
        %1645 = vst.msk [vmem:[%s442 + $0x30] sm:$0xff] %vm709, %v1637
        %1646 = vst.msk [vmem:[%s442 + $0x38] sm:$0xff] %vm709, %v1638
        %s1647 = sand.u32 %s217, 1
        %s1648 = scalar_lea.sflag [#allocation4], %s1647
        %s1649 = sand.u32 %s217, 1
        %s1650 = smul.addr %s1649, 64
        %s1651 = scalar_lea.vmem [#allocation16], %s1650
        // Predicated region
        $region85: #{next_stage_g_forward.5} parent=51 // pred_check
          %p1652 = pneg %p227
        $region86: #{next_stage_g_forward.5} parent=51 // pred_check_branch
          %1654 = sbr.rel (%p1652) target = $region88
        $region87: #{next_stage_g_forward.5} parent=51 // pred_region
          %s1656 = ssub.s32 1024, 1024
          %1657 = vsyncadd %s1648, %s1656
          %s1658 = smul.addr %s31, 8
          %s1659 = smul.addr %s1658, 128
          %s1660 = scalar_lea.hbm %s8, %s1659
          %s1661 = sshll.u32 %s1651, 4
          %s1662 = int_to_ptr.vmem [resolvable:$true] %s1661
          %1667 = dma.vmem_to_hbm [thread:$0]  %s1662, 1024, %s1660, %s1648, 128, 128, 8
        $region88: #{next_stage_g_forward.5} parent=51 // pred_fallthru
          _
      $region52: #{next_stage_g_forward.5} parent=5 // pred_fallthru
        _
      %p1668 = scmp.le.s32.totalorder 2, %s26
      // Predicated region
      $region89: #{next_stage_g_forward.5} parent=5 // pred_check
        %p1669 = pneg %p1668
      $region90: #{next_stage_g_forward.5} parent=5 // pred_check_branch
        %1671 = sbr.rel (%p1669) target = $region92
      $region91: #{next_stage_g_forward.5} parent=5 // pred_region
        %s1672 = ssub.s32 %s26, 2
        // Predicated region
        $region93: #{next_stage_g_forward.5} parent=91 // pred_check
          %p1673 = pneg %p233
        $region94: #{next_stage_g_forward.5} parent=91 // pred_check_branch
          %1675 = sbr.rel (%p1673) target = $region96
        $region95: #{next_stage_g_forward.5} parent=91 // pred_region
          %s1676 = sand.u32 %s218, 1
          %s1677 = scalar_lea.sflag [#allocation4], %s1676
          %s1678 = sand.u32 %s218, 1
          %s1679 = smul.addr %s1678, 64
          %s1680 = scalar_lea.vmem [#allocation16], %s1679
          %1681 = dma.done %s1677, 1024
        $region96: #{next_stage_g_forward.5} parent=91 // pred_fallthru
          _
      $region92: #{next_stage_g_forward.5} parent=5 // pred_fallthru
        _
    $region6: #{next_stage_g_forward.5} parent=1 // loop_footer
      %s30 = sadd.s32 1, %s26
    $region7: #{next_stage_g_forward.5} parent=1 // loop_footer_branch
      %25 = sbr.rel target = $region3
    $region8: #{next_stage_g_forward.5} parent=1 // loop_exit
      _
    %1682 = vsyncpa [#allocation3], 1
    %s1683 = scalar_lea.sflag [#allocation3], 1
    %1684 = vsyncpa %s1683, 1
    %1685 = vsyncpa [#allocation6], 1
    %s1686 = scalar_lea.sflag [#allocation6], 1
    %1687 = vsyncpa %s1686, 1
    %1688 = vsyncpa [#allocation9], 1
    %1689 = vsyncpa [#allocation12], 1
    %1690 = vsyncpa [#allocation15], 1
    %1691 = vsyncpa [#allocation4], 1
    %s1692 = scalar_lea.sflag [#allocation4], 1
    %1693 = vsyncpa %s1692, 1

// kernel: next_stage_g_forward.6
$region0: #{next_stage_g_forward.6}
  #allocation0 [shape = 'u32[]', space=smem, size = 0x4, offset = 0x4, fixed_abs, tag = 'smem constant byte address 0x4 - core index']
  #allocation1 [shape = 'u32[144,128]{1,0:T(1,128)}', space=vmem, size = 0x12000, scoped, tag = 'internal scratch']
  %s0 = inlined_call_operand.hbm [shape: f32[2,8,8,16], index: 0, kind: input, shape index: {}]
  %s1 = inlined_call_operand.hbm [shape: f32[3,48,16], index: 1, kind: input, shape index: {}]
  %s2 = inlined_call_operand.hbm [shape: f32[1,16], index: 2, kind: input, shape index: {}]
  %s3 = inlined_call_operand.hbm [shape: f32[1,16], index: 3, kind: input, shape index: {}]
  %s4 = inlined_call_operand.hbm [shape: f32[3,48,16], index: 4, kind: input, shape index: {}]
  %s5 = inlined_call_operand.hbm [shape: f32[1,16], index: 5, kind: input, shape index: {}]
  %s6 = inlined_call_operand.hbm [shape: f32[1,16], index: 6, kind: input, shape index: {}]
  %s7 = inlined_call_operand.hbm [shape: f32[2,8,8,16], index: 7, kind: output, shape index: {}]
  %s8 = sld [smem:[#allocation0]]
  $region89: #{next_stage_g_forward.6} parent=0
    _
  %s10 = ssub.s32 1, %s8
  %s11 = scalar_select 0, %s10, %s8
  $region1: #{next_stage_g_forward.6} parent=0
    #allocation2 [shape = 'u8[65536]{0}', space=vmem, size = 0x10000, scoped, tag = 'input window, operand 0']
    #allocation3 [shape = 's32[2]{0}', space=sflag, size = 0x8, scoped, tag = 'scoped memory for next_stage_g_forward.6']
    #allocation4 [shape = 's32[2]{0}', space=sflag, size = 0x8, scoped, tag = 'scoped memory for next_stage_g_forward.6']
    #allocation5 [shape = 'u8[73728]{0}', space=vmem, size = 0x12000, scoped, tag = 'input window, operand 1, single buffered']
    #allocation6 [shape = 's32[1]{0}', space=sflag, size = 0x4, scoped, tag = 'scoped memory for next_stage_g_forward.6']
    #allocation7 [shape = 'u8[512]{0}', space=vmem, size = 0x400, scoped, tag = 'input window, operand 2, single buffered']
    #allocation8 [shape = 'u8[512]{0}', space=vmem, size = 0x400, scoped, tag = 'input window, operand 3, single buffered']
    #allocation9 [shape = 's32[1]{0}', space=sflag, size = 0x4, scoped, tag = 'scoped memory for next_stage_g_forward.6']
    #allocation10 [shape = 'u8[73728]{0}', space=vmem, size = 0x12000, scoped, tag = 'input window, operand 4, single buffered']
    #allocation11 [shape = 'u8[512]{0}', space=vmem, size = 0x400, scoped, tag = 'input window, operand 5, single buffered']
    #allocation12 [shape = 's32[1]{0}', space=sflag, size = 0x4, scoped, tag = 'scoped memory for next_stage_g_forward.6']
    #allocation13 [shape = 'u8[512]{0}', space=vmem, size = 0x400, scoped, tag = 'input window, operand 6, single buffered']
    #allocation14 [shape = 'u8[65536]{0}', space=vmem, size = 0x10000, scoped, tag = 'output window, operand 0']
    %12 = vsyncpa [#allocation3], 0
    %s13 = scalar_lea.sflag [#allocation3], 1
    %14 = vsyncpa %s13, 0
    %15 = vsyncpa [#allocation6], 0
    %16 = vsyncpa [#allocation9], 0
    %17 = vsyncpa [#allocation12], 0
    %18 = vsyncpa [#allocation4], 0
    %s19 = scalar_lea.sflag [#allocation4], 1
    %20 = vsyncpa %s19, 0
    loop: start=0, step=1, limit=4
    $region2: #{next_stage_g_forward.6} parent=1 // loop_pre_header
      _
    $region3: #{next_stage_g_forward.6} parent=1 // loop_header
      %s22 = sphi 0, %s26
      %p23 = scmp.ge.s32.totalorder %s22, 4
      %s32 = sphi 0, %s34
      %s35 = sphi 0, %s32
      %s36 = sphi 0, %s35
      %s52 = sphi 0, %s36
      %s56 = sphi 0, %s56
      %s58 = sphi 0, %s56
      %s59 = sphi 0, %s58
      %s73 = sphi 0, %s59
      %s77 = sphi 0, %s77
      %s79 = sphi 0, %s77
      %s80 = sphi 0, %s79
      %s94 = sphi 0, %s80
      %s98 = sphi 0, %s98
      %s100 = sphi 0, %s98
      %s101 = sphi 0, %s100
      %s115 = sphi 0, %s101
      %s119 = sphi 0, %s119
      %s121 = sphi 0, %s119
      %s122 = sphi 0, %s121
      %s136 = sphi 0, %s122
      %s140 = sphi 0, %s140
      %s142 = sphi 0, %s140
      %s143 = sphi 0, %s142
      %s157 = sphi 0, %s143
      %s161 = sphi 0, %s161
      %s163 = sphi 0, %s161
      %s164 = sphi 0, %s163
      %s178 = sphi 0, %s164
      %s184 = sphi 0, %s186
      %s187 = sphi 0, %s184
      %s188 = sphi 0, %s187
      %s204 = sphi 0, %s188
    $region4: #{next_stage_g_forward.6} parent=1 // loop_header_branch
      %25 = sbr.rel (%p23) target = $region8
    $region5: #{next_stage_g_forward.6} parent=1 // loop_body
      %s27 = ssub.s32 %s22, 1
      %s28 = ssub.s32 %s22, 2
      %s29 = sadd.s32 %s22, 1
      %s30 = ssub.s32 %s22, %s29
      %p31 = scmp.eq.s32.totalorder %s30, 0
      %s33 = sadd.s32 %s32, 1
      %s34 = scalar_select %p31, %s32, %s33
      %p37 = pneg %p31
      %p38 = scmp.eq.s32.totalorder %s22, 1
      %p39 = por %p37, %p38
      %p40 = scmp.ne.s32.totalorder %s32, %s35
      %p41 = scmp.eq.s32.totalorder %s22, 0
      %p42 = por %p40, %p41
      %p43 = scmp.ne.s32.totalorder %s32, %s35
      %p44 = scmp.eq.s32.totalorder %s27, 1
      %p45 = por %p43, %p44
      %p46 = scmp.ne.s32.totalorder %s35, %s36
      %p47 = scmp.eq.s32.totalorder %s27, 0
      %p48 = por %p46, %p47
      %p49 = scmp.ne.s32.totalorder %s35, %s36
      %p50 = scmp.eq.s32.totalorder %s28, 1
      %p51 = por %p49, %p50
      %p53 = scmp.ne.s32.totalorder %s36, %s52
      %p54 = scmp.eq.s32.totalorder %s28, 0
      %p55 = por %p53, %p54
      %s57 = sadd.s32 %s56, 1
      %p60 = scmp.eq.s32.totalorder %s22, 1
      %p61 = scmp.ne.s32.totalorder %s56, %s58
      %p62 = scmp.eq.s32.totalorder %s22, 0
      %p63 = por %p61, %p62
      %p64 = scmp.ne.s32.totalorder %s56, %s58
      %p65 = scmp.eq.s32.totalorder %s27, 1
      %p66 = por %p64, %p65
      %p67 = scmp.ne.s32.totalorder %s58, %s59
      %p68 = scmp.eq.s32.totalorder %s27, 0
      %p69 = por %p67, %p68
      %p70 = scmp.ne.s32.totalorder %s58, %s59
      %p71 = scmp.eq.s32.totalorder %s28, 1
      %p72 = por %p70, %p71
      %p74 = scmp.ne.s32.totalorder %s59, %s73
      %p75 = scmp.eq.s32.totalorder %s28, 0
      %p76 = por %p74, %p75
      %s78 = sadd.s32 %s77, 1
      %p81 = scmp.eq.s32.totalorder %s22, 1
      %p82 = scmp.ne.s32.totalorder %s77, %s79
      %p83 = scmp.eq.s32.totalorder %s22, 0
      %p84 = por %p82, %p83
      %p85 = scmp.ne.s32.totalorder %s77, %s79
      %p86 = scmp.eq.s32.totalorder %s27, 1
      %p87 = por %p85, %p86
      %p88 = scmp.ne.s32.totalorder %s79, %s80
      %p89 = scmp.eq.s32.totalorder %s27, 0
      %p90 = por %p88, %p89
      %p91 = scmp.ne.s32.totalorder %s79, %s80
      %p92 = scmp.eq.s32.totalorder %s28, 1
      %p93 = por %p91, %p92
      %p95 = scmp.ne.s32.totalorder %s80, %s94
      %p96 = scmp.eq.s32.totalorder %s28, 0
      %p97 = por %p95, %p96
      %s99 = sadd.s32 %s98, 1
      %p102 = scmp.eq.s32.totalorder %s22, 1
      %p103 = scmp.ne.s32.totalorder %s98, %s100
      %p104 = scmp.eq.s32.totalorder %s22, 0
      %p105 = por %p103, %p104
      %p106 = scmp.ne.s32.totalorder %s98, %s100
      %p107 = scmp.eq.s32.totalorder %s27, 1
      %p108 = por %p106, %p107
      %p109 = scmp.ne.s32.totalorder %s100, %s101
      %p110 = scmp.eq.s32.totalorder %s27, 0
      %p111 = por %p109, %p110
      %p112 = scmp.ne.s32.totalorder %s100, %s101
      %p113 = scmp.eq.s32.totalorder %s28, 1
      %p114 = por %p112, %p113
      %p116 = scmp.ne.s32.totalorder %s101, %s115
      %p117 = scmp.eq.s32.totalorder %s28, 0
      %p118 = por %p116, %p117
      %s120 = sadd.s32 %s119, 1
      %p123 = scmp.eq.s32.totalorder %s22, 1
      %p124 = scmp.ne.s32.totalorder %s119, %s121
      %p125 = scmp.eq.s32.totalorder %s22, 0
      %p126 = por %p124, %p125
      %p127 = scmp.ne.s32.totalorder %s119, %s121
      %p128 = scmp.eq.s32.totalorder %s27, 1
      %p129 = por %p127, %p128
      %p130 = scmp.ne.s32.totalorder %s121, %s122
      %p131 = scmp.eq.s32.totalorder %s27, 0
      %p132 = por %p130, %p131
      %p133 = scmp.ne.s32.totalorder %s121, %s122
      %p134 = scmp.eq.s32.totalorder %s28, 1
      %p135 = por %p133, %p134
      %p137 = scmp.ne.s32.totalorder %s122, %s136
      %p138 = scmp.eq.s32.totalorder %s28, 0
      %p139 = por %p137, %p138
      %s141 = sadd.s32 %s140, 1
      %p144 = scmp.eq.s32.totalorder %s22, 1
      %p145 = scmp.ne.s32.totalorder %s140, %s142
      %p146 = scmp.eq.s32.totalorder %s22, 0
      %p147 = por %p145, %p146
      %p148 = scmp.ne.s32.totalorder %s140, %s142
      %p149 = scmp.eq.s32.totalorder %s27, 1
      %p150 = por %p148, %p149
      %p151 = scmp.ne.s32.totalorder %s142, %s143
      %p152 = scmp.eq.s32.totalorder %s27, 0
      %p153 = por %p151, %p152
      %p154 = scmp.ne.s32.totalorder %s142, %s143
      %p155 = scmp.eq.s32.totalorder %s28, 1
      %p156 = por %p154, %p155
      %p158 = scmp.ne.s32.totalorder %s143, %s157
      %p159 = scmp.eq.s32.totalorder %s28, 0
      %p160 = por %p158, %p159
      %s162 = sadd.s32 %s161, 1
      %p165 = scmp.eq.s32.totalorder %s22, 1
      %p166 = scmp.ne.s32.totalorder %s161, %s163
      %p167 = scmp.eq.s32.totalorder %s22, 0
      %p168 = por %p166, %p167
      %p169 = scmp.ne.s32.totalorder %s161, %s163
      %p170 = scmp.eq.s32.totalorder %s27, 1
      %p171 = por %p169, %p170
      %p172 = scmp.ne.s32.totalorder %s163, %s164
      %p173 = scmp.eq.s32.totalorder %s27, 0
      %p174 = por %p172, %p173
      %p175 = scmp.ne.s32.totalorder %s163, %s164
      %p176 = scmp.eq.s32.totalorder %s28, 1
      %p177 = por %p175, %p176
      %p179 = scmp.ne.s32.totalorder %s164, %s178
      %p180 = scmp.eq.s32.totalorder %s28, 0
      %p181 = por %p179, %p180
      %s182 = ssub.s32 %s22, %s29
      %p183 = scmp.eq.s32.totalorder %s182, 0
      %s185 = sadd.s32 %s184, 1
      %s186 = scalar_select %p183, %s184, %s185
      %p189 = pneg %p183
      %p190 = scmp.eq.s32.totalorder %s22, 1
      %p191 = por %p189, %p190
      %p192 = scmp.ne.s32.totalorder %s184, %s187
      %p193 = scmp.eq.s32.totalorder %s22, 0
      %p194 = por %p192, %p193
      %p195 = scmp.ne.s32.totalorder %s184, %s187
      %p196 = scmp.eq.s32.totalorder %s27, 1
      %p197 = por %p195, %p196
      %p198 = scmp.ne.s32.totalorder %s187, %s188
      %p199 = scmp.eq.s32.totalorder %s27, 0
      %p200 = por %p198, %p199
      %p201 = scmp.ne.s32.totalorder %s187, %s188
      %p202 = scmp.eq.s32.totalorder %s28, 1
      %p203 = por %p201, %p202
      %p205 = scmp.ne.s32.totalorder %s188, %s204
      %p206 = scmp.eq.s32.totalorder %s28, 0
      %p207 = por %p205, %p206
      %p208 = scmp.le.s32.totalorder 1, %s22
      %p209 = scmp.lt.s32.totalorder %s22, 3
      %p210 = pnand %p208, %p209
      %p211 = pneg %p210
      // Predicated region
      $region9: #{next_stage_g_forward.6} parent=5 // pred_check
        _
      $region10: #{next_stage_g_forward.6} parent=5 // pred_check_branch
        %213 = sbr.rel (%p210) target = $region12
      $region11: #{next_stage_g_forward.6} parent=5 // pred_region
        %s214 = ssub.s32 %s22, 1
        // Predicated region
        $region13: #{next_stage_g_forward.6} parent=11 // pred_check
          %p215 = pneg %p69
        $region14: #{next_stage_g_forward.6} parent=11 // pred_check_branch
          %217 = sbr.rel (%p215) target = $region16
        $region15: #{next_stage_g_forward.6} parent=11 // pred_region
          %s219 = ssub.s32 2304, 2304
          %220 = vsyncadd [#allocation6], %s219
          %s221 = sshll.u32 [#allocation5], 4
          %s222 = int_to_ptr.vmem [resolvable:$true] %s221
          %227 = dma.hbm_to_vmem [thread:$0]  %s1, 2304, %s222, [#allocation6], 128, 128, 8
        $region16: #{next_stage_g_forward.6} parent=11 // pred_fallthru
          _
        // Predicated region
        $region17: #{next_stage_g_forward.6} parent=11 // pred_check
          %p228 = pneg %p90
        $region18: #{next_stage_g_forward.6} parent=11 // pred_check_branch
          %230 = sbr.rel (%p228) target = $region20
        $region19: #{next_stage_g_forward.6} parent=11 // pred_region
          %s232 = ssub.s32 16, 16
          %233 = vsyncadd [#allocation6], %s232
          %s235 = sshll.u32 [#allocation7], 4
          %s236 = int_to_ptr.vmem [resolvable:$true] %s235
          %238 = dma.hbm_to_vmem [thread:$0]  %s2, 16, %s236, [#allocation6]
        $region20: #{next_stage_g_forward.6} parent=11 // pred_fallthru
          _
        // Predicated region
        $region21: #{next_stage_g_forward.6} parent=11 // pred_check
          %p239 = pneg %p111
        $region22: #{next_stage_g_forward.6} parent=11 // pred_check_branch
          %241 = sbr.rel (%p239) target = $region24
        $region23: #{next_stage_g_forward.6} parent=11 // pred_region
          %s243 = ssub.s32 16, 16
          %244 = vsyncadd [#allocation9], %s243
          %s246 = sshll.u32 [#allocation8], 4
          %s247 = int_to_ptr.vmem [resolvable:$true] %s246
          %249 = dma.hbm_to_vmem [thread:$0]  %s3, 16, %s247, [#allocation9]
        $region24: #{next_stage_g_forward.6} parent=11 // pred_fallthru
          _
        // Predicated region
        $region25: #{next_stage_g_forward.6} parent=11 // pred_check
          %p250 = pneg %p132
        $region26: #{next_stage_g_forward.6} parent=11 // pred_check_branch
          %252 = sbr.rel (%p250) target = $region28
        $region27: #{next_stage_g_forward.6} parent=11 // pred_region
          %s254 = ssub.s32 2304, 2304
          %255 = vsyncadd [#allocation9], %s254
          %s256 = sshll.u32 [#allocation10], 4
          %s257 = int_to_ptr.vmem [resolvable:$true] %s256
          %262 = dma.hbm_to_vmem [thread:$0]  %s4, 2304, %s257, [#allocation9], 128, 128, 8
        $region28: #{next_stage_g_forward.6} parent=11 // pred_fallthru
          _
        // Predicated region
        $region29: #{next_stage_g_forward.6} parent=11 // pred_check
          %p263 = pneg %p153
        $region30: #{next_stage_g_forward.6} parent=11 // pred_check_branch
          %265 = sbr.rel (%p263) target = $region32
        $region31: #{next_stage_g_forward.6} parent=11 // pred_region
          %s267 = ssub.s32 16, 16
          %268 = vsyncadd [#allocation12], %s267
          %s270 = sshll.u32 [#allocation11], 4
          %s271 = int_to_ptr.vmem [resolvable:$true] %s270
          %273 = dma.hbm_to_vmem [thread:$0]  %s5, 16, %s271, [#allocation12]
        $region32: #{next_stage_g_forward.6} parent=11 // pred_fallthru
          _
        // Predicated region
        $region33: #{next_stage_g_forward.6} parent=11 // pred_check
          %p274 = pneg %p174
        $region34: #{next_stage_g_forward.6} parent=11 // pred_check_branch
          %276 = sbr.rel (%p274) target = $region36
        $region35: #{next_stage_g_forward.6} parent=11 // pred_region
          %s278 = ssub.s32 16, 16
          %279 = vsyncadd [#allocation12], %s278
          %s281 = sshll.u32 [#allocation13], 4
          %s282 = int_to_ptr.vmem [resolvable:$true] %s281
          %284 = dma.hbm_to_vmem [thread:$0]  %s6, 16, %s282, [#allocation12]
        $region36: #{next_stage_g_forward.6} parent=11 // pred_fallthru
          _
      $region12: #{next_stage_g_forward.6} parent=5 // pred_fallthru
        _
      %p285 = scmp.lt.s32.totalorder %s22, 2
      // Predicated region
      $region37: #{next_stage_g_forward.6} parent=5 // pred_check
        %p286 = pneg %p285
      $region38: #{next_stage_g_forward.6} parent=5 // pred_check_branch
        %288 = sbr.rel (%p286) target = $region40
      $region39: #{next_stage_g_forward.6} parent=5 // pred_region
        // Predicated region
        $region41: #{next_stage_g_forward.6} parent=39 // pred_check
          %p289 = pneg %p42
        $region42: #{next_stage_g_forward.6} parent=39 // pred_check_branch
          %291 = sbr.rel (%p289) target = $region44
        $region43: #{next_stage_g_forward.6} parent=39 // pred_region
          %s292 = sand.u32 %s32, 1
          %s293 = scalar_lea.sflag [#allocation3], %s292
          %s294 = sand.u32 %s32, 1
          %s295 = smul.addr %s294, 64
          %s296 = scalar_lea.vmem [#allocation2], %s295
          %s298 = ssub.s32 1024, 1024
          %299 = vsyncadd %s293, %s298
          %s300 = smul.addr %s22, 8
          %s301 = smul.addr %s300, 128
          %s302 = scalar_lea.hbm %s0, %s301
          %s303 = sshll.u32 %s296, 4
          %s304 = int_to_ptr.vmem [resolvable:$true] %s303
          %309 = dma.hbm_to_vmem [thread:$0]  %s302, 1024, %s304, %s293, 128, 128, 8
        $region44: #{next_stage_g_forward.6} parent=39 // pred_fallthru
          _
      $region40: #{next_stage_g_forward.6} parent=5 // pred_fallthru
        _
      %p310 = scmp.le.s32.totalorder 1, %s22
      %p311 = scmp.lt.s32.totalorder %s22, 3
      %p312 = pnand %p310, %p311
      %p313 = pneg %p312
      // Predicated region
      $region45: #{next_stage_g_forward.6} parent=5 // pred_check
        _
      $region46: #{next_stage_g_forward.6} parent=5 // pred_check_branch
        %315 = sbr.rel (%p312) target = $region48
      $region47: #{next_stage_g_forward.6} parent=5 // pred_region
        %s316 = ssub.s32 %s22, 1
        %s317 = sand.u32 %s35, 1
        %s318 = scalar_lea.sflag [#allocation3], %s317
        %s319 = sand.u32 %s35, 1
        %s320 = smul.addr %s319, 64
        %s321 = scalar_lea.vmem [#allocation2], %s320
        // Predicated region
        $region49: #{next_stage_g_forward.6} parent=47 // pred_check
          %p322 = pneg %p48
        $region50: #{next_stage_g_forward.6} parent=47 // pred_check_branch
          %324 = sbr.rel (%p322) target = $region52
        $region51: #{next_stage_g_forward.6} parent=47 // pred_region
          %325 = dma.done %s318, 1024
        $region52: #{next_stage_g_forward.6} parent=47 // pred_fallthru
          _
        // Predicated region
        $region53: #{next_stage_g_forward.6} parent=47 // pred_check
          %p326 = pneg %p69
        $region54: #{next_stage_g_forward.6} parent=47 // pred_check_branch
          %328 = sbr.rel (%p326) target = $region56
        $region55: #{next_stage_g_forward.6} parent=47 // pred_region
          %329 = dma.done [#allocation6], 2304
        $region56: #{next_stage_g_forward.6} parent=47 // pred_fallthru
          _
        // Predicated region
        $region57: #{next_stage_g_forward.6} parent=47 // pred_check
          %p330 = pneg %p90
        $region58: #{next_stage_g_forward.6} parent=47 // pred_check_branch
          %332 = sbr.rel (%p330) target = $region60
        $region59: #{next_stage_g_forward.6} parent=47 // pred_region
          %333 = dma.done [#allocation6], 16
        $region60: #{next_stage_g_forward.6} parent=47 // pred_fallthru
          _
        // Predicated region
        $region61: #{next_stage_g_forward.6} parent=47 // pred_check
          %p334 = pneg %p111
        $region62: #{next_stage_g_forward.6} parent=47 // pred_check_branch
          %336 = sbr.rel (%p334) target = $region64
        $region63: #{next_stage_g_forward.6} parent=47 // pred_region
          %337 = dma.done [#allocation9], 16
        $region64: #{next_stage_g_forward.6} parent=47 // pred_fallthru
          _
        // Predicated region
        $region65: #{next_stage_g_forward.6} parent=47 // pred_check
          %p338 = pneg %p132
        $region66: #{next_stage_g_forward.6} parent=47 // pred_check_branch
          %340 = sbr.rel (%p338) target = $region68
        $region67: #{next_stage_g_forward.6} parent=47 // pred_region
          %341 = dma.done [#allocation9], 2304
        $region68: #{next_stage_g_forward.6} parent=47 // pred_fallthru
          _
        // Predicated region
        $region69: #{next_stage_g_forward.6} parent=47 // pred_check
          %p342 = pneg %p153
        $region70: #{next_stage_g_forward.6} parent=47 // pred_check_branch
          %344 = sbr.rel (%p342) target = $region72
        $region71: #{next_stage_g_forward.6} parent=47 // pred_region
          %345 = dma.done [#allocation12], 16
        $region72: #{next_stage_g_forward.6} parent=47 // pred_fallthru
          _
        // Predicated region
        $region73: #{next_stage_g_forward.6} parent=47 // pred_check
          %p346 = pneg %p174
        $region74: #{next_stage_g_forward.6} parent=47 // pred_check_branch
          %348 = sbr.rel (%p346) target = $region76
        $region75: #{next_stage_g_forward.6} parent=47 // pred_region
          %349 = dma.done [#allocation12], 16
        $region76: #{next_stage_g_forward.6} parent=47 // pred_fallthru
          _
        %s350 = sand.u32 %s35, 1
        %s351 = scalar_lea.sflag [#allocation3], %s350
        %s352 = sand.u32 %s35, 1
        %s353 = smul.addr %s352, 64
        %s354 = scalar_lea.vmem [#allocation2], %s353
        %p355 = pneg %p48
        %p356 = pneg %p45
        %p357 = pneg %p69
        %p358 = pneg %p66
        %p359 = pneg %p90
        %p360 = pneg %p87
        %p361 = pneg %p111
        %p362 = pneg %p108
        %p363 = pneg %p132
        %p364 = pneg %p129
        %p365 = pneg %p153
        %p366 = pneg %p150
        %p367 = pneg %p174
        %p368 = pneg %p171
        %p369 = pneg %p200
        %p370 = pneg %p197
        %s371 = sand.u32 %s187, 1
        %s372 = scalar_lea.sflag [#allocation4], %s371
        %s373 = sand.u32 %s187, 1
        %s374 = smul.addr %s373, 64
        %s375 = scalar_lea.vmem [#allocation14], %s374
        %v377 = vld [vmem:[%s321] sm:$0xff]
        %v378 = vld [vmem:[%s321 + $0x8] sm:$0xff]
        %v379 = vld [vmem:[%s321 + $0x10] sm:$0xff]
        %v380 = vld [vmem:[%s321 + $0x18] sm:$0xff]
        %v381 = vld [vmem:[%s321 + $0x20] sm:$0xff]
        %v382 = vld [vmem:[%s321 + $0x28] sm:$0xff]
        %v383 = vld [vmem:[%s321 + $0x30] sm:$0xff]
        %v384 = vld [vmem:[%s321 + $0x38] sm:$0xff]
        %v385 = vpack.c.bf16 %v377, %v377
        %v386 = vpack.c.bf16 %v378, %v378
        %v387 = vpack.c.bf16 %v379, %v379
        %v388 = vpack.c.bf16 %v380, %v380
        %v389 = vpack.c.bf16 %v381, %v381
        %v390 = vpack.c.bf16 %v382, %v382
        %v391 = vpack.c.bf16 %v383, %v383
        %v392 = vpack.c.bf16 %v384, %v384
        %v394 = vshrl.u32 0, 16
        %v396 = vrot.slane %v394, 7
        %v397 = vshll.u32 0, 16
        %v399 = vor.u32 %v396, %v397
        %v401 = vshrl.u32 %v385, 16
        %v403 = vrot.slane %v401, 7
        %v404 = vshll.u32 %v385, 16
        %v406 = vor.u32 %v403, %v404
        %v408 = vshrl.u32 %v386, 16
        %v410 = vrot.slane %v408, 7
        %v411 = vshll.u32 %v386, 16
        %v413 = vor.u32 %v410, %v411
        %v415 = vshrl.u32 %v387, 16
        %v417 = vrot.slane %v415, 7
        %v418 = vshll.u32 %v387, 16
        %v420 = vor.u32 %v417, %v418
        %v422 = vshrl.u32 %v388, 16
        %v424 = vrot.slane %v422, 7
        %v425 = vshll.u32 %v388, 16
        %v427 = vor.u32 %v424, %v425
        %v429 = vshrl.u32 %v389, 16
        %v431 = vrot.slane %v429, 7
        %v432 = vshll.u32 %v389, 16
        %v434 = vor.u32 %v431, %v432
        %v436 = vshrl.u32 %v390, 16
        %v438 = vrot.slane %v436, 7
        %v439 = vshll.u32 %v390, 16
        %v441 = vor.u32 %v438, %v439
        %v443 = vshrl.u32 %v391, 16
        %v445 = vrot.slane %v443, 7
        %v446 = vshll.u32 %v391, 16
        %v448 = vor.u32 %v445, %v446
        %v450 = vshrl.u32 %v392, 16
        %v452 = vrot.slane %v450, 7
        %v453 = vshll.u32 %v392, 16
        %v455 = vor.u32 %v452, %v453
        %vm465 = vcmask 1040384
        %vm466 = vsmask.f32 256
        %vm467 = vmand %vm465, %vm466
        %v468 = vsel %vm467, 0, %v399
        %v469 = vsel %vm467, 0, %v406
        %v470 = vsel %vm467, 0, %v413
        %v471 = vsel %vm467, 0, %v420
        %v472 = vsel %vm467, 0, %v427
        %v473 = vsel %vm467, 0, %v434
        %v474 = vsel %vm467, 0, %v441
        %v475 = vsel %vm467, 0, %v448
        %v476 = vsel %vm467, 0, %v455
        %vm477 = vcmask 1044480
        %vm478 = vsmask.f32 4352
        %vm479 = vmand %vm477, %vm478
        %v480 = vsel %vm479, %v468, 0
        %v481 = vsel %vm479, %v469, 0
        %v482 = vsel %vm479, %v470, 0
        %v483 = vsel %vm479, %v471, 0
        %v484 = vsel %vm479, %v472, 0
        %v485 = vsel %vm479, %v473, 0
        %v486 = vsel %vm479, %v474, 0
        %v487 = vsel %vm479, %v475, 0
        %v488 = vsel %vm479, %v476, 0
        %v490 = vshrl.u32 %v480, 16
        %v492 = vshll.u32 %v480, 16
        %v494 = vrot.slane %v492, 1
        %v495 = vor.u32 %v490, %v494
        %v497 = vshrl.u32 %v481, 16
        %v499 = vshll.u32 %v481, 16
        %v501 = vrot.slane %v499, 1
        %v502 = vor.u32 %v497, %v501
        %v504 = vshrl.u32 %v482, 16
        %v506 = vshll.u32 %v482, 16
        %v508 = vrot.slane %v506, 1
        %v509 = vor.u32 %v504, %v508
        %v511 = vshrl.u32 %v483, 16
        %v513 = vshll.u32 %v483, 16
        %v515 = vrot.slane %v513, 1
        %v516 = vor.u32 %v511, %v515
        %v518 = vshrl.u32 %v484, 16
        %v520 = vshll.u32 %v484, 16
        %v522 = vrot.slane %v520, 1
        %v523 = vor.u32 %v518, %v522
        %v525 = vshrl.u32 %v485, 16
        %v527 = vshll.u32 %v485, 16
        %v529 = vrot.slane %v527, 1
        %v530 = vor.u32 %v525, %v529
        %v532 = vshrl.u32 %v486, 16
        %v534 = vshll.u32 %v486, 16
        %v536 = vrot.slane %v534, 1
        %v537 = vor.u32 %v532, %v536
        %v539 = vshrl.u32 %v487, 16
        %v541 = vshll.u32 %v487, 16
        %v543 = vrot.slane %v541, 1
        %v544 = vor.u32 %v539, %v543
        %545 = vrot.lane.b32.xlu0 %v495, 16
        %v546 = vpop.permute.xlu0 %545
        %547 = vrot.lane.b32.xlu0 %v502, 16
        %v548 = vpop.permute.xlu0 %547
        %549 = vrot.lane.b32.xlu0 %v509, 16
        %v550 = vpop.permute.xlu0 %549
        %551 = vrot.lane.b32.xlu0 %v516, 16
        %v552 = vpop.permute.xlu0 %551
        %553 = vrot.lane.b32.xlu0 %v523, 16
        %v554 = vpop.permute.xlu0 %553
        %555 = vrot.lane.b32.xlu0 %v530, 16
        %v556 = vpop.permute.xlu0 %555
        %557 = vrot.lane.b32.xlu0 %v537, 16
        %v558 = vpop.permute.xlu0 %557
        %559 = vrot.lane.b32.xlu0 %v544, 16
        %v560 = vpop.permute.xlu0 %559
        %v569 = vrot.slane %v480, 1
        %v570 = vrot.slane %v481, 1
        %v571 = vrot.slane %v482, 1
        %v572 = vrot.slane %v483, 1
        %v573 = vrot.slane %v484, 1
        %v574 = vrot.slane %v485, 1
        %v575 = vrot.slane %v486, 1
        %v576 = vrot.slane %v487, 1
        %577 = vrot.lane.b32.xlu0 %v569, 32
        %v578 = vpop.permute.xlu0 %577
        %579 = vrot.lane.b32.xlu0 %v570, 32
        %v580 = vpop.permute.xlu0 %579
        %581 = vrot.lane.b32.xlu0 %v571, 32
        %v582 = vpop.permute.xlu0 %581
        %583 = vrot.lane.b32.xlu0 %v572, 32
        %v584 = vpop.permute.xlu0 %583
        %585 = vrot.lane.b32.xlu0 %v573, 32
        %v586 = vpop.permute.xlu0 %585
        %587 = vrot.lane.b32.xlu0 %v574, 32
        %v588 = vpop.permute.xlu0 %587
        %589 = vrot.lane.b32.xlu0 %v575, 32
        %v590 = vpop.permute.xlu0 %589
        %591 = vrot.lane.b32.xlu0 %v576, 32
        %v592 = vpop.permute.xlu0 %591
        %vm593 = vcmask 130048
        %v595 = vsel %vm593, %v480, %v546
        %v597 = vsel %vm593, %v481, %v548
        %v599 = vsel %vm593, %v482, %v550
        %v601 = vsel %vm593, %v483, %v552
        %v603 = vsel %vm593, %v484, %v554
        %v605 = vsel %vm593, %v485, %v556
        %v607 = vsel %vm593, %v486, %v558
        %v609 = vsel %vm593, %v487, %v560
        %vm610 = vcmask 261120
        %v612 = vsel %vm610, %v595, %v578
        %v614 = vsel %vm610, %v597, %v580
        %v616 = vsel %vm610, %v599, %v582
        %v618 = vsel %vm610, %v601, %v584
        %v620 = vsel %vm610, %v603, %v586
        %v622 = vsel %vm610, %v605, %v588
        %v624 = vsel %vm610, %v607, %v590
        %v626 = vsel %vm610, %v609, %v592
        %v627 = vld [vmem:[#allocation5] sm:$0xff]
        %v628 = vld [vmem:[#allocation5 + $0x8] sm:$0xff]
        %v629 = vld [vmem:[#allocation5 + $0x10] sm:$0xff]
        %v630 = vld [vmem:[#allocation5 + $0x18] sm:$0xff]
        %v631 = vld [vmem:[#allocation5 + $0x20] sm:$0xff]
        %v632 = vld [vmem:[#allocation5 + $0x28] sm:$0xff]
        %v633 = vpack.c.bf16 %v628, %v627
        %v634 = vpack.c.bf16 %v630, %v629
        %v635 = vpack.c.bf16 %v632, %v631
        %v637 = vshrl.u32 %v488, 16
        %v639 = vshll.u32 %v488, 16
        %v641 = vrot.slane %v639, 1
        %v642 = vor.u32 %v637, %v641
        %643 = vrot.lane.b32.xlu0 %v642, 16
        %v644 = vpop.permute.xlu0 %643
        %v646 = vrot.slane %v488, 1
        %647 = vrot.lane.b32.xlu0 %v646, 32
        %v648 = vpop.permute.xlu0 %647
        %v650 = vsel %vm593, %v488, %v644
        %v652 = vsel %vm610, %v650, %v648
        %s653 = scalar_lea.vmem [#allocation5], 48
        %v654 = vld [vmem:[%s653] sm:$0xff]
        %v655 = vld [vmem:[%s653 + $0x8] sm:$0xff]
        %v656 = vld [vmem:[%s653 + $0x10] sm:$0xff]
        %v657 = vld [vmem:[%s653 + $0x18] sm:$0xff]
        %v658 = vld [vmem:[%s653 + $0x20] sm:$0xff]
        %v659 = vld [vmem:[%s653 + $0x28] sm:$0xff]
        %v660 = vpack.c.bf16 %v655, %v654
        %v661 = vpack.c.bf16 %v657, %v656
        %v662 = vpack.c.bf16 %v659, %v658
        %v671 = vunpack.c.l.b16 %v614
        %v672 = vunpack.c.l.b16 %v616
        %v673 = vunpack.c.l.b16 %v618
        %v674 = vunpack.c.l.b16 %v620
        %v675 = vunpack.c.l.b16 %v622
        %v676 = vunpack.c.l.b16 %v624
        %v677 = vunpack.c.l.b16 %v626
        %v678 = vunpack.c.l.b16 %v652
        %v679 = vpack.c.b16 %v672, %v671
        %v680 = vpack.c.b16 %v674, %v673
        %v681 = vpack.c.b16 %v676, %v675
        %v682 = vpack.c.b16 %v678, %v677
        %vm683 = vcmask 392192
        %v685 = vsel %vm683, %v679, 0
        %v688 = vsel %vm683, %v680, 0
        %v691 = vsel %vm683, %v681, 0
        %v694 = vsel %vm683, %v682, 0
        %696 = vmatprep.subr.bf16.mxu0 0
        %697 = vmatpush1.bf16.msra.mxu0 %v660
        %698 = vmatprep.subr.bf16.mxu0 0
        %699 = vmatpush1.bf16.msra.mxu0 %v661
        %700 = vmatprep.subr.bf16.mxu0 0
        %701 = vmatpush1.bf16.msra.mxu0 %v662
        %702 = vmatprep.subr.bf16.mxu0 0
        %703 = vmatpush1.bf16.msra.mxu0 0
        %704 = vmatprep.subr.bf16.mxu0 0
        %705 = vmatpush1.bf16.msra.mxu0 0
        %706 = vmatprep.subr.bf16.mxu0 0
        %707 = vmatpush1.bf16.msra.mxu0 0
        %708 = vmatprep.subr.bf16.mxu0 0
        %709 = vmatpush1.bf16.msra.mxu0 0
        %710 = vmatprep.subr.bf16.mxu0 0
        %711 = vmatpush1.bf16.msra.mxu0 0
        %712 = vmatprep.subr.bf16.mxu0 0
        %713 = vmatpush1.bf16.msra.mxu0 0
        %714 = vmatprep.subr.bf16.mxu0 0
        %715 = vmatpush1.bf16.msra.mxu0 0
        %716 = vmatprep.subr.bf16.mxu0 0
        %717 = vmatpush1.bf16.msra.mxu0 0
        %718 = vmatprep.subr.bf16.mxu0 0
        %719 = vmatpush1.bf16.msra.mxu0 0
        %720 = vmatprep.subr.bf16.mxu0 0
        %721 = vmatpush1.bf16.msra.mxu0 0
        %722 = vmatprep.subr.bf16.mxu0 0
        %723 = vmatpush1.bf16.msra.mxu0 0
        %724 = vmatprep.subr.bf16.mxu0 0
        %725 = vmatpush1.bf16.msra.mxu0 0
        %726 = vmatprep.subr.bf16.mxu0 0
        %727 = vmatpush1.bf16.msra.mxu0 0
        %728 = vmatprep.mubr.bf16.mxu0 0
        %729 = vmatmul.mubr.bf16.gmra.mrb[0].mxu0 %v685
        %v730 = vpop.f32.mrb[0].mxu0
        %v731 = vadd.f32 0.0, %v730
        %v732 = vpop.f32.mrb[0].mxu0
        %v733 = vpop.f32.mrb[0].mxu0
        %v734 = vadd.f32 0.0, %v733
        %v735 = vpop.f32.mrb[0].mxu0
        %736 = vmatprep.mubr.bf16.mxu0 0
        %737 = vmatmul.mubr.bf16.gmra.mrb[0].mxu0 %v688
        %v738 = vpop.f32.mrb[0].mxu0
        %v739 = vadd.f32 0.0, %v738
        %v740 = vpop.f32.mrb[0].mxu0
        %v741 = vpop.f32.mrb[0].mxu0
        %v742 = vadd.f32 0.0, %v741
        %v743 = vpop.f32.mrb[0].mxu0
        %744 = vmatprep.mubr.bf16.mxu0 0
        %745 = vmatmul.mubr.bf16.gmra.mrb[0].mxu0 %v691
        %v746 = vpop.f32.mrb[0].mxu0
        %v747 = vadd.f32 0.0, %v746
        %v748 = vpop.f32.mrb[0].mxu0
        %v749 = vpop.f32.mrb[0].mxu0
        %v750 = vadd.f32 0.0, %v749
        %v751 = vpop.f32.mrb[0].mxu0
        %752 = vmatprep.mubr.bf16.mxu0 0
        %753 = vmatmul.mubr.bf16.gmra.mrb[0].mxu0 %v694
        %v754 = vpop.f32.mrb[0].mxu0
        %v755 = vadd.f32 0.0, %v754
        %v756 = vpop.f32.mrb[0].mxu0
        %v757 = vpop.f32.mrb[0].mxu0
        %v758 = vadd.f32 0.0, %v757
        %v759 = vpop.f32.mrb[0].mxu0
        %760 = vdwg.mxu0
        %v762 = vunpack.c.l.b16 %v612
        %v763 = vpack.c.b16 %v671, %v762
        %v764 = vpack.c.b16 %v673, %v672
        %v765 = vpack.c.b16 %v675, %v674
        %v766 = vpack.c.b16 %v677, %v676
        %v768 = vsel %vm683, %v763, 0
        %v771 = vsel %vm683, %v764, 0
        %v774 = vsel %vm683, %v765, 0
        %v777 = vsel %vm683, %v766, 0
        %779 = vmatprep.subr.bf16.mxu0 0
        %780 = vmatpush1.bf16.msra.mxu0 %v633
        %781 = vmatprep.subr.bf16.mxu0 0
        %782 = vmatpush1.bf16.msra.mxu0 %v634
        %783 = vmatprep.subr.bf16.mxu0 0
        %784 = vmatpush1.bf16.msra.mxu0 %v635
        %785 = vmatprep.subr.bf16.mxu0 0
        %786 = vmatpush1.bf16.msra.mxu0 0
        %787 = vmatprep.subr.bf16.mxu0 0
        %788 = vmatpush1.bf16.msra.mxu0 0
        %789 = vmatprep.subr.bf16.mxu0 0
        %790 = vmatpush1.bf16.msra.mxu0 0
        %791 = vmatprep.subr.bf16.mxu0 0
        %792 = vmatpush1.bf16.msra.mxu0 0
        %793 = vmatprep.subr.bf16.mxu0 0
        %794 = vmatpush1.bf16.msra.mxu0 0
        %795 = vmatprep.subr.bf16.mxu0 0
        %796 = vmatpush1.bf16.msra.mxu0 0
        %797 = vmatprep.subr.bf16.mxu0 0
        %798 = vmatpush1.bf16.msra.mxu0 0
        %799 = vmatprep.subr.bf16.mxu0 0
        %800 = vmatpush1.bf16.msra.mxu0 0
        %801 = vmatprep.subr.bf16.mxu0 0
        %802 = vmatpush1.bf16.msra.mxu0 0
        %803 = vmatprep.subr.bf16.mxu0 0
        %804 = vmatpush1.bf16.msra.mxu0 0
        %805 = vmatprep.subr.bf16.mxu0 0
        %806 = vmatpush1.bf16.msra.mxu0 0
        %807 = vmatprep.subr.bf16.mxu0 0
        %808 = vmatpush1.bf16.msra.mxu0 0
        %809 = vmatprep.subr.bf16.mxu0 0
        %810 = vmatpush1.bf16.msra.mxu0 0
        %811 = vmatprep.mubr.bf16.mxu0 0
        %812 = vmatmul.mubr.bf16.gmra.mrb[0].mxu0 %v768
        %v813 = vpop.f32.mrb[0].mxu0
        %v814 = vadd.f32 %v731, %v813
        %v815 = vpop.f32.mrb[0].mxu0
        %v816 = vpop.f32.mrb[0].mxu0
        %v817 = vadd.f32 %v734, %v816
        %v818 = vpop.f32.mrb[0].mxu0
        %819 = vmatprep.mubr.bf16.mxu0 0
        %820 = vmatmul.mubr.bf16.gmra.mrb[0].mxu0 %v771
        %v821 = vpop.f32.mrb[0].mxu0
        %v822 = vadd.f32 %v739, %v821
        %v823 = vpop.f32.mrb[0].mxu0
        %v824 = vpop.f32.mrb[0].mxu0
        %v825 = vadd.f32 %v742, %v824
        %v826 = vpop.f32.mrb[0].mxu0
        %827 = vmatprep.mubr.bf16.mxu0 0
        %828 = vmatmul.mubr.bf16.gmra.mrb[0].mxu0 %v774
        %v829 = vpop.f32.mrb[0].mxu0
        %v830 = vadd.f32 %v747, %v829
        %v831 = vpop.f32.mrb[0].mxu0
        %v832 = vpop.f32.mrb[0].mxu0
        %v833 = vadd.f32 %v750, %v832
        %v834 = vpop.f32.mrb[0].mxu0
        %835 = vmatprep.mubr.bf16.mxu0 0
        %836 = vmatmul.mubr.bf16.gmra.mrb[0].mxu0 %v777
        %v837 = vpop.f32.mrb[0].mxu0
        %v838 = vadd.f32 %v755, %v837
        %v839 = vpop.f32.mrb[0].mxu0
        %v840 = vpop.f32.mrb[0].mxu0
        %v841 = vadd.f32 %v758, %v840
        %v842 = vpop.f32.mrb[0].mxu0
        %843 = vdwg.mxu0
        %s844 = scalar_lea.vmem [#allocation5], 96
        %v845 = vld [vmem:[%s844] sm:$0xff]
        %v846 = vld [vmem:[%s844 + $0x8] sm:$0xff]
        %v847 = vld [vmem:[%s844 + $0x10] sm:$0xff]
        %v848 = vld [vmem:[%s844 + $0x18] sm:$0xff]
        %v849 = vld [vmem:[%s844 + $0x20] sm:$0xff]
        %v850 = vld [vmem:[%s844 + $0x28] sm:$0xff]
        %v851 = vpack.c.bf16 %v846, %v845
        %v852 = vpack.c.bf16 %v848, %v847
        %v853 = vpack.c.bf16 %v850, %v849
        %v854 = vpack.c.b16 %v762, %v678
        %v856 = vsel %vm683, %v854, 0
        %858 = vmatprep.subr.bf16.mxu0 0
        %859 = vmatpush1.bf16.msra.mxu0 %v851
        %860 = vmatprep.subr.bf16.mxu0 0
        %861 = vmatpush1.bf16.msra.mxu0 %v852
        %862 = vmatprep.subr.bf16.mxu0 0
        %863 = vmatpush1.bf16.msra.mxu0 %v853
        %864 = vmatprep.subr.bf16.mxu0 0
        %865 = vmatpush1.bf16.msra.mxu0 0
        %866 = vmatprep.subr.bf16.mxu0 0
        %867 = vmatpush1.bf16.msra.mxu0 0
        %868 = vmatprep.subr.bf16.mxu0 0
        %869 = vmatpush1.bf16.msra.mxu0 0
        %870 = vmatprep.subr.bf16.mxu0 0
        %871 = vmatpush1.bf16.msra.mxu0 0
        %872 = vmatprep.subr.bf16.mxu0 0
        %873 = vmatpush1.bf16.msra.mxu0 0
        %874 = vmatprep.subr.bf16.mxu0 0
        %875 = vmatpush1.bf16.msra.mxu0 0
        %876 = vmatprep.subr.bf16.mxu0 0
        %877 = vmatpush1.bf16.msra.mxu0 0
        %878 = vmatprep.subr.bf16.mxu0 0
        %879 = vmatpush1.bf16.msra.mxu0 0
        %880 = vmatprep.subr.bf16.mxu0 0
        %881 = vmatpush1.bf16.msra.mxu0 0
        %882 = vmatprep.subr.bf16.mxu0 0
        %883 = vmatpush1.bf16.msra.mxu0 0
        %884 = vmatprep.subr.bf16.mxu0 0
        %885 = vmatpush1.bf16.msra.mxu0 0
        %886 = vmatprep.subr.bf16.mxu0 0
        %887 = vmatpush1.bf16.msra.mxu0 0
        %888 = vmatprep.subr.bf16.mxu0 0
        %889 = vmatpush1.bf16.msra.mxu0 0
        %890 = vmatprep.mubr.bf16.mxu0 0
        %891 = vmatmul.mubr.bf16.gmra.mrb[0].mxu0 %v771
        %v892 = vpop.f32.mrb[0].mxu0
        %v893 = vadd.f32 0.0, %v892
        %v894 = vpop.f32.mrb[0].mxu0
        %v895 = vpop.f32.mrb[0].mxu0
        %v896 = vadd.f32 0.0, %v895
        %v897 = vpop.f32.mrb[0].mxu0
        %898 = vmatprep.mubr.bf16.mxu0 0
        %899 = vmatmul.mubr.bf16.gmra.mrb[0].mxu0 %v774
        %v900 = vpop.f32.mrb[0].mxu0
        %v901 = vadd.f32 0.0, %v900
        %v902 = vpop.f32.mrb[0].mxu0
        %v903 = vpop.f32.mrb[0].mxu0
        %v904 = vadd.f32 0.0, %v903
        %v905 = vpop.f32.mrb[0].mxu0
        %906 = vmatprep.mubr.bf16.mxu0 0
        %907 = vmatmul.mubr.bf16.gmra.mrb[0].mxu0 %v777
        %v908 = vpop.f32.mrb[0].mxu0
        %v909 = vadd.f32 0.0, %v908
        %v910 = vpop.f32.mrb[0].mxu0
        %v911 = vpop.f32.mrb[0].mxu0
        %v912 = vadd.f32 0.0, %v911
        %v913 = vpop.f32.mrb[0].mxu0
        %914 = vmatprep.mubr.bf16.mxu0 0
        %915 = vmatmul.mubr.bf16.gmra.mrb[0].mxu0 %v856
        %v916 = vpop.f32.mrb[0].mxu0
        %v917 = vadd.f32 0.0, %v916
        %v918 = vpop.f32.mrb[0].mxu0
        %v919 = vpop.f32.mrb[0].mxu0
        %v920 = vadd.f32 0.0, %v919
        %v921 = vpop.f32.mrb[0].mxu0
        %922 = vdwg.mxu0
        %v923 = vadd.f32 %v814, %v893
        %v924 = vadd.f32 %v817, %v896
        %v925 = vadd.f32 %v822, %v901
        %v926 = vadd.f32 %v825, %v904
        %v927 = vadd.f32 %v830, %v909
        %v928 = vadd.f32 %v833, %v912
        %v929 = vadd.f32 %v838, %v917
        %v930 = vadd.f32 %v841, %v920
        %v931 = vld [vmem:[#allocation7] sm:$0x1]
        %v933 = vlaneseq
        %v934 = vshrl.u32 %v933, 7
        %v935 = vsub.s32 0, %v934
        %v936 = vrot.slane %v931, %v935
        %v938 = vmul.f32 %v923, %v936
        %v939 = vmul.f32 %v924, %v936
        %v940 = vmul.f32 %v925, %v936
        %v941 = vmul.f32 %v926, %v936
        %v942 = vmul.f32 %v927, %v936
        %v943 = vmul.f32 %v928, %v936
        %v944 = vmul.f32 %v929, %v936
        %v945 = vmul.f32 %v930, %v936
        %v946 = vld [vmem:[#allocation8] sm:$0x1]
        %v948 = vlaneseq
        %v949 = vshrl.u32 %v948, 7
        %v950 = vsub.s32 0, %v949
        %v951 = vrot.slane %v946, %v950
        %v953 = vadd.f32 %v938, %v951
        %v954 = vadd.f32 %v939, %v951
        %v955 = vadd.f32 %v940, %v951
        %v956 = vadd.f32 %v941, %v951
        %v957 = vadd.f32 %v942, %v951
        %v958 = vadd.f32 %v943, %v951
        %v959 = vadd.f32 %v944, %v951
        %v960 = vadd.f32 %v945, %v951
        %v961 = vmax.f32 %v953, 0.0
        %v962 = vmax.f32 %v954, 0.0
        %v963 = vmax.f32 %v955, 0.0
        %v964 = vmax.f32 %v956, 0.0
        %v965 = vmax.f32 %v957, 0.0
        %v966 = vmax.f32 %v958, 0.0
        %v967 = vmax.f32 %v959, 0.0
        %v968 = vmax.f32 %v960, 0.0
        %v969 = vpack.c.bf16 %v961, %v961
        %v970 = vpack.c.bf16 %v962, %v962
        %v971 = vpack.c.bf16 %v963, %v963
        %v972 = vpack.c.bf16 %v964, %v964
        %v973 = vpack.c.bf16 %v965, %v965
        %v974 = vpack.c.bf16 %v966, %v966
        %v975 = vpack.c.bf16 %v967, %v967
        %v976 = vpack.c.bf16 %v968, %v968
        %v978 = vshrl.u32 %v969, 16
        %v980 = vrot.slane %v978, 7
        %v981 = vshll.u32 %v969, 16
        %v983 = vor.u32 %v980, %v981
        %v985 = vshrl.u32 %v970, 16
        %v987 = vrot.slane %v985, 7
        %v988 = vshll.u32 %v970, 16
        %v990 = vor.u32 %v987, %v988
        %v992 = vshrl.u32 %v971, 16
        %v994 = vrot.slane %v992, 7
        %v995 = vshll.u32 %v971, 16
        %v997 = vor.u32 %v994, %v995
        %v999 = vshrl.u32 %v972, 16
        %v1001 = vrot.slane %v999, 7
        %v1002 = vshll.u32 %v972, 16
        %v1004 = vor.u32 %v1001, %v1002
        %v1006 = vshrl.u32 %v973, 16
        %v1008 = vrot.slane %v1006, 7
        %v1009 = vshll.u32 %v973, 16
        %v1011 = vor.u32 %v1008, %v1009
        %v1013 = vshrl.u32 %v974, 16
        %v1015 = vrot.slane %v1013, 7
        %v1016 = vshll.u32 %v974, 16
        %v1018 = vor.u32 %v1015, %v1016
        %v1020 = vshrl.u32 %v975, 16
        %v1022 = vrot.slane %v1020, 7
        %v1023 = vshll.u32 %v975, 16
        %v1025 = vor.u32 %v1022, %v1023
        %v1027 = vshrl.u32 %v976, 16
        %v1029 = vrot.slane %v1027, 7
        %v1030 = vshll.u32 %v976, 16
        %v1032 = vor.u32 %v1029, %v1030
        %v1041 = vsel %vm467, 0, %v983
        %v1042 = vsel %vm467, 0, %v990
        %v1043 = vsel %vm467, 0, %v997
        %v1044 = vsel %vm467, 0, %v1004
        %v1045 = vsel %vm467, 0, %v1011
        %v1046 = vsel %vm467, 0, %v1018
        %v1047 = vsel %vm467, 0, %v1025
        %v1048 = vsel %vm467, 0, %v1032
        %v1049 = vsel %vm479, %v1041, 0
        %v1050 = vsel %vm479, %v1042, 0
        %v1051 = vsel %vm479, %v1043, 0
        %v1052 = vsel %vm479, %v1044, 0
        %v1053 = vsel %vm479, %v1045, 0
        %v1054 = vsel %vm479, %v1046, 0
        %v1055 = vsel %vm479, %v1047, 0
        %v1056 = vsel %vm479, %v1048, 0
        %v1058 = vshrl.u32 %v1049, 16
        %v1060 = vshll.u32 %v1049, 16
        %v1062 = vrot.slane %v1060, 1
        %v1063 = vor.u32 %v1058, %v1062
        %v1065 = vshrl.u32 %v1050, 16
        %v1067 = vshll.u32 %v1050, 16
        %v1069 = vrot.slane %v1067, 1
        %v1070 = vor.u32 %v1065, %v1069
        %v1072 = vshrl.u32 %v1051, 16
        %v1074 = vshll.u32 %v1051, 16
        %v1076 = vrot.slane %v1074, 1
        %v1077 = vor.u32 %v1072, %v1076
        %v1079 = vshrl.u32 %v1052, 16
        %v1081 = vshll.u32 %v1052, 16
        %v1083 = vrot.slane %v1081, 1
        %v1084 = vor.u32 %v1079, %v1083
        %v1086 = vshrl.u32 %v1053, 16
        %v1088 = vshll.u32 %v1053, 16
        %v1090 = vrot.slane %v1088, 1
        %v1091 = vor.u32 %v1086, %v1090
        %v1093 = vshrl.u32 %v1054, 16
        %v1095 = vshll.u32 %v1054, 16
        %v1097 = vrot.slane %v1095, 1
        %v1098 = vor.u32 %v1093, %v1097
        %v1100 = vshrl.u32 %v1055, 16
        %v1102 = vshll.u32 %v1055, 16
        %v1104 = vrot.slane %v1102, 1
        %v1105 = vor.u32 %v1100, %v1104
        %1106 = vrot.lane.b32.xlu0 %v1063, 16
        %v1107 = vpop.permute.xlu0 %1106
        %1108 = vrot.lane.b32.xlu0 %v1070, 16
        %v1109 = vpop.permute.xlu0 %1108
        %1110 = vrot.lane.b32.xlu0 %v1077, 16
        %v1111 = vpop.permute.xlu0 %1110
        %1112 = vrot.lane.b32.xlu0 %v1084, 16
        %v1113 = vpop.permute.xlu0 %1112
        %1114 = vrot.lane.b32.xlu0 %v1091, 16
        %v1115 = vpop.permute.xlu0 %1114
        %1116 = vrot.lane.b32.xlu0 %v1098, 16
        %v1117 = vpop.permute.xlu0 %1116
        %1118 = vrot.lane.b32.xlu0 %v1105, 16
        %v1119 = vpop.permute.xlu0 %1118
        %v1127 = vrot.slane %v1049, 1
        %v1128 = vrot.slane %v1050, 1
        %v1129 = vrot.slane %v1051, 1
        %v1130 = vrot.slane %v1052, 1
        %v1131 = vrot.slane %v1053, 1
        %v1132 = vrot.slane %v1054, 1
        %v1133 = vrot.slane %v1055, 1
        %1134 = vrot.lane.b32.xlu0 %v1127, 32
        %v1135 = vpop.permute.xlu0 %1134
        %1136 = vrot.lane.b32.xlu0 %v1128, 32
        %v1137 = vpop.permute.xlu0 %1136
        %1138 = vrot.lane.b32.xlu0 %v1129, 32
        %v1139 = vpop.permute.xlu0 %1138
        %1140 = vrot.lane.b32.xlu0 %v1130, 32
        %v1141 = vpop.permute.xlu0 %1140
        %1142 = vrot.lane.b32.xlu0 %v1131, 32
        %v1143 = vpop.permute.xlu0 %1142
        %1144 = vrot.lane.b32.xlu0 %v1132, 32
        %v1145 = vpop.permute.xlu0 %1144
        %1146 = vrot.lane.b32.xlu0 %v1133, 32
        %v1147 = vpop.permute.xlu0 %1146
        %v1149 = vsel %vm593, %v1049, %v1107
        %v1151 = vsel %vm593, %v1050, %v1109
        %v1153 = vsel %vm593, %v1051, %v1111
        %v1155 = vsel %vm593, %v1052, %v1113
        %v1157 = vsel %vm593, %v1053, %v1115
        %v1159 = vsel %vm593, %v1054, %v1117
        %v1161 = vsel %vm593, %v1055, %v1119
        %v1163 = vsel %vm610, %v1149, %v1135
        %v1165 = vsel %vm610, %v1151, %v1137
        %v1167 = vsel %vm610, %v1153, %v1139
        %v1169 = vsel %vm610, %v1155, %v1141
        %v1171 = vsel %vm610, %v1157, %v1143
        %v1173 = vsel %vm610, %v1159, %v1145
        %v1175 = vsel %vm610, %v1161, %v1147
        %v1176 = vld [vmem:[#allocation10] sm:$0xff]
        %v1177 = vld [vmem:[#allocation10 + $0x8] sm:$0xff]
        %v1178 = vld [vmem:[#allocation10 + $0x10] sm:$0xff]
        %v1179 = vld [vmem:[#allocation10 + $0x18] sm:$0xff]
        %v1180 = vld [vmem:[#allocation10 + $0x20] sm:$0xff]
        %v1181 = vld [vmem:[#allocation10 + $0x28] sm:$0xff]
        %v1182 = vpack.c.bf16 %v1177, %v1176
        %v1183 = vpack.c.bf16 %v1179, %v1178
        %v1184 = vpack.c.bf16 %v1181, %v1180
        %v1186 = vshrl.u32 %v1056, 16
        %v1188 = vshll.u32 %v1056, 16
        %v1190 = vrot.slane %v1188, 1
        %v1191 = vor.u32 %v1186, %v1190
        %1192 = vrot.lane.b32.xlu0 %v1191, 16
        %v1193 = vpop.permute.xlu0 %1192
        %v1195 = vrot.slane %v1056, 1
        %1196 = vrot.lane.b32.xlu0 %v1195, 32
        %v1197 = vpop.permute.xlu0 %1196
        %v1199 = vsel %vm593, %v1056, %v1193
        %v1201 = vsel %vm610, %v1199, %v1197
        %s1202 = scalar_lea.vmem [#allocation10], 48
        %v1203 = vld [vmem:[%s1202] sm:$0xff]
        %v1204 = vld [vmem:[%s1202 + $0x8] sm:$0xff]
        %v1205 = vld [vmem:[%s1202 + $0x10] sm:$0xff]
        %v1206 = vld [vmem:[%s1202 + $0x18] sm:$0xff]
        %v1207 = vld [vmem:[%s1202 + $0x20] sm:$0xff]
        %v1208 = vld [vmem:[%s1202 + $0x28] sm:$0xff]
        %v1209 = vpack.c.bf16 %v1204, %v1203
        %v1210 = vpack.c.bf16 %v1206, %v1205
        %v1211 = vpack.c.bf16 %v1208, %v1207
        %v1220 = vunpack.c.l.b16 %v1163
        %v1221 = vunpack.c.l.b16 %v1165
        %v1222 = vunpack.c.l.b16 %v1167
        %v1223 = vunpack.c.l.b16 %v1169
        %v1224 = vunpack.c.l.b16 %v1171
        %v1225 = vunpack.c.l.b16 %v1173
        %v1226 = vunpack.c.l.b16 %v1175
        %v1227 = vunpack.c.l.b16 %v1201
        %v1228 = vpack.c.b16 %v1221, %v1220
        %v1229 = vpack.c.b16 %v1223, %v1222
        %v1230 = vpack.c.b16 %v1225, %v1224
        %v1231 = vpack.c.b16 %v1227, %v1226
        %v1233 = vsel %vm683, %v1228, 0
        %v1236 = vsel %vm683, %v1229, 0
        %v1239 = vsel %vm683, %v1230, 0
        %v1242 = vsel %vm683, %v1231, 0
        %1244 = vmatprep.subr.bf16.mxu0 0
        %1245 = vmatpush1.bf16.msra.mxu0 %v1209
        %1246 = vmatprep.subr.bf16.mxu0 0
        %1247 = vmatpush1.bf16.msra.mxu0 %v1210
        %1248 = vmatprep.subr.bf16.mxu0 0
        %1249 = vmatpush1.bf16.msra.mxu0 %v1211
        %1250 = vmatprep.subr.bf16.mxu0 0
        %1251 = vmatpush1.bf16.msra.mxu0 0
        %1252 = vmatprep.subr.bf16.mxu0 0
        %1253 = vmatpush1.bf16.msra.mxu0 0
        %1254 = vmatprep.subr.bf16.mxu0 0
        %1255 = vmatpush1.bf16.msra.mxu0 0
        %1256 = vmatprep.subr.bf16.mxu0 0
        %1257 = vmatpush1.bf16.msra.mxu0 0
        %1258 = vmatprep.subr.bf16.mxu0 0
        %1259 = vmatpush1.bf16.msra.mxu0 0
        %1260 = vmatprep.subr.bf16.mxu0 0
        %1261 = vmatpush1.bf16.msra.mxu0 0
        %1262 = vmatprep.subr.bf16.mxu0 0
        %1263 = vmatpush1.bf16.msra.mxu0 0
        %1264 = vmatprep.subr.bf16.mxu0 0
        %1265 = vmatpush1.bf16.msra.mxu0 0
        %1266 = vmatprep.subr.bf16.mxu0 0
        %1267 = vmatpush1.bf16.msra.mxu0 0
        %1268 = vmatprep.subr.bf16.mxu0 0
        %1269 = vmatpush1.bf16.msra.mxu0 0
        %1270 = vmatprep.subr.bf16.mxu0 0
        %1271 = vmatpush1.bf16.msra.mxu0 0
        %1272 = vmatprep.subr.bf16.mxu0 0
        %1273 = vmatpush1.bf16.msra.mxu0 0
        %1274 = vmatprep.subr.bf16.mxu0 0
        %1275 = vmatpush1.bf16.msra.mxu0 0
        %1276 = vmatprep.mubr.bf16.mxu0 0
        %1277 = vmatmul.mubr.bf16.gmra.mrb[0].mxu0 %v1233
        %v1278 = vpop.f32.mrb[0].mxu0
        %v1279 = vadd.f32 0.0, %v1278
        %v1280 = vpop.f32.mrb[0].mxu0
        %v1281 = vpop.f32.mrb[0].mxu0
        %v1282 = vadd.f32 0.0, %v1281
        %v1283 = vpop.f32.mrb[0].mxu0
        %1284 = vmatprep.mubr.bf16.mxu0 0
        %1285 = vmatmul.mubr.bf16.gmra.mrb[0].mxu0 %v1236
        %v1286 = vpop.f32.mrb[0].mxu0
        %v1287 = vadd.f32 0.0, %v1286
        %v1288 = vpop.f32.mrb[0].mxu0
        %v1289 = vpop.f32.mrb[0].mxu0
        %v1290 = vadd.f32 0.0, %v1289
        %v1291 = vpop.f32.mrb[0].mxu0
        %1292 = vmatprep.mubr.bf16.mxu0 0
        %1293 = vmatmul.mubr.bf16.gmra.mrb[0].mxu0 %v1239
        %v1294 = vpop.f32.mrb[0].mxu0
        %v1295 = vadd.f32 0.0, %v1294
        %v1296 = vpop.f32.mrb[0].mxu0
        %v1297 = vpop.f32.mrb[0].mxu0
        %v1298 = vadd.f32 0.0, %v1297
        %v1299 = vpop.f32.mrb[0].mxu0
        %1300 = vmatprep.mubr.bf16.mxu0 0
        %1301 = vmatmul.mubr.bf16.gmra.mrb[0].mxu0 %v1242
        %v1302 = vpop.f32.mrb[0].mxu0
        %v1303 = vadd.f32 0.0, %v1302
        %v1304 = vpop.f32.mrb[0].mxu0
        %v1305 = vpop.f32.mrb[0].mxu0
        %v1306 = vadd.f32 0.0, %v1305
        %v1307 = vpop.f32.mrb[0].mxu0
        %1308 = vdwg.mxu0
        %v1309 = vpack.c.b16 %v1220, %v762
        %v1310 = vpack.c.b16 %v1222, %v1221
        %v1311 = vpack.c.b16 %v1224, %v1223
        %v1312 = vpack.c.b16 %v1226, %v1225
        %v1314 = vsel %vm683, %v1309, 0
        %v1317 = vsel %vm683, %v1310, 0
        %v1320 = vsel %vm683, %v1311, 0
        %v1323 = vsel %vm683, %v1312, 0
        %1325 = vmatprep.subr.bf16.mxu0 0
        %1326 = vmatpush1.bf16.msra.mxu0 %v1182
        %1327 = vmatprep.subr.bf16.mxu0 0
        %1328 = vmatpush1.bf16.msra.mxu0 %v1183
        %1329 = vmatprep.subr.bf16.mxu0 0
        %1330 = vmatpush1.bf16.msra.mxu0 %v1184
        %1331 = vmatprep.subr.bf16.mxu0 0
        %1332 = vmatpush1.bf16.msra.mxu0 0
        %1333 = vmatprep.subr.bf16.mxu0 0
        %1334 = vmatpush1.bf16.msra.mxu0 0
        %1335 = vmatprep.subr.bf16.mxu0 0
        %1336 = vmatpush1.bf16.msra.mxu0 0
        %1337 = vmatprep.subr.bf16.mxu0 0
        %1338 = vmatpush1.bf16.msra.mxu0 0
        %1339 = vmatprep.subr.bf16.mxu0 0
        %1340 = vmatpush1.bf16.msra.mxu0 0
        %1341 = vmatprep.subr.bf16.mxu0 0
        %1342 = vmatpush1.bf16.msra.mxu0 0
        %1343 = vmatprep.subr.bf16.mxu0 0
        %1344 = vmatpush1.bf16.msra.mxu0 0
        %1345 = vmatprep.subr.bf16.mxu0 0
        %1346 = vmatpush1.bf16.msra.mxu0 0
        %1347 = vmatprep.subr.bf16.mxu0 0
        %1348 = vmatpush1.bf16.msra.mxu0 0
        %1349 = vmatprep.subr.bf16.mxu0 0
        %1350 = vmatpush1.bf16.msra.mxu0 0
        %1351 = vmatprep.subr.bf16.mxu0 0
        %1352 = vmatpush1.bf16.msra.mxu0 0
        %1353 = vmatprep.subr.bf16.mxu0 0
        %1354 = vmatpush1.bf16.msra.mxu0 0
        %1355 = vmatprep.subr.bf16.mxu0 0
        %1356 = vmatpush1.bf16.msra.mxu0 0
        %1357 = vmatprep.mubr.bf16.mxu0 0
        %1358 = vmatmul.mubr.bf16.gmra.mrb[0].mxu0 %v1314
        %v1359 = vpop.f32.mrb[0].mxu0
        %v1360 = vadd.f32 %v1279, %v1359
        %v1361 = vpop.f32.mrb[0].mxu0
        %v1362 = vpop.f32.mrb[0].mxu0
        %v1363 = vadd.f32 %v1282, %v1362
        %v1364 = vpop.f32.mrb[0].mxu0
        %1365 = vmatprep.mubr.bf16.mxu0 0
        %1366 = vmatmul.mubr.bf16.gmra.mrb[0].mxu0 %v1317
        %v1367 = vpop.f32.mrb[0].mxu0
        %v1368 = vadd.f32 %v1287, %v1367
        %v1369 = vpop.f32.mrb[0].mxu0
        %v1370 = vpop.f32.mrb[0].mxu0
        %v1371 = vadd.f32 %v1290, %v1370
        %v1372 = vpop.f32.mrb[0].mxu0
        %1373 = vmatprep.mubr.bf16.mxu0 0
        %1374 = vmatmul.mubr.bf16.gmra.mrb[0].mxu0 %v1320
        %v1375 = vpop.f32.mrb[0].mxu0
        %v1376 = vadd.f32 %v1295, %v1375
        %v1377 = vpop.f32.mrb[0].mxu0
        %v1378 = vpop.f32.mrb[0].mxu0
        %v1379 = vadd.f32 %v1298, %v1378
        %v1380 = vpop.f32.mrb[0].mxu0
        %1381 = vmatprep.mubr.bf16.mxu0 0
        %1382 = vmatmul.mubr.bf16.gmra.mrb[0].mxu0 %v1323
        %v1383 = vpop.f32.mrb[0].mxu0
        %v1384 = vadd.f32 %v1303, %v1383
        %v1385 = vpop.f32.mrb[0].mxu0
        %v1386 = vpop.f32.mrb[0].mxu0
        %v1387 = vadd.f32 %v1306, %v1386
        %v1388 = vpop.f32.mrb[0].mxu0
        %1389 = vdwg.mxu0
        %s1390 = scalar_lea.vmem [#allocation10], 96
        %v1391 = vld [vmem:[%s1390] sm:$0xff]
        %v1392 = vld [vmem:[%s1390 + $0x8] sm:$0xff]
        %v1393 = vld [vmem:[%s1390 + $0x10] sm:$0xff]
        %v1394 = vld [vmem:[%s1390 + $0x18] sm:$0xff]
        %v1395 = vld [vmem:[%s1390 + $0x20] sm:$0xff]
        %v1396 = vld [vmem:[%s1390 + $0x28] sm:$0xff]
        %v1397 = vpack.c.bf16 %v1392, %v1391
        %v1398 = vpack.c.bf16 %v1394, %v1393
        %v1399 = vpack.c.bf16 %v1396, %v1395
        %v1400 = vpack.c.b16 %v762, %v1227
        %v1402 = vsel %vm683, %v1400, 0
        %1404 = vmatprep.subr.bf16.mxu0 0
        %1405 = vmatpush1.bf16.msra.mxu0 %v1397
        %1406 = vmatprep.subr.bf16.mxu0 0
        %1407 = vmatpush1.bf16.msra.mxu0 %v1398
        %1408 = vmatprep.subr.bf16.mxu0 0
        %1409 = vmatpush1.bf16.msra.mxu0 %v1399
        %1410 = vmatprep.subr.bf16.mxu0 0
        %1411 = vmatpush1.bf16.msra.mxu0 0
        %1412 = vmatprep.subr.bf16.mxu0 0
        %1413 = vmatpush1.bf16.msra.mxu0 0
        %1414 = vmatprep.subr.bf16.mxu0 0
        %1415 = vmatpush1.bf16.msra.mxu0 0
        %1416 = vmatprep.subr.bf16.mxu0 0
        %1417 = vmatpush1.bf16.msra.mxu0 0
        %1418 = vmatprep.subr.bf16.mxu0 0
        %1419 = vmatpush1.bf16.msra.mxu0 0
        %1420 = vmatprep.subr.bf16.mxu0 0
        %1421 = vmatpush1.bf16.msra.mxu0 0
        %1422 = vmatprep.subr.bf16.mxu0 0
        %1423 = vmatpush1.bf16.msra.mxu0 0
        %1424 = vmatprep.subr.bf16.mxu0 0
        %1425 = vmatpush1.bf16.msra.mxu0 0
        %1426 = vmatprep.subr.bf16.mxu0 0
        %1427 = vmatpush1.bf16.msra.mxu0 0
        %1428 = vmatprep.subr.bf16.mxu0 0
        %1429 = vmatpush1.bf16.msra.mxu0 0
        %1430 = vmatprep.subr.bf16.mxu0 0
        %1431 = vmatpush1.bf16.msra.mxu0 0
        %1432 = vmatprep.subr.bf16.mxu0 0
        %1433 = vmatpush1.bf16.msra.mxu0 0
        %1434 = vmatprep.subr.bf16.mxu0 0
        %1435 = vmatpush1.bf16.msra.mxu0 0
        %1436 = vmatprep.mubr.bf16.mxu0 0
        %1437 = vmatmul.mubr.bf16.gmra.mrb[0].mxu0 %v1317
        %v1438 = vpop.f32.mrb[0].mxu0
        %v1439 = vadd.f32 0.0, %v1438
        %v1440 = vpop.f32.mrb[0].mxu0
        %v1441 = vpop.f32.mrb[0].mxu0
        %v1442 = vadd.f32 0.0, %v1441
        %v1443 = vpop.f32.mrb[0].mxu0
        %1444 = vmatprep.mubr.bf16.mxu0 0
        %1445 = vmatmul.mubr.bf16.gmra.mrb[0].mxu0 %v1320
        %v1446 = vpop.f32.mrb[0].mxu0
        %v1447 = vadd.f32 0.0, %v1446
        %v1448 = vpop.f32.mrb[0].mxu0
        %v1449 = vpop.f32.mrb[0].mxu0
        %v1450 = vadd.f32 0.0, %v1449
        %v1451 = vpop.f32.mrb[0].mxu0
        %1452 = vmatprep.mubr.bf16.mxu0 0
        %1453 = vmatmul.mubr.bf16.gmra.mrb[0].mxu0 %v1323
        %v1454 = vpop.f32.mrb[0].mxu0
        %v1455 = vadd.f32 0.0, %v1454
        %v1456 = vpop.f32.mrb[0].mxu0
        %v1457 = vpop.f32.mrb[0].mxu0
        %v1458 = vadd.f32 0.0, %v1457
        %v1459 = vpop.f32.mrb[0].mxu0
        %1460 = vmatprep.mubr.bf16.mxu0 0
        %1461 = vmatmul.mubr.bf16.gmra.mrb[0].mxu0 %v1402
        %v1462 = vpop.f32.mrb[0].mxu0
        %v1463 = vadd.f32 0.0, %v1462
        %v1464 = vpop.f32.mrb[0].mxu0
        %v1465 = vpop.f32.mrb[0].mxu0
        %v1466 = vadd.f32 0.0, %v1465
        %v1467 = vpop.f32.mrb[0].mxu0
        %1468 = vdwg.mxu0
        %v1469 = vadd.f32 %v1360, %v1439
        %v1470 = vadd.f32 %v1363, %v1442
        %v1471 = vadd.f32 %v1368, %v1447
        %v1472 = vadd.f32 %v1371, %v1450
        %v1473 = vadd.f32 %v1376, %v1455
        %v1474 = vadd.f32 %v1379, %v1458
        %v1475 = vadd.f32 %v1384, %v1463
        %v1476 = vadd.f32 %v1387, %v1466
        %v1477 = vld [vmem:[#allocation11] sm:$0x1]
        %v1479 = vlaneseq
        %v1480 = vshrl.u32 %v1479, 7
        %v1481 = vsub.s32 0, %v1480
        %v1482 = vrot.slane %v1477, %v1481
        %v1484 = vmul.f32 %v1469, %v1482
        %v1485 = vmul.f32 %v1470, %v1482
        %v1486 = vmul.f32 %v1471, %v1482
        %v1487 = vmul.f32 %v1472, %v1482
        %v1488 = vmul.f32 %v1473, %v1482
        %v1489 = vmul.f32 %v1474, %v1482
        %v1490 = vmul.f32 %v1475, %v1482
        %v1491 = vmul.f32 %v1476, %v1482
        %v1492 = vld [vmem:[#allocation13] sm:$0x1]
        %v1494 = vlaneseq
        %v1495 = vshrl.u32 %v1494, 7
        %v1496 = vsub.s32 0, %v1495
        %v1497 = vrot.slane %v1492, %v1496
        %v1499 = vadd.f32 %v1484, %v1497
        %v1500 = vadd.f32 %v1485, %v1497
        %v1501 = vadd.f32 %v1486, %v1497
        %v1502 = vadd.f32 %v1487, %v1497
        %v1503 = vadd.f32 %v1488, %v1497
        %v1504 = vadd.f32 %v1489, %v1497
        %v1505 = vadd.f32 %v1490, %v1497
        %v1506 = vadd.f32 %v1491, %v1497
        %v1507 = vadd.f32 %v1499, %v377
        %v1508 = vadd.f32 %v1500, %v378
        %v1509 = vadd.f32 %v1501, %v379
        %v1510 = vadd.f32 %v1502, %v380
        %v1511 = vadd.f32 %v1503, %v381
        %v1512 = vadd.f32 %v1504, %v382
        %v1513 = vadd.f32 %v1505, %v383
        %v1514 = vadd.f32 %v1506, %v384
        %v1515 = vmax.f32 %v1507, 0.0
        %v1516 = vmax.f32 %v1508, 0.0
        %v1517 = vmax.f32 %v1509, 0.0
        %v1518 = vmax.f32 %v1510, 0.0
        %v1519 = vmax.f32 %v1511, 0.0
        %v1520 = vmax.f32 %v1512, 0.0
        %v1521 = vmax.f32 %v1513, 0.0
        %v1522 = vmax.f32 %v1514, 0.0
        %1523 = vst.msk [vmem:[%s375] sm:$0xff] %vm593, %v1515
        %1524 = vst.msk [vmem:[%s375 + $0x8] sm:$0xff] %vm593, %v1516
        %1525 = vst.msk [vmem:[%s375 + $0x10] sm:$0xff] %vm593, %v1517
        %1526 = vst.msk [vmem:[%s375 + $0x18] sm:$0xff] %vm593, %v1518
        %1527 = vst.msk [vmem:[%s375 + $0x20] sm:$0xff] %vm593, %v1519
        %1528 = vst.msk [vmem:[%s375 + $0x28] sm:$0xff] %vm593, %v1520
        %1529 = vst.msk [vmem:[%s375 + $0x30] sm:$0xff] %vm593, %v1521
        %1530 = vst.msk [vmem:[%s375 + $0x38] sm:$0xff] %vm593, %v1522
        %s1531 = sand.u32 %s187, 1
        %s1532 = scalar_lea.sflag [#allocation4], %s1531
        %s1533 = sand.u32 %s187, 1
        %s1534 = smul.addr %s1533, 64
        %s1535 = scalar_lea.vmem [#allocation14], %s1534
        // Predicated region
        $region77: #{next_stage_g_forward.6} parent=47 // pred_check
          %p1536 = pneg %p197
        $region78: #{next_stage_g_forward.6} parent=47 // pred_check_branch
          %1538 = sbr.rel (%p1536) target = $region80
        $region79: #{next_stage_g_forward.6} parent=47 // pred_region
          %s1540 = ssub.s32 1024, 1024
          %1541 = vsyncadd %s1532, %s1540
          %s1542 = smul.addr %s27, 8
          %s1543 = smul.addr %s1542, 128
          %s1544 = scalar_lea.hbm %s7, %s1543
          %s1545 = sshll.u32 %s1535, 4
          %s1546 = int_to_ptr.vmem [resolvable:$true] %s1545
          %1551 = dma.vmem_to_hbm [thread:$0]  %s1546, 1024, %s1544, %s1532, 128, 128, 8
        $region80: #{next_stage_g_forward.6} parent=47 // pred_fallthru
          _
      $region48: #{next_stage_g_forward.6} parent=5 // pred_fallthru
        _
      %p1552 = scmp.le.s32.totalorder 2, %s22
      // Predicated region
      $region81: #{next_stage_g_forward.6} parent=5 // pred_check
        %p1553 = pneg %p1552
      $region82: #{next_stage_g_forward.6} parent=5 // pred_check_branch
        %1555 = sbr.rel (%p1553) target = $region84
      $region83: #{next_stage_g_forward.6} parent=5 // pred_region
        %s1556 = ssub.s32 %s22, 2
        // Predicated region
        $region85: #{next_stage_g_forward.6} parent=83 // pred_check
          %p1557 = pneg %p203
        $region86: #{next_stage_g_forward.6} parent=83 // pred_check_branch
          %1559 = sbr.rel (%p1557) target = $region88
        $region87: #{next_stage_g_forward.6} parent=83 // pred_region
          %s1560 = sand.u32 %s188, 1
          %s1561 = scalar_lea.sflag [#allocation4], %s1560
          %s1562 = sand.u32 %s188, 1
          %s1563 = smul.addr %s1562, 64
          %s1564 = scalar_lea.vmem [#allocation14], %s1563
          %1565 = dma.done %s1561, 1024
        $region88: #{next_stage_g_forward.6} parent=83 // pred_fallthru
          _
      $region84: #{next_stage_g_forward.6} parent=5 // pred_fallthru
        _
    $region6: #{next_stage_g_forward.6} parent=1 // loop_footer
      %s26 = sadd.s32 1, %s22
    $region7: #{next_stage_g_forward.6} parent=1 // loop_footer_branch
      %21 = sbr.rel target = $region3
    $region8: #{next_stage_g_forward.6} parent=1 // loop_exit
      _
    %1566 = vsyncpa [#allocation3], 1
    %s1567 = scalar_lea.sflag [#allocation3], 1
    %1568 = vsyncpa %s1567, 1
    %1569 = vsyncpa [#allocation6], 1
    %1570 = vsyncpa [#allocation9], 1
    %1571 = vsyncpa [#allocation12], 1
    %1572 = vsyncpa [#allocation4], 1
    %s1573 = scalar_lea.sflag [#allocation4], 1
    %1574 = vsyncpa %s1573, 1

// kernel: next_stage_g_forward.7
$region0: #{next_stage_g_forward.7}
  #allocation0 [shape = 'u32[]', space=smem, size = 0x4, offset = 0x4, fixed_abs, tag = 'smem constant byte address 0x4 - core index']
  #allocation1 [shape = 'u32[144,128]{1,0:T(1,128)}', space=vmem, size = 0x12000, scoped, tag = 'internal scratch']
  %s0 = inlined_call_operand.hbm [shape: f32[2,8,8,16], index: 0, kind: input, shape index: {}]
  %s1 = inlined_call_operand.hbm [shape: f32[3,48,32], index: 1, kind: input, shape index: {}]
  %s2 = inlined_call_operand.hbm [shape: f32[1,32], index: 2, kind: input, shape index: {}]
  %s3 = inlined_call_operand.hbm [shape: f32[1,32], index: 3, kind: input, shape index: {}]
  %s4 = inlined_call_operand.hbm [shape: f32[2,16,16,8], index: 4, kind: output, shape index: {}]
  %s5 = sld [smem:[#allocation0]]
  $region65: #{next_stage_g_forward.7} parent=0
    _
  %s7 = ssub.s32 1, %s5
  %s8 = scalar_select 0, %s7, %s5
  $region1: #{next_stage_g_forward.7} parent=0
    #allocation2 [shape = 'u8[65536]{0}', space=vmem, size = 0x10000, scoped, tag = 'input window, operand 0']
    #allocation3 [shape = 's32[2]{0}', space=sflag, size = 0x8, scoped, tag = 'scoped memory for next_stage_g_forward.7']
    #allocation4 [shape = 's32[2]{0}', space=sflag, size = 0x8, scoped, tag = 'scoped memory for next_stage_g_forward.7']
    #allocation5 [shape = 'u8[73728]{0}', space=vmem, size = 0x12000, scoped, tag = 'input window, operand 1, single buffered']
    #allocation6 [shape = 's32[1]{0}', space=sflag, size = 0x4, scoped, tag = 'scoped memory for next_stage_g_forward.7']
    #allocation7 [shape = 'u8[512]{0}', space=vmem, size = 0x400, scoped, tag = 'input window, operand 2, single buffered']
    #allocation8 [shape = 'u8[512]{0}', space=vmem, size = 0x400, scoped, tag = 'input window, operand 3, single buffered']
    #allocation9 [shape = 's32[1]{0}', space=sflag, size = 0x4, scoped, tag = 'scoped memory for next_stage_g_forward.7']
    #allocation10 [shape = 'u8[262144]{0}', space=vmem, size = 0x40000, scoped, tag = 'output window, operand 0']
    %9 = vsyncpa [#allocation3], 0
    %s10 = scalar_lea.sflag [#allocation3], 1
    %11 = vsyncpa %s10, 0
    %12 = vsyncpa [#allocation6], 0
    %13 = vsyncpa [#allocation9], 0
    %14 = vsyncpa [#allocation4], 0
    %s15 = scalar_lea.sflag [#allocation4], 1
    %16 = vsyncpa %s15, 0
    loop: start=0, step=1, limit=4
    $region2: #{next_stage_g_forward.7} parent=1 // loop_pre_header
      _
    $region3: #{next_stage_g_forward.7} parent=1 // loop_header
      %s18 = sphi 0, %s22
      %p19 = scmp.ge.s32.totalorder %s18, 4
      %s28 = sphi 0, %s30
      %s31 = sphi 0, %s28
      %s32 = sphi 0, %s31
      %s48 = sphi 0, %s32
      %s52 = sphi 0, %s52
      %s54 = sphi 0, %s52
      %s55 = sphi 0, %s54
      %s69 = sphi 0, %s55
      %s73 = sphi 0, %s73
      %s75 = sphi 0, %s73
      %s76 = sphi 0, %s75
      %s90 = sphi 0, %s76
      %s94 = sphi 0, %s94
      %s96 = sphi 0, %s94
      %s97 = sphi 0, %s96
      %s111 = sphi 0, %s97
      %s117 = sphi 0, %s119
      %s120 = sphi 0, %s117
      %s121 = sphi 0, %s120
      %s137 = sphi 0, %s121
    $region4: #{next_stage_g_forward.7} parent=1 // loop_header_branch
      %21 = sbr.rel (%p19) target = $region8
    $region5: #{next_stage_g_forward.7} parent=1 // loop_body
      %s23 = ssub.s32 %s18, 1
      %s24 = ssub.s32 %s18, 2
      %s25 = sadd.s32 %s18, 1
      %s26 = ssub.s32 %s18, %s25
      %p27 = scmp.eq.s32.totalorder %s26, 0
      %s29 = sadd.s32 %s28, 1
      %s30 = scalar_select %p27, %s28, %s29
      %p33 = pneg %p27
      %p34 = scmp.eq.s32.totalorder %s18, 1
      %p35 = por %p33, %p34
      %p36 = scmp.ne.s32.totalorder %s28, %s31
      %p37 = scmp.eq.s32.totalorder %s18, 0
      %p38 = por %p36, %p37
      %p39 = scmp.ne.s32.totalorder %s28, %s31
      %p40 = scmp.eq.s32.totalorder %s23, 1
      %p41 = por %p39, %p40
      %p42 = scmp.ne.s32.totalorder %s31, %s32
      %p43 = scmp.eq.s32.totalorder %s23, 0
      %p44 = por %p42, %p43
      %p45 = scmp.ne.s32.totalorder %s31, %s32
      %p46 = scmp.eq.s32.totalorder %s24, 1
      %p47 = por %p45, %p46
      %p49 = scmp.ne.s32.totalorder %s32, %s48
      %p50 = scmp.eq.s32.totalorder %s24, 0
      %p51 = por %p49, %p50
      %s53 = sadd.s32 %s52, 1
      %p56 = scmp.eq.s32.totalorder %s18, 1
      %p57 = scmp.ne.s32.totalorder %s52, %s54
      %p58 = scmp.eq.s32.totalorder %s18, 0
      %p59 = por %p57, %p58
      %p60 = scmp.ne.s32.totalorder %s52, %s54
      %p61 = scmp.eq.s32.totalorder %s23, 1
      %p62 = por %p60, %p61
      %p63 = scmp.ne.s32.totalorder %s54, %s55
      %p64 = scmp.eq.s32.totalorder %s23, 0
      %p65 = por %p63, %p64
      %p66 = scmp.ne.s32.totalorder %s54, %s55
      %p67 = scmp.eq.s32.totalorder %s24, 1
      %p68 = por %p66, %p67
      %p70 = scmp.ne.s32.totalorder %s55, %s69
      %p71 = scmp.eq.s32.totalorder %s24, 0
      %p72 = por %p70, %p71
      %s74 = sadd.s32 %s73, 1
      %p77 = scmp.eq.s32.totalorder %s18, 1
      %p78 = scmp.ne.s32.totalorder %s73, %s75
      %p79 = scmp.eq.s32.totalorder %s18, 0
      %p80 = por %p78, %p79
      %p81 = scmp.ne.s32.totalorder %s73, %s75
      %p82 = scmp.eq.s32.totalorder %s23, 1
      %p83 = por %p81, %p82
      %p84 = scmp.ne.s32.totalorder %s75, %s76
      %p85 = scmp.eq.s32.totalorder %s23, 0
      %p86 = por %p84, %p85
      %p87 = scmp.ne.s32.totalorder %s75, %s76
      %p88 = scmp.eq.s32.totalorder %s24, 1
      %p89 = por %p87, %p88
      %p91 = scmp.ne.s32.totalorder %s76, %s90
      %p92 = scmp.eq.s32.totalorder %s24, 0
      %p93 = por %p91, %p92
      %s95 = sadd.s32 %s94, 1
      %p98 = scmp.eq.s32.totalorder %s18, 1
      %p99 = scmp.ne.s32.totalorder %s94, %s96
      %p100 = scmp.eq.s32.totalorder %s18, 0
      %p101 = por %p99, %p100
      %p102 = scmp.ne.s32.totalorder %s94, %s96
      %p103 = scmp.eq.s32.totalorder %s23, 1
      %p104 = por %p102, %p103
      %p105 = scmp.ne.s32.totalorder %s96, %s97
      %p106 = scmp.eq.s32.totalorder %s23, 0
      %p107 = por %p105, %p106
      %p108 = scmp.ne.s32.totalorder %s96, %s97
      %p109 = scmp.eq.s32.totalorder %s24, 1
      %p110 = por %p108, %p109
      %p112 = scmp.ne.s32.totalorder %s97, %s111
      %p113 = scmp.eq.s32.totalorder %s24, 0
      %p114 = por %p112, %p113
      %s115 = ssub.s32 %s18, %s25
      %p116 = scmp.eq.s32.totalorder %s115, 0
      %s118 = sadd.s32 %s117, 1
      %s119 = scalar_select %p116, %s117, %s118
      %p122 = pneg %p116
      %p123 = scmp.eq.s32.totalorder %s18, 1
      %p124 = por %p122, %p123
      %p125 = scmp.ne.s32.totalorder %s117, %s120
      %p126 = scmp.eq.s32.totalorder %s18, 0
      %p127 = por %p125, %p126
      %p128 = scmp.ne.s32.totalorder %s117, %s120
      %p129 = scmp.eq.s32.totalorder %s23, 1
      %p130 = por %p128, %p129
      %p131 = scmp.ne.s32.totalorder %s120, %s121
      %p132 = scmp.eq.s32.totalorder %s23, 0
      %p133 = por %p131, %p132
      %p134 = scmp.ne.s32.totalorder %s120, %s121
      %p135 = scmp.eq.s32.totalorder %s24, 1
      %p136 = por %p134, %p135
      %p138 = scmp.ne.s32.totalorder %s121, %s137
      %p139 = scmp.eq.s32.totalorder %s24, 0
      %p140 = por %p138, %p139
      %p141 = scmp.le.s32.totalorder 1, %s18
      %p142 = scmp.lt.s32.totalorder %s18, 3
      %p143 = pnand %p141, %p142
      %p144 = pneg %p143
      // Predicated region
      $region9: #{next_stage_g_forward.7} parent=5 // pred_check
        _
      $region10: #{next_stage_g_forward.7} parent=5 // pred_check_branch
        %146 = sbr.rel (%p143) target = $region12
      $region11: #{next_stage_g_forward.7} parent=5 // pred_region
        %s147 = ssub.s32 %s18, 1
        // Predicated region
        $region13: #{next_stage_g_forward.7} parent=11 // pred_check
          %p148 = pneg %p65
        $region14: #{next_stage_g_forward.7} parent=11 // pred_check_branch
          %150 = sbr.rel (%p148) target = $region16
        $region15: #{next_stage_g_forward.7} parent=11 // pred_region
          %s152 = ssub.s32 2304, 2304
          %153 = vsyncadd [#allocation6], %s152
          %s154 = sshll.u32 [#allocation5], 4
          %s155 = int_to_ptr.vmem [resolvable:$true] %s154
          %160 = dma.hbm_to_vmem [thread:$0]  %s1, 2304, %s155, [#allocation6], 128, 128, 8
        $region16: #{next_stage_g_forward.7} parent=11 // pred_fallthru
          _
        // Predicated region
        $region17: #{next_stage_g_forward.7} parent=11 // pred_check
          %p161 = pneg %p86
        $region18: #{next_stage_g_forward.7} parent=11 // pred_check_branch
          %163 = sbr.rel (%p161) target = $region20
        $region19: #{next_stage_g_forward.7} parent=11 // pred_region
          %s165 = ssub.s32 16, 16
          %166 = vsyncadd [#allocation6], %s165
          %s168 = sshll.u32 [#allocation7], 4
          %s169 = int_to_ptr.vmem [resolvable:$true] %s168
          %171 = dma.hbm_to_vmem [thread:$0]  %s2, 16, %s169, [#allocation6]
        $region20: #{next_stage_g_forward.7} parent=11 // pred_fallthru
          _
        // Predicated region
        $region21: #{next_stage_g_forward.7} parent=11 // pred_check
          %p172 = pneg %p107
        $region22: #{next_stage_g_forward.7} parent=11 // pred_check_branch
          %174 = sbr.rel (%p172) target = $region24
        $region23: #{next_stage_g_forward.7} parent=11 // pred_region
          %s176 = ssub.s32 16, 16
          %177 = vsyncadd [#allocation9], %s176
          %s179 = sshll.u32 [#allocation8], 4
          %s180 = int_to_ptr.vmem [resolvable:$true] %s179
          %182 = dma.hbm_to_vmem [thread:$0]  %s3, 16, %s180, [#allocation9]
        $region24: #{next_stage_g_forward.7} parent=11 // pred_fallthru
          _
      $region12: #{next_stage_g_forward.7} parent=5 // pred_fallthru
        _
      %p183 = scmp.lt.s32.totalorder %s18, 2
      // Predicated region
      $region25: #{next_stage_g_forward.7} parent=5 // pred_check
        %p184 = pneg %p183
      $region26: #{next_stage_g_forward.7} parent=5 // pred_check_branch
        %186 = sbr.rel (%p184) target = $region28
      $region27: #{next_stage_g_forward.7} parent=5 // pred_region
        // Predicated region
        $region29: #{next_stage_g_forward.7} parent=27 // pred_check
          %p187 = pneg %p38
        $region30: #{next_stage_g_forward.7} parent=27 // pred_check_branch
          %189 = sbr.rel (%p187) target = $region32
        $region31: #{next_stage_g_forward.7} parent=27 // pred_region
          %s190 = sand.u32 %s28, 1
          %s191 = scalar_lea.sflag [#allocation3], %s190
          %s192 = sand.u32 %s28, 1
          %s193 = smul.addr %s192, 64
          %s194 = scalar_lea.vmem [#allocation2], %s193
          %s196 = ssub.s32 1024, 1024
          %197 = vsyncadd %s191, %s196
          %s198 = smul.addr %s18, 8
          %s199 = smul.addr %s198, 128
          %s200 = scalar_lea.hbm %s0, %s199
          %s201 = sshll.u32 %s194, 4
          %s202 = int_to_ptr.vmem [resolvable:$true] %s201
          %207 = dma.hbm_to_vmem [thread:$0]  %s200, 1024, %s202, %s191, 128, 128, 8
        $region32: #{next_stage_g_forward.7} parent=27 // pred_fallthru
          _
      $region28: #{next_stage_g_forward.7} parent=5 // pred_fallthru
        _
      %p208 = scmp.le.s32.totalorder 1, %s18
      %p209 = scmp.lt.s32.totalorder %s18, 3
      %p210 = pnand %p208, %p209
      %p211 = pneg %p210
      // Predicated region
      $region33: #{next_stage_g_forward.7} parent=5 // pred_check
        _
      $region34: #{next_stage_g_forward.7} parent=5 // pred_check_branch
        %213 = sbr.rel (%p210) target = $region36
      $region35: #{next_stage_g_forward.7} parent=5 // pred_region
        %s214 = ssub.s32 %s18, 1
        %s215 = sand.u32 %s31, 1
        %s216 = scalar_lea.sflag [#allocation3], %s215
        %s217 = sand.u32 %s31, 1
        %s218 = smul.addr %s217, 64
        %s219 = scalar_lea.vmem [#allocation2], %s218
        // Predicated region
        $region37: #{next_stage_g_forward.7} parent=35 // pred_check
          %p220 = pneg %p44
        $region38: #{next_stage_g_forward.7} parent=35 // pred_check_branch
          %222 = sbr.rel (%p220) target = $region40
        $region39: #{next_stage_g_forward.7} parent=35 // pred_region
          %223 = dma.done %s216, 1024
        $region40: #{next_stage_g_forward.7} parent=35 // pred_fallthru
          _
        // Predicated region
        $region41: #{next_stage_g_forward.7} parent=35 // pred_check
          %p224 = pneg %p65
        $region42: #{next_stage_g_forward.7} parent=35 // pred_check_branch
          %226 = sbr.rel (%p224) target = $region44
        $region43: #{next_stage_g_forward.7} parent=35 // pred_region
          %227 = dma.done [#allocation6], 2304
        $region44: #{next_stage_g_forward.7} parent=35 // pred_fallthru
          _
        // Predicated region
        $region45: #{next_stage_g_forward.7} parent=35 // pred_check
          %p228 = pneg %p86
        $region46: #{next_stage_g_forward.7} parent=35 // pred_check_branch
          %230 = sbr.rel (%p228) target = $region48
        $region47: #{next_stage_g_forward.7} parent=35 // pred_region
          %231 = dma.done [#allocation6], 16
        $region48: #{next_stage_g_forward.7} parent=35 // pred_fallthru
          _
        // Predicated region
        $region49: #{next_stage_g_forward.7} parent=35 // pred_check
          %p232 = pneg %p107
        $region50: #{next_stage_g_forward.7} parent=35 // pred_check_branch
          %234 = sbr.rel (%p232) target = $region52
        $region51: #{next_stage_g_forward.7} parent=35 // pred_region
          %235 = dma.done [#allocation9], 16
        $region52: #{next_stage_g_forward.7} parent=35 // pred_fallthru
          _
        %s236 = sand.u32 %s31, 1
        %s237 = scalar_lea.sflag [#allocation3], %s236
        %s238 = sand.u32 %s31, 1
        %s239 = smul.addr %s238, 64
        %s240 = scalar_lea.vmem [#allocation2], %s239
        %p241 = pneg %p44
        %p242 = pneg %p41
        %p243 = pneg %p65
        %p244 = pneg %p62
        %p245 = pneg %p86
        %p246 = pneg %p83
        %p247 = pneg %p107
        %p248 = pneg %p104
        %p249 = pneg %p133
        %p250 = pneg %p130
        %s251 = sand.u32 %s120, 1
        %s252 = scalar_lea.sflag [#allocation4], %s251
        %s253 = sand.u32 %s120, 1
        %s254 = smul.addr %s253, 256
        %s255 = scalar_lea.vmem [#allocation10], %s254
        %v257 = vld [vmem:[%s219] sm:$0xff]
        %v258 = vld [vmem:[%s219 + $0x8] sm:$0xff]
        %v259 = vld [vmem:[%s219 + $0x10] sm:$0xff]
        %v260 = vld [vmem:[%s219 + $0x18] sm:$0xff]
        %v261 = vld [vmem:[%s219 + $0x20] sm:$0xff]
        %v262 = vld [vmem:[%s219 + $0x28] sm:$0xff]
        %v263 = vld [vmem:[%s219 + $0x30] sm:$0xff]
        %v264 = vld [vmem:[%s219 + $0x38] sm:$0xff]
        %v265 = vpack.c.bf16 %v257, %v257
        %v266 = vpack.c.bf16 %v258, %v258
        %v267 = vpack.c.bf16 %v259, %v259
        %v268 = vpack.c.bf16 %v260, %v260
        %v269 = vpack.c.bf16 %v261, %v261
        %v270 = vpack.c.bf16 %v262, %v262
        %v271 = vpack.c.bf16 %v263, %v263
        %v272 = vpack.c.bf16 %v264, %v264
        %v274 = vshrl.u32 0, 16
        %v276 = vrot.slane %v274, 7
        %v277 = vshll.u32 0, 16
        %v279 = vor.u32 %v276, %v277
        %v281 = vshrl.u32 %v265, 16
        %v283 = vrot.slane %v281, 7
        %v284 = vshll.u32 %v265, 16
        %v286 = vor.u32 %v283, %v284
        %v288 = vshrl.u32 %v266, 16
        %v290 = vrot.slane %v288, 7
        %v291 = vshll.u32 %v266, 16
        %v293 = vor.u32 %v290, %v291
        %v295 = vshrl.u32 %v267, 16
        %v297 = vrot.slane %v295, 7
        %v298 = vshll.u32 %v267, 16
        %v300 = vor.u32 %v297, %v298
        %v302 = vshrl.u32 %v268, 16
        %v304 = vrot.slane %v302, 7
        %v305 = vshll.u32 %v268, 16
        %v307 = vor.u32 %v304, %v305
        %v309 = vshrl.u32 %v269, 16
        %v311 = vrot.slane %v309, 7
        %v312 = vshll.u32 %v269, 16
        %v314 = vor.u32 %v311, %v312
        %v316 = vshrl.u32 %v270, 16
        %v318 = vrot.slane %v316, 7
        %v319 = vshll.u32 %v270, 16
        %v321 = vor.u32 %v318, %v319
        %v323 = vshrl.u32 %v271, 16
        %v325 = vrot.slane %v323, 7
        %v326 = vshll.u32 %v271, 16
        %v328 = vor.u32 %v325, %v326
        %v330 = vshrl.u32 %v272, 16
        %v332 = vrot.slane %v330, 7
        %v333 = vshll.u32 %v272, 16
        %v335 = vor.u32 %v332, %v333
        %vm345 = vcmask 1040384
        %vm346 = vsmask.f32 256
        %vm347 = vmand %vm345, %vm346
        %v348 = vsel %vm347, 0, %v279
        %v349 = vsel %vm347, 0, %v286
        %v350 = vsel %vm347, 0, %v293
        %v351 = vsel %vm347, 0, %v300
        %v352 = vsel %vm347, 0, %v307
        %v353 = vsel %vm347, 0, %v314
        %v354 = vsel %vm347, 0, %v321
        %v355 = vsel %vm347, 0, %v328
        %v356 = vsel %vm347, 0, %v335
        %vm357 = vcmask 1044480
        %vm358 = vsmask.f32 4352
        %vm359 = vmand %vm357, %vm358
        %v360 = vsel %vm359, %v348, 0
        %v361 = vsel %vm359, %v349, 0
        %v362 = vsel %vm359, %v350, 0
        %v363 = vsel %vm359, %v351, 0
        %v364 = vsel %vm359, %v352, 0
        %v365 = vsel %vm359, %v353, 0
        %v366 = vsel %vm359, %v354, 0
        %v367 = vsel %vm359, %v355, 0
        %v368 = vsel %vm359, %v356, 0
        %v370 = vshrl.u32 %v360, 16
        %v372 = vshll.u32 %v360, 16
        %v374 = vrot.slane %v372, 1
        %v375 = vor.u32 %v370, %v374
        %v377 = vshrl.u32 %v361, 16
        %v379 = vshll.u32 %v361, 16
        %v381 = vrot.slane %v379, 1
        %v382 = vor.u32 %v377, %v381
        %v384 = vshrl.u32 %v362, 16
        %v386 = vshll.u32 %v362, 16
        %v388 = vrot.slane %v386, 1
        %v389 = vor.u32 %v384, %v388
        %v391 = vshrl.u32 %v363, 16
        %v393 = vshll.u32 %v363, 16
        %v395 = vrot.slane %v393, 1
        %v396 = vor.u32 %v391, %v395
        %v398 = vshrl.u32 %v364, 16
        %v400 = vshll.u32 %v364, 16
        %v402 = vrot.slane %v400, 1
        %v403 = vor.u32 %v398, %v402
        %v405 = vshrl.u32 %v365, 16
        %v407 = vshll.u32 %v365, 16
        %v409 = vrot.slane %v407, 1
        %v410 = vor.u32 %v405, %v409
        %v412 = vshrl.u32 %v366, 16
        %v414 = vshll.u32 %v366, 16
        %v416 = vrot.slane %v414, 1
        %v417 = vor.u32 %v412, %v416
        %v419 = vshrl.u32 %v367, 16
        %v421 = vshll.u32 %v367, 16
        %v423 = vrot.slane %v421, 1
        %v424 = vor.u32 %v419, %v423
        %425 = vrot.lane.b32.xlu0 %v375, 16
        %v426 = vpop.permute.xlu0 %425
        %427 = vrot.lane.b32.xlu0 %v382, 16
        %v428 = vpop.permute.xlu0 %427
        %429 = vrot.lane.b32.xlu0 %v389, 16
        %v430 = vpop.permute.xlu0 %429
        %431 = vrot.lane.b32.xlu0 %v396, 16
        %v432 = vpop.permute.xlu0 %431
        %433 = vrot.lane.b32.xlu0 %v403, 16
        %v434 = vpop.permute.xlu0 %433
        %435 = vrot.lane.b32.xlu0 %v410, 16
        %v436 = vpop.permute.xlu0 %435
        %437 = vrot.lane.b32.xlu0 %v417, 16
        %v438 = vpop.permute.xlu0 %437
        %439 = vrot.lane.b32.xlu0 %v424, 16
        %v440 = vpop.permute.xlu0 %439
        %v449 = vrot.slane %v360, 1
        %v450 = vrot.slane %v361, 1
        %v451 = vrot.slane %v362, 1
        %v452 = vrot.slane %v363, 1
        %v453 = vrot.slane %v364, 1
        %v454 = vrot.slane %v365, 1
        %v455 = vrot.slane %v366, 1
        %v456 = vrot.slane %v367, 1
        %457 = vrot.lane.b32.xlu0 %v449, 32
        %v458 = vpop.permute.xlu0 %457
        %459 = vrot.lane.b32.xlu0 %v450, 32
        %v460 = vpop.permute.xlu0 %459
        %461 = vrot.lane.b32.xlu0 %v451, 32
        %v462 = vpop.permute.xlu0 %461
        %463 = vrot.lane.b32.xlu0 %v452, 32
        %v464 = vpop.permute.xlu0 %463
        %465 = vrot.lane.b32.xlu0 %v453, 32
        %v466 = vpop.permute.xlu0 %465
        %467 = vrot.lane.b32.xlu0 %v454, 32
        %v468 = vpop.permute.xlu0 %467
        %469 = vrot.lane.b32.xlu0 %v455, 32
        %v470 = vpop.permute.xlu0 %469
        %471 = vrot.lane.b32.xlu0 %v456, 32
        %v472 = vpop.permute.xlu0 %471
        %vm473 = vcmask 130048
        %v475 = vsel %vm473, %v360, %v426
        %v477 = vsel %vm473, %v361, %v428
        %v479 = vsel %vm473, %v362, %v430
        %v481 = vsel %vm473, %v363, %v432
        %v483 = vsel %vm473, %v364, %v434
        %v485 = vsel %vm473, %v365, %v436
        %v487 = vsel %vm473, %v366, %v438
        %v489 = vsel %vm473, %v367, %v440
        %vm490 = vcmask 261120
        %v492 = vsel %vm490, %v475, %v458
        %v494 = vsel %vm490, %v477, %v460
        %v496 = vsel %vm490, %v479, %v462
        %v498 = vsel %vm490, %v481, %v464
        %v500 = vsel %vm490, %v483, %v466
        %v502 = vsel %vm490, %v485, %v468
        %v504 = vsel %vm490, %v487, %v470
        %v506 = vsel %vm490, %v489, %v472
        %v507 = vld [vmem:[#allocation5] sm:$0xff]
        %v508 = vld [vmem:[#allocation5 + $0x8] sm:$0xff]
        %v509 = vld [vmem:[#allocation5 + $0x10] sm:$0xff]
        %v510 = vld [vmem:[#allocation5 + $0x18] sm:$0xff]
        %v511 = vld [vmem:[#allocation5 + $0x20] sm:$0xff]
        %v512 = vld [vmem:[#allocation5 + $0x28] sm:$0xff]
        %v513 = vpack.c.bf16 %v508, %v507
        %v514 = vpack.c.bf16 %v510, %v509
        %v515 = vpack.c.bf16 %v512, %v511
        %v517 = vshrl.u32 %v368, 16
        %v519 = vshll.u32 %v368, 16
        %v521 = vrot.slane %v519, 1
        %v522 = vor.u32 %v517, %v521
        %523 = vrot.lane.b32.xlu0 %v522, 16
        %v524 = vpop.permute.xlu0 %523
        %v526 = vrot.slane %v368, 1
        %527 = vrot.lane.b32.xlu0 %v526, 32
        %v528 = vpop.permute.xlu0 %527
        %v530 = vsel %vm473, %v368, %v524
        %v532 = vsel %vm490, %v530, %v528
        %s533 = scalar_lea.vmem [#allocation5], 48
        %v534 = vld [vmem:[%s533] sm:$0xff]
        %v535 = vld [vmem:[%s533 + $0x8] sm:$0xff]
        %v536 = vld [vmem:[%s533 + $0x10] sm:$0xff]
        %v537 = vld [vmem:[%s533 + $0x18] sm:$0xff]
        %v538 = vld [vmem:[%s533 + $0x20] sm:$0xff]
        %v539 = vld [vmem:[%s533 + $0x28] sm:$0xff]
        %v540 = vpack.c.bf16 %v535, %v534
        %v541 = vpack.c.bf16 %v537, %v536
        %v542 = vpack.c.bf16 %v539, %v538
        %v551 = vunpack.c.l.b16 %v494
        %v552 = vunpack.c.l.b16 %v496
        %v553 = vunpack.c.l.b16 %v498
        %v554 = vunpack.c.l.b16 %v500
        %v555 = vunpack.c.l.b16 %v502
        %v556 = vunpack.c.l.b16 %v504
        %v557 = vunpack.c.l.b16 %v506
        %v558 = vunpack.c.l.b16 %v532
        %v559 = vpack.c.b16 %v552, %v551
        %v560 = vpack.c.b16 %v554, %v553
        %v561 = vpack.c.b16 %v556, %v555
        %v562 = vpack.c.b16 %v558, %v557
        %vm563 = vcmask 392192
        %v565 = vsel %vm563, %v559, 0
        %v568 = vsel %vm563, %v560, 0
        %v571 = vsel %vm563, %v561, 0
        %v574 = vsel %vm563, %v562, 0
        %576 = vmatprep.subr.bf16.mxu0 0
        %577 = vmatpush1.bf16.msra.mxu0 %v540
        %578 = vmatprep.subr.bf16.mxu0 0
        %579 = vmatpush1.bf16.msra.mxu0 %v541
        %580 = vmatprep.subr.bf16.mxu0 0
        %581 = vmatpush1.bf16.msra.mxu0 %v542
        %582 = vmatprep.subr.bf16.mxu0 0
        %583 = vmatpush1.bf16.msra.mxu0 0
        %584 = vmatprep.subr.bf16.mxu0 0
        %585 = vmatpush1.bf16.msra.mxu0 0
        %586 = vmatprep.subr.bf16.mxu0 0
        %587 = vmatpush1.bf16.msra.mxu0 0
        %588 = vmatprep.subr.bf16.mxu0 0
        %589 = vmatpush1.bf16.msra.mxu0 0
        %590 = vmatprep.subr.bf16.mxu0 0
        %591 = vmatpush1.bf16.msra.mxu0 0
        %592 = vmatprep.subr.bf16.mxu0 0
        %593 = vmatpush1.bf16.msra.mxu0 0
        %594 = vmatprep.subr.bf16.mxu0 0
        %595 = vmatpush1.bf16.msra.mxu0 0
        %596 = vmatprep.subr.bf16.mxu0 0
        %597 = vmatpush1.bf16.msra.mxu0 0
        %598 = vmatprep.subr.bf16.mxu0 0
        %599 = vmatpush1.bf16.msra.mxu0 0
        %600 = vmatprep.subr.bf16.mxu0 0
        %601 = vmatpush1.bf16.msra.mxu0 0
        %602 = vmatprep.subr.bf16.mxu0 0
        %603 = vmatpush1.bf16.msra.mxu0 0
        %604 = vmatprep.subr.bf16.mxu0 0
        %605 = vmatpush1.bf16.msra.mxu0 0
        %606 = vmatprep.subr.bf16.mxu0 0
        %607 = vmatpush1.bf16.msra.mxu0 0
        %608 = vmatprep.mubr.bf16.mxu0 0
        %609 = vmatmul.mubr.bf16.gmra.mrb[0].mxu0 %v565
        %v610 = vpop.f32.mrb[0].mxu0
        %v611 = vadd.f32 0.0, %v610
        %v612 = vpop.f32.mrb[0].mxu0
        %v613 = vpop.f32.mrb[0].mxu0
        %v614 = vadd.f32 0.0, %v613
        %v615 = vpop.f32.mrb[0].mxu0
        %616 = vmatprep.mubr.bf16.mxu0 0
        %617 = vmatmul.mubr.bf16.gmra.mrb[0].mxu0 %v568
        %v618 = vpop.f32.mrb[0].mxu0
        %v619 = vadd.f32 0.0, %v618
        %v620 = vpop.f32.mrb[0].mxu0
        %v621 = vpop.f32.mrb[0].mxu0
        %v622 = vadd.f32 0.0, %v621
        %v623 = vpop.f32.mrb[0].mxu0
        %624 = vmatprep.mubr.bf16.mxu0 0
        %625 = vmatmul.mubr.bf16.gmra.mrb[0].mxu0 %v571
        %v626 = vpop.f32.mrb[0].mxu0
        %v627 = vadd.f32 0.0, %v626
        %v628 = vpop.f32.mrb[0].mxu0
        %v629 = vpop.f32.mrb[0].mxu0
        %v630 = vadd.f32 0.0, %v629
        %v631 = vpop.f32.mrb[0].mxu0
        %632 = vmatprep.mubr.bf16.mxu0 0
        %633 = vmatmul.mubr.bf16.gmra.mrb[0].mxu0 %v574
        %v634 = vpop.f32.mrb[0].mxu0
        %v635 = vadd.f32 0.0, %v634
        %v636 = vpop.f32.mrb[0].mxu0
        %v637 = vpop.f32.mrb[0].mxu0
        %v638 = vadd.f32 0.0, %v637
        %v639 = vpop.f32.mrb[0].mxu0
        %640 = vdwg.mxu0
        %v642 = vunpack.c.l.b16 %v492
        %v643 = vpack.c.b16 %v551, %v642
        %v644 = vpack.c.b16 %v553, %v552
        %v645 = vpack.c.b16 %v555, %v554
        %v646 = vpack.c.b16 %v557, %v556
        %v648 = vsel %vm563, %v643, 0
        %v651 = vsel %vm563, %v644, 0
        %v654 = vsel %vm563, %v645, 0
        %v657 = vsel %vm563, %v646, 0
        %659 = vmatprep.subr.bf16.mxu0 0
        %660 = vmatpush1.bf16.msra.mxu0 %v513
        %661 = vmatprep.subr.bf16.mxu0 0
        %662 = vmatpush1.bf16.msra.mxu0 %v514
        %663 = vmatprep.subr.bf16.mxu0 0
        %664 = vmatpush1.bf16.msra.mxu0 %v515
        %665 = vmatprep.subr.bf16.mxu0 0
        %666 = vmatpush1.bf16.msra.mxu0 0
        %667 = vmatprep.subr.bf16.mxu0 0
        %668 = vmatpush1.bf16.msra.mxu0 0
        %669 = vmatprep.subr.bf16.mxu0 0
        %670 = vmatpush1.bf16.msra.mxu0 0
        %671 = vmatprep.subr.bf16.mxu0 0
        %672 = vmatpush1.bf16.msra.mxu0 0
        %673 = vmatprep.subr.bf16.mxu0 0
        %674 = vmatpush1.bf16.msra.mxu0 0
        %675 = vmatprep.subr.bf16.mxu0 0
        %676 = vmatpush1.bf16.msra.mxu0 0
        %677 = vmatprep.subr.bf16.mxu0 0
        %678 = vmatpush1.bf16.msra.mxu0 0
        %679 = vmatprep.subr.bf16.mxu0 0
        %680 = vmatpush1.bf16.msra.mxu0 0
        %681 = vmatprep.subr.bf16.mxu0 0
        %682 = vmatpush1.bf16.msra.mxu0 0
        %683 = vmatprep.subr.bf16.mxu0 0
        %684 = vmatpush1.bf16.msra.mxu0 0
        %685 = vmatprep.subr.bf16.mxu0 0
        %686 = vmatpush1.bf16.msra.mxu0 0
        %687 = vmatprep.subr.bf16.mxu0 0
        %688 = vmatpush1.bf16.msra.mxu0 0
        %689 = vmatprep.subr.bf16.mxu0 0
        %690 = vmatpush1.bf16.msra.mxu0 0
        %691 = vmatprep.mubr.bf16.mxu0 0
        %692 = vmatmul.mubr.bf16.gmra.mrb[0].mxu0 %v648
        %v693 = vpop.f32.mrb[0].mxu0
        %v694 = vadd.f32 %v611, %v693
        %v695 = vpop.f32.mrb[0].mxu0
        %v696 = vpop.f32.mrb[0].mxu0
        %v697 = vadd.f32 %v614, %v696
        %v698 = vpop.f32.mrb[0].mxu0
        %699 = vmatprep.mubr.bf16.mxu0 0
        %700 = vmatmul.mubr.bf16.gmra.mrb[0].mxu0 %v651
        %v701 = vpop.f32.mrb[0].mxu0
        %v702 = vadd.f32 %v619, %v701
        %v703 = vpop.f32.mrb[0].mxu0
        %v704 = vpop.f32.mrb[0].mxu0
        %v705 = vadd.f32 %v622, %v704
        %v706 = vpop.f32.mrb[0].mxu0
        %707 = vmatprep.mubr.bf16.mxu0 0
        %708 = vmatmul.mubr.bf16.gmra.mrb[0].mxu0 %v654
        %v709 = vpop.f32.mrb[0].mxu0
        %v710 = vadd.f32 %v627, %v709
        %v711 = vpop.f32.mrb[0].mxu0
        %v712 = vpop.f32.mrb[0].mxu0
        %v713 = vadd.f32 %v630, %v712
        %v714 = vpop.f32.mrb[0].mxu0
        %715 = vmatprep.mubr.bf16.mxu0 0
        %716 = vmatmul.mubr.bf16.gmra.mrb[0].mxu0 %v657
        %v717 = vpop.f32.mrb[0].mxu0
        %v718 = vadd.f32 %v635, %v717
        %v719 = vpop.f32.mrb[0].mxu0
        %v720 = vpop.f32.mrb[0].mxu0
        %v721 = vadd.f32 %v638, %v720
        %v722 = vpop.f32.mrb[0].mxu0
        %723 = vdwg.mxu0
        %s724 = scalar_lea.vmem [#allocation5], 96
        %v725 = vld [vmem:[%s724] sm:$0xff]
        %v726 = vld [vmem:[%s724 + $0x8] sm:$0xff]
        %v727 = vld [vmem:[%s724 + $0x10] sm:$0xff]
        %v728 = vld [vmem:[%s724 + $0x18] sm:$0xff]
        %v729 = vld [vmem:[%s724 + $0x20] sm:$0xff]
        %v730 = vld [vmem:[%s724 + $0x28] sm:$0xff]
        %v731 = vpack.c.bf16 %v726, %v725
        %v732 = vpack.c.bf16 %v728, %v727
        %v733 = vpack.c.bf16 %v730, %v729
        %v734 = vpack.c.b16 %v642, %v558
        %v736 = vsel %vm563, %v734, 0
        %738 = vmatprep.subr.bf16.mxu0 0
        %739 = vmatpush1.bf16.msra.mxu0 %v731
        %740 = vmatprep.subr.bf16.mxu0 0
        %741 = vmatpush1.bf16.msra.mxu0 %v732
        %742 = vmatprep.subr.bf16.mxu0 0
        %743 = vmatpush1.bf16.msra.mxu0 %v733
        %744 = vmatprep.subr.bf16.mxu0 0
        %745 = vmatpush1.bf16.msra.mxu0 0
        %746 = vmatprep.subr.bf16.mxu0 0
        %747 = vmatpush1.bf16.msra.mxu0 0
        %748 = vmatprep.subr.bf16.mxu0 0
        %749 = vmatpush1.bf16.msra.mxu0 0
        %750 = vmatprep.subr.bf16.mxu0 0
        %751 = vmatpush1.bf16.msra.mxu0 0
        %752 = vmatprep.subr.bf16.mxu0 0
        %753 = vmatpush1.bf16.msra.mxu0 0
        %754 = vmatprep.subr.bf16.mxu0 0
        %755 = vmatpush1.bf16.msra.mxu0 0
        %756 = vmatprep.subr.bf16.mxu0 0
        %757 = vmatpush1.bf16.msra.mxu0 0
        %758 = vmatprep.subr.bf16.mxu0 0
        %759 = vmatpush1.bf16.msra.mxu0 0
        %760 = vmatprep.subr.bf16.mxu0 0
        %761 = vmatpush1.bf16.msra.mxu0 0
        %762 = vmatprep.subr.bf16.mxu0 0
        %763 = vmatpush1.bf16.msra.mxu0 0
        %764 = vmatprep.subr.bf16.mxu0 0
        %765 = vmatpush1.bf16.msra.mxu0 0
        %766 = vmatprep.subr.bf16.mxu0 0
        %767 = vmatpush1.bf16.msra.mxu0 0
        %768 = vmatprep.subr.bf16.mxu0 0
        %769 = vmatpush1.bf16.msra.mxu0 0
        %770 = vmatprep.mubr.bf16.mxu0 0
        %771 = vmatmul.mubr.bf16.gmra.mrb[0].mxu0 %v651
        %v772 = vpop.f32.mrb[0].mxu0
        %v773 = vadd.f32 0.0, %v772
        %v774 = vpop.f32.mrb[0].mxu0
        %v775 = vpop.f32.mrb[0].mxu0
        %v776 = vadd.f32 0.0, %v775
        %v777 = vpop.f32.mrb[0].mxu0
        %778 = vmatprep.mubr.bf16.mxu0 0
        %779 = vmatmul.mubr.bf16.gmra.mrb[0].mxu0 %v654
        %v780 = vpop.f32.mrb[0].mxu0
        %v781 = vadd.f32 0.0, %v780
        %v782 = vpop.f32.mrb[0].mxu0
        %v783 = vpop.f32.mrb[0].mxu0
        %v784 = vadd.f32 0.0, %v783
        %v785 = vpop.f32.mrb[0].mxu0
        %786 = vmatprep.mubr.bf16.mxu0 0
        %787 = vmatmul.mubr.bf16.gmra.mrb[0].mxu0 %v657
        %v788 = vpop.f32.mrb[0].mxu0
        %v789 = vadd.f32 0.0, %v788
        %v790 = vpop.f32.mrb[0].mxu0
        %v791 = vpop.f32.mrb[0].mxu0
        %v792 = vadd.f32 0.0, %v791
        %v793 = vpop.f32.mrb[0].mxu0
        %794 = vmatprep.mubr.bf16.mxu0 0
        %795 = vmatmul.mubr.bf16.gmra.mrb[0].mxu0 %v736
        %v796 = vpop.f32.mrb[0].mxu0
        %v797 = vadd.f32 0.0, %v796
        %v798 = vpop.f32.mrb[0].mxu0
        %v799 = vpop.f32.mrb[0].mxu0
        %v800 = vadd.f32 0.0, %v799
        %v801 = vpop.f32.mrb[0].mxu0
        %802 = vdwg.mxu0
        %v803 = vadd.f32 %v694, %v773
        %v804 = vadd.f32 %v697, %v776
        %v805 = vadd.f32 %v702, %v781
        %v806 = vadd.f32 %v705, %v784
        %v807 = vadd.f32 %v710, %v789
        %v808 = vadd.f32 %v713, %v792
        %v809 = vadd.f32 %v718, %v797
        %v810 = vadd.f32 %v721, %v800
        %v811 = vld [vmem:[#allocation7] sm:$0x1]
        %v813 = vlaneseq
        %v814 = vshrl.u32 %v813, 7
        %v815 = vsub.s32 0, %v814
        %v816 = vrot.slane %v811, %v815
        %v818 = vmul.f32 %v803, %v816
        %v819 = vmul.f32 %v804, %v816
        %v820 = vmul.f32 %v805, %v816
        %v821 = vmul.f32 %v806, %v816
        %v822 = vmul.f32 %v807, %v816
        %v823 = vmul.f32 %v808, %v816
        %v824 = vmul.f32 %v809, %v816
        %v825 = vmul.f32 %v810, %v816
        %v826 = vld [vmem:[#allocation8] sm:$0x1]
        %v828 = vlaneseq
        %v829 = vshrl.u32 %v828, 7
        %v830 = vsub.s32 0, %v829
        %v831 = vrot.slane %v826, %v830
        %v833 = vadd.f32 %v818, %v831
        %v834 = vadd.f32 %v819, %v831
        %v835 = vadd.f32 %v820, %v831
        %v836 = vadd.f32 %v821, %v831
        %v837 = vadd.f32 %v822, %v831
        %v838 = vadd.f32 %v823, %v831
        %v839 = vadd.f32 %v824, %v831
        %v840 = vadd.f32 %v825, %v831
        %v841 = vmax.f32 %v833, 0.0
        %v842 = vmax.f32 %v834, 0.0
        %v843 = vmax.f32 %v835, 0.0
        %v844 = vmax.f32 %v836, 0.0
        %v845 = vmax.f32 %v837, 0.0
        %v846 = vmax.f32 %v838, 0.0
        %v847 = vmax.f32 %v839, 0.0
        %v848 = vmax.f32 %v840, 0.0
        %v857 = vcombine.high %v841, %v841
        %v859 = vunpack.c.l.s4 1966171168
        %v860 = vunpack.c.0.s8 %v859
        %v861 = vlaneseq
        %v862 = vshrl.u32 %v861, 7
        %v863 = vsub.s32 %v860, %v862
        %v864 = vrot.slane %v841, %v863
        %v866 = vunpack.c.l.s4 1966171168
        %v867 = vunpack.c.0.s8 %v866
        %v868 = vlaneseq
        %v869 = vshrl.u32 %v868, 7
        %v870 = vsub.s32 %v867, %v869
        %v871 = vrot.slane %v857, %v870
        %v872 = vcombine.high %v864, %v864
        %v873 = vcombine.high %v871, %v871
        %v875 = vunpack.c.l.s4 1966171168
        %v876 = vunpack.c.0.s8 %v875
        %v877 = vlaneseq
        %v878 = vshrl.u32 %v877, 7
        %v879 = vsub.s32 %v876, %v878
        %v880 = vrot.slane %v864, %v879
        %v882 = vunpack.c.l.s4 1966171168
        %v883 = vunpack.c.0.s8 %v882
        %v884 = vlaneseq
        %v885 = vshrl.u32 %v884, 7
        %v886 = vsub.s32 %v883, %v885
        %v887 = vrot.slane %v871, %v886
        %v889 = vunpack.c.l.s4 1966171168
        %v890 = vunpack.c.0.s8 %v889
        %v891 = vlaneseq
        %v892 = vshrl.u32 %v891, 7
        %v893 = vsub.s32 %v890, %v892
        %v894 = vrot.slane %v872, %v893
        %v896 = vunpack.c.l.s4 1966171168
        %v897 = vunpack.c.0.s8 %v896
        %v898 = vlaneseq
        %v899 = vshrl.u32 %v898, 7
        %v900 = vsub.s32 %v897, %v899
        %v901 = vrot.slane %v873, %v900
        %v902 = vcombine.high %v880, %v880
        %v903 = vcombine.high %v887, %v887
        %v904 = vcombine.high %v894, %v894
        %v905 = vcombine.high %v901, %v901
        %v906 = vcombine.high %v842, %v842
        %v908 = vunpack.c.l.s4 1966171168
        %v909 = vunpack.c.0.s8 %v908
        %v910 = vlaneseq
        %v911 = vshrl.u32 %v910, 7
        %v912 = vsub.s32 %v909, %v911
        %v913 = vrot.slane %v842, %v912
        %v915 = vunpack.c.l.s4 1966171168
        %v916 = vunpack.c.0.s8 %v915
        %v917 = vlaneseq
        %v918 = vshrl.u32 %v917, 7
        %v919 = vsub.s32 %v916, %v918
        %v920 = vrot.slane %v906, %v919
        %v921 = vcombine.high %v913, %v913
        %v922 = vcombine.high %v920, %v920
        %v924 = vunpack.c.l.s4 1966171168
        %v925 = vunpack.c.0.s8 %v924
        %v926 = vlaneseq
        %v927 = vshrl.u32 %v926, 7
        %v928 = vsub.s32 %v925, %v927
        %v929 = vrot.slane %v913, %v928
        %v931 = vunpack.c.l.s4 1966171168
        %v932 = vunpack.c.0.s8 %v931
        %v933 = vlaneseq
        %v934 = vshrl.u32 %v933, 7
        %v935 = vsub.s32 %v932, %v934
        %v936 = vrot.slane %v920, %v935
        %v938 = vunpack.c.l.s4 1966171168
        %v939 = vunpack.c.0.s8 %v938
        %v940 = vlaneseq
        %v941 = vshrl.u32 %v940, 7
        %v942 = vsub.s32 %v939, %v941
        %v943 = vrot.slane %v921, %v942
        %v945 = vunpack.c.l.s4 1966171168
        %v946 = vunpack.c.0.s8 %v945
        %v947 = vlaneseq
        %v948 = vshrl.u32 %v947, 7
        %v949 = vsub.s32 %v946, %v948
        %v950 = vrot.slane %v922, %v949
        %v951 = vcombine.high %v929, %v929
        %v952 = vcombine.high %v936, %v936
        %v953 = vcombine.high %v943, %v943
        %v954 = vcombine.high %v950, %v950
        %v955 = vcombine.high %v843, %v843
        %v957 = vunpack.c.l.s4 1966171168
        %v958 = vunpack.c.0.s8 %v957
        %v959 = vlaneseq
        %v960 = vshrl.u32 %v959, 7
        %v961 = vsub.s32 %v958, %v960
        %v962 = vrot.slane %v843, %v961
        %v964 = vunpack.c.l.s4 1966171168
        %v965 = vunpack.c.0.s8 %v964
        %v966 = vlaneseq
        %v967 = vshrl.u32 %v966, 7
        %v968 = vsub.s32 %v965, %v967
        %v969 = vrot.slane %v955, %v968
        %v970 = vcombine.high %v962, %v962
        %v971 = vcombine.high %v969, %v969
        %v973 = vunpack.c.l.s4 1966171168
        %v974 = vunpack.c.0.s8 %v973
        %v975 = vlaneseq
        %v976 = vshrl.u32 %v975, 7
        %v977 = vsub.s32 %v974, %v976
        %v978 = vrot.slane %v962, %v977
        %v980 = vunpack.c.l.s4 1966171168
        %v981 = vunpack.c.0.s8 %v980
        %v982 = vlaneseq
        %v983 = vshrl.u32 %v982, 7
        %v984 = vsub.s32 %v981, %v983
        %v985 = vrot.slane %v969, %v984
        %v987 = vunpack.c.l.s4 1966171168
        %v988 = vunpack.c.0.s8 %v987
        %v989 = vlaneseq
        %v990 = vshrl.u32 %v989, 7
        %v991 = vsub.s32 %v988, %v990
        %v992 = vrot.slane %v970, %v991
        %v994 = vunpack.c.l.s4 1966171168
        %v995 = vunpack.c.0.s8 %v994
        %v996 = vlaneseq
        %v997 = vshrl.u32 %v996, 7
        %v998 = vsub.s32 %v995, %v997
        %v999 = vrot.slane %v971, %v998
        %v1000 = vcombine.high %v978, %v978
        %v1001 = vcombine.high %v985, %v985
        %v1002 = vcombine.high %v992, %v992
        %v1003 = vcombine.high %v999, %v999
        %v1004 = vcombine.high %v844, %v844
        %v1006 = vunpack.c.l.s4 1966171168
        %v1007 = vunpack.c.0.s8 %v1006
        %v1008 = vlaneseq
        %v1009 = vshrl.u32 %v1008, 7
        %v1010 = vsub.s32 %v1007, %v1009
        %v1011 = vrot.slane %v844, %v1010
        %v1013 = vunpack.c.l.s4 1966171168
        %v1014 = vunpack.c.0.s8 %v1013
        %v1015 = vlaneseq
        %v1016 = vshrl.u32 %v1015, 7
        %v1017 = vsub.s32 %v1014, %v1016
        %v1018 = vrot.slane %v1004, %v1017
        %v1019 = vcombine.high %v1011, %v1011
        %v1020 = vcombine.high %v1018, %v1018
        %v1022 = vunpack.c.l.s4 1966171168
        %v1023 = vunpack.c.0.s8 %v1022
        %v1024 = vlaneseq
        %v1025 = vshrl.u32 %v1024, 7
        %v1026 = vsub.s32 %v1023, %v1025
        %v1027 = vrot.slane %v1011, %v1026
        %v1029 = vunpack.c.l.s4 1966171168
        %v1030 = vunpack.c.0.s8 %v1029
        %v1031 = vlaneseq
        %v1032 = vshrl.u32 %v1031, 7
        %v1033 = vsub.s32 %v1030, %v1032
        %v1034 = vrot.slane %v1018, %v1033
        %v1036 = vunpack.c.l.s4 1966171168
        %v1037 = vunpack.c.0.s8 %v1036
        %v1038 = vlaneseq
        %v1039 = vshrl.u32 %v1038, 7
        %v1040 = vsub.s32 %v1037, %v1039
        %v1041 = vrot.slane %v1019, %v1040
        %v1043 = vunpack.c.l.s4 1966171168
        %v1044 = vunpack.c.0.s8 %v1043
        %v1045 = vlaneseq
        %v1046 = vshrl.u32 %v1045, 7
        %v1047 = vsub.s32 %v1044, %v1046
        %v1048 = vrot.slane %v1020, %v1047
        %v1049 = vcombine.high %v1027, %v1027
        %v1050 = vcombine.high %v1034, %v1034
        %v1051 = vcombine.high %v1041, %v1041
        %v1052 = vcombine.high %v1048, %v1048
        %v1053 = vcombine.high %v845, %v845
        %v1055 = vunpack.c.l.s4 1966171168
        %v1056 = vunpack.c.0.s8 %v1055
        %v1057 = vlaneseq
        %v1058 = vshrl.u32 %v1057, 7
        %v1059 = vsub.s32 %v1056, %v1058
        %v1060 = vrot.slane %v845, %v1059
        %v1062 = vunpack.c.l.s4 1966171168
        %v1063 = vunpack.c.0.s8 %v1062
        %v1064 = vlaneseq
        %v1065 = vshrl.u32 %v1064, 7
        %v1066 = vsub.s32 %v1063, %v1065
        %v1067 = vrot.slane %v1053, %v1066
        %v1068 = vcombine.high %v1060, %v1060
        %v1069 = vcombine.high %v1067, %v1067
        %v1071 = vunpack.c.l.s4 1966171168
        %v1072 = vunpack.c.0.s8 %v1071
        %v1073 = vlaneseq
        %v1074 = vshrl.u32 %v1073, 7
        %v1075 = vsub.s32 %v1072, %v1074
        %v1076 = vrot.slane %v1060, %v1075
        %v1078 = vunpack.c.l.s4 1966171168
        %v1079 = vunpack.c.0.s8 %v1078
        %v1080 = vlaneseq
        %v1081 = vshrl.u32 %v1080, 7
        %v1082 = vsub.s32 %v1079, %v1081
        %v1083 = vrot.slane %v1067, %v1082
        %v1085 = vunpack.c.l.s4 1966171168
        %v1086 = vunpack.c.0.s8 %v1085
        %v1087 = vlaneseq
        %v1088 = vshrl.u32 %v1087, 7
        %v1089 = vsub.s32 %v1086, %v1088
        %v1090 = vrot.slane %v1068, %v1089
        %v1092 = vunpack.c.l.s4 1966171168
        %v1093 = vunpack.c.0.s8 %v1092
        %v1094 = vlaneseq
        %v1095 = vshrl.u32 %v1094, 7
        %v1096 = vsub.s32 %v1093, %v1095
        %v1097 = vrot.slane %v1069, %v1096
        %v1098 = vcombine.high %v1076, %v1076
        %v1099 = vcombine.high %v1083, %v1083
        %v1100 = vcombine.high %v1090, %v1090
        %v1101 = vcombine.high %v1097, %v1097
        %v1102 = vcombine.high %v846, %v846
        %v1104 = vunpack.c.l.s4 1966171168
        %v1105 = vunpack.c.0.s8 %v1104
        %v1106 = vlaneseq
        %v1107 = vshrl.u32 %v1106, 7
        %v1108 = vsub.s32 %v1105, %v1107
        %v1109 = vrot.slane %v846, %v1108
        %v1111 = vunpack.c.l.s4 1966171168
        %v1112 = vunpack.c.0.s8 %v1111
        %v1113 = vlaneseq
        %v1114 = vshrl.u32 %v1113, 7
        %v1115 = vsub.s32 %v1112, %v1114
        %v1116 = vrot.slane %v1102, %v1115
        %v1117 = vcombine.high %v1109, %v1109
        %v1118 = vcombine.high %v1116, %v1116
        %v1120 = vunpack.c.l.s4 1966171168
        %v1121 = vunpack.c.0.s8 %v1120
        %v1122 = vlaneseq
        %v1123 = vshrl.u32 %v1122, 7
        %v1124 = vsub.s32 %v1121, %v1123
        %v1125 = vrot.slane %v1109, %v1124
        %v1127 = vunpack.c.l.s4 1966171168
        %v1128 = vunpack.c.0.s8 %v1127
        %v1129 = vlaneseq
        %v1130 = vshrl.u32 %v1129, 7
        %v1131 = vsub.s32 %v1128, %v1130
        %v1132 = vrot.slane %v1116, %v1131
        %v1134 = vunpack.c.l.s4 1966171168
        %v1135 = vunpack.c.0.s8 %v1134
        %v1136 = vlaneseq
        %v1137 = vshrl.u32 %v1136, 7
        %v1138 = vsub.s32 %v1135, %v1137
        %v1139 = vrot.slane %v1117, %v1138
        %v1141 = vunpack.c.l.s4 1966171168
        %v1142 = vunpack.c.0.s8 %v1141
        %v1143 = vlaneseq
        %v1144 = vshrl.u32 %v1143, 7
        %v1145 = vsub.s32 %v1142, %v1144
        %v1146 = vrot.slane %v1118, %v1145
        %v1147 = vcombine.high %v1125, %v1125
        %v1148 = vcombine.high %v1132, %v1132
        %v1149 = vcombine.high %v1139, %v1139
        %v1150 = vcombine.high %v1146, %v1146
        %v1151 = vcombine.high %v847, %v847
        %v1153 = vunpack.c.l.s4 1966171168
        %v1154 = vunpack.c.0.s8 %v1153
        %v1155 = vlaneseq
        %v1156 = vshrl.u32 %v1155, 7
        %v1157 = vsub.s32 %v1154, %v1156
        %v1158 = vrot.slane %v847, %v1157
        %v1160 = vunpack.c.l.s4 1966171168
        %v1161 = vunpack.c.0.s8 %v1160
        %v1162 = vlaneseq
        %v1163 = vshrl.u32 %v1162, 7
        %v1164 = vsub.s32 %v1161, %v1163
        %v1165 = vrot.slane %v1151, %v1164
        %v1166 = vcombine.high %v1158, %v1158
        %v1167 = vcombine.high %v1165, %v1165
        %v1169 = vunpack.c.l.s4 1966171168
        %v1170 = vunpack.c.0.s8 %v1169
        %v1171 = vlaneseq
        %v1172 = vshrl.u32 %v1171, 7
        %v1173 = vsub.s32 %v1170, %v1172
        %v1174 = vrot.slane %v1158, %v1173
        %v1176 = vunpack.c.l.s4 1966171168
        %v1177 = vunpack.c.0.s8 %v1176
        %v1178 = vlaneseq
        %v1179 = vshrl.u32 %v1178, 7
        %v1180 = vsub.s32 %v1177, %v1179
        %v1181 = vrot.slane %v1165, %v1180
        %v1183 = vunpack.c.l.s4 1966171168
        %v1184 = vunpack.c.0.s8 %v1183
        %v1185 = vlaneseq
        %v1186 = vshrl.u32 %v1185, 7
        %v1187 = vsub.s32 %v1184, %v1186
        %v1188 = vrot.slane %v1166, %v1187
        %v1190 = vunpack.c.l.s4 1966171168
        %v1191 = vunpack.c.0.s8 %v1190
        %v1192 = vlaneseq
        %v1193 = vshrl.u32 %v1192, 7
        %v1194 = vsub.s32 %v1191, %v1193
        %v1195 = vrot.slane %v1167, %v1194
        %v1196 = vcombine.high %v1174, %v1174
        %v1197 = vcombine.high %v1181, %v1181
        %v1198 = vcombine.high %v1188, %v1188
        %v1199 = vcombine.high %v1195, %v1195
        %v1200 = vcombine.high %v848, %v848
        %v1202 = vunpack.c.l.s4 1966171168
        %v1203 = vunpack.c.0.s8 %v1202
        %v1204 = vlaneseq
        %v1205 = vshrl.u32 %v1204, 7
        %v1206 = vsub.s32 %v1203, %v1205
        %v1207 = vrot.slane %v848, %v1206
        %v1209 = vunpack.c.l.s4 1966171168
        %v1210 = vunpack.c.0.s8 %v1209
        %v1211 = vlaneseq
        %v1212 = vshrl.u32 %v1211, 7
        %v1213 = vsub.s32 %v1210, %v1212
        %v1214 = vrot.slane %v1200, %v1213
        %v1215 = vcombine.high %v1207, %v1207
        %v1216 = vcombine.high %v1214, %v1214
        %v1218 = vunpack.c.l.s4 1966171168
        %v1219 = vunpack.c.0.s8 %v1218
        %v1220 = vlaneseq
        %v1221 = vshrl.u32 %v1220, 7
        %v1222 = vsub.s32 %v1219, %v1221
        %v1223 = vrot.slane %v1207, %v1222
        %v1225 = vunpack.c.l.s4 1966171168
        %v1226 = vunpack.c.0.s8 %v1225
        %v1227 = vlaneseq
        %v1228 = vshrl.u32 %v1227, 7
        %v1229 = vsub.s32 %v1226, %v1228
        %v1230 = vrot.slane %v1214, %v1229
        %v1232 = vunpack.c.l.s4 1966171168
        %v1233 = vunpack.c.0.s8 %v1232
        %v1234 = vlaneseq
        %v1235 = vshrl.u32 %v1234, 7
        %v1236 = vsub.s32 %v1233, %v1235
        %v1237 = vrot.slane %v1215, %v1236
        %v1239 = vunpack.c.l.s4 1966171168
        %v1240 = vunpack.c.0.s8 %v1239
        %v1241 = vlaneseq
        %v1242 = vshrl.u32 %v1241, 7
        %v1243 = vsub.s32 %v1240, %v1242
        %v1244 = vrot.slane %v1216, %v1243
        %v1245 = vcombine.high %v1223, %v1223
        %v1246 = vcombine.high %v1230, %v1230
        %v1247 = vcombine.high %v1237, %v1237
        %v1248 = vcombine.high %v1244, %v1244
        %v1313 = vlaneseq
        %v1314 = vshrl.u32 %v1313, 7
        %v1315 = vsub.s32 0, %v1314
        %v1316 = vrot.slane %v880, %v1315
        %v1317 = vlaneseq
        %v1318 = vshrl.u32 %v1317, 7
        %v1319 = vsub.s32 0, %v1318
        %v1320 = vrot.slane %v894, %v1319
        %v1321 = vlaneseq
        %v1322 = vshrl.u32 %v1321, 7
        %v1323 = vsub.s32 0, %v1322
        %v1324 = vrot.slane %v902, %v1323
        %v1325 = vlaneseq
        %v1326 = vshrl.u32 %v1325, 7
        %v1327 = vsub.s32 0, %v1326
        %v1328 = vrot.slane %v904, %v1327
        %v1329 = vlaneseq
        %v1330 = vshrl.u32 %v1329, 7
        %v1331 = vsub.s32 0, %v1330
        %v1332 = vrot.slane %v887, %v1331
        %v1333 = vlaneseq
        %v1334 = vshrl.u32 %v1333, 7
        %v1335 = vsub.s32 0, %v1334
        %v1336 = vrot.slane %v901, %v1335
        %v1337 = vlaneseq
        %v1338 = vshrl.u32 %v1337, 7
        %v1339 = vsub.s32 0, %v1338
        %v1340 = vrot.slane %v903, %v1339
        %v1341 = vlaneseq
        %v1342 = vshrl.u32 %v1341, 7
        %v1343 = vsub.s32 0, %v1342
        %v1344 = vrot.slane %v905, %v1343
        %v1345 = vlaneseq
        %v1346 = vshrl.u32 %v1345, 7
        %v1347 = vsub.s32 0, %v1346
        %v1348 = vrot.slane %v929, %v1347
        %v1349 = vlaneseq
        %v1350 = vshrl.u32 %v1349, 7
        %v1351 = vsub.s32 0, %v1350
        %v1352 = vrot.slane %v943, %v1351
        %v1353 = vlaneseq
        %v1354 = vshrl.u32 %v1353, 7
        %v1355 = vsub.s32 0, %v1354
        %v1356 = vrot.slane %v951, %v1355
        %v1357 = vlaneseq
        %v1358 = vshrl.u32 %v1357, 7
        %v1359 = vsub.s32 0, %v1358
        %v1360 = vrot.slane %v953, %v1359
        %v1361 = vlaneseq
        %v1362 = vshrl.u32 %v1361, 7
        %v1363 = vsub.s32 0, %v1362
        %v1364 = vrot.slane %v936, %v1363
        %v1365 = vlaneseq
        %v1366 = vshrl.u32 %v1365, 7
        %v1367 = vsub.s32 0, %v1366
        %v1368 = vrot.slane %v950, %v1367
        %v1369 = vlaneseq
        %v1370 = vshrl.u32 %v1369, 7
        %v1371 = vsub.s32 0, %v1370
        %v1372 = vrot.slane %v952, %v1371
        %v1373 = vlaneseq
        %v1374 = vshrl.u32 %v1373, 7
        %v1375 = vsub.s32 0, %v1374
        %v1376 = vrot.slane %v954, %v1375
        %v1377 = vlaneseq
        %v1378 = vshrl.u32 %v1377, 7
        %v1379 = vsub.s32 0, %v1378
        %v1380 = vrot.slane %v978, %v1379
        %v1381 = vlaneseq
        %v1382 = vshrl.u32 %v1381, 7
        %v1383 = vsub.s32 0, %v1382
        %v1384 = vrot.slane %v992, %v1383
        %v1385 = vlaneseq
        %v1386 = vshrl.u32 %v1385, 7
        %v1387 = vsub.s32 0, %v1386
        %v1388 = vrot.slane %v1000, %v1387
        %v1389 = vlaneseq
        %v1390 = vshrl.u32 %v1389, 7
        %v1391 = vsub.s32 0, %v1390
        %v1392 = vrot.slane %v1002, %v1391
        %v1393 = vlaneseq
        %v1394 = vshrl.u32 %v1393, 7
        %v1395 = vsub.s32 0, %v1394
        %v1396 = vrot.slane %v985, %v1395
        %v1397 = vlaneseq
        %v1398 = vshrl.u32 %v1397, 7
        %v1399 = vsub.s32 0, %v1398
        %v1400 = vrot.slane %v999, %v1399
        %v1401 = vlaneseq
        %v1402 = vshrl.u32 %v1401, 7
        %v1403 = vsub.s32 0, %v1402
        %v1404 = vrot.slane %v1001, %v1403
        %v1405 = vlaneseq
        %v1406 = vshrl.u32 %v1405, 7
        %v1407 = vsub.s32 0, %v1406
        %v1408 = vrot.slane %v1003, %v1407
        %v1409 = vlaneseq
        %v1410 = vshrl.u32 %v1409, 7
        %v1411 = vsub.s32 0, %v1410
        %v1412 = vrot.slane %v1027, %v1411
        %v1413 = vlaneseq
        %v1414 = vshrl.u32 %v1413, 7
        %v1415 = vsub.s32 0, %v1414
        %v1416 = vrot.slane %v1041, %v1415
        %v1417 = vlaneseq
        %v1418 = vshrl.u32 %v1417, 7
        %v1419 = vsub.s32 0, %v1418
        %v1420 = vrot.slane %v1049, %v1419
        %v1421 = vlaneseq
        %v1422 = vshrl.u32 %v1421, 7
        %v1423 = vsub.s32 0, %v1422
        %v1424 = vrot.slane %v1051, %v1423
        %v1425 = vlaneseq
        %v1426 = vshrl.u32 %v1425, 7
        %v1427 = vsub.s32 0, %v1426
        %v1428 = vrot.slane %v1034, %v1427
        %v1429 = vlaneseq
        %v1430 = vshrl.u32 %v1429, 7
        %v1431 = vsub.s32 0, %v1430
        %v1432 = vrot.slane %v1048, %v1431
        %v1433 = vlaneseq
        %v1434 = vshrl.u32 %v1433, 7
        %v1435 = vsub.s32 0, %v1434
        %v1436 = vrot.slane %v1050, %v1435
        %v1437 = vlaneseq
        %v1438 = vshrl.u32 %v1437, 7
        %v1439 = vsub.s32 0, %v1438
        %v1440 = vrot.slane %v1052, %v1439
        %v1441 = vlaneseq
        %v1442 = vshrl.u32 %v1441, 7
        %v1443 = vsub.s32 0, %v1442
        %v1444 = vrot.slane %v1076, %v1443
        %v1445 = vlaneseq
        %v1446 = vshrl.u32 %v1445, 7
        %v1447 = vsub.s32 0, %v1446
        %v1448 = vrot.slane %v1090, %v1447
        %v1449 = vlaneseq
        %v1450 = vshrl.u32 %v1449, 7
        %v1451 = vsub.s32 0, %v1450
        %v1452 = vrot.slane %v1098, %v1451
        %v1453 = vlaneseq
        %v1454 = vshrl.u32 %v1453, 7
        %v1455 = vsub.s32 0, %v1454
        %v1456 = vrot.slane %v1100, %v1455
        %v1457 = vlaneseq
        %v1458 = vshrl.u32 %v1457, 7
        %v1459 = vsub.s32 0, %v1458
        %v1460 = vrot.slane %v1083, %v1459
        %v1461 = vlaneseq
        %v1462 = vshrl.u32 %v1461, 7
        %v1463 = vsub.s32 0, %v1462
        %v1464 = vrot.slane %v1097, %v1463
        %v1465 = vlaneseq
        %v1466 = vshrl.u32 %v1465, 7
        %v1467 = vsub.s32 0, %v1466
        %v1468 = vrot.slane %v1099, %v1467
        %v1469 = vlaneseq
        %v1470 = vshrl.u32 %v1469, 7
        %v1471 = vsub.s32 0, %v1470
        %v1472 = vrot.slane %v1101, %v1471
        %v1473 = vlaneseq
        %v1474 = vshrl.u32 %v1473, 7
        %v1475 = vsub.s32 0, %v1474
        %v1476 = vrot.slane %v1125, %v1475
        %v1477 = vlaneseq
        %v1478 = vshrl.u32 %v1477, 7
        %v1479 = vsub.s32 0, %v1478
        %v1480 = vrot.slane %v1139, %v1479
        %v1481 = vlaneseq
        %v1482 = vshrl.u32 %v1481, 7
        %v1483 = vsub.s32 0, %v1482
        %v1484 = vrot.slane %v1147, %v1483
        %v1485 = vlaneseq
        %v1486 = vshrl.u32 %v1485, 7
        %v1487 = vsub.s32 0, %v1486
        %v1488 = vrot.slane %v1149, %v1487
        %v1489 = vlaneseq
        %v1490 = vshrl.u32 %v1489, 7
        %v1491 = vsub.s32 0, %v1490
        %v1492 = vrot.slane %v1132, %v1491
        %v1493 = vlaneseq
        %v1494 = vshrl.u32 %v1493, 7
        %v1495 = vsub.s32 0, %v1494
        %v1496 = vrot.slane %v1146, %v1495
        %v1497 = vlaneseq
        %v1498 = vshrl.u32 %v1497, 7
        %v1499 = vsub.s32 0, %v1498
        %v1500 = vrot.slane %v1148, %v1499
        %v1501 = vlaneseq
        %v1502 = vshrl.u32 %v1501, 7
        %v1503 = vsub.s32 0, %v1502
        %v1504 = vrot.slane %v1150, %v1503
        %v1505 = vlaneseq
        %v1506 = vshrl.u32 %v1505, 7
        %v1507 = vsub.s32 0, %v1506
        %v1508 = vrot.slane %v1174, %v1507
        %v1509 = vlaneseq
        %v1510 = vshrl.u32 %v1509, 7
        %v1511 = vsub.s32 0, %v1510
        %v1512 = vrot.slane %v1188, %v1511
        %v1513 = vlaneseq
        %v1514 = vshrl.u32 %v1513, 7
        %v1515 = vsub.s32 0, %v1514
        %v1516 = vrot.slane %v1196, %v1515
        %v1517 = vlaneseq
        %v1518 = vshrl.u32 %v1517, 7
        %v1519 = vsub.s32 0, %v1518
        %v1520 = vrot.slane %v1198, %v1519
        %v1521 = vlaneseq
        %v1522 = vshrl.u32 %v1521, 7
        %v1523 = vsub.s32 0, %v1522
        %v1524 = vrot.slane %v1181, %v1523
        %v1525 = vlaneseq
        %v1526 = vshrl.u32 %v1525, 7
        %v1527 = vsub.s32 0, %v1526
        %v1528 = vrot.slane %v1195, %v1527
        %v1529 = vlaneseq
        %v1530 = vshrl.u32 %v1529, 7
        %v1531 = vsub.s32 0, %v1530
        %v1532 = vrot.slane %v1197, %v1531
        %v1533 = vlaneseq
        %v1534 = vshrl.u32 %v1533, 7
        %v1535 = vsub.s32 0, %v1534
        %v1536 = vrot.slane %v1199, %v1535
        %v1537 = vlaneseq
        %v1538 = vshrl.u32 %v1537, 7
        %v1539 = vsub.s32 0, %v1538
        %v1540 = vrot.slane %v1223, %v1539
        %v1541 = vlaneseq
        %v1542 = vshrl.u32 %v1541, 7
        %v1543 = vsub.s32 0, %v1542
        %v1544 = vrot.slane %v1237, %v1543
        %v1545 = vlaneseq
        %v1546 = vshrl.u32 %v1545, 7
        %v1547 = vsub.s32 0, %v1546
        %v1548 = vrot.slane %v1245, %v1547
        %v1549 = vlaneseq
        %v1550 = vshrl.u32 %v1549, 7
        %v1551 = vsub.s32 0, %v1550
        %v1552 = vrot.slane %v1247, %v1551
        %v1553 = vlaneseq
        %v1554 = vshrl.u32 %v1553, 7
        %v1555 = vsub.s32 0, %v1554
        %v1556 = vrot.slane %v1230, %v1555
        %v1557 = vlaneseq
        %v1558 = vshrl.u32 %v1557, 7
        %v1559 = vsub.s32 0, %v1558
        %v1560 = vrot.slane %v1244, %v1559
        %v1561 = vlaneseq
        %v1562 = vshrl.u32 %v1561, 7
        %v1563 = vsub.s32 0, %v1562
        %v1564 = vrot.slane %v1246, %v1563
        %v1565 = vlaneseq
        %v1566 = vshrl.u32 %v1565, 7
        %v1567 = vsub.s32 0, %v1566
        %v1568 = vrot.slane %v1248, %v1567
        %1569 = vrot.lane.b32.xlu0 %v1316, 120
        %v1570 = vpop.permute.xlu0 %1569
        %1571 = vrot.lane.b32.xlu0 %v1320, 120
        %v1572 = vpop.permute.xlu0 %1571
        %1573 = vrot.lane.b32.xlu0 %v1324, 120
        %v1574 = vpop.permute.xlu0 %1573
        %1575 = vrot.lane.b32.xlu0 %v1328, 120
        %v1576 = vpop.permute.xlu0 %1575
        %1577 = vrot.lane.b32.xlu0 %v1332, 120
        %v1578 = vpop.permute.xlu0 %1577
        %1579 = vrot.lane.b32.xlu0 %v1336, 120
        %v1580 = vpop.permute.xlu0 %1579
        %1581 = vrot.lane.b32.xlu0 %v1340, 120
        %v1582 = vpop.permute.xlu0 %1581
        %1583 = vrot.lane.b32.xlu0 %v1344, 120
        %v1584 = vpop.permute.xlu0 %1583
        %1585 = vrot.lane.b32.xlu0 %v1348, 120
        %v1586 = vpop.permute.xlu0 %1585
        %1587 = vrot.lane.b32.xlu0 %v1352, 120
        %v1588 = vpop.permute.xlu0 %1587
        %1589 = vrot.lane.b32.xlu0 %v1356, 120
        %v1590 = vpop.permute.xlu0 %1589
        %1591 = vrot.lane.b32.xlu0 %v1360, 120
        %v1592 = vpop.permute.xlu0 %1591
        %1593 = vrot.lane.b32.xlu0 %v1364, 120
        %v1594 = vpop.permute.xlu0 %1593
        %1595 = vrot.lane.b32.xlu0 %v1368, 120
        %v1596 = vpop.permute.xlu0 %1595
        %1597 = vrot.lane.b32.xlu0 %v1372, 120
        %v1598 = vpop.permute.xlu0 %1597
        %1599 = vrot.lane.b32.xlu0 %v1376, 120
        %v1600 = vpop.permute.xlu0 %1599
        %1601 = vrot.lane.b32.xlu0 %v1380, 120
        %v1602 = vpop.permute.xlu0 %1601
        %1603 = vrot.lane.b32.xlu0 %v1384, 120
        %v1604 = vpop.permute.xlu0 %1603
        %1605 = vrot.lane.b32.xlu0 %v1388, 120
        %v1606 = vpop.permute.xlu0 %1605
        %1607 = vrot.lane.b32.xlu0 %v1392, 120
        %v1608 = vpop.permute.xlu0 %1607
        %1609 = vrot.lane.b32.xlu0 %v1396, 120
        %v1610 = vpop.permute.xlu0 %1609
        %1611 = vrot.lane.b32.xlu0 %v1400, 120
        %v1612 = vpop.permute.xlu0 %1611
        %1613 = vrot.lane.b32.xlu0 %v1404, 120
        %v1614 = vpop.permute.xlu0 %1613
        %1615 = vrot.lane.b32.xlu0 %v1408, 120
        %v1616 = vpop.permute.xlu0 %1615
        %1617 = vrot.lane.b32.xlu0 %v1412, 120
        %v1618 = vpop.permute.xlu0 %1617
        %1619 = vrot.lane.b32.xlu0 %v1416, 120
        %v1620 = vpop.permute.xlu0 %1619
        %1621 = vrot.lane.b32.xlu0 %v1420, 120
        %v1622 = vpop.permute.xlu0 %1621
        %1623 = vrot.lane.b32.xlu0 %v1424, 120
        %v1624 = vpop.permute.xlu0 %1623
        %1625 = vrot.lane.b32.xlu0 %v1428, 120
        %v1626 = vpop.permute.xlu0 %1625
        %1627 = vrot.lane.b32.xlu0 %v1432, 120
        %v1628 = vpop.permute.xlu0 %1627
        %1629 = vrot.lane.b32.xlu0 %v1436, 120
        %v1630 = vpop.permute.xlu0 %1629
        %1631 = vrot.lane.b32.xlu0 %v1440, 120
        %v1632 = vpop.permute.xlu0 %1631
        %1633 = vrot.lane.b32.xlu0 %v1444, 120
        %v1634 = vpop.permute.xlu0 %1633
        %1635 = vrot.lane.b32.xlu0 %v1448, 120
        %v1636 = vpop.permute.xlu0 %1635
        %1637 = vrot.lane.b32.xlu0 %v1452, 120
        %v1638 = vpop.permute.xlu0 %1637
        %1639 = vrot.lane.b32.xlu0 %v1456, 120
        %v1640 = vpop.permute.xlu0 %1639
        %1641 = vrot.lane.b32.xlu0 %v1460, 120
        %v1642 = vpop.permute.xlu0 %1641
        %1643 = vrot.lane.b32.xlu0 %v1464, 120
        %v1644 = vpop.permute.xlu0 %1643
        %1645 = vrot.lane.b32.xlu0 %v1468, 120
        %v1646 = vpop.permute.xlu0 %1645
        %1647 = vrot.lane.b32.xlu0 %v1472, 120
        %v1648 = vpop.permute.xlu0 %1647
        %1649 = vrot.lane.b32.xlu0 %v1476, 120
        %v1650 = vpop.permute.xlu0 %1649
        %1651 = vrot.lane.b32.xlu0 %v1480, 120
        %v1652 = vpop.permute.xlu0 %1651
        %1653 = vrot.lane.b32.xlu0 %v1484, 120
        %v1654 = vpop.permute.xlu0 %1653
        %1655 = vrot.lane.b32.xlu0 %v1488, 120
        %v1656 = vpop.permute.xlu0 %1655
        %1657 = vrot.lane.b32.xlu0 %v1492, 120
        %v1658 = vpop.permute.xlu0 %1657
        %1659 = vrot.lane.b32.xlu0 %v1496, 120
        %v1660 = vpop.permute.xlu0 %1659
        %1661 = vrot.lane.b32.xlu0 %v1500, 120
        %v1662 = vpop.permute.xlu0 %1661
        %1663 = vrot.lane.b32.xlu0 %v1504, 120
        %v1664 = vpop.permute.xlu0 %1663
        %1665 = vrot.lane.b32.xlu0 %v1508, 120
        %v1666 = vpop.permute.xlu0 %1665
        %1667 = vrot.lane.b32.xlu0 %v1512, 120
        %v1668 = vpop.permute.xlu0 %1667
        %1669 = vrot.lane.b32.xlu0 %v1516, 120
        %v1670 = vpop.permute.xlu0 %1669
        %1671 = vrot.lane.b32.xlu0 %v1520, 120
        %v1672 = vpop.permute.xlu0 %1671
        %1673 = vrot.lane.b32.xlu0 %v1524, 120
        %v1674 = vpop.permute.xlu0 %1673
        %1675 = vrot.lane.b32.xlu0 %v1528, 120
        %v1676 = vpop.permute.xlu0 %1675
        %1677 = vrot.lane.b32.xlu0 %v1532, 120
        %v1678 = vpop.permute.xlu0 %1677
        %1679 = vrot.lane.b32.xlu0 %v1536, 120
        %v1680 = vpop.permute.xlu0 %1679
        %1681 = vrot.lane.b32.xlu0 %v1540, 120
        %v1682 = vpop.permute.xlu0 %1681
        %1683 = vrot.lane.b32.xlu0 %v1544, 120
        %v1684 = vpop.permute.xlu0 %1683
        %1685 = vrot.lane.b32.xlu0 %v1548, 120
        %v1686 = vpop.permute.xlu0 %1685
        %1687 = vrot.lane.b32.xlu0 %v1552, 120
        %v1688 = vpop.permute.xlu0 %1687
        %1689 = vrot.lane.b32.xlu0 %v1556, 120
        %v1690 = vpop.permute.xlu0 %1689
        %1691 = vrot.lane.b32.xlu0 %v1560, 120
        %v1692 = vpop.permute.xlu0 %1691
        %1693 = vrot.lane.b32.xlu0 %v1564, 120
        %v1694 = vpop.permute.xlu0 %1693
        %1695 = vrot.lane.b32.xlu0 %v1568, 120
        %v1696 = vpop.permute.xlu0 %1695
        %vm1761 = vcmask 1040384
        %v1762 = vsel %vm1761, %v880, %v1570
        %v1763 = vsel %vm1761, %v894, %v1572
        %v1764 = vsel %vm1761, %v902, %v1574
        %v1765 = vsel %vm1761, %v904, %v1576
        %v1766 = vsel %vm1761, %v887, %v1578
        %v1767 = vsel %vm1761, %v901, %v1580
        %v1768 = vsel %vm1761, %v903, %v1582
        %v1769 = vsel %vm1761, %v905, %v1584
        %v1770 = vsel %vm1761, %v929, %v1586
        %v1771 = vsel %vm1761, %v943, %v1588
        %v1772 = vsel %vm1761, %v951, %v1590
        %v1773 = vsel %vm1761, %v953, %v1592
        %v1774 = vsel %vm1761, %v936, %v1594
        %v1775 = vsel %vm1761, %v950, %v1596
        %v1776 = vsel %vm1761, %v952, %v1598
        %v1777 = vsel %vm1761, %v954, %v1600
        %v1778 = vsel %vm1761, %v978, %v1602
        %v1779 = vsel %vm1761, %v992, %v1604
        %v1780 = vsel %vm1761, %v1000, %v1606
        %v1781 = vsel %vm1761, %v1002, %v1608
        %v1782 = vsel %vm1761, %v985, %v1610
        %v1783 = vsel %vm1761, %v999, %v1612
        %v1784 = vsel %vm1761, %v1001, %v1614
        %v1785 = vsel %vm1761, %v1003, %v1616
        %v1786 = vsel %vm1761, %v1027, %v1618
        %v1787 = vsel %vm1761, %v1041, %v1620
        %v1788 = vsel %vm1761, %v1049, %v1622
        %v1789 = vsel %vm1761, %v1051, %v1624
        %v1790 = vsel %vm1761, %v1034, %v1626
        %v1791 = vsel %vm1761, %v1048, %v1628
        %v1792 = vsel %vm1761, %v1050, %v1630
        %v1793 = vsel %vm1761, %v1052, %v1632
        %v1794 = vsel %vm1761, %v1076, %v1634
        %v1795 = vsel %vm1761, %v1090, %v1636
        %v1796 = vsel %vm1761, %v1098, %v1638
        %v1797 = vsel %vm1761, %v1100, %v1640
        %v1798 = vsel %vm1761, %v1083, %v1642
        %v1799 = vsel %vm1761, %v1097, %v1644
        %v1800 = vsel %vm1761, %v1099, %v1646
        %v1801 = vsel %vm1761, %v1101, %v1648
        %v1802 = vsel %vm1761, %v1125, %v1650
        %v1803 = vsel %vm1761, %v1139, %v1652
        %v1804 = vsel %vm1761, %v1147, %v1654
        %v1805 = vsel %vm1761, %v1149, %v1656
        %v1806 = vsel %vm1761, %v1132, %v1658
        %v1807 = vsel %vm1761, %v1146, %v1660
        %v1808 = vsel %vm1761, %v1148, %v1662
        %v1809 = vsel %vm1761, %v1150, %v1664
        %v1810 = vsel %vm1761, %v1174, %v1666
        %v1811 = vsel %vm1761, %v1188, %v1668
        %v1812 = vsel %vm1761, %v1196, %v1670
        %v1813 = vsel %vm1761, %v1198, %v1672
        %v1814 = vsel %vm1761, %v1181, %v1674
        %v1815 = vsel %vm1761, %v1195, %v1676
        %v1816 = vsel %vm1761, %v1197, %v1678
        %v1817 = vsel %vm1761, %v1199, %v1680
        %v1818 = vsel %vm1761, %v1223, %v1682
        %v1819 = vsel %vm1761, %v1237, %v1684
        %v1820 = vsel %vm1761, %v1245, %v1686
        %v1821 = vsel %vm1761, %v1247, %v1688
        %v1822 = vsel %vm1761, %v1230, %v1690
        %v1823 = vsel %vm1761, %v1244, %v1692
        %v1824 = vsel %vm1761, %v1246, %v1694
        %v1825 = vsel %vm1761, %v1248, %v1696
        %1890 = vrot.lane.b32.xlu0 %v1762, 112
        %v1891 = vpop.permute.xlu0 %1890
        %1892 = vrot.lane.b32.xlu0 %v1763, 112
        %v1893 = vpop.permute.xlu0 %1892
        %1894 = vrot.lane.b32.xlu0 %v1764, 112
        %v1895 = vpop.permute.xlu0 %1894
        %1896 = vrot.lane.b32.xlu0 %v1765, 112
        %v1897 = vpop.permute.xlu0 %1896
        %1898 = vrot.lane.b32.xlu0 %v1766, 112
        %v1899 = vpop.permute.xlu0 %1898
        %1900 = vrot.lane.b32.xlu0 %v1767, 112
        %v1901 = vpop.permute.xlu0 %1900
        %1902 = vrot.lane.b32.xlu0 %v1768, 112
        %v1903 = vpop.permute.xlu0 %1902
        %1904 = vrot.lane.b32.xlu0 %v1769, 112
        %v1905 = vpop.permute.xlu0 %1904
        %1906 = vrot.lane.b32.xlu0 %v1770, 112
        %v1907 = vpop.permute.xlu0 %1906
        %1908 = vrot.lane.b32.xlu0 %v1771, 112
        %v1909 = vpop.permute.xlu0 %1908
        %1910 = vrot.lane.b32.xlu0 %v1772, 112
        %v1911 = vpop.permute.xlu0 %1910
        %1912 = vrot.lane.b32.xlu0 %v1773, 112
        %v1913 = vpop.permute.xlu0 %1912
        %1914 = vrot.lane.b32.xlu0 %v1774, 112
        %v1915 = vpop.permute.xlu0 %1914
        %1916 = vrot.lane.b32.xlu0 %v1775, 112
        %v1917 = vpop.permute.xlu0 %1916
        %1918 = vrot.lane.b32.xlu0 %v1776, 112
        %v1919 = vpop.permute.xlu0 %1918
        %1920 = vrot.lane.b32.xlu0 %v1777, 112
        %v1921 = vpop.permute.xlu0 %1920
        %1922 = vrot.lane.b32.xlu0 %v1778, 112
        %v1923 = vpop.permute.xlu0 %1922
        %1924 = vrot.lane.b32.xlu0 %v1779, 112
        %v1925 = vpop.permute.xlu0 %1924
        %1926 = vrot.lane.b32.xlu0 %v1780, 112
        %v1927 = vpop.permute.xlu0 %1926
        %1928 = vrot.lane.b32.xlu0 %v1781, 112
        %v1929 = vpop.permute.xlu0 %1928
        %1930 = vrot.lane.b32.xlu0 %v1782, 112
        %v1931 = vpop.permute.xlu0 %1930
        %1932 = vrot.lane.b32.xlu0 %v1783, 112
        %v1933 = vpop.permute.xlu0 %1932
        %1934 = vrot.lane.b32.xlu0 %v1784, 112
        %v1935 = vpop.permute.xlu0 %1934
        %1936 = vrot.lane.b32.xlu0 %v1785, 112
        %v1937 = vpop.permute.xlu0 %1936
        %1938 = vrot.lane.b32.xlu0 %v1786, 112
        %v1939 = vpop.permute.xlu0 %1938
        %1940 = vrot.lane.b32.xlu0 %v1787, 112
        %v1941 = vpop.permute.xlu0 %1940
        %1942 = vrot.lane.b32.xlu0 %v1788, 112
        %v1943 = vpop.permute.xlu0 %1942
        %1944 = vrot.lane.b32.xlu0 %v1789, 112
        %v1945 = vpop.permute.xlu0 %1944
        %1946 = vrot.lane.b32.xlu0 %v1790, 112
        %v1947 = vpop.permute.xlu0 %1946
        %1948 = vrot.lane.b32.xlu0 %v1791, 112
        %v1949 = vpop.permute.xlu0 %1948
        %1950 = vrot.lane.b32.xlu0 %v1792, 112
        %v1951 = vpop.permute.xlu0 %1950
        %1952 = vrot.lane.b32.xlu0 %v1793, 112
        %v1953 = vpop.permute.xlu0 %1952
        %1954 = vrot.lane.b32.xlu0 %v1794, 112
        %v1955 = vpop.permute.xlu0 %1954
        %1956 = vrot.lane.b32.xlu0 %v1795, 112
        %v1957 = vpop.permute.xlu0 %1956
        %1958 = vrot.lane.b32.xlu0 %v1796, 112
        %v1959 = vpop.permute.xlu0 %1958
        %1960 = vrot.lane.b32.xlu0 %v1797, 112
        %v1961 = vpop.permute.xlu0 %1960
        %1962 = vrot.lane.b32.xlu0 %v1798, 112
        %v1963 = vpop.permute.xlu0 %1962
        %1964 = vrot.lane.b32.xlu0 %v1799, 112
        %v1965 = vpop.permute.xlu0 %1964
        %1966 = vrot.lane.b32.xlu0 %v1800, 112
        %v1967 = vpop.permute.xlu0 %1966
        %1968 = vrot.lane.b32.xlu0 %v1801, 112
        %v1969 = vpop.permute.xlu0 %1968
        %1970 = vrot.lane.b32.xlu0 %v1802, 112
        %v1971 = vpop.permute.xlu0 %1970
        %1972 = vrot.lane.b32.xlu0 %v1803, 112
        %v1973 = vpop.permute.xlu0 %1972
        %1974 = vrot.lane.b32.xlu0 %v1804, 112
        %v1975 = vpop.permute.xlu0 %1974
        %1976 = vrot.lane.b32.xlu0 %v1805, 112
        %v1977 = vpop.permute.xlu0 %1976
        %1978 = vrot.lane.b32.xlu0 %v1806, 112
        %v1979 = vpop.permute.xlu0 %1978
        %1980 = vrot.lane.b32.xlu0 %v1807, 112
        %v1981 = vpop.permute.xlu0 %1980
        %1982 = vrot.lane.b32.xlu0 %v1808, 112
        %v1983 = vpop.permute.xlu0 %1982
        %1984 = vrot.lane.b32.xlu0 %v1809, 112
        %v1985 = vpop.permute.xlu0 %1984
        %1986 = vrot.lane.b32.xlu0 %v1810, 112
        %v1987 = vpop.permute.xlu0 %1986
        %1988 = vrot.lane.b32.xlu0 %v1811, 112
        %v1989 = vpop.permute.xlu0 %1988
        %1990 = vrot.lane.b32.xlu0 %v1812, 112
        %v1991 = vpop.permute.xlu0 %1990
        %1992 = vrot.lane.b32.xlu0 %v1813, 112
        %v1993 = vpop.permute.xlu0 %1992
        %1994 = vrot.lane.b32.xlu0 %v1814, 112
        %v1995 = vpop.permute.xlu0 %1994
        %1996 = vrot.lane.b32.xlu0 %v1815, 112
        %v1997 = vpop.permute.xlu0 %1996
        %1998 = vrot.lane.b32.xlu0 %v1816, 112
        %v1999 = vpop.permute.xlu0 %1998
        %2000 = vrot.lane.b32.xlu0 %v1817, 112
        %v2001 = vpop.permute.xlu0 %2000
        %2002 = vrot.lane.b32.xlu0 %v1818, 112
        %v2003 = vpop.permute.xlu0 %2002
        %2004 = vrot.lane.b32.xlu0 %v1819, 112
        %v2005 = vpop.permute.xlu0 %2004
        %2006 = vrot.lane.b32.xlu0 %v1820, 112
        %v2007 = vpop.permute.xlu0 %2006
        %2008 = vrot.lane.b32.xlu0 %v1821, 112
        %v2009 = vpop.permute.xlu0 %2008
        %2010 = vrot.lane.b32.xlu0 %v1822, 112
        %v2011 = vpop.permute.xlu0 %2010
        %2012 = vrot.lane.b32.xlu0 %v1823, 112
        %v2013 = vpop.permute.xlu0 %2012
        %2014 = vrot.lane.b32.xlu0 %v1824, 112
        %v2015 = vpop.permute.xlu0 %2014
        %2016 = vrot.lane.b32.xlu0 %v1825, 112
        %v2017 = vpop.permute.xlu0 %2016
        %v2018 = vcombine.low %v1762, %v1763
        %v2019 = vcombine.low %v1764, %v1765
        %v2021 = vunpack.c.l.s4 1983009808
        %v2022 = vunpack.c.0.s8 %v2021
        %v2023 = vlaneseq
        %v2024 = vshrl.u32 %v2023, 7
        %v2025 = vsub.s32 %v2022, %v2024
        %v2026 = vrot.slane %v2018, %v2025
        %v2028 = vunpack.c.l.s4 1983009808
        %v2029 = vunpack.c.0.s8 %v2028
        %v2030 = vlaneseq
        %v2031 = vshrl.u32 %v2030, 7
        %v2032 = vsub.s32 %v2029, %v2031
        %v2033 = vrot.slane %v2019, %v2032
        %v2034 = vcombine.low %v2026, %v2033
        %v2035 = vcombine.low %v1766, %v1767
        %v2036 = vcombine.low %v1768, %v1769
        %v2038 = vunpack.c.l.s4 1983009808
        %v2039 = vunpack.c.0.s8 %v2038
        %v2040 = vlaneseq
        %v2041 = vshrl.u32 %v2040, 7
        %v2042 = vsub.s32 %v2039, %v2041
        %v2043 = vrot.slane %v2035, %v2042
        %v2045 = vunpack.c.l.s4 1983009808
        %v2046 = vunpack.c.0.s8 %v2045
        %v2047 = vlaneseq
        %v2048 = vshrl.u32 %v2047, 7
        %v2049 = vsub.s32 %v2046, %v2048
        %v2050 = vrot.slane %v2036, %v2049
        %v2051 = vcombine.low %v2043, %v2050
        %v2052 = vcombine.low %v1891, %v1893
        %v2053 = vcombine.low %v1895, %v1897
        %v2055 = vunpack.c.l.s4 1983009808
        %v2056 = vunpack.c.0.s8 %v2055
        %v2057 = vlaneseq
        %v2058 = vshrl.u32 %v2057, 7
        %v2059 = vsub.s32 %v2056, %v2058
        %v2060 = vrot.slane %v2052, %v2059
        %v2062 = vunpack.c.l.s4 1983009808
        %v2063 = vunpack.c.0.s8 %v2062
        %v2064 = vlaneseq
        %v2065 = vshrl.u32 %v2064, 7
        %v2066 = vsub.s32 %v2063, %v2065
        %v2067 = vrot.slane %v2053, %v2066
        %v2068 = vcombine.low %v2060, %v2067
        %v2069 = vcombine.low %v1899, %v1901
        %v2070 = vcombine.low %v1903, %v1905
        %v2072 = vunpack.c.l.s4 1983009808
        %v2073 = vunpack.c.0.s8 %v2072
        %v2074 = vlaneseq
        %v2075 = vshrl.u32 %v2074, 7
        %v2076 = vsub.s32 %v2073, %v2075
        %v2077 = vrot.slane %v2069, %v2076
        %v2079 = vunpack.c.l.s4 1983009808
        %v2080 = vunpack.c.0.s8 %v2079
        %v2081 = vlaneseq
        %v2082 = vshrl.u32 %v2081, 7
        %v2083 = vsub.s32 %v2080, %v2082
        %v2084 = vrot.slane %v2070, %v2083
        %v2085 = vcombine.low %v2077, %v2084
        %v2086 = vcombine.low %v1770, %v1771
        %v2087 = vcombine.low %v1772, %v1773
        %v2089 = vunpack.c.l.s4 1983009808
        %v2090 = vunpack.c.0.s8 %v2089
        %v2091 = vlaneseq
        %v2092 = vshrl.u32 %v2091, 7
        %v2093 = vsub.s32 %v2090, %v2092
        %v2094 = vrot.slane %v2086, %v2093
        %v2096 = vunpack.c.l.s4 1983009808
        %v2097 = vunpack.c.0.s8 %v2096
        %v2098 = vlaneseq
        %v2099 = vshrl.u32 %v2098, 7
        %v2100 = vsub.s32 %v2097, %v2099
        %v2101 = vrot.slane %v2087, %v2100
        %v2102 = vcombine.low %v2094, %v2101
        %v2103 = vcombine.low %v1774, %v1775
        %v2104 = vcombine.low %v1776, %v1777
        %v2106 = vunpack.c.l.s4 1983009808
        %v2107 = vunpack.c.0.s8 %v2106
        %v2108 = vlaneseq
        %v2109 = vshrl.u32 %v2108, 7
        %v2110 = vsub.s32 %v2107, %v2109
        %v2111 = vrot.slane %v2103, %v2110
        %v2113 = vunpack.c.l.s4 1983009808
        %v2114 = vunpack.c.0.s8 %v2113
        %v2115 = vlaneseq
        %v2116 = vshrl.u32 %v2115, 7
        %v2117 = vsub.s32 %v2114, %v2116
        %v2118 = vrot.slane %v2104, %v2117
        %v2119 = vcombine.low %v2111, %v2118
        %v2120 = vcombine.low %v1907, %v1909
        %v2121 = vcombine.low %v1911, %v1913
        %v2123 = vunpack.c.l.s4 1983009808
        %v2124 = vunpack.c.0.s8 %v2123
        %v2125 = vlaneseq
        %v2126 = vshrl.u32 %v2125, 7
        %v2127 = vsub.s32 %v2124, %v2126
        %v2128 = vrot.slane %v2120, %v2127
        %v2130 = vunpack.c.l.s4 1983009808
        %v2131 = vunpack.c.0.s8 %v2130
        %v2132 = vlaneseq
        %v2133 = vshrl.u32 %v2132, 7
        %v2134 = vsub.s32 %v2131, %v2133
        %v2135 = vrot.slane %v2121, %v2134
        %v2136 = vcombine.low %v2128, %v2135
        %v2137 = vcombine.low %v1915, %v1917
        %v2138 = vcombine.low %v1919, %v1921
        %v2140 = vunpack.c.l.s4 1983009808
        %v2141 = vunpack.c.0.s8 %v2140
        %v2142 = vlaneseq
        %v2143 = vshrl.u32 %v2142, 7
        %v2144 = vsub.s32 %v2141, %v2143
        %v2145 = vrot.slane %v2137, %v2144
        %v2147 = vunpack.c.l.s4 1983009808
        %v2148 = vunpack.c.0.s8 %v2147
        %v2149 = vlaneseq
        %v2150 = vshrl.u32 %v2149, 7
        %v2151 = vsub.s32 %v2148, %v2150
        %v2152 = vrot.slane %v2138, %v2151
        %v2153 = vcombine.low %v2145, %v2152
        %v2154 = vcombine.low %v1778, %v1779
        %v2155 = vcombine.low %v1780, %v1781
        %v2157 = vunpack.c.l.s4 1983009808
        %v2158 = vunpack.c.0.s8 %v2157
        %v2159 = vlaneseq
        %v2160 = vshrl.u32 %v2159, 7
        %v2161 = vsub.s32 %v2158, %v2160
        %v2162 = vrot.slane %v2154, %v2161
        %v2164 = vunpack.c.l.s4 1983009808
        %v2165 = vunpack.c.0.s8 %v2164
        %v2166 = vlaneseq
        %v2167 = vshrl.u32 %v2166, 7
        %v2168 = vsub.s32 %v2165, %v2167
        %v2169 = vrot.slane %v2155, %v2168
        %v2170 = vcombine.low %v2162, %v2169
        %v2171 = vcombine.low %v1782, %v1783
        %v2172 = vcombine.low %v1784, %v1785
        %v2174 = vunpack.c.l.s4 1983009808
        %v2175 = vunpack.c.0.s8 %v2174
        %v2176 = vlaneseq
        %v2177 = vshrl.u32 %v2176, 7
        %v2178 = vsub.s32 %v2175, %v2177
        %v2179 = vrot.slane %v2171, %v2178
        %v2181 = vunpack.c.l.s4 1983009808
        %v2182 = vunpack.c.0.s8 %v2181
        %v2183 = vlaneseq
        %v2184 = vshrl.u32 %v2183, 7
        %v2185 = vsub.s32 %v2182, %v2184
        %v2186 = vrot.slane %v2172, %v2185
        %v2187 = vcombine.low %v2179, %v2186
        %v2188 = vcombine.low %v1923, %v1925
        %v2189 = vcombine.low %v1927, %v1929
        %v2191 = vunpack.c.l.s4 1983009808
        %v2192 = vunpack.c.0.s8 %v2191
        %v2193 = vlaneseq
        %v2194 = vshrl.u32 %v2193, 7
        %v2195 = vsub.s32 %v2192, %v2194
        %v2196 = vrot.slane %v2188, %v2195
        %v2198 = vunpack.c.l.s4 1983009808
        %v2199 = vunpack.c.0.s8 %v2198
        %v2200 = vlaneseq
        %v2201 = vshrl.u32 %v2200, 7
        %v2202 = vsub.s32 %v2199, %v2201
        %v2203 = vrot.slane %v2189, %v2202
        %v2204 = vcombine.low %v2196, %v2203
        %v2205 = vcombine.low %v1931, %v1933
        %v2206 = vcombine.low %v1935, %v1937
        %v2208 = vunpack.c.l.s4 1983009808
        %v2209 = vunpack.c.0.s8 %v2208
        %v2210 = vlaneseq
        %v2211 = vshrl.u32 %v2210, 7
        %v2212 = vsub.s32 %v2209, %v2211
        %v2213 = vrot.slane %v2205, %v2212
        %v2215 = vunpack.c.l.s4 1983009808
        %v2216 = vunpack.c.0.s8 %v2215
        %v2217 = vlaneseq
        %v2218 = vshrl.u32 %v2217, 7
        %v2219 = vsub.s32 %v2216, %v2218
        %v2220 = vrot.slane %v2206, %v2219
        %v2221 = vcombine.low %v2213, %v2220
        %v2222 = vcombine.low %v1786, %v1787
        %v2223 = vcombine.low %v1788, %v1789
        %v2225 = vunpack.c.l.s4 1983009808
        %v2226 = vunpack.c.0.s8 %v2225
        %v2227 = vlaneseq
        %v2228 = vshrl.u32 %v2227, 7
        %v2229 = vsub.s32 %v2226, %v2228
        %v2230 = vrot.slane %v2222, %v2229
        %v2232 = vunpack.c.l.s4 1983009808
        %v2233 = vunpack.c.0.s8 %v2232
        %v2234 = vlaneseq
        %v2235 = vshrl.u32 %v2234, 7
        %v2236 = vsub.s32 %v2233, %v2235
        %v2237 = vrot.slane %v2223, %v2236
        %v2238 = vcombine.low %v2230, %v2237
        %v2239 = vcombine.low %v1790, %v1791
        %v2240 = vcombine.low %v1792, %v1793
        %v2242 = vunpack.c.l.s4 1983009808
        %v2243 = vunpack.c.0.s8 %v2242
        %v2244 = vlaneseq
        %v2245 = vshrl.u32 %v2244, 7
        %v2246 = vsub.s32 %v2243, %v2245
        %v2247 = vrot.slane %v2239, %v2246
        %v2249 = vunpack.c.l.s4 1983009808
        %v2250 = vunpack.c.0.s8 %v2249
        %v2251 = vlaneseq
        %v2252 = vshrl.u32 %v2251, 7
        %v2253 = vsub.s32 %v2250, %v2252
        %v2254 = vrot.slane %v2240, %v2253
        %v2255 = vcombine.low %v2247, %v2254
        %v2256 = vcombine.low %v1939, %v1941
        %v2257 = vcombine.low %v1943, %v1945
        %v2259 = vunpack.c.l.s4 1983009808
        %v2260 = vunpack.c.0.s8 %v2259
        %v2261 = vlaneseq
        %v2262 = vshrl.u32 %v2261, 7
        %v2263 = vsub.s32 %v2260, %v2262
        %v2264 = vrot.slane %v2256, %v2263
        %v2266 = vunpack.c.l.s4 1983009808
        %v2267 = vunpack.c.0.s8 %v2266
        %v2268 = vlaneseq
        %v2269 = vshrl.u32 %v2268, 7
        %v2270 = vsub.s32 %v2267, %v2269
        %v2271 = vrot.slane %v2257, %v2270
        %v2272 = vcombine.low %v2264, %v2271
        %v2273 = vcombine.low %v1947, %v1949
        %v2274 = vcombine.low %v1951, %v1953
        %v2276 = vunpack.c.l.s4 1983009808
        %v2277 = vunpack.c.0.s8 %v2276
        %v2278 = vlaneseq
        %v2279 = vshrl.u32 %v2278, 7
        %v2280 = vsub.s32 %v2277, %v2279
        %v2281 = vrot.slane %v2273, %v2280
        %v2283 = vunpack.c.l.s4 1983009808
        %v2284 = vunpack.c.0.s8 %v2283
        %v2285 = vlaneseq
        %v2286 = vshrl.u32 %v2285, 7
        %v2287 = vsub.s32 %v2284, %v2286
        %v2288 = vrot.slane %v2274, %v2287
        %v2289 = vcombine.low %v2281, %v2288
        %v2290 = vcombine.low %v1794, %v1795
        %v2291 = vcombine.low %v1796, %v1797
        %v2293 = vunpack.c.l.s4 1983009808
        %v2294 = vunpack.c.0.s8 %v2293
        %v2295 = vlaneseq
        %v2296 = vshrl.u32 %v2295, 7
        %v2297 = vsub.s32 %v2294, %v2296
        %v2298 = vrot.slane %v2290, %v2297
        %v2300 = vunpack.c.l.s4 1983009808
        %v2301 = vunpack.c.0.s8 %v2300
        %v2302 = vlaneseq
        %v2303 = vshrl.u32 %v2302, 7
        %v2304 = vsub.s32 %v2301, %v2303
        %v2305 = vrot.slane %v2291, %v2304
        %v2306 = vcombine.low %v2298, %v2305
        %v2307 = vcombine.low %v1798, %v1799
        %v2308 = vcombine.low %v1800, %v1801
        %v2310 = vunpack.c.l.s4 1983009808
        %v2311 = vunpack.c.0.s8 %v2310
        %v2312 = vlaneseq
        %v2313 = vshrl.u32 %v2312, 7
        %v2314 = vsub.s32 %v2311, %v2313
        %v2315 = vrot.slane %v2307, %v2314
        %v2317 = vunpack.c.l.s4 1983009808
        %v2318 = vunpack.c.0.s8 %v2317
        %v2319 = vlaneseq
        %v2320 = vshrl.u32 %v2319, 7
        %v2321 = vsub.s32 %v2318, %v2320
        %v2322 = vrot.slane %v2308, %v2321
        %v2323 = vcombine.low %v2315, %v2322
        %v2324 = vcombine.low %v1955, %v1957
        %v2325 = vcombine.low %v1959, %v1961
        %v2327 = vunpack.c.l.s4 1983009808
        %v2328 = vunpack.c.0.s8 %v2327
        %v2329 = vlaneseq
        %v2330 = vshrl.u32 %v2329, 7
        %v2331 = vsub.s32 %v2328, %v2330
        %v2332 = vrot.slane %v2324, %v2331
        %v2334 = vunpack.c.l.s4 1983009808
        %v2335 = vunpack.c.0.s8 %v2334
        %v2336 = vlaneseq
        %v2337 = vshrl.u32 %v2336, 7
        %v2338 = vsub.s32 %v2335, %v2337
        %v2339 = vrot.slane %v2325, %v2338
        %v2340 = vcombine.low %v2332, %v2339
        %v2341 = vcombine.low %v1963, %v1965
        %v2342 = vcombine.low %v1967, %v1969
        %v2344 = vunpack.c.l.s4 1983009808
        %v2345 = vunpack.c.0.s8 %v2344
        %v2346 = vlaneseq
        %v2347 = vshrl.u32 %v2346, 7
        %v2348 = vsub.s32 %v2345, %v2347
        %v2349 = vrot.slane %v2341, %v2348
        %v2351 = vunpack.c.l.s4 1983009808
        %v2352 = vunpack.c.0.s8 %v2351
        %v2353 = vlaneseq
        %v2354 = vshrl.u32 %v2353, 7
        %v2355 = vsub.s32 %v2352, %v2354
        %v2356 = vrot.slane %v2342, %v2355
        %v2357 = vcombine.low %v2349, %v2356
        %v2358 = vcombine.low %v1802, %v1803
        %v2359 = vcombine.low %v1804, %v1805
        %v2361 = vunpack.c.l.s4 1983009808
        %v2362 = vunpack.c.0.s8 %v2361
        %v2363 = vlaneseq
        %v2364 = vshrl.u32 %v2363, 7
        %v2365 = vsub.s32 %v2362, %v2364
        %v2366 = vrot.slane %v2358, %v2365
        %v2368 = vunpack.c.l.s4 1983009808
        %v2369 = vunpack.c.0.s8 %v2368
        %v2370 = vlaneseq
        %v2371 = vshrl.u32 %v2370, 7
        %v2372 = vsub.s32 %v2369, %v2371
        %v2373 = vrot.slane %v2359, %v2372
        %v2374 = vcombine.low %v2366, %v2373
        %v2375 = vcombine.low %v1806, %v1807
        %v2376 = vcombine.low %v1808, %v1809
        %v2378 = vunpack.c.l.s4 1983009808
        %v2379 = vunpack.c.0.s8 %v2378
        %v2380 = vlaneseq
        %v2381 = vshrl.u32 %v2380, 7
        %v2382 = vsub.s32 %v2379, %v2381
        %v2383 = vrot.slane %v2375, %v2382
        %v2385 = vunpack.c.l.s4 1983009808
        %v2386 = vunpack.c.0.s8 %v2385
        %v2387 = vlaneseq
        %v2388 = vshrl.u32 %v2387, 7
        %v2389 = vsub.s32 %v2386, %v2388
        %v2390 = vrot.slane %v2376, %v2389
        %v2391 = vcombine.low %v2383, %v2390
        %v2392 = vcombine.low %v1971, %v1973
        %v2393 = vcombine.low %v1975, %v1977
        %v2395 = vunpack.c.l.s4 1983009808
        %v2396 = vunpack.c.0.s8 %v2395
        %v2397 = vlaneseq
        %v2398 = vshrl.u32 %v2397, 7
        %v2399 = vsub.s32 %v2396, %v2398
        %v2400 = vrot.slane %v2392, %v2399
        %v2402 = vunpack.c.l.s4 1983009808
        %v2403 = vunpack.c.0.s8 %v2402
        %v2404 = vlaneseq
        %v2405 = vshrl.u32 %v2404, 7
        %v2406 = vsub.s32 %v2403, %v2405
        %v2407 = vrot.slane %v2393, %v2406
        %v2408 = vcombine.low %v2400, %v2407
        %v2409 = vcombine.low %v1979, %v1981
        %v2410 = vcombine.low %v1983, %v1985
        %v2412 = vunpack.c.l.s4 1983009808
        %v2413 = vunpack.c.0.s8 %v2412
        %v2414 = vlaneseq
        %v2415 = vshrl.u32 %v2414, 7
        %v2416 = vsub.s32 %v2413, %v2415
        %v2417 = vrot.slane %v2409, %v2416
        %v2419 = vunpack.c.l.s4 1983009808
        %v2420 = vunpack.c.0.s8 %v2419
        %v2421 = vlaneseq
        %v2422 = vshrl.u32 %v2421, 7
        %v2423 = vsub.s32 %v2420, %v2422
        %v2424 = vrot.slane %v2410, %v2423
        %v2425 = vcombine.low %v2417, %v2424
        %v2426 = vcombine.low %v1810, %v1811
        %v2427 = vcombine.low %v1812, %v1813
        %v2429 = vunpack.c.l.s4 1983009808
        %v2430 = vunpack.c.0.s8 %v2429
        %v2431 = vlaneseq
        %v2432 = vshrl.u32 %v2431, 7
        %v2433 = vsub.s32 %v2430, %v2432
        %v2434 = vrot.slane %v2426, %v2433
        %v2436 = vunpack.c.l.s4 1983009808
        %v2437 = vunpack.c.0.s8 %v2436
        %v2438 = vlaneseq
        %v2439 = vshrl.u32 %v2438, 7
        %v2440 = vsub.s32 %v2437, %v2439
        %v2441 = vrot.slane %v2427, %v2440
        %v2442 = vcombine.low %v2434, %v2441
        %v2443 = vcombine.low %v1814, %v1815
        %v2444 = vcombine.low %v1816, %v1817
        %v2446 = vunpack.c.l.s4 1983009808
        %v2447 = vunpack.c.0.s8 %v2446
        %v2448 = vlaneseq
        %v2449 = vshrl.u32 %v2448, 7
        %v2450 = vsub.s32 %v2447, %v2449
        %v2451 = vrot.slane %v2443, %v2450
        %v2453 = vunpack.c.l.s4 1983009808
        %v2454 = vunpack.c.0.s8 %v2453
        %v2455 = vlaneseq
        %v2456 = vshrl.u32 %v2455, 7
        %v2457 = vsub.s32 %v2454, %v2456
        %v2458 = vrot.slane %v2444, %v2457
        %v2459 = vcombine.low %v2451, %v2458
        %v2460 = vcombine.low %v1987, %v1989
        %v2461 = vcombine.low %v1991, %v1993
        %v2463 = vunpack.c.l.s4 1983009808
        %v2464 = vunpack.c.0.s8 %v2463
        %v2465 = vlaneseq
        %v2466 = vshrl.u32 %v2465, 7
        %v2467 = vsub.s32 %v2464, %v2466
        %v2468 = vrot.slane %v2460, %v2467
        %v2470 = vunpack.c.l.s4 1983009808
        %v2471 = vunpack.c.0.s8 %v2470
        %v2472 = vlaneseq
        %v2473 = vshrl.u32 %v2472, 7
        %v2474 = vsub.s32 %v2471, %v2473
        %v2475 = vrot.slane %v2461, %v2474
        %v2476 = vcombine.low %v2468, %v2475
        %v2477 = vcombine.low %v1995, %v1997
        %v2478 = vcombine.low %v1999, %v2001
        %v2480 = vunpack.c.l.s4 1983009808
        %v2481 = vunpack.c.0.s8 %v2480
        %v2482 = vlaneseq
        %v2483 = vshrl.u32 %v2482, 7
        %v2484 = vsub.s32 %v2481, %v2483
        %v2485 = vrot.slane %v2477, %v2484
        %v2487 = vunpack.c.l.s4 1983009808
        %v2488 = vunpack.c.0.s8 %v2487
        %v2489 = vlaneseq
        %v2490 = vshrl.u32 %v2489, 7
        %v2491 = vsub.s32 %v2488, %v2490
        %v2492 = vrot.slane %v2478, %v2491
        %v2493 = vcombine.low %v2485, %v2492
        %v2494 = vcombine.low %v1818, %v1819
        %v2495 = vcombine.low %v1820, %v1821
        %v2497 = vunpack.c.l.s4 1983009808
        %v2498 = vunpack.c.0.s8 %v2497
        %v2499 = vlaneseq
        %v2500 = vshrl.u32 %v2499, 7
        %v2501 = vsub.s32 %v2498, %v2500
        %v2502 = vrot.slane %v2494, %v2501
        %v2504 = vunpack.c.l.s4 1983009808
        %v2505 = vunpack.c.0.s8 %v2504
        %v2506 = vlaneseq
        %v2507 = vshrl.u32 %v2506, 7
        %v2508 = vsub.s32 %v2505, %v2507
        %v2509 = vrot.slane %v2495, %v2508
        %v2510 = vcombine.low %v2502, %v2509
        %v2511 = vcombine.low %v1822, %v1823
        %v2512 = vcombine.low %v1824, %v1825
        %v2514 = vunpack.c.l.s4 1983009808
        %v2515 = vunpack.c.0.s8 %v2514
        %v2516 = vlaneseq
        %v2517 = vshrl.u32 %v2516, 7
        %v2518 = vsub.s32 %v2515, %v2517
        %v2519 = vrot.slane %v2511, %v2518
        %v2521 = vunpack.c.l.s4 1983009808
        %v2522 = vunpack.c.0.s8 %v2521
        %v2523 = vlaneseq
        %v2524 = vshrl.u32 %v2523, 7
        %v2525 = vsub.s32 %v2522, %v2524
        %v2526 = vrot.slane %v2512, %v2525
        %v2527 = vcombine.low %v2519, %v2526
        %v2528 = vcombine.low %v2003, %v2005
        %v2529 = vcombine.low %v2007, %v2009
        %v2531 = vunpack.c.l.s4 1983009808
        %v2532 = vunpack.c.0.s8 %v2531
        %v2533 = vlaneseq
        %v2534 = vshrl.u32 %v2533, 7
        %v2535 = vsub.s32 %v2532, %v2534
        %v2536 = vrot.slane %v2528, %v2535
        %v2538 = vunpack.c.l.s4 1983009808
        %v2539 = vunpack.c.0.s8 %v2538
        %v2540 = vlaneseq
        %v2541 = vshrl.u32 %v2540, 7
        %v2542 = vsub.s32 %v2539, %v2541
        %v2543 = vrot.slane %v2529, %v2542
        %v2544 = vcombine.low %v2536, %v2543
        %v2545 = vcombine.low %v2011, %v2013
        %v2546 = vcombine.low %v2015, %v2017
        %v2548 = vunpack.c.l.s4 1983009808
        %v2549 = vunpack.c.0.s8 %v2548
        %v2550 = vlaneseq
        %v2551 = vshrl.u32 %v2550, 7
        %v2552 = vsub.s32 %v2549, %v2551
        %v2553 = vrot.slane %v2545, %v2552
        %v2555 = vunpack.c.l.s4 1983009808
        %v2556 = vunpack.c.0.s8 %v2555
        %v2557 = vlaneseq
        %v2558 = vshrl.u32 %v2557, 7
        %v2559 = vsub.s32 %v2556, %v2558
        %v2560 = vrot.slane %v2546, %v2559
        %v2561 = vcombine.low %v2553, %v2560
        %vm2594 = vcmask 64512
        %2595 = vst.msk [vmem:[%s255] sm:$0xff] %vm2594, %v2034
        %2596 = vst.msk [vmem:[%s255 + $0x8] sm:$0xff] %vm2594, %v2051
        %2597 = vst.msk [vmem:[%s255 + $0x10] sm:$0xff] %vm2594, %v2068
        %2598 = vst.msk [vmem:[%s255 + $0x18] sm:$0xff] %vm2594, %v2085
        %2599 = vst.msk [vmem:[%s255 + $0x20] sm:$0xff] %vm2594, %v2102
        %2600 = vst.msk [vmem:[%s255 + $0x28] sm:$0xff] %vm2594, %v2119
        %2601 = vst.msk [vmem:[%s255 + $0x30] sm:$0xff] %vm2594, %v2136
        %2602 = vst.msk [vmem:[%s255 + $0x38] sm:$0xff] %vm2594, %v2153
        %2603 = vst.msk [vmem:[%s255 + $0x40] sm:$0xff] %vm2594, %v2170
        %2604 = vst.msk [vmem:[%s255 + $0x48] sm:$0xff] %vm2594, %v2187
        %2605 = vst.msk [vmem:[%s255 + $0x50] sm:$0xff] %vm2594, %v2204
        %2606 = vst.msk [vmem:[%s255 + $0x58] sm:$0xff] %vm2594, %v2221
        %2607 = vst.msk [vmem:[%s255 + $0x60] sm:$0xff] %vm2594, %v2238
        %2608 = vst.msk [vmem:[%s255 + $0x68] sm:$0xff] %vm2594, %v2255
        %2609 = vst.msk [vmem:[%s255 + $0x70] sm:$0xff] %vm2594, %v2272
        %2610 = vst.msk [vmem:[%s255 + $0x78] sm:$0xff] %vm2594, %v2289
        %2611 = vst.msk [vmem:[%s255 + $0x80] sm:$0xff] %vm2594, %v2306
        %2612 = vst.msk [vmem:[%s255 + $0x88] sm:$0xff] %vm2594, %v2323
        %2613 = vst.msk [vmem:[%s255 + $0x90] sm:$0xff] %vm2594, %v2340
        %2614 = vst.msk [vmem:[%s255 + $0x98] sm:$0xff] %vm2594, %v2357
        %2615 = vst.msk [vmem:[%s255 + $0xa0] sm:$0xff] %vm2594, %v2374
        %2616 = vst.msk [vmem:[%s255 + $0xa8] sm:$0xff] %vm2594, %v2391
        %2617 = vst.msk [vmem:[%s255 + $0xb0] sm:$0xff] %vm2594, %v2408
        %2618 = vst.msk [vmem:[%s255 + $0xb8] sm:$0xff] %vm2594, %v2425
        %2619 = vst.msk [vmem:[%s255 + $0xc0] sm:$0xff] %vm2594, %v2442
        %2620 = vst.msk [vmem:[%s255 + $0xc8] sm:$0xff] %vm2594, %v2459
        %2621 = vst.msk [vmem:[%s255 + $0xd0] sm:$0xff] %vm2594, %v2476
        %2622 = vst.msk [vmem:[%s255 + $0xd8] sm:$0xff] %vm2594, %v2493
        %2623 = vst.msk [vmem:[%s255 + $0xe0] sm:$0xff] %vm2594, %v2510
        %2624 = vst.msk [vmem:[%s255 + $0xe8] sm:$0xff] %vm2594, %v2527
        %2625 = vst.msk [vmem:[%s255 + $0xf0] sm:$0xff] %vm2594, %v2544
        %2626 = vst.msk [vmem:[%s255 + $0xf8] sm:$0xff] %vm2594, %v2561
        %s2627 = sand.u32 %s120, 1
        %s2628 = scalar_lea.sflag [#allocation4], %s2627
        %s2629 = sand.u32 %s120, 1
        %s2630 = smul.addr %s2629, 256
        %s2631 = scalar_lea.vmem [#allocation10], %s2630
        // Predicated region
        $region53: #{next_stage_g_forward.7} parent=35 // pred_check
          %p2632 = pneg %p130
        $region54: #{next_stage_g_forward.7} parent=35 // pred_check_branch
          %2634 = sbr.rel (%p2632) target = $region56
        $region55: #{next_stage_g_forward.7} parent=35 // pred_region
          %s2636 = ssub.s32 4096, 4096
          %2637 = vsyncadd %s2628, %s2636
          %s2638 = smul.addr %s23, 32
          %s2639 = smul.addr %s2638, 128
          %s2640 = scalar_lea.hbm %s4, %s2639
          %s2641 = sshll.u32 %s2631, 4
          %s2642 = int_to_ptr.vmem [resolvable:$true] %s2641
          %2647 = dma.vmem_to_hbm [thread:$0]  %s2642, 4096, %s2640, %s2628, 128, 128, 8
        $region56: #{next_stage_g_forward.7} parent=35 // pred_fallthru
          _
      $region36: #{next_stage_g_forward.7} parent=5 // pred_fallthru
        _
      %p2648 = scmp.le.s32.totalorder 2, %s18
      // Predicated region
      $region57: #{next_stage_g_forward.7} parent=5 // pred_check
        %p2649 = pneg %p2648
      $region58: #{next_stage_g_forward.7} parent=5 // pred_check_branch
        %2651 = sbr.rel (%p2649) target = $region60
      $region59: #{next_stage_g_forward.7} parent=5 // pred_region
        %s2652 = ssub.s32 %s18, 2
        // Predicated region
        $region61: #{next_stage_g_forward.7} parent=59 // pred_check
          %p2653 = pneg %p136
        $region62: #{next_stage_g_forward.7} parent=59 // pred_check_branch
          %2655 = sbr.rel (%p2653) target = $region64
        $region63: #{next_stage_g_forward.7} parent=59 // pred_region
          %s2656 = sand.u32 %s121, 1
          %s2657 = scalar_lea.sflag [#allocation4], %s2656
          %s2658 = sand.u32 %s121, 1
          %s2659 = smul.addr %s2658, 256
          %s2660 = scalar_lea.vmem [#allocation10], %s2659
          %2661 = dma.done %s2657, 4096
        $region64: #{next_stage_g_forward.7} parent=59 // pred_fallthru
          _
      $region60: #{next_stage_g_forward.7} parent=5 // pred_fallthru
        _
    $region6: #{next_stage_g_forward.7} parent=1 // loop_footer
      %s22 = sadd.s32 1, %s18
    $region7: #{next_stage_g_forward.7} parent=1 // loop_footer_branch
      %17 = sbr.rel target = $region3
    $region8: #{next_stage_g_forward.7} parent=1 // loop_exit
      _
    %2662 = vsyncpa [#allocation3], 1
    %s2663 = scalar_lea.sflag [#allocation3], 1
    %2664 = vsyncpa %s2663, 1
    %2665 = vsyncpa [#allocation6], 1
    %2666 = vsyncpa [#allocation9], 1
    %2667 = vsyncpa [#allocation4], 1
    %s2668 = scalar_lea.sflag [#allocation4], 1
    %2669 = vsyncpa %s2668, 1

</llo_original>
